<compile_context>
chip_gen: v7x
topology: tpu7x:2x2x1
jax: 0.10.0
libtpu: 0.0.40
codegen_flags: <defaults>
</compile_context>

<pallas_src>
import functools
import math

import jax
import jax.numpy as jnp
from jax.experimental import pallas as pl
from jax.experimental.pallas import tpu as pltpu  # noqa: F401  (TPU backend assumed)

# ----------------------------- model config -----------------------------
IMG = 16            # image height/width
CH = 4              # input channels
PATCH = 4           # patch size
HIDDEN = 32         # vit hidden size
NUM_HEADS = 2
HEAD_DIM = HIDDEN // NUM_HEADS
MLP_DIM = 64
NUM_LAYERS = 2
NUM_POSITIONS = 8
LN_EPS = 1e-12      # HuggingFace ViT LayerNorm eps
LOGIT_PAD = 128     # classifier weight padded to 128 lanes for the MXU

NUM_PATCHES = (IMG // PATCH) ** 2      # 16
SEQ = NUM_PATCHES + 1                  # 17 (patches + CLS)
SEQ_PAD = 24                           # padded to a sublane multiple of 8
CLS_ROW = NUM_PATCHES                  # CLS stored at aligned row 16 internally
PATCH_DIM = CH * PATCH * PATCH         # 64


# ----------------------------- in-kernel helpers -----------------------------
def _layer_norm(x, g, b):
    mean = jnp.mean(x, axis=-1, keepdims=True)
    var = jnp.mean(jnp.square(x - mean), axis=-1, keepdims=True)
    return (x - mean) * jax.lax.rsqrt(var + LN_EPS) * g + b


# ----------------------------- the single fused kernel -----------------------------
def _fused_kernel(xp_ref, pw_ref, pb_ref, base_ref,
                  ln1g_ref, ln1b_ref, qkvw_ref, qkvb_ref, ow_ref, ob_ref,
                  ln2g_ref, ln2b_ref, fc1w_ref, fc1b_ref, fc2w_ref, fc2b_ref,
                  lnfg_ref, lnfb_ref, poolw_ref, poolb_ref,
                  pe1w_ref, pe1b_ref, pe2w_ref, pe2b_ref,
                  pc1w1_ref, pc1w2_ref, pc1b_ref, pc2w_ref, pc2b_ref,
                  out_ref, *, batch):
    f32 = jnp.float32
    bf16 = jnp.bfloat16
    imgs = 2 * batch
    rows = imgs * SEQ_PAD
    scale = 1.0 / math.sqrt(HEAD_DIM)

    # --- patch embedding: [imgs*16, 64] @ [64, 32] ---
    patches = (jnp.dot(xp_ref[...].astype(bf16), pw_ref[...],
                       preferred_element_type=f32) + pb_ref[...])
    patches = patches.reshape(imgs, NUM_PATCHES, HIDDEN)

    # --- assemble tokens: rows 0..15 = patches, row 16 = CLS, rows 17..23 = pad ---
    pad = jnp.zeros((imgs, SEQ_PAD - NUM_PATCHES, HIDDEN), f32)
    h = (jnp.concatenate([patches, pad], axis=1) + base_ref[...]).reshape(rows, HIDDEN)

    # key-padding bias: valid key rows are 0..SEQ-1 (patches + CLS)
    kidx = jax.lax.broadcasted_iota(jnp.int32, (1, 1, SEQ_PAD), 2)
    kbias = jnp.where(kidx < SEQ, 0.0, -1e30).astype(f32)

    # --- transformer layers (2) ---
    for l in range(NUM_LAYERS):
        # pre-LN self-attention; per-head Q/K/V via static slices of the weight refs
        x2 = _layer_norm(h, ln1g_ref[l], ln1b_ref[l]).astype(bf16)
        attn = jnp.zeros((rows, HIDDEN), f32)
        for hh in range(NUM_HEADS):
            def _proj(j, _l=l, _hh=hh, _x2=x2):
                idx = (_l * 3 + j) * NUM_HEADS + _hh
                y = jnp.dot(_x2, qkvw_ref[idx], preferred_element_type=f32) + qkvb_ref[idx]
                return y.reshape(imgs, SEQ_PAD, HEAD_DIM)
            q, k, v = _proj(0), _proj(1), _proj(2)
            s = jnp.einsum('iqd,ikd->iqk', q.astype(bf16), k.astype(bf16),
                           preferred_element_type=f32) * scale + kbias
            s = s - jnp.max(s, axis=-1, keepdims=True)
            e = jnp.exp(s)
            p = e * pl.reciprocal(jnp.sum(e, axis=-1, keepdims=True), approx=True)
            o = jnp.einsum('iqk,ikd->iqd', p.astype(bf16), v.astype(bf16),
                           preferred_element_type=f32)
            # fold output projection in per head (== concat(heads) @ W_o)
            attn = attn + jnp.dot(o.reshape(rows, HEAD_DIM).astype(bf16),
                                  ow_ref[l * NUM_HEADS + hh],
                                  preferred_element_type=f32)
        h = h + attn + ob_ref[l]

        # pre-LN MLP (tanh-GELU: EUP path; tiny numeric drift vs exact-erf nn.GELU)
        x3 = _layer_norm(h, ln2g_ref[l], ln2b_ref[l]).astype(bf16)
        m = jnp.dot(x3, fc1w_ref[l], preferred_element_type=f32) + fc1b_ref[l]
        m = jax.nn.gelu(m, approximate=True)
        h = h + jnp.dot(m.astype(bf16), fc2w_ref[l], preferred_element_type=f32) + fc2b_ref[l]

    # --- final LN + tanh pooler on the (aligned) CLS rows ---
    cls = h.reshape(imgs, SEQ_PAD, HIDDEN)[:, CLS_ROW:CLS_ROW + 1, :].reshape(imgs, HIDDEN)
    cls = _layer_norm(cls, lnfg_ref[...], lnfb_ref[...])
    pooled = jnp.tanh(jnp.dot(cls.astype(bf16), poolw_ref[...],
                              preferred_element_type=f32) + poolb_ref[...])

    # --- patch_encoder: Linear(32,1024) -> ReLU -> Linear(1024,512) ---
    h1 = jnp.maximum(jnp.dot(pooled.astype(bf16), pe1w_ref[...],
                             preferred_element_type=f32) + pe1b_ref[...], 0.0)
    emb = jnp.dot(h1.astype(bf16), pe2w_ref[...],
                  preferred_element_type=f32) + pe2b_ref[...]

    # --- position_classifier on concat([emb1, emb2], dim=1) as a split matmul ---
    e1 = emb[0:batch, :].astype(bf16)
    e2 = emb[batch:2 * batch, :].astype(bf16)
    c1 = jnp.maximum(jnp.dot(e1, pc1w1_ref[...], preferred_element_type=f32)
                     + jnp.dot(e2, pc1w2_ref[...], preferred_element_type=f32)
                     + pc1b_ref[...], 0.0)
    logits = jnp.dot(c1.astype(bf16), pc2w_ref[...],
                     preferred_element_type=f32) + pc2b_ref[...]
    out_ref[...] = logits[:, :NUM_POSITIONS]


# ----------------------------- parameter init -----------------------------
def init_params(seed=0):
    key = jax.random.PRNGKey(seed)
    counter = [0]

    def nxt():
        counter[0] += 1
        return jax.random.fold_in(key, counter[0])

    def w(shape, scale=0.02):
        return scale * jax.random.normal(nxt(), shape, jnp.float32)

    L, H, NH, HD = NUM_LAYERS, HIDDEN, NUM_HEADS, HEAD_DIM
    bf16 = jnp.bfloat16
    p = {}
    p["patch_w"] = w((PATCH_DIM, H)).astype(bf16)
    p["patch_b"] = jnp.zeros((1, H), jnp.float32)

    cls = w((1, H))
    pos = w((SEQ, H))
    # Internal token layout: rows 0..15 = patch tokens (orig positions 1..16),
    # row 16 = CLS (orig position 0), rows 17..23 = padding (masked in attention).
    base = jnp.concatenate([pos[1:SEQ, :], cls + pos[0:1, :],
                            jnp.zeros((SEQ_PAD - SEQ, H), jnp.float32)], axis=0)
    p["base"] = base[None]                                     # [1, SEQ_PAD, H]

    p["ln1_g"] = jnp.ones((L, 1, H), jnp.float32)
    p["ln1_b"] = jnp.zeros((L, 1, H), jnp.float32)
    # QKV weights pre-split per head: flat index = (layer*3 + {q,k,v}) * heads + head
    p["qkv_w"] = w((L * 3 * NH, H, HD)).astype(bf16)
    p["qkv_b"] = jnp.zeros((L * 3 * NH, 1, HD), jnp.float32)
    p["o_w"] = w((L * NH, HD, H)).astype(bf16)                  # per-head output proj
    p["o_b"] = jnp.zeros((L, 1, H), jnp.float32)
    p["ln2_g"] = jnp.ones((L, 1, H), jnp.float32)
    p["ln2_b"] = jnp.zeros((L, 1, H), jnp.float32)
    p["fc1_w"] = w((L, H, MLP_DIM)).astype(bf16)
    p["fc1_b"] = jnp.zeros((L, 1, MLP_DIM), jnp.float32)
    p["fc2_w"] = w((L, MLP_DIM, H)).astype(bf16)
    p["fc2_b"] = jnp.zeros((L, 1, H), jnp.float32)

    p["ln_f_g"] = jnp.ones((1, H), jnp.float32)
    p["ln_f_b"] = jnp.zeros((1, H), jnp.float32)
    p["pool_w"] = w((H, H)).astype(bf16)
    p["pool_b"] = jnp.zeros((1, H), jnp.float32)

    # heads: all weight matrices in bf16 (halves the dominant weight DMA)
    p["pe1_w"] = w((H, 1024)).astype(bf16)
    p["pe1_b"] = jnp.zeros((1, 1024), jnp.float32)
    p["pe2_w"] = w((1024, 512)).astype(bf16)
    p["pe2_b"] = jnp.zeros((1, 512), jnp.float32)
    p["pc1_w1"] = w((512, 512)).astype(bf16)                    # acts on emb(patch1)
    p["pc1_w2"] = w((512, 512)).astype(bf16)                    # acts on emb(patch2)
    p["pc1_b"] = jnp.zeros((1, 512), jnp.float32)
    p["pc2_w"] = jnp.pad(w((512, NUM_POSITIONS)),
                         ((0, 0), (0, LOGIT_PAD - NUM_POSITIONS))).astype(bf16)
    p["pc2_b"] = jnp.zeros((1, LOGIT_PAD), jnp.float32)
    return p


# ----------------------------- forward pass -----------------------------
def context_prediction_vit_forward(params, patch1, patch2):
    batch = patch1.shape[0]
    nimg = 2 * batch
    pixels = jnp.concatenate([patch1, patch2], axis=0)          # [2B, C, 16, 16]
    # patchify (== Conv2d(kernel=4, stride=4) in NCHW, columns in (C, ph, pw) order)
    pg = IMG // PATCH
    xp = pixels.reshape(nimg, CH, pg, PATCH, pg, PATCH)
    xp = xp.transpose(0, 2, 4, 1, 3, 5).reshape(nimg * NUM_PATCHES, PATCH_DIM)
    return pl.pallas_call(
        functools.partial(_fused_kernel, batch=batch),
        out_shape=jax.ShapeDtypeStruct((batch, NUM_POSITIONS), jnp.float32),
    )(xp,
      params["patch_w"], params["patch_b"], params["base"],
      params["ln1_g"], params["ln1_b"], params["qkv_w"], params["qkv_b"],
      params["o_w"], params["o_b"], params["ln2_g"], params["ln2_b"],
      params["fc1_w"], params["fc1_b"], params["fc2_w"], params["fc2_b"],
      params["ln_f_g"], params["ln_f_b"], params["pool_w"], params["pool_b"],
      params["pe1_w"], params["pe1_b"], params["pe2_w"], params["pe2_b"],
      params["pc1_w1"], params["pc1_w2"], params["pc1_b"],
      params["pc2_w"], params["pc2_b"])


# ----------------------------- main -----------------------------
if __name__ == "__main__":
    params = init_params(seed=0)

    key = jax.random.PRNGKey(0)
    k1, k2 = jax.random.split(key)
    patch1 = jax.random.normal(k1, (2, CH, IMG, IMG), jnp.float32)   # NCHW like PyTorch
    patch2 = jax.random.normal(k2, (2, CH, IMG, IMG), jnp.float32)

    fwd = jax.jit(functools.partial(context_prediction_vit_forward, params))
    logits = fwd(patch1, patch2)
    jax.block_until_ready(logits)
    assert logits.shape == (2, NUM_POSITIONS), logits.shape
    print("KERNEL_OK")
</pallas_src>

<mosaic_0001>
module attributes {stable_mosaic.version = 11 : i64} {
  func.func @_fused_kernel(%arg0: memref<64x64xf32, #tpu.memory_space<vmem>>, %arg1: memref<64x32xbf16, #tpu.memory_space<vmem>>, %arg2: memref<1x32xf32, #tpu.memory_space<vmem>>, %arg3: memref<1x24x32xf32, #tpu.memory_space<vmem>>, %arg4: memref<2x1x32xf32, #tpu.memory_space<vmem>>, %arg5: memref<2x1x32xf32, #tpu.memory_space<vmem>>, %arg6: memref<12x32x16xbf16, #tpu.memory_space<vmem>>, %arg7: memref<12x1x16xf32, #tpu.memory_space<vmem>>, %arg8: memref<4x16x32xbf16, #tpu.memory_space<vmem>>, %arg9: memref<2x1x32xf32, #tpu.memory_space<vmem>>, %arg10: memref<2x1x32xf32, #tpu.memory_space<vmem>>, %arg11: memref<2x1x32xf32, #tpu.memory_space<vmem>>, %arg12: memref<2x32x64xbf16, #tpu.memory_space<vmem>>, %arg13: memref<2x1x64xf32, #tpu.memory_space<vmem>>, %arg14: memref<2x64x32xbf16, #tpu.memory_space<vmem>>, %arg15: memref<2x1x32xf32, #tpu.memory_space<vmem>>, %arg16: memref<1x32xf32, #tpu.memory_space<vmem>>, %arg17: memref<1x32xf32, #tpu.memory_space<vmem>>, %arg18: memref<32x32xbf16, #tpu.memory_space<vmem>>, %arg19: memref<1x32xf32, #tpu.memory_space<vmem>>, %arg20: memref<32x1024xbf16, #tpu.memory_space<vmem>>, %arg21: memref<1x1024xf32, #tpu.memory_space<vmem>>, %arg22: memref<1024x512xbf16, #tpu.memory_space<vmem>>, %arg23: memref<1x512xf32, #tpu.memory_space<vmem>>, %arg24: memref<512x512xbf16, #tpu.memory_space<vmem>>, %arg25: memref<512x512xbf16, #tpu.memory_space<vmem>>, %arg26: memref<1x512xf32, #tpu.memory_space<vmem>>, %arg27: memref<512x128xbf16, #tpu.memory_space<vmem>>, %arg28: memref<1x128xf32, #tpu.memory_space<vmem>>, %arg29: memref<2x8xf32, #tpu.memory_space<vmem>>) attributes {dimension_semantics = [], scalar_prefetch = 0 : i64, scratch_operands = 0 : i64, tpu.core_type = #tpu.core_type<tc>} {
    %c0 = arith.constant 0 : index
    %c0_0 = arith.constant 0 : index
    %0 = vector.load %arg0[%c0, %c0_0] : memref<64x64xf32, #tpu.memory_space<vmem>>, vector<64x64xf32>
    %1 = arith.truncf %0 : vector<64x64xf32> to vector<64x64xbf16>
    %c0_1 = arith.constant 0 : index
    %c0_2 = arith.constant 0 : index
    %2 = vector.load %arg1[%c0_1, %c0_2] : memref<64x32xbf16, #tpu.memory_space<vmem>>, vector<64x32xbf16>
    %cst = arith.constant dense<0.000000e+00> : vector<64x32xf32>
    %3 = tpu.matmul %1, %2, %cst {dimension_numbers = #tpu.dot_dimension_numbers<[1], [0], [0], [1], [0, 0, 1, 1], [], []>} : vector<64x64xbf16>, vector<64x32xbf16>, vector<64x32xf32> -> vector<64x32xf32>
    %c0_3 = arith.constant 0 : index
    %c0_4 = arith.constant 0 : index
    %4 = vector.load %arg2[%c0_3, %c0_4] : memref<1x32xf32, #tpu.memory_space<vmem>>, vector<1x32xf32>
    %5 = vector.broadcast %4 : vector<1x32xf32> to vector<64x32xf32>
    %6 = arith.addf %3, %5 : vector<64x32xf32>
    %7 = vector.shape_cast %6 : vector<64x32xf32> to vector<4x16x32xf32>
    %cst_5 = arith.constant 0.000000e+00 : f32
    %8 = vector.broadcast %cst_5 : f32 to vector<4x8x32xf32>
    %9 = tpu.concatenate %7, %8 in 1 : vector<4x16x32xf32>, vector<4x8x32xf32> -> vector<4x24x32xf32>
    %c0_6 = arith.constant 0 : index
    %c0_7 = arith.constant 0 : index
    %c0_8 = arith.constant 0 : index
    %10 = vector.load %arg3[%c0_6, %c0_7, %c0_8] : memref<1x24x32xf32, #tpu.memory_space<vmem>>, vector<1x24x32xf32>
    %11 = vector.broadcast %10 : vector<1x24x32xf32> to vector<4x24x32xf32>
    %12 = arith.addf %9, %11 : vector<4x24x32xf32>
    %13 = vector.shape_cast %12 : vector<4x24x32xf32> to vector<96x32xf32>
    %14 = tpu.iota {dimensions = array<i32: 2>} : vector<1x1x24xi32>
    %c17_i32 = arith.constant 17 : i32
    %15 = vector.broadcast %c17_i32 : i32 to vector<1x1x24xi32>
    %16 = arith.cmpi slt, %14, %15 : vector<1x1x24xi32>
    %cst_9 = arith.constant 0.000000e+00 : f32
    %cst_10 = arith.constant -1.000000e+30 : f32
    %17 = vector.broadcast %cst_9 : f32 to vector<1x1x24xf32>
    %18 = vector.broadcast %cst_10 : f32 to vector<1x1x24xf32>
    %19 = arith.select %16, %17, %18 : vector<1x1x24xi1>, vector<1x1x24xf32>
    %c0_11 = arith.constant 0 : index
    %c0_12 = arith.constant 0 : index
    %c0_13 = arith.constant 0 : index
    %20 = vector.load %arg4[%c0_11, %c0_12, %c0_13] : memref<2x1x32xf32, #tpu.memory_space<vmem>>, vector<1x1x32xf32>
    %21 = vector.shape_cast %20 : vector<1x1x32xf32> to vector<1x32xf32>
    %c0_14 = arith.constant 0 : index
    %c0_15 = arith.constant 0 : index
    %c0_16 = arith.constant 0 : index
    %22 = vector.load %arg5[%c0_14, %c0_15, %c0_16] : memref<2x1x32xf32, #tpu.memory_space<vmem>>, vector<1x1x32xf32>
    %23 = vector.shape_cast %22 : vector<1x1x32xf32> to vector<1x32xf32>
    %cst_17 = arith.constant dense<0.000000e+00> : vector<96xf32>
    %24 = vector.multi_reduction <add>, %13, %cst_17 [1] : vector<96x32xf32> to vector<96xf32>
    %25 = vector.shape_cast %24 : vector<96xf32> to vector<96x1xf32>
    %cst_18 = arith.constant 3.200000e+01 : f32
    %26 = vector.broadcast %cst_18 : f32 to vector<96x1xf32>
    %27 = arith.divf %25, %26 : vector<96x1xf32>
    %28 = vector.broadcast %27 : vector<96x1xf32> to vector<96x32xf32>
    %29 = arith.subf %13, %28 : vector<96x32xf32>
    %30 = arith.mulf %29, %29 : vector<96x32xf32>
    %cst_19 = arith.constant dense<0.000000e+00> : vector<96xf32>
    %31 = vector.multi_reduction <add>, %30, %cst_19 [1] : vector<96x32xf32> to vector<96xf32>
    %32 = vector.shape_cast %31 : vector<96xf32> to vector<96x1xf32>
    %cst_20 = arith.constant 3.200000e+01 : f32
    %33 = vector.broadcast %cst_20 : f32 to vector<96x1xf32>
    %34 = arith.divf %32, %33 : vector<96x1xf32>
    %35 = vector.broadcast %27 : vector<96x1xf32> to vector<96x32xf32>
    %36 = arith.subf %13, %35 : vector<96x32xf32>
    %cst_21 = arith.constant 9.99999996E-13 : f32
    %37 = vector.broadcast %cst_21 : f32 to vector<96x1xf32>
    %38 = arith.addf %34, %37 : vector<96x1xf32>
    %39 = math.rsqrt %38 : vector<96x1xf32>
    %40 = vector.broadcast %39 : vector<96x1xf32> to vector<96x32xf32>
    %41 = arith.mulf %36, %40 : vector<96x32xf32>
    %42 = vector.broadcast %21 : vector<1x32xf32> to vector<96x32xf32>
    %43 = arith.mulf %41, %42 : vector<96x32xf32>
    %44 = vector.broadcast %23 : vector<1x32xf32> to vector<96x32xf32>
    %45 = arith.addf %43, %44 : vector<96x32xf32>
    %46 = arith.truncf %45 : vector<96x32xf32> to vector<96x32xbf16>
    %cst_22 = arith.constant 0.000000e+00 : f32
    %47 = vector.broadcast %cst_22 : f32 to vector<96x32xf32>
    %c0_23 = arith.constant 0 : index
    %c0_24 = arith.constant 0 : index
    %c0_25 = arith.constant 0 : index
    %48 = vector.load %arg6[%c0_23, %c0_24, %c0_25] : memref<12x32x16xbf16, #tpu.memory_space<vmem>>, vector<1x32x16xbf16>
    %49 = vector.shape_cast %48 : vector<1x32x16xbf16> to vector<32x16xbf16>
    %cst_26 = arith.constant dense<0.000000e+00> : vector<96x16xf32>
    %50 = tpu.matmul %46, %49, %cst_26 {dimension_numbers = #tpu.dot_dimension_numbers<[1], [0], [0], [1], [0, 0, 1, 1], [], []>} : vector<96x32xbf16>, vector<32x16xbf16>, vector<96x16xf32> -> vector<96x16xf32>
    %c0_27 = arith.constant 0 : index
    %c0_28 = arith.constant 0 : index
    %c0_29 = arith.constant 0 : index
    %51 = vector.load %arg7[%c0_27, %c0_28, %c0_29] : memref<12x1x16xf32, #tpu.memory_space<vmem>>, vector<1x1x16xf32>
    %52 = vector.shape_cast %51 : vector<1x1x16xf32> to vector<1x16xf32>
    %53 = vector.broadcast %52 : vector<1x16xf32> to vector<96x16xf32>
    %54 = arith.addf %50, %53 : vector<96x16xf32>
    %55 = vector.shape_cast %54 : vector<96x16xf32> to vector<4x24x16xf32>
    %c2 = arith.constant 2 : index
    %c0_30 = arith.constant 0 : index
    %c0_31 = arith.constant 0 : index
    %56 = vector.load %arg6[%c2, %c0_30, %c0_31] : memref<12x32x16xbf16, #tpu.memory_space<vmem>>, vector<1x32x16xbf16>
    %57 = vector.shape_cast %56 : vector<1x32x16xbf16> to vector<32x16xbf16>
    %cst_32 = arith.constant dense<0.000000e+00> : vector<96x16xf32>
    %58 = tpu.matmul %46, %57, %cst_32 {dimension_numbers = #tpu.dot_dimension_numbers<[1], [0], [0], [1], [0, 0, 1, 1], [], []>} : vector<96x32xbf16>, vector<32x16xbf16>, vector<96x16xf32> -> vector<96x16xf32>
    %c2_33 = arith.constant 2 : index
    %c0_34 = arith.constant 0 : index
    %c0_35 = arith.constant 0 : index
    %59 = vector.load %arg7[%c2_33, %c0_34, %c0_35] : memref<12x1x16xf32, #tpu.memory_space<vmem>>, vector<1x1x16xf32>
    %60 = vector.shape_cast %59 : vector<1x1x16xf32> to vector<1x16xf32>
    %61 = vector.broadcast %60 : vector<1x16xf32> to vector<96x16xf32>
    %62 = arith.addf %58, %61 : vector<96x16xf32>
    %63 = vector.shape_cast %62 : vector<96x16xf32> to vector<4x24x16xf32>
    %c4 = arith.constant 4 : index
    %c0_36 = arith.constant 0 : index
    %c0_37 = arith.constant 0 : index
    %64 = vector.load %arg6[%c4, %c0_36, %c0_37] : memref<12x32x16xbf16, #tpu.memory_space<vmem>>, vector<1x32x16xbf16>
    %65 = vector.shape_cast %64 : vector<1x32x16xbf16> to vector<32x16xbf16>
    %cst_38 = arith.constant dense<0.000000e+00> : vector<96x16xf32>
    %66 = tpu.matmul %46, %65, %cst_38 {dimension_numbers = #tpu.dot_dimension_numbers<[1], [0], [0], [1], [0, 0, 1, 1], [], []>} : vector<96x32xbf16>, vector<32x16xbf16>, vector<96x16xf32> -> vector<96x16xf32>
    %c4_39 = arith.constant 4 : index
    %c0_40 = arith.constant 0 : index
    %c0_41 = arith.constant 0 : index
    %67 = vector.load %arg7[%c4_39, %c0_40, %c0_41] : memref<12x1x16xf32, #tpu.memory_space<vmem>>, vector<1x1x16xf32>
    %68 = vector.shape_cast %67 : vector<1x1x16xf32> to vector<1x16xf32>
    %69 = vector.broadcast %68 : vector<1x16xf32> to vector<96x16xf32>
    %70 = arith.addf %66, %69 : vector<96x16xf32>
    %71 = vector.shape_cast %70 : vector<96x16xf32> to vector<4x24x16xf32>
    %72 = arith.truncf %55 : vector<4x24x16xf32> to vector<4x24x16xbf16>
    %73 = arith.truncf %63 : vector<4x24x16xf32> to vector<4x24x16xbf16>
    "tpu.trace_start"() <{level = 10 : i32, message = "iqd,ikd->iqk"}> : () -> ()
    %cst_42 = arith.constant dense<0.000000e+00> : vector<4x24x24xf32>
    %74 = tpu.matmul %72, %73, %cst_42 {dimension_numbers = #tpu.dot_dimension_numbers<[2], [2], [1], [1], [0, 0, 0, 1, 1, 1], [0], [0]>} : vector<4x24x16xbf16>, vector<4x24x16xbf16>, vector<4x24x24xf32> -> vector<4x24x24xf32>
    "tpu.trace_stop"() : () -> ()
    %cst_43 = arith.constant 2.500000e-01 : f32
    %75 = vector.broadcast %cst_43 : f32 to vector<4x24x24xf32>
    %76 = arith.mulf %74, %75 : vector<4x24x24xf32>
    %77 = vector.broadcast %19 : vector<1x1x24xf32> to vector<4x24x24xf32>
    %78 = arith.addf %76, %77 : vector<4x24x24xf32>
    %cst_44 = arith.constant dense<0xFF800000> : vector<4x24xf32>
    %79 = vector.multi_reduction <maximumf>, %78, %cst_44 [2] : vector<4x24x24xf32> to vector<4x24xf32>
    %80 = vector.shape_cast %79 : vector<4x24xf32> to vector<4x24x1xf32>
    %81 = vector.broadcast %80 : vector<4x24x1xf32> to vector<4x24x24xf32>
    %82 = arith.subf %78, %81 : vector<4x24x24xf32>
    %83 = math.exp %82 : vector<4x24x24xf32>
    %cst_45 = arith.constant dense<0.000000e+00> : vector<4x24xf32>
    %84 = vector.multi_reduction <add>, %83, %cst_45 [2] : vector<4x24x24xf32> to vector<4x24xf32>
    %85 = vector.shape_cast %84 : vector<4x24xf32> to vector<4x24x1xf32>
    %86 = tpu.reciprocal %85 {approx = true} : vector<4x24x1xf32> -> vector<4x24x1xf32>
    %87 = vector.broadcast %86 : vector<4x24x1xf32> to vector<4x24x24xf32>
    %88 = arith.mulf %83, %87 : vector<4x24x24xf32>
    %89 = arith.truncf %88 : vector<4x24x24xf32> to vector<4x24x24xbf16>
    %90 = arith.truncf %71 : vector<4x24x16xf32> to vector<4x24x16xbf16>
    "tpu.trace_start"() <{level = 10 : i32, message = "iqk,ikd->iqd"}> : () -> ()
    %cst_46 = arith.constant dense<0.000000e+00> : vector<4x24x16xf32>
    %91 = tpu.matmul %89, %90, %cst_46 {dimension_numbers = #tpu.dot_dimension_numbers<[2], [1], [1], [2], [0, 0, 0, 1, 1, 2], [0], [0]>} : vector<4x24x24xbf16>, vector<4x24x16xbf16>, vector<4x24x16xf32> -> vector<4x24x16xf32>
    "tpu.trace_stop"() : () -> ()
    %92 = vector.shape_cast %91 : vector<4x24x16xf32> to vector<96x16xf32>
    %93 = arith.truncf %92 : vector<96x16xf32> to vector<96x16xbf16>
    %c0_47 = arith.constant 0 : index
    %c0_48 = arith.constant 0 : index
    %c0_49 = arith.constant 0 : index
    %94 = vector.load %arg8[%c0_47, %c0_48, %c0_49] : memref<4x16x32xbf16, #tpu.memory_space<vmem>>, vector<1x16x32xbf16>
    %95 = vector.shape_cast %94 : vector<1x16x32xbf16> to vector<16x32xbf16>
    %cst_50 = arith.constant dense<0.000000e+00> : vector<96x32xf32>
    %96 = tpu.matmul %93, %95, %cst_50 {dimension_numbers = #tpu.dot_dimension_numbers<[1], [0], [0], [1], [0, 0, 1, 1], [], []>} : vector<96x16xbf16>, vector<16x32xbf16>, vector<96x32xf32> -> vector<96x32xf32>
    %97 = arith.addf %47, %96 : vector<96x32xf32>
    %c1 = arith.constant 1 : index
    %c0_51 = arith.constant 0 : index
    %c0_52 = arith.constant 0 : index
    %98 = vector.load %arg6[%c1, %c0_51, %c0_52] : memref<12x32x16xbf16, #tpu.memory_space<vmem>>, vector<1x32x16xbf16>
    %99 = vector.shape_cast %98 : vector<1x32x16xbf16> to vector<32x16xbf16>
    %cst_53 = arith.constant dense<0.000000e+00> : vector<96x16xf32>
    %100 = tpu.matmul %46, %99, %cst_53 {dimension_numbers = #tpu.dot_dimension_numbers<[1], [0], [0], [1], [0, 0, 1, 1], [], []>} : vector<96x32xbf16>, vector<32x16xbf16>, vector<96x16xf32> -> vector<96x16xf32>
    %c1_54 = arith.constant 1 : index
    %c0_55 = arith.constant 0 : index
    %c0_56 = arith.constant 0 : index
    %101 = vector.load %arg7[%c1_54, %c0_55, %c0_56] : memref<12x1x16xf32, #tpu.memory_space<vmem>>, vector<1x1x16xf32>
    %102 = vector.shape_cast %101 : vector<1x1x16xf32> to vector<1x16xf32>
    %103 = vector.broadcast %102 : vector<1x16xf32> to vector<96x16xf32>
    %104 = arith.addf %100, %103 : vector<96x16xf32>
    %105 = vector.shape_cast %104 : vector<96x16xf32> to vector<4x24x16xf32>
    %c3 = arith.constant 3 : index
    %c0_57 = arith.constant 0 : index
    %c0_58 = arith.constant 0 : index
    %106 = vector.load %arg6[%c3, %c0_57, %c0_58] : memref<12x32x16xbf16, #tpu.memory_space<vmem>>, vector<1x32x16xbf16>
    %107 = vector.shape_cast %106 : vector<1x32x16xbf16> to vector<32x16xbf16>
    %cst_59 = arith.constant dense<0.000000e+00> : vector<96x16xf32>
    %108 = tpu.matmul %46, %107, %cst_59 {dimension_numbers = #tpu.dot_dimension_numbers<[1], [0], [0], [1], [0, 0, 1, 1], [], []>} : vector<96x32xbf16>, vector<32x16xbf16>, vector<96x16xf32> -> vector<96x16xf32>
    %c3_60 = arith.constant 3 : index
    %c0_61 = arith.constant 0 : index
    %c0_62 = arith.constant 0 : index
    %109 = vector.load %arg7[%c3_60, %c0_61, %c0_62] : memref<12x1x16xf32, #tpu.memory_space<vmem>>, vector<1x1x16xf32>
    %110 = vector.shape_cast %109 : vector<1x1x16xf32> to vector<1x16xf32>
    %111 = vector.broadcast %110 : vector<1x16xf32> to vector<96x16xf32>
    %112 = arith.addf %108, %111 : vector<96x16xf32>
    %113 = vector.shape_cast %112 : vector<96x16xf32> to vector<4x24x16xf32>
    %c5 = arith.constant 5 : index
    %c0_63 = arith.constant 0 : index
    %c0_64 = arith.constant 0 : index
    %114 = vector.load %arg6[%c5, %c0_63, %c0_64] : memref<12x32x16xbf16, #tpu.memory_space<vmem>>, vector<1x32x16xbf16>
    %115 = vector.shape_cast %114 : vector<1x32x16xbf16> to vector<32x16xbf16>
    %cst_65 = arith.constant dense<0.000000e+00> : vector<96x16xf32>
    %116 = tpu.matmul %46, %115, %cst_65 {dimension_numbers = #tpu.dot_dimension_numbers<[1], [0], [0], [1], [0, 0, 1, 1], [], []>} : vector<96x32xbf16>, vector<32x16xbf16>, vector<96x16xf32> -> vector<96x16xf32>
    %c5_66 = arith.constant 5 : index
    %c0_67 = arith.constant 0 : index
    %c0_68 = arith.constant 0 : index
    %117 = vector.load %arg7[%c5_66, %c0_67, %c0_68] : memref<12x1x16xf32, #tpu.memory_space<vmem>>, vector<1x1x16xf32>
    %118 = vector.shape_cast %117 : vector<1x1x16xf32> to vector<1x16xf32>
    %119 = vector.broadcast %118 : vector<1x16xf32> to vector<96x16xf32>
    %120 = arith.addf %116, %119 : vector<96x16xf32>
    %121 = vector.shape_cast %120 : vector<96x16xf32> to vector<4x24x16xf32>
    %122 = arith.truncf %105 : vector<4x24x16xf32> to vector<4x24x16xbf16>
    %123 = arith.truncf %113 : vector<4x24x16xf32> to vector<4x24x16xbf16>
    "tpu.trace_start"() <{level = 10 : i32, message = "iqd,ikd->iqk"}> : () -> ()
    %cst_69 = arith.constant dense<0.000000e+00> : vector<4x24x24xf32>
    %124 = tpu.matmul %122, %123, %cst_69 {dimension_numbers = #tpu.dot_dimension_numbers<[2], [2], [1], [1], [0, 0, 0, 1, 1, 1], [0], [0]>} : vector<4x24x16xbf16>, vector<4x24x16xbf16>, vector<4x24x24xf32> -> vector<4x24x24xf32>
    "tpu.trace_stop"() : () -> ()
    %cst_70 = arith.constant 2.500000e-01 : f32
    %125 = vector.broadcast %cst_70 : f32 to vector<4x24x24xf32>
    %126 = arith.mulf %124, %125 : vector<4x24x24xf32>
    %127 = vector.broadcast %19 : vector<1x1x24xf32> to vector<4x24x24xf32>
    %128 = arith.addf %126, %127 : vector<4x24x24xf32>
    %cst_71 = arith.constant dense<0xFF800000> : vector<4x24xf32>
    %129 = vector.multi_reduction <maximumf>, %128, %cst_71 [2] : vector<4x24x24xf32> to vector<4x24xf32>
    %130 = vector.shape_cast %129 : vector<4x24xf32> to vector<4x24x1xf32>
    %131 = vector.broadcast %130 : vector<4x24x1xf32> to vector<4x24x24xf32>
    %132 = arith.subf %128, %131 : vector<4x24x24xf32>
    %133 = math.exp %132 : vector<4x24x24xf32>
    %cst_72 = arith.constant dense<0.000000e+00> : vector<4x24xf32>
    %134 = vector.multi_reduction <add>, %133, %cst_72 [2] : vector<4x24x24xf32> to vector<4x24xf32>
    %135 = vector.shape_cast %134 : vector<4x24xf32> to vector<4x24x1xf32>
    %136 = tpu.reciprocal %135 {approx = true} : vector<4x24x1xf32> -> vector<4x24x1xf32>
    %137 = vector.broadcast %136 : vector<4x24x1xf32> to vector<4x24x24xf32>
    %138 = arith.mulf %133, %137 : vector<4x24x24xf32>
    %139 = arith.truncf %138 : vector<4x24x24xf32> to vector<4x24x24xbf16>
    %140 = arith.truncf %121 : vector<4x24x16xf32> to vector<4x24x16xbf16>
    "tpu.trace_start"() <{level = 10 : i32, message = "iqk,ikd->iqd"}> : () -> ()
    %cst_73 = arith.constant dense<0.000000e+00> : vector<4x24x16xf32>
    %141 = tpu.matmul %139, %140, %cst_73 {dimension_numbers = #tpu.dot_dimension_numbers<[2], [1], [1], [2], [0, 0, 0, 1, 1, 2], [0], [0]>} : vector<4x24x24xbf16>, vector<4x24x16xbf16>, vector<4x24x16xf32> -> vector<4x24x16xf32>
    "tpu.trace_stop"() : () -> ()
    %142 = vector.shape_cast %141 : vector<4x24x16xf32> to vector<96x16xf32>
    %143 = arith.truncf %142 : vector<96x16xf32> to vector<96x16xbf16>
    %c1_74 = arith.constant 1 : index
    %c0_75 = arith.constant 0 : index
    %c0_76 = arith.constant 0 : index
    %144 = vector.load %arg8[%c1_74, %c0_75, %c0_76] : memref<4x16x32xbf16, #tpu.memory_space<vmem>>, vector<1x16x32xbf16>
    %145 = vector.shape_cast %144 : vector<1x16x32xbf16> to vector<16x32xbf16>
    %cst_77 = arith.constant dense<0.000000e+00> : vector<96x32xf32>
    %146 = tpu.matmul %143, %145, %cst_77 {dimension_numbers = #tpu.dot_dimension_numbers<[1], [0], [0], [1], [0, 0, 1, 1], [], []>} : vector<96x16xbf16>, vector<16x32xbf16>, vector<96x32xf32> -> vector<96x32xf32>
    %147 = arith.addf %97, %146 : vector<96x32xf32>
    %148 = arith.addf %13, %147 : vector<96x32xf32>
    %c0_78 = arith.constant 0 : index
    %c0_79 = arith.constant 0 : index
    %c0_80 = arith.constant 0 : index
    %149 = vector.load %arg9[%c0_78, %c0_79, %c0_80] : memref<2x1x32xf32, #tpu.memory_space<vmem>>, vector<1x1x32xf32>
    %150 = vector.shape_cast %149 : vector<1x1x32xf32> to vector<1x32xf32>
    %151 = vector.broadcast %150 : vector<1x32xf32> to vector<96x32xf32>
    %152 = arith.addf %148, %151 : vector<96x32xf32>
    %c0_81 = arith.constant 0 : index
    %c0_82 = arith.constant 0 : index
    %c0_83 = arith.constant 0 : index
    %153 = vector.load %arg10[%c0_81, %c0_82, %c0_83] : memref<2x1x32xf32, #tpu.memory_space<vmem>>, vector<1x1x32xf32>
    %154 = vector.shape_cast %153 : vector<1x1x32xf32> to vector<1x32xf32>
    %c0_84 = arith.constant 0 : index
    %c0_85 = arith.constant 0 : index
    %c0_86 = arith.constant 0 : index
    %155 = vector.load %arg11[%c0_84, %c0_85, %c0_86] : memref<2x1x32xf32, #tpu.memory_space<vmem>>, vector<1x1x32xf32>
    %156 = vector.shape_cast %155 : vector<1x1x32xf32> to vector<1x32xf32>
    %cst_87 = arith.constant dense<0.000000e+00> : vector<96xf32>
    %157 = vector.multi_reduction <add>, %152, %cst_87 [1] : vector<96x32xf32> to vector<96xf32>
    %158 = vector.shape_cast %157 : vector<96xf32> to vector<96x1xf32>
    %cst_88 = arith.constant 3.200000e+01 : f32
    %159 = vector.broadcast %cst_88 : f32 to vector<96x1xf32>
    %160 = arith.divf %158, %159 : vector<96x1xf32>
    %161 = vector.broadcast %160 : vector<96x1xf32> to vector<96x32xf32>
    %162 = arith.subf %152, %161 : vector<96x32xf32>
    %163 = arith.mulf %162, %162 : vector<96x32xf32>
    %cst_89 = arith.constant dense<0.000000e+00> : vector<96xf32>
    %164 = vector.multi_reduction <add>, %163, %cst_89 [1] : vector<96x32xf32> to vector<96xf32>
    %165 = vector.shape_cast %164 : vector<96xf32> to vector<96x1xf32>
    %cst_90 = arith.constant 3.200000e+01 : f32
    %166 = vector.broadcast %cst_90 : f32 to vector<96x1xf32>
    %167 = arith.divf %165, %166 : vector<96x1xf32>
    %168 = vector.broadcast %160 : vector<96x1xf32> to vector<96x32xf32>
    %169 = arith.subf %152, %168 : vector<96x32xf32>
    %cst_91 = arith.constant 9.99999996E-13 : f32
    %170 = vector.broadcast %cst_91 : f32 to vector<96x1xf32>
    %171 = arith.addf %167, %170 : vector<96x1xf32>
    %172 = math.rsqrt %171 : vector<96x1xf32>
    %173 = vector.broadcast %172 : vector<96x1xf32> to vector<96x32xf32>
    %174 = arith.mulf %169, %173 : vector<96x32xf32>
    %175 = vector.broadcast %154 : vector<1x32xf32> to vector<96x32xf32>
    %176 = arith.mulf %174, %175 : vector<96x32xf32>
    %177 = vector.broadcast %156 : vector<1x32xf32> to vector<96x32xf32>
    %178 = arith.addf %176, %177 : vector<96x32xf32>
    %179 = arith.truncf %178 : vector<96x32xf32> to vector<96x32xbf16>
    %c0_92 = arith.constant 0 : index
    %c0_93 = arith.constant 0 : index
    %c0_94 = arith.constant 0 : index
    %180 = vector.load %arg12[%c0_92, %c0_93, %c0_94] : memref<2x32x64xbf16, #tpu.memory_space<vmem>>, vector<1x32x64xbf16>
    %181 = vector.shape_cast %180 : vector<1x32x64xbf16> to vector<32x64xbf16>
    %cst_95 = arith.constant dense<0.000000e+00> : vector<96x64xf32>
    %182 = tpu.matmul %179, %181, %cst_95 {dimension_numbers = #tpu.dot_dimension_numbers<[1], [0], [0], [1], [0, 0, 1, 1], [], []>} : vector<96x32xbf16>, vector<32x64xbf16>, vector<96x64xf32> -> vector<96x64xf32>
    %c0_96 = arith.constant 0 : index
    %c0_97 = arith.constant 0 : index
    %c0_98 = arith.constant 0 : index
    %183 = vector.load %arg13[%c0_96, %c0_97, %c0_98] : memref<2x1x64xf32, #tpu.memory_space<vmem>>, vector<1x1x64xf32>
    %184 = vector.shape_cast %183 : vector<1x1x64xf32> to vector<1x64xf32>
    %185 = vector.broadcast %184 : vector<1x64xf32> to vector<96x64xf32>
    %186 = arith.addf %182, %185 : vector<96x64xf32>
    %187 = arith.mulf %186, %186 : vector<96x64xf32>
    %188 = arith.mulf %186, %187 : vector<96x64xf32>
    %cst_99 = arith.constant 4.471500e-02 : f32
    %189 = vector.broadcast %cst_99 : f32 to vector<96x64xf32>
    %190 = arith.mulf %189, %188 : vector<96x64xf32>
    %191 = arith.addf %186, %190 : vector<96x64xf32>
    %cst_100 = arith.constant 0.797884583 : f32
    %192 = vector.broadcast %cst_100 : f32 to vector<96x64xf32>
    %193 = arith.mulf %192, %191 : vector<96x64xf32>
    %194 = math.tanh %193 : vector<96x64xf32>
    %cst_101 = arith.constant 1.000000e+00 : f32
    %195 = vector.broadcast %cst_101 : f32 to vector<96x64xf32>
    %196 = arith.addf %195, %194 : vector<96x64xf32>
    %cst_102 = arith.constant 5.000000e-01 : f32
    %197 = vector.broadcast %cst_102 : f32 to vector<96x64xf32>
    %198 = arith.mulf %197, %196 : vector<96x64xf32>
    %199 = arith.mulf %186, %198 : vector<96x64xf32>
    %200 = arith.truncf %199 : vector<96x64xf32> to vector<96x64xbf16>
    %c0_103 = arith.constant 0 : index
    %c0_104 = arith.constant 0 : index
    %c0_105 = arith.constant 0 : index
    %201 = vector.load %arg14[%c0_103, %c0_104, %c0_105] : memref<2x64x32xbf16, #tpu.memory_space<vmem>>, vector<1x64x32xbf16>
    %202 = vector.shape_cast %201 : vector<1x64x32xbf16> to vector<64x32xbf16>
    %cst_106 = arith.constant dense<0.000000e+00> : vector<96x32xf32>
    %203 = tpu.matmul %200, %202, %cst_106 {dimension_numbers = #tpu.dot_dimension_numbers<[1], [0], [0], [1], [0, 0, 1, 1], [], []>} : vector<96x64xbf16>, vector<64x32xbf16>, vector<96x32xf32> -> vector<96x32xf32>
    %204 = arith.addf %152, %203 : vector<96x32xf32>
    %c0_107 = arith.constant 0 : index
    %c0_108 = arith.constant 0 : index
    %c0_109 = arith.constant 0 : index
    %205 = vector.load %arg15[%c0_107, %c0_108, %c0_109] : memref<2x1x32xf32, #tpu.memory_space<vmem>>, vector<1x1x32xf32>
    %206 = vector.shape_cast %205 : vector<1x1x32xf32> to vector<1x32xf32>
    %207 = vector.broadcast %206 : vector<1x32xf32> to vector<96x32xf32>
    %208 = arith.addf %204, %207 : vector<96x32xf32>
    %c1_110 = arith.constant 1 : index
    %c0_111 = arith.constant 0 : index
    %c0_112 = arith.constant 0 : index
    %209 = vector.load %arg4[%c1_110, %c0_111, %c0_112] : memref<2x1x32xf32, #tpu.memory_space<vmem>>, vector<1x1x32xf32>
    %210 = vector.shape_cast %209 : vector<1x1x32xf32> to vector<1x32xf32>
    %c1_113 = arith.constant 1 : index
    %c0_114 = arith.constant 0 : index
    %c0_115 = arith.constant 0 : index
    %211 = vector.load %arg5[%c1_113, %c0_114, %c0_115] : memref<2x1x32xf32, #tpu.memory_space<vmem>>, vector<1x1x32xf32>
    %212 = vector.shape_cast %211 : vector<1x1x32xf32> to vector<1x32xf32>
    %cst_116 = arith.constant dense<0.000000e+00> : vector<96xf32>
    %213 = vector.multi_reduction <add>, %208, %cst_116 [1] : vector<96x32xf32> to vector<96xf32>
    %214 = vector.shape_cast %213 : vector<96xf32> to vector<96x1xf32>
    %cst_117 = arith.constant 3.200000e+01 : f32
    %215 = vector.broadcast %cst_117 : f32 to vector<96x1xf32>
    %216 = arith.divf %214, %215 : vector<96x1xf32>
    %217 = vector.broadcast %216 : vector<96x1xf32> to vector<96x32xf32>
    %218 = arith.subf %208, %217 : vector<96x32xf32>
    %219 = arith.mulf %218, %218 : vector<96x32xf32>
    %cst_118 = arith.constant dense<0.000000e+00> : vector<96xf32>
    %220 = vector.multi_reduction <add>, %219, %cst_118 [1] : vector<96x32xf32> to vector<96xf32>
    %221 = vector.shape_cast %220 : vector<96xf32> to vector<96x1xf32>
    %cst_119 = arith.constant 3.200000e+01 : f32
    %222 = vector.broadcast %cst_119 : f32 to vector<96x1xf32>
    %223 = arith.divf %221, %222 : vector<96x1xf32>
    %224 = vector.broadcast %216 : vector<96x1xf32> to vector<96x32xf32>
    %225 = arith.subf %208, %224 : vector<96x32xf32>
    %cst_120 = arith.constant 9.99999996E-13 : f32
    %226 = vector.broadcast %cst_120 : f32 to vector<96x1xf32>
    %227 = arith.addf %223, %226 : vector<96x1xf32>
    %228 = math.rsqrt %227 : vector<96x1xf32>
    %229 = vector.broadcast %228 : vector<96x1xf32> to vector<96x32xf32>
    %230 = arith.mulf %225, %229 : vector<96x32xf32>
    %231 = vector.broadcast %210 : vector<1x32xf32> to vector<96x32xf32>
    %232 = arith.mulf %230, %231 : vector<96x32xf32>
    %233 = vector.broadcast %212 : vector<1x32xf32> to vector<96x32xf32>
    %234 = arith.addf %232, %233 : vector<96x32xf32>
    %235 = arith.truncf %234 : vector<96x32xf32> to vector<96x32xbf16>
    %cst_121 = arith.constant 0.000000e+00 : f32
    %236 = vector.broadcast %cst_121 : f32 to vector<96x32xf32>
    %c6 = arith.constant 6 : index
    %c0_122 = arith.constant 0 : index
    %c0_123 = arith.constant 0 : index
    %237 = vector.load %arg6[%c6, %c0_122, %c0_123] : memref<12x32x16xbf16, #tpu.memory_space<vmem>>, vector<1x32x16xbf16>
    %238 = vector.shape_cast %237 : vector<1x32x16xbf16> to vector<32x16xbf16>
    %cst_124 = arith.constant dense<0.000000e+00> : vector<96x16xf32>
    %239 = tpu.matmul %235, %238, %cst_124 {dimension_numbers = #tpu.dot_dimension_numbers<[1], [0], [0], [1], [0, 0, 1, 1], [], []>} : vector<96x32xbf16>, vector<32x16xbf16>, vector<96x16xf32> -> vector<96x16xf32>
    %c6_125 = arith.constant 6 : index
    %c0_126 = arith.constant 0 : index
    %c0_127 = arith.constant 0 : index
    %240 = vector.load %arg7[%c6_125, %c0_126, %c0_127] : memref<12x1x16xf32, #tpu.memory_space<vmem>>, vector<1x1x16xf32>
    %241 = vector.shape_cast %240 : vector<1x1x16xf32> to vector<1x16xf32>
    %242 = vector.broadcast %241 : vector<1x16xf32> to vector<96x16xf32>
    %243 = arith.addf %239, %242 : vector<96x16xf32>
    %244 = vector.shape_cast %243 : vector<96x16xf32> to vector<4x24x16xf32>
    %c8 = arith.constant 8 : index
    %c0_128 = arith.constant 0 : index
    %c0_129 = arith.constant 0 : index
    %245 = vector.load %arg6[%c8, %c0_128, %c0_129] : memref<12x32x16xbf16, #tpu.memory_space<vmem>>, vector<1x32x16xbf16>
    %246 = vector.shape_cast %245 : vector<1x32x16xbf16> to vector<32x16xbf16>
    %cst_130 = arith.constant dense<0.000000e+00> : vector<96x16xf32>
    %247 = tpu.matmul %235, %246, %cst_130 {dimension_numbers = #tpu.dot_dimension_numbers<[1], [0], [0], [1], [0, 0, 1, 1], [], []>} : vector<96x32xbf16>, vector<32x16xbf16>, vector<96x16xf32> -> vector<96x16xf32>
    %c8_131 = arith.constant 8 : index
    %c0_132 = arith.constant 0 : index
    %c0_133 = arith.constant 0 : index
    %248 = vector.load %arg7[%c8_131, %c0_132, %c0_133] : memref<12x1x16xf32, #tpu.memory_space<vmem>>, vector<1x1x16xf32>
    %249 = vector.shape_cast %248 : vector<1x1x16xf32> to vector<1x16xf32>
    %250 = vector.broadcast %249 : vector<1x16xf32> to vector<96x16xf32>
    %251 = arith.addf %247, %250 : vector<96x16xf32>
    %252 = vector.shape_cast %251 : vector<96x16xf32> to vector<4x24x16xf32>
    %c10 = arith.constant 10 : index
    %c0_134 = arith.constant 0 : index
    %c0_135 = arith.constant 0 : index
    %253 = vector.load %arg6[%c10, %c0_134, %c0_135] : memref<12x32x16xbf16, #tpu.memory_space<vmem>>, vector<1x32x16xbf16>
    %254 = vector.shape_cast %253 : vector<1x32x16xbf16> to vector<32x16xbf16>
    %cst_136 = arith.constant dense<0.000000e+00> : vector<96x16xf32>
    %255 = tpu.matmul %235, %254, %cst_136 {dimension_numbers = #tpu.dot_dimension_numbers<[1], [0], [0], [1], [0, 0, 1, 1], [], []>} : vector<96x32xbf16>, vector<32x16xbf16>, vector<96x16xf32> -> vector<96x16xf32>
    %c10_137 = arith.constant 10 : index
    %c0_138 = arith.constant 0 : index
    %c0_139 = arith.constant 0 : index
    %256 = vector.load %arg7[%c10_137, %c0_138, %c0_139] : memref<12x1x16xf32, #tpu.memory_space<vmem>>, vector<1x1x16xf32>
    %257 = vector.shape_cast %256 : vector<1x1x16xf32> to vector<1x16xf32>
    %258 = vector.broadcast %257 : vector<1x16xf32> to vector<96x16xf32>
    %259 = arith.addf %255, %258 : vector<96x16xf32>
    %260 = vector.shape_cast %259 : vector<96x16xf32> to vector<4x24x16xf32>
    %261 = arith.truncf %244 : vector<4x24x16xf32> to vector<4x24x16xbf16>
    %262 = arith.truncf %252 : vector<4x24x16xf32> to vector<4x24x16xbf16>
    "tpu.trace_start"() <{level = 10 : i32, message = "iqd,ikd->iqk"}> : () -> ()
    %cst_140 = arith.constant dense<0.000000e+00> : vector<4x24x24xf32>
    %263 = tpu.matmul %261, %262, %cst_140 {dimension_numbers = #tpu.dot_dimension_numbers<[2], [2], [1], [1], [0, 0, 0, 1, 1, 1], [0], [0]>} : vector<4x24x16xbf16>, vector<4x24x16xbf16>, vector<4x24x24xf32> -> vector<4x24x24xf32>
    "tpu.trace_stop"() : () -> ()
    %cst_141 = arith.constant 2.500000e-01 : f32
    %264 = vector.broadcast %cst_141 : f32 to vector<4x24x24xf32>
    %265 = arith.mulf %263, %264 : vector<4x24x24xf32>
    %266 = vector.broadcast %19 : vector<1x1x24xf32> to vector<4x24x24xf32>
    %267 = arith.addf %265, %266 : vector<4x24x24xf32>
    %cst_142 = arith.constant dense<0xFF800000> : vector<4x24xf32>
    %268 = vector.multi_reduction <maximumf>, %267, %cst_142 [2] : vector<4x24x24xf32> to vector<4x24xf32>
    %269 = vector.shape_cast %268 : vector<4x24xf32> to vector<4x24x1xf32>
    %270 = vector.broadcast %269 : vector<4x24x1xf32> to vector<4x24x24xf32>
    %271 = arith.subf %267, %270 : vector<4x24x24xf32>
    %272 = math.exp %271 : vector<4x24x24xf32>
    %cst_143 = arith.constant dense<0.000000e+00> : vector<4x24xf32>
    %273 = vector.multi_reduction <add>, %272, %cst_143 [2] : vector<4x24x24xf32> to vector<4x24xf32>
    %274 = vector.shape_cast %273 : vector<4x24xf32> to vector<4x24x1xf32>
    %275 = tpu.reciprocal %274 {approx = true} : vector<4x24x1xf32> -> vector<4x24x1xf32>
    %276 = vector.broadcast %275 : vector<4x24x1xf32> to vector<4x24x24xf32>
    %277 = arith.mulf %272, %276 : vector<4x24x24xf32>
    %278 = arith.truncf %277 : vector<4x24x24xf32> to vector<4x24x24xbf16>
    %279 = arith.truncf %260 : vector<4x24x16xf32> to vector<4x24x16xbf16>
    "tpu.trace_start"() <{level = 10 : i32, message = "iqk,ikd->iqd"}> : () -> ()
    %cst_144 = arith.constant dense<0.000000e+00> : vector<4x24x16xf32>
    %280 = tpu.matmul %278, %279, %cst_144 {dimension_numbers = #tpu.dot_dimension_numbers<[2], [1], [1], [2], [0, 0, 0, 1, 1, 2], [0], [0]>} : vector<4x24x24xbf16>, vector<4x24x16xbf16>, vector<4x24x16xf32> -> vector<4x24x16xf32>
    "tpu.trace_stop"() : () -> ()
    %281 = vector.shape_cast %280 : vector<4x24x16xf32> to vector<96x16xf32>
    %282 = arith.truncf %281 : vector<96x16xf32> to vector<96x16xbf16>
    %c2_145 = arith.constant 2 : index
    %c0_146 = arith.constant 0 : index
    %c0_147 = arith.constant 0 : index
    %283 = vector.load %arg8[%c2_145, %c0_146, %c0_147] : memref<4x16x32xbf16, #tpu.memory_space<vmem>>, vector<1x16x32xbf16>
    %284 = vector.shape_cast %283 : vector<1x16x32xbf16> to vector<16x32xbf16>
    %cst_148 = arith.constant dense<0.000000e+00> : vector<96x32xf32>
    %285 = tpu.matmul %282, %284, %cst_148 {dimension_numbers = #tpu.dot_dimension_numbers<[1], [0], [0], [1], [0, 0, 1, 1], [], []>} : vector<96x16xbf16>, vector<16x32xbf16>, vector<96x32xf32> -> vector<96x32xf32>
    %286 = arith.addf %236, %285 : vector<96x32xf32>
    %c7 = arith.constant 7 : index
    %c0_149 = arith.constant 0 : index
    %c0_150 = arith.constant 0 : index
    %287 = vector.load %arg6[%c7, %c0_149, %c0_150] : memref<12x32x16xbf16, #tpu.memory_space<vmem>>, vector<1x32x16xbf16>
    %288 = vector.shape_cast %287 : vector<1x32x16xbf16> to vector<32x16xbf16>
    %cst_151 = arith.constant dense<0.000000e+00> : vector<96x16xf32>
    %289 = tpu.matmul %235, %288, %cst_151 {dimension_numbers = #tpu.dot_dimension_numbers<[1], [0], [0], [1], [0, 0, 1, 1], [], []>} : vector<96x32xbf16>, vector<32x16xbf16>, vector<96x16xf32> -> vector<96x16xf32>
    %c7_152 = arith.constant 7 : index
    %c0_153 = arith.constant 0 : index
    %c0_154 = arith.constant 0 : index
    %290 = vector.load %arg7[%c7_152, %c0_153, %c0_154] : memref<12x1x16xf32, #tpu.memory_space<vmem>>, vector<1x1x16xf32>
    %291 = vector.shape_cast %290 : vector<1x1x16xf32> to vector<1x16xf32>
    %292 = vector.broadcast %291 : vector<1x16xf32> to vector<96x16xf32>
    %293 = arith.addf %289, %292 : vector<96x16xf32>
    %294 = vector.shape_cast %293 : vector<96x16xf32> to vector<4x24x16xf32>
    %c9 = arith.constant 9 : index
    %c0_155 = arith.constant 0 : index
    %c0_156 = arith.constant 0 : index
    %295 = vector.load %arg6[%c9, %c0_155, %c0_156] : memref<12x32x16xbf16, #tpu.memory_space<vmem>>, vector<1x32x16xbf16>
    %296 = vector.shape_cast %295 : vector<1x32x16xbf16> to vector<32x16xbf16>
    %cst_157 = arith.constant dense<0.000000e+00> : vector<96x16xf32>
    %297 = tpu.matmul %235, %296, %cst_157 {dimension_numbers = #tpu.dot_dimension_numbers<[1], [0], [0], [1], [0, 0, 1, 1], [], []>} : vector<96x32xbf16>, vector<32x16xbf16>, vector<96x16xf32> -> vector<96x16xf32>
    %c9_158 = arith.constant 9 : index
    %c0_159 = arith.constant 0 : index
    %c0_160 = arith.constant 0 : index
    %298 = vector.load %arg7[%c9_158, %c0_159, %c0_160] : memref<12x1x16xf32, #tpu.memory_space<vmem>>, vector<1x1x16xf32>
    %299 = vector.shape_cast %298 : vector<1x1x16xf32> to vector<1x16xf32>
    %300 = vector.broadcast %299 : vector<1x16xf32> to vector<96x16xf32>
    %301 = arith.addf %297, %300 : vector<96x16xf32>
    %302 = vector.shape_cast %301 : vector<96x16xf32> to vector<4x24x16xf32>
    %c11 = arith.constant 11 : index
    %c0_161 = arith.constant 0 : index
    %c0_162 = arith.constant 0 : index
    %303 = vector.load %arg6[%c11, %c0_161, %c0_162] : memref<12x32x16xbf16, #tpu.memory_space<vmem>>, vector<1x32x16xbf16>
    %304 = vector.shape_cast %303 : vector<1x32x16xbf16> to vector<32x16xbf16>
    %cst_163 = arith.constant dense<0.000000e+00> : vector<96x16xf32>
    %305 = tpu.matmul %235, %304, %cst_163 {dimension_numbers = #tpu.dot_dimension_numbers<[1], [0], [0], [1], [0, 0, 1, 1], [], []>} : vector<96x32xbf16>, vector<32x16xbf16>, vector<96x16xf32> -> vector<96x16xf32>
    %c11_164 = arith.constant 11 : index
    %c0_165 = arith.constant 0 : index
    %c0_166 = arith.constant 0 : index
    %306 = vector.load %arg7[%c11_164, %c0_165, %c0_166] : memref<12x1x16xf32, #tpu.memory_space<vmem>>, vector<1x1x16xf32>
    %307 = vector.shape_cast %306 : vector<1x1x16xf32> to vector<1x16xf32>
    %308 = vector.broadcast %307 : vector<1x16xf32> to vector<96x16xf32>
    %309 = arith.addf %305, %308 : vector<96x16xf32>
    %310 = vector.shape_cast %309 : vector<96x16xf32> to vector<4x24x16xf32>
    %311 = arith.truncf %294 : vector<4x24x16xf32> to vector<4x24x16xbf16>
    %312 = arith.truncf %302 : vector<4x24x16xf32> to vector<4x24x16xbf16>
    "tpu.trace_start"() <{level = 10 : i32, message = "iqd,ikd->iqk"}> : () -> ()
    %cst_167 = arith.constant dense<0.000000e+00> : vector<4x24x24xf32>
    %313 = tpu.matmul %311, %312, %cst_167 {dimension_numbers = #tpu.dot_dimension_numbers<[2], [2], [1], [1], [0, 0, 0, 1, 1, 1], [0], [0]>} : vector<4x24x16xbf16>, vector<4x24x16xbf16>, vector<4x24x24xf32> -> vector<4x24x24xf32>
    "tpu.trace_stop"() : () -> ()
    %cst_168 = arith.constant 2.500000e-01 : f32
    %314 = vector.broadcast %cst_168 : f32 to vector<4x24x24xf32>
    %315 = arith.mulf %313, %314 : vector<4x24x24xf32>
    %316 = vector.broadcast %19 : vector<1x1x24xf32> to vector<4x24x24xf32>
    %317 = arith.addf %315, %316 : vector<4x24x24xf32>
    %cst_169 = arith.constant dense<0xFF800000> : vector<4x24xf32>
    %318 = vector.multi_reduction <maximumf>, %317, %cst_169 [2] : vector<4x24x24xf32> to vector<4x24xf32>
    %319 = vector.shape_cast %318 : vector<4x24xf32> to vector<4x24x1xf32>
    %320 = vector.broadcast %319 : vector<4x24x1xf32> to vector<4x24x24xf32>
    %321 = arith.subf %317, %320 : vector<4x24x24xf32>
    %322 = math.exp %321 : vector<4x24x24xf32>
    %cst_170 = arith.constant dense<0.000000e+00> : vector<4x24xf32>
    %323 = vector.multi_reduction <add>, %322, %cst_170 [2] : vector<4x24x24xf32> to vector<4x24xf32>
    %324 = vector.shape_cast %323 : vector<4x24xf32> to vector<4x24x1xf32>
    %325 = tpu.reciprocal %324 {approx = true} : vector<4x24x1xf32> -> vector<4x24x1xf32>
    %326 = vector.broadcast %325 : vector<4x24x1xf32> to vector<4x24x24xf32>
    %327 = arith.mulf %322, %326 : vector<4x24x24xf32>
    %328 = arith.truncf %327 : vector<4x24x24xf32> to vector<4x24x24xbf16>
    %329 = arith.truncf %310 : vector<4x24x16xf32> to vector<4x24x16xbf16>
    "tpu.trace_start"() <{level = 10 : i32, message = "iqk,ikd->iqd"}> : () -> ()
    %cst_171 = arith.constant dense<0.000000e+00> : vector<4x24x16xf32>
    %330 = tpu.matmul %328, %329, %cst_171 {dimension_numbers = #tpu.dot_dimension_numbers<[2], [1], [1], [2], [0, 0, 0, 1, 1, 2], [0], [0]>} : vector<4x24x24xbf16>, vector<4x24x16xbf16>, vector<4x24x16xf32> -> vector<4x24x16xf32>
    "tpu.trace_stop"() : () -> ()
    %331 = vector.shape_cast %330 : vector<4x24x16xf32> to vector<96x16xf32>
    %332 = arith.truncf %331 : vector<96x16xf32> to vector<96x16xbf16>
    %c3_172 = arith.constant 3 : index
    %c0_173 = arith.constant 0 : index
    %c0_174 = arith.constant 0 : index
    %333 = vector.load %arg8[%c3_172, %c0_173, %c0_174] : memref<4x16x32xbf16, #tpu.memory_space<vmem>>, vector<1x16x32xbf16>
    %334 = vector.shape_cast %333 : vector<1x16x32xbf16> to vector<16x32xbf16>
    %cst_175 = arith.constant dense<0.000000e+00> : vector<96x32xf32>
    %335 = tpu.matmul %332, %334, %cst_175 {dimension_numbers = #tpu.dot_dimension_numbers<[1], [0], [0], [1], [0, 0, 1, 1], [], []>} : vector<96x16xbf16>, vector<16x32xbf16>, vector<96x32xf32> -> vector<96x32xf32>
    %336 = arith.addf %286, %335 : vector<96x32xf32>
    %337 = arith.addf %208, %336 : vector<96x32xf32>
    %c1_176 = arith.constant 1 : index
    %c0_177 = arith.constant 0 : index
    %c0_178 = arith.constant 0 : index
    %338 = vector.load %arg9[%c1_176, %c0_177, %c0_178] : memref<2x1x32xf32, #tpu.memory_space<vmem>>, vector<1x1x32xf32>
    %339 = vector.shape_cast %338 : vector<1x1x32xf32> to vector<1x32xf32>
    %340 = vector.broadcast %339 : vector<1x32xf32> to vector<96x32xf32>
    %341 = arith.addf %337, %340 : vector<96x32xf32>
    %c1_179 = arith.constant 1 : index
    %c0_180 = arith.constant 0 : index
    %c0_181 = arith.constant 0 : index
    %342 = vector.load %arg10[%c1_179, %c0_180, %c0_181] : memref<2x1x32xf32, #tpu.memory_space<vmem>>, vector<1x1x32xf32>
    %343 = vector.shape_cast %342 : vector<1x1x32xf32> to vector<1x32xf32>
    %c1_182 = arith.constant 1 : index
    %c0_183 = arith.constant 0 : index
    %c0_184 = arith.constant 0 : index
    %344 = vector.load %arg11[%c1_182, %c0_183, %c0_184] : memref<2x1x32xf32, #tpu.memory_space<vmem>>, vector<1x1x32xf32>
    %345 = vector.shape_cast %344 : vector<1x1x32xf32> to vector<1x32xf32>
    %cst_185 = arith.constant dense<0.000000e+00> : vector<96xf32>
    %346 = vector.multi_reduction <add>, %341, %cst_185 [1] : vector<96x32xf32> to vector<96xf32>
    %347 = vector.shape_cast %346 : vector<96xf32> to vector<96x1xf32>
    %cst_186 = arith.constant 3.200000e+01 : f32
    %348 = vector.broadcast %cst_186 : f32 to vector<96x1xf32>
    %349 = arith.divf %347, %348 : vector<96x1xf32>
    %350 = vector.broadcast %349 : vector<96x1xf32> to vector<96x32xf32>
    %351 = arith.subf %341, %350 : vector<96x32xf32>
    %352 = arith.mulf %351, %351 : vector<96x32xf32>
    %cst_187 = arith.constant dense<0.000000e+00> : vector<96xf32>
    %353 = vector.multi_reduction <add>, %352, %cst_187 [1] : vector<96x32xf32> to vector<96xf32>
    %354 = vector.shape_cast %353 : vector<96xf32> to vector<96x1xf32>
    %cst_188 = arith.constant 3.200000e+01 : f32
    %355 = vector.broadcast %cst_188 : f32 to vector<96x1xf32>
    %356 = arith.divf %354, %355 : vector<96x1xf32>
    %357 = vector.broadcast %349 : vector<96x1xf32> to vector<96x32xf32>
    %358 = arith.subf %341, %357 : vector<96x32xf32>
    %cst_189 = arith.constant 9.99999996E-13 : f32
    %359 = vector.broadcast %cst_189 : f32 to vector<96x1xf32>
    %360 = arith.addf %356, %359 : vector<96x1xf32>
    %361 = math.rsqrt %360 : vector<96x1xf32>
    %362 = vector.broadcast %361 : vector<96x1xf32> to vector<96x32xf32>
    %363 = arith.mulf %358, %362 : vector<96x32xf32>
    %364 = vector.broadcast %343 : vector<1x32xf32> to vector<96x32xf32>
    %365 = arith.mulf %363, %364 : vector<96x32xf32>
    %366 = vector.broadcast %345 : vector<1x32xf32> to vector<96x32xf32>
    %367 = arith.addf %365, %366 : vector<96x32xf32>
    %368 = arith.truncf %367 : vector<96x32xf32> to vector<96x32xbf16>
    %c1_190 = arith.constant 1 : index
    %c0_191 = arith.constant 0 : index
    %c0_192 = arith.constant 0 : index
    %369 = vector.load %arg12[%c1_190, %c0_191, %c0_192] : memref<2x32x64xbf16, #tpu.memory_space<vmem>>, vector<1x32x64xbf16>
    %370 = vector.shape_cast %369 : vector<1x32x64xbf16> to vector<32x64xbf16>
    %cst_193 = arith.constant dense<0.000000e+00> : vector<96x64xf32>
    %371 = tpu.matmul %368, %370, %cst_193 {dimension_numbers = #tpu.dot_dimension_numbers<[1], [0], [0], [1], [0, 0, 1, 1], [], []>} : vector<96x32xbf16>, vector<32x64xbf16>, vector<96x64xf32> -> vector<96x64xf32>
    %c1_194 = arith.constant 1 : index
    %c0_195 = arith.constant 0 : index
    %c0_196 = arith.constant 0 : index
    %372 = vector.load %arg13[%c1_194, %c0_195, %c0_196] : memref<2x1x64xf32, #tpu.memory_space<vmem>>, vector<1x1x64xf32>
    %373 = vector.shape_cast %372 : vector<1x1x64xf32> to vector<1x64xf32>
    %374 = vector.broadcast %373 : vector<1x64xf32> to vector<96x64xf32>
    %375 = arith.addf %371, %374 : vector<96x64xf32>
    %376 = arith.mulf %375, %375 : vector<96x64xf32>
    %377 = arith.mulf %375, %376 : vector<96x64xf32>
    %cst_197 = arith.constant 4.471500e-02 : f32
    %378 = vector.broadcast %cst_197 : f32 to vector<96x64xf32>
    %379 = arith.mulf %378, %377 : vector<96x64xf32>
    %380 = arith.addf %375, %379 : vector<96x64xf32>
    %cst_198 = arith.constant 0.797884583 : f32
    %381 = vector.broadcast %cst_198 : f32 to vector<96x64xf32>
    %382 = arith.mulf %381, %380 : vector<96x64xf32>
    %383 = math.tanh %382 : vector<96x64xf32>
    %cst_199 = arith.constant 1.000000e+00 : f32
    %384 = vector.broadcast %cst_199 : f32 to vector<96x64xf32>
    %385 = arith.addf %384, %383 : vector<96x64xf32>
    %cst_200 = arith.constant 5.000000e-01 : f32
    %386 = vector.broadcast %cst_200 : f32 to vector<96x64xf32>
    %387 = arith.mulf %386, %385 : vector<96x64xf32>
    %388 = arith.mulf %375, %387 : vector<96x64xf32>
    %389 = arith.truncf %388 : vector<96x64xf32> to vector<96x64xbf16>
    %c1_201 = arith.constant 1 : index
    %c0_202 = arith.constant 0 : index
    %c0_203 = arith.constant 0 : index
    %390 = vector.load %arg14[%c1_201, %c0_202, %c0_203] : memref<2x64x32xbf16, #tpu.memory_space<vmem>>, vector<1x64x32xbf16>
    %391 = vector.shape_cast %390 : vector<1x64x32xbf16> to vector<64x32xbf16>
    %cst_204 = arith.constant dense<0.000000e+00> : vector<96x32xf32>
    %392 = tpu.matmul %389, %391, %cst_204 {dimension_numbers = #tpu.dot_dimension_numbers<[1], [0], [0], [1], [0, 0, 1, 1], [], []>} : vector<96x64xbf16>, vector<64x32xbf16>, vector<96x32xf32> -> vector<96x32xf32>
    %393 = arith.addf %341, %392 : vector<96x32xf32>
    %c1_205 = arith.constant 1 : index
    %c0_206 = arith.constant 0 : index
    %c0_207 = arith.constant 0 : index
    %394 = vector.load %arg15[%c1_205, %c0_206, %c0_207] : memref<2x1x32xf32, #tpu.memory_space<vmem>>, vector<1x1x32xf32>
    %395 = vector.shape_cast %394 : vector<1x1x32xf32> to vector<1x32xf32>
    %396 = vector.broadcast %395 : vector<1x32xf32> to vector<96x32xf32>
    %397 = arith.addf %393, %396 : vector<96x32xf32>
    %398 = vector.shape_cast %397 : vector<96x32xf32> to vector<4x24x32xf32>
    %399 = vector.extract_strided_slice %398 {offsets = [0, 16, 0], sizes = [4, 1, 32], strides = [1, 1, 1]} : vector<4x24x32xf32> to vector<4x1x32xf32>
    %400 = vector.shape_cast %399 : vector<4x1x32xf32> to vector<4x32xf32>
    %c0_208 = arith.constant 0 : index
    %c0_209 = arith.constant 0 : index
    %401 = vector.load %arg16[%c0_208, %c0_209] : memref<1x32xf32, #tpu.memory_space<vmem>>, vector<1x32xf32>
    %c0_210 = arith.constant 0 : index
    %c0_211 = arith.constant 0 : index
    %402 = vector.load %arg17[%c0_210, %c0_211] : memref<1x32xf32, #tpu.memory_space<vmem>>, vector<1x32xf32>
    %cst_212 = arith.constant dense<0.000000e+00> : vector<4xf32>
    %403 = vector.multi_reduction <add>, %400, %cst_212 [1] : vector<4x32xf32> to vector<4xf32>
    %404 = vector.shape_cast %403 : vector<4xf32> to vector<4x1xf32>
    %cst_213 = arith.constant 3.200000e+01 : f32
    %405 = vector.broadcast %cst_213 : f32 to vector<4x1xf32>
    %406 = arith.divf %404, %405 : vector<4x1xf32>
    %407 = vector.broadcast %406 : vector<4x1xf32> to vector<4x32xf32>
    %408 = arith.subf %400, %407 : vector<4x32xf32>
    %409 = arith.mulf %408, %408 : vector<4x32xf32>
    %cst_214 = arith.constant dense<0.000000e+00> : vector<4xf32>
    %410 = vector.multi_reduction <add>, %409, %cst_214 [1] : vector<4x32xf32> to vector<4xf32>
    %411 = vector.shape_cast %410 : vector<4xf32> to vector<4x1xf32>
    %cst_215 = arith.constant 3.200000e+01 : f32
    %412 = vector.broadcast %cst_215 : f32 to vector<4x1xf32>
    %413 = arith.divf %411, %412 : vector<4x1xf32>
    %414 = vector.broadcast %406 : vector<4x1xf32> to vector<4x32xf32>
    %415 = arith.subf %400, %414 : vector<4x32xf32>
    %cst_216 = arith.constant 9.99999996E-13 : f32
    %416 = vector.broadcast %cst_216 : f32 to vector<4x1xf32>
    %417 = arith.addf %413, %416 : vector<4x1xf32>
    %418 = math.rsqrt %417 : vector<4x1xf32>
    %419 = vector.broadcast %418 : vector<4x1xf32> to vector<4x32xf32>
    %420 = arith.mulf %415, %419 : vector<4x32xf32>
    %421 = vector.broadcast %401 : vector<1x32xf32> to vector<4x32xf32>
    %422 = arith.mulf %420, %421 : vector<4x32xf32>
    %423 = vector.broadcast %402 : vector<1x32xf32> to vector<4x32xf32>
    %424 = arith.addf %422, %423 : vector<4x32xf32>
    %425 = arith.truncf %424 : vector<4x32xf32> to vector<4x32xbf16>
    %c0_217 = arith.constant 0 : index
    %c0_218 = arith.constant 0 : index
    %426 = vector.load %arg18[%c0_217, %c0_218] : memref<32x32xbf16, #tpu.memory_space<vmem>>, vector<32x32xbf16>
    %cst_219 = arith.constant dense<0.000000e+00> : vector<4x32xf32>
    %427 = tpu.matmul %425, %426, %cst_219 {dimension_numbers = #tpu.dot_dimension_numbers<[1], [0], [0], [1], [0, 0, 1, 1], [], []>} : vector<4x32xbf16>, vector<32x32xbf16>, vector<4x32xf32> -> vector<4x32xf32>
    %c0_220 = arith.constant 0 : index
    %c0_221 = arith.constant 0 : index
    %428 = vector.load %arg19[%c0_220, %c0_221] : memref<1x32xf32, #tpu.memory_space<vmem>>, vector<1x32xf32>
    %429 = vector.broadcast %428 : vector<1x32xf32> to vector<4x32xf32>
    %430 = arith.addf %427, %429 : vector<4x32xf32>
    %431 = math.tanh %430 : vector<4x32xf32>
    %432 = arith.truncf %431 : vector<4x32xf32> to vector<4x32xbf16>
    %c0_222 = arith.constant 0 : index
    %c0_223 = arith.constant 0 : index
    %433 = vector.load %arg20[%c0_222, %c0_223] : memref<32x1024xbf16, #tpu.memory_space<vmem>>, vector<32x1024xbf16>
    %cst_224 = arith.constant dense<0.000000e+00> : vector<4x1024xf32>
    %434 = tpu.matmul %432, %433, %cst_224 {dimension_numbers = #tpu.dot_dimension_numbers<[1], [0], [0], [1], [0, 0, 1, 1], [], []>} : vector<4x32xbf16>, vector<32x1024xbf16>, vector<4x1024xf32> -> vector<4x1024xf32>
    %c0_225 = arith.constant 0 : index
    %c0_226 = arith.constant 0 : index
    %435 = vector.load %arg21[%c0_225, %c0_226] : memref<1x1024xf32, #tpu.memory_space<vmem>>, vector<1x1024xf32>
    %436 = vector.broadcast %435 : vector<1x1024xf32> to vector<4x1024xf32>
    %437 = arith.addf %434, %436 : vector<4x1024xf32>
    %cst_227 = arith.constant 0.000000e+00 : f32
    %438 = vector.broadcast %cst_227 : f32 to vector<4x1024xf32>
    %439 = arith.maximumf %437, %438 : vector<4x1024xf32>
    %440 = arith.truncf %439 : vector<4x1024xf32> to vector<4x1024xbf16>
    %c0_228 = arith.constant 0 : index
    %c0_229 = arith.constant 0 : index
    %441 = vector.load %arg22[%c0_228, %c0_229] : memref<1024x512xbf16, #tpu.memory_space<vmem>>, vector<1024x512xbf16>
    %cst_230 = arith.constant dense<0.000000e+00> : vector<4x512xf32>
    %442 = tpu.matmul %440, %441, %cst_230 {dimension_numbers = #tpu.dot_dimension_numbers<[1], [0], [0], [1], [0, 0, 1, 1], [], []>} : vector<4x1024xbf16>, vector<1024x512xbf16>, vector<4x512xf32> -> vector<4x512xf32>
    %c0_231 = arith.constant 0 : index
    %c0_232 = arith.constant 0 : index
    %443 = vector.load %arg23[%c0_231, %c0_232] : memref<1x512xf32, #tpu.memory_space<vmem>>, vector<1x512xf32>
    %444 = vector.broadcast %443 : vector<1x512xf32> to vector<4x512xf32>
    %445 = arith.addf %442, %444 : vector<4x512xf32>
    %446 = vector.extract_strided_slice %445 {offsets = [0, 0], sizes = [2, 512], strides = [1, 1]} : vector<4x512xf32> to vector<2x512xf32>
    %447 = arith.truncf %446 : vector<2x512xf32> to vector<2x512xbf16>
    %448 = vector.extract_strided_slice %445 {offsets = [2, 0], sizes = [2, 512], strides = [1, 1]} : vector<4x512xf32> to vector<2x512xf32>
    %449 = arith.truncf %448 : vector<2x512xf32> to vector<2x512xbf16>
    %c0_233 = arith.constant 0 : index
    %c0_234 = arith.constant 0 : index
    %450 = vector.load %arg24[%c0_233, %c0_234] : memref<512x512xbf16, #tpu.memory_space<vmem>>, vector<512x512xbf16>
    %cst_235 = arith.constant dense<0.000000e+00> : vector<2x512xf32>
    %451 = tpu.matmul %447, %450, %cst_235 {dimension_numbers = #tpu.dot_dimension_numbers<[1], [0], [0], [1], [0, 0, 1, 1], [], []>} : vector<2x512xbf16>, vector<512x512xbf16>, vector<2x512xf32> -> vector<2x512xf32>
    %c0_236 = arith.constant 0 : index
    %c0_237 = arith.constant 0 : index
    %452 = vector.load %arg25[%c0_236, %c0_237] : memref<512x512xbf16, #tpu.memory_space<vmem>>, vector<512x512xbf16>
    %cst_238 = arith.constant dense<0.000000e+00> : vector<2x512xf32>
    %453 = tpu.matmul %449, %452, %cst_238 {dimension_numbers = #tpu.dot_dimension_numbers<[1], [0], [0], [1], [0, 0, 1, 1], [], []>} : vector<2x512xbf16>, vector<512x512xbf16>, vector<2x512xf32> -> vector<2x512xf32>
    %454 = arith.addf %451, %453 : vector<2x512xf32>
    %c0_239 = arith.constant 0 : index
    %c0_240 = arith.constant 0 : index
    %455 = vector.load %arg26[%c0_239, %c0_240] : memref<1x512xf32, #tpu.memory_space<vmem>>, vector<1x512xf32>
    %456 = vector.broadcast %455 : vector<1x512xf32> to vector<2x512xf32>
    %457 = arith.addf %454, %456 : vector<2x512xf32>
    %cst_241 = arith.constant 0.000000e+00 : f32
    %458 = vector.broadcast %cst_241 : f32 to vector<2x512xf32>
    %459 = arith.maximumf %457, %458 : vector<2x512xf32>
    %460 = arith.truncf %459 : vector<2x512xf32> to vector<2x512xbf16>
    %c0_242 = arith.constant 0 : index
    %c0_243 = arith.constant 0 : index
    %461 = vector.load %arg27[%c0_242, %c0_243] : memref<512x128xbf16, #tpu.memory_space<vmem>>, vector<512x128xbf16>
    %cst_244 = arith.constant dense<0.000000e+00> : vector<2x128xf32>
    %462 = tpu.matmul %460, %461, %cst_244 {dimension_numbers = #tpu.dot_dimension_numbers<[1], [0], [0], [1], [0, 0, 1, 1], [], []>} : vector<2x512xbf16>, vector<512x128xbf16>, vector<2x128xf32> -> vector<2x128xf32>
    %c0_245 = arith.constant 0 : index
    %c0_246 = arith.constant 0 : index
    %463 = vector.load %arg28[%c0_245, %c0_246] : memref<1x128xf32, #tpu.memory_space<vmem>>, vector<1x128xf32>
    %464 = vector.broadcast %463 : vector<1x128xf32> to vector<2x128xf32>
    %465 = arith.addf %462, %464 : vector<2x128xf32>
    %466 = vector.extract_strided_slice %465 {offsets = [0, 0], sizes = [2, 8], strides = [1, 1]} : vector<2x128xf32> to vector<2x8xf32>
    %c0_247 = arith.constant 0 : index
    %c0_248 = arith.constant 0 : index
    %467 = vector.load %arg29[%c0_247, %c0_248] : memref<2x8xf32, #tpu.memory_space<vmem>>, vector<2x8xf32>
    tpu.vector_store %arg29[%c0_247, %c0_248], %466 {strides = array<i32>} : memref<2x8xf32, #tpu.memory_space<vmem>>, vector<2x8xf32>,
    return
  }
}

</mosaic_0001>

<llo_original>
// kernel: context_prediction_vit_forward.1
$region0: #{context_prediction_vit_forward.1}
  #allocation0 [shape = 'u32[]', space=smem, size = 0x4, offset = 0x4, fixed_abs, tag = 'smem constant byte address 0x4 - core index']
  #allocation1 [shape = 'u32[144,128]{1,0:T(1,128)}', space=vmem, size = 0x12000, scoped, tag = 'internal scratch']
  %s0 = inlined_call_operand.smem [shape: u32[30], index: -1, kind: input, shape index: {}]
  %s1 = sld [smem:[%s0]]
  %s2 = scalar_lea.smem %s0, 1
  %s3 = sld [smem:[%s2]]
  %s4 = scalar_lea.smem %s0, 2
  %s5 = sld [smem:[%s4]]
  %s6 = scalar_lea.smem %s0, 3
  %s7 = sld [smem:[%s6]]
  %s8 = scalar_lea.smem %s0, 4
  %s9 = sld [smem:[%s8]]
  %s10 = scalar_lea.smem %s0, 5
  %s11 = sld [smem:[%s10]]
  %s12 = scalar_lea.smem %s0, 6
  %s13 = sld [smem:[%s12]]
  %s14 = scalar_lea.smem %s0, 7
  %s15 = sld [smem:[%s14]]
  %s16 = scalar_lea.smem %s0, 8
  %s17 = sld [smem:[%s16]]
  %s18 = scalar_lea.smem %s0, 9
  %s19 = sld [smem:[%s18]]
  %s20 = scalar_lea.smem %s0, 10
  %s21 = sld [smem:[%s20]]
  %s22 = scalar_lea.smem %s0, 11
  %s23 = sld [smem:[%s22]]
  %s24 = scalar_lea.smem %s0, 12
  %s25 = sld [smem:[%s24]]
  %s26 = scalar_lea.smem %s0, 13
  %s27 = sld [smem:[%s26]]
  %s28 = scalar_lea.smem %s0, 14
  %s29 = sld [smem:[%s28]]
  %s30 = scalar_lea.smem %s0, 15
  %s31 = sld [smem:[%s30]]
  %s32 = scalar_lea.smem %s0, 16
  %s33 = sld [smem:[%s32]]
  %s34 = scalar_lea.smem %s0, 17
  %s35 = sld [smem:[%s34]]
  %s36 = scalar_lea.smem %s0, 18
  %s37 = sld [smem:[%s36]]
  %s38 = scalar_lea.smem %s0, 19
  %s39 = sld [smem:[%s38]]
  %s40 = scalar_lea.smem %s0, 20
  %s41 = sld [smem:[%s40]]
  %s42 = scalar_lea.smem %s0, 21
  %s43 = sld [smem:[%s42]]
  %s44 = scalar_lea.smem %s0, 22
  %s45 = sld [smem:[%s44]]
  %s46 = scalar_lea.smem %s0, 23
  %s47 = sld [smem:[%s46]]
  %s48 = scalar_lea.smem %s0, 24
  %s49 = sld [smem:[%s48]]
  %s50 = scalar_lea.smem %s0, 25
  %s51 = sld [smem:[%s50]]
  %s52 = scalar_lea.smem %s0, 26
  %s53 = sld [smem:[%s52]]
  %s54 = scalar_lea.smem %s0, 27
  %s55 = sld [smem:[%s54]]
  %s56 = scalar_lea.smem %s0, 28
  %s57 = sld [smem:[%s56]]
  %s58 = scalar_lea.smem %s0, 29
  %s59 = sld [smem:[%s58]]
  %s60 = sld [smem:[#allocation0]]
  $region126: #{context_prediction_vit_forward.1} parent=0
    _
  %s62 = ssub.s32 1, %s60
  %s63 = scalar_select 0, %s62, %s60
  $region1: #{context_prediction_vit_forward.1} parent=0
    #allocation2 [shape = 'u8[1024]{0}', space=vmem, size = 0x400, scoped, tag = 'output window, operand 0, single buffered']
    #allocation3 [shape = 's32[1]{0}', space=sflag, size = 0x4, scoped, tag = 'scoped memory for context_prediction_vit_forward.1']
    %64 = vsyncpa [#allocation3], 0
    // Predicated region
    $region2: #{context_prediction_vit_forward.1} parent=1 // pred_check
      _
    $region3: #{context_prediction_vit_forward.1} parent=1 // pred_check_branch
      %66 = sbr.rel (0) target = $region5
    $region4: #{context_prediction_vit_forward.1} parent=1 // pred_region
      _
    $region5: #{context_prediction_vit_forward.1} parent=1 // pred_fallthru
      _
    // Predicated region
    $region6: #{context_prediction_vit_forward.1} parent=1 // pred_check
      _
    $region7: #{context_prediction_vit_forward.1} parent=1 // pred_check_branch
      %68 = sbr.rel (0) target = $region9
    $region8: #{context_prediction_vit_forward.1} parent=1 // pred_region
      _
    $region9: #{context_prediction_vit_forward.1} parent=1 // pred_fallthru
      _
    // Predicated region
    $region10: #{context_prediction_vit_forward.1} parent=1 // pred_check
      _
    $region11: #{context_prediction_vit_forward.1} parent=1 // pred_check_branch
      %70 = sbr.rel (0) target = $region13
    $region12: #{context_prediction_vit_forward.1} parent=1 // pred_region
      _
    $region13: #{context_prediction_vit_forward.1} parent=1 // pred_fallthru
      _
    // Predicated region
    $region14: #{context_prediction_vit_forward.1} parent=1 // pred_check
      _
    $region15: #{context_prediction_vit_forward.1} parent=1 // pred_check_branch
      %72 = sbr.rel (0) target = $region17
    $region16: #{context_prediction_vit_forward.1} parent=1 // pred_region
      _
    $region17: #{context_prediction_vit_forward.1} parent=1 // pred_fallthru
      _
    // Predicated region
    $region18: #{context_prediction_vit_forward.1} parent=1 // pred_check
      _
    $region19: #{context_prediction_vit_forward.1} parent=1 // pred_check_branch
      %74 = sbr.rel (0) target = $region21
    $region20: #{context_prediction_vit_forward.1} parent=1 // pred_region
      _
    $region21: #{context_prediction_vit_forward.1} parent=1 // pred_fallthru
      _
    // Predicated region
    $region22: #{context_prediction_vit_forward.1} parent=1 // pred_check
      _
    $region23: #{context_prediction_vit_forward.1} parent=1 // pred_check_branch
      %76 = sbr.rel (0) target = $region25
    $region24: #{context_prediction_vit_forward.1} parent=1 // pred_region
      _
    $region25: #{context_prediction_vit_forward.1} parent=1 // pred_fallthru
      _
    // Predicated region
    $region26: #{context_prediction_vit_forward.1} parent=1 // pred_check
      _
    $region27: #{context_prediction_vit_forward.1} parent=1 // pred_check_branch
      %78 = sbr.rel (0) target = $region29
    $region28: #{context_prediction_vit_forward.1} parent=1 // pred_region
      _
    $region29: #{context_prediction_vit_forward.1} parent=1 // pred_fallthru
      _
    // Predicated region
    $region30: #{context_prediction_vit_forward.1} parent=1 // pred_check
      _
    $region31: #{context_prediction_vit_forward.1} parent=1 // pred_check_branch
      %80 = sbr.rel (0) target = $region33
    $region32: #{context_prediction_vit_forward.1} parent=1 // pred_region
      _
    $region33: #{context_prediction_vit_forward.1} parent=1 // pred_fallthru
      _
    // Predicated region
    $region34: #{context_prediction_vit_forward.1} parent=1 // pred_check
      _
    $region35: #{context_prediction_vit_forward.1} parent=1 // pred_check_branch
      %82 = sbr.rel (0) target = $region37
    $region36: #{context_prediction_vit_forward.1} parent=1 // pred_region
      _
    $region37: #{context_prediction_vit_forward.1} parent=1 // pred_fallthru
      _
    // Predicated region
    $region38: #{context_prediction_vit_forward.1} parent=1 // pred_check
      _
    $region39: #{context_prediction_vit_forward.1} parent=1 // pred_check_branch
      %84 = sbr.rel (0) target = $region41
    $region40: #{context_prediction_vit_forward.1} parent=1 // pred_region
      _
    $region41: #{context_prediction_vit_forward.1} parent=1 // pred_fallthru
      _
    // Predicated region
    $region42: #{context_prediction_vit_forward.1} parent=1 // pred_check
      _
    $region43: #{context_prediction_vit_forward.1} parent=1 // pred_check_branch
      %86 = sbr.rel (0) target = $region45
    $region44: #{context_prediction_vit_forward.1} parent=1 // pred_region
      _
    $region45: #{context_prediction_vit_forward.1} parent=1 // pred_fallthru
      _
    // Predicated region
    $region46: #{context_prediction_vit_forward.1} parent=1 // pred_check
      _
    $region47: #{context_prediction_vit_forward.1} parent=1 // pred_check_branch
      %88 = sbr.rel (0) target = $region49
    $region48: #{context_prediction_vit_forward.1} parent=1 // pred_region
      _
    $region49: #{context_prediction_vit_forward.1} parent=1 // pred_fallthru
      _
    // Predicated region
    $region50: #{context_prediction_vit_forward.1} parent=1 // pred_check
      _
    $region51: #{context_prediction_vit_forward.1} parent=1 // pred_check_branch
      %90 = sbr.rel (0) target = $region53
    $region52: #{context_prediction_vit_forward.1} parent=1 // pred_region
      _
    $region53: #{context_prediction_vit_forward.1} parent=1 // pred_fallthru
      _
    // Predicated region
    $region54: #{context_prediction_vit_forward.1} parent=1 // pred_check
      _
    $region55: #{context_prediction_vit_forward.1} parent=1 // pred_check_branch
      %92 = sbr.rel (0) target = $region57
    $region56: #{context_prediction_vit_forward.1} parent=1 // pred_region
      _
    $region57: #{context_prediction_vit_forward.1} parent=1 // pred_fallthru
      _
    // Predicated region
    $region58: #{context_prediction_vit_forward.1} parent=1 // pred_check
      _
    $region59: #{context_prediction_vit_forward.1} parent=1 // pred_check_branch
      %94 = sbr.rel (0) target = $region61
    $region60: #{context_prediction_vit_forward.1} parent=1 // pred_region
      _
    $region61: #{context_prediction_vit_forward.1} parent=1 // pred_fallthru
      _
    // Predicated region
    $region62: #{context_prediction_vit_forward.1} parent=1 // pred_check
      _
    $region63: #{context_prediction_vit_forward.1} parent=1 // pred_check_branch
      %96 = sbr.rel (0) target = $region65
    $region64: #{context_prediction_vit_forward.1} parent=1 // pred_region
      _
    $region65: #{context_prediction_vit_forward.1} parent=1 // pred_fallthru
      _
    // Predicated region
    $region66: #{context_prediction_vit_forward.1} parent=1 // pred_check
      _
    $region67: #{context_prediction_vit_forward.1} parent=1 // pred_check_branch
      %98 = sbr.rel (0) target = $region69
    $region68: #{context_prediction_vit_forward.1} parent=1 // pred_region
      _
    $region69: #{context_prediction_vit_forward.1} parent=1 // pred_fallthru
      _
    // Predicated region
    $region70: #{context_prediction_vit_forward.1} parent=1 // pred_check
      _
    $region71: #{context_prediction_vit_forward.1} parent=1 // pred_check_branch
      %100 = sbr.rel (0) target = $region73
    $region72: #{context_prediction_vit_forward.1} parent=1 // pred_region
      _
    $region73: #{context_prediction_vit_forward.1} parent=1 // pred_fallthru
      _
    // Predicated region
    $region74: #{context_prediction_vit_forward.1} parent=1 // pred_check
      _
    $region75: #{context_prediction_vit_forward.1} parent=1 // pred_check_branch
      %102 = sbr.rel (0) target = $region77
    $region76: #{context_prediction_vit_forward.1} parent=1 // pred_region
      _
    $region77: #{context_prediction_vit_forward.1} parent=1 // pred_fallthru
      _
    // Predicated region
    $region78: #{context_prediction_vit_forward.1} parent=1 // pred_check
      _
    $region79: #{context_prediction_vit_forward.1} parent=1 // pred_check_branch
      %104 = sbr.rel (0) target = $region81
    $region80: #{context_prediction_vit_forward.1} parent=1 // pred_region
      _
    $region81: #{context_prediction_vit_forward.1} parent=1 // pred_fallthru
      _
    // Predicated region
    $region82: #{context_prediction_vit_forward.1} parent=1 // pred_check
      _
    $region83: #{context_prediction_vit_forward.1} parent=1 // pred_check_branch
      %106 = sbr.rel (0) target = $region85
    $region84: #{context_prediction_vit_forward.1} parent=1 // pred_region
      _
    $region85: #{context_prediction_vit_forward.1} parent=1 // pred_fallthru
      _
    // Predicated region
    $region86: #{context_prediction_vit_forward.1} parent=1 // pred_check
      _
    $region87: #{context_prediction_vit_forward.1} parent=1 // pred_check_branch
      %108 = sbr.rel (0) target = $region89
    $region88: #{context_prediction_vit_forward.1} parent=1 // pred_region
      _
    $region89: #{context_prediction_vit_forward.1} parent=1 // pred_fallthru
      _
    // Predicated region
    $region90: #{context_prediction_vit_forward.1} parent=1 // pred_check
      _
    $region91: #{context_prediction_vit_forward.1} parent=1 // pred_check_branch
      %110 = sbr.rel (0) target = $region93
    $region92: #{context_prediction_vit_forward.1} parent=1 // pred_region
      _
    $region93: #{context_prediction_vit_forward.1} parent=1 // pred_fallthru
      _
    // Predicated region
    $region94: #{context_prediction_vit_forward.1} parent=1 // pred_check
      _
    $region95: #{context_prediction_vit_forward.1} parent=1 // pred_check_branch
      %112 = sbr.rel (0) target = $region97
    $region96: #{context_prediction_vit_forward.1} parent=1 // pred_region
      _
    $region97: #{context_prediction_vit_forward.1} parent=1 // pred_fallthru
      _
    // Predicated region
    $region98: #{context_prediction_vit_forward.1} parent=1 // pred_check
      _
    $region99: #{context_prediction_vit_forward.1} parent=1 // pred_check_branch
      %114 = sbr.rel (0) target = $region101
    $region100: #{context_prediction_vit_forward.1} parent=1 // pred_region
      _
    $region101: #{context_prediction_vit_forward.1} parent=1 // pred_fallthru
      _
    // Predicated region
    $region102: #{context_prediction_vit_forward.1} parent=1 // pred_check
      _
    $region103: #{context_prediction_vit_forward.1} parent=1 // pred_check_branch
      %116 = sbr.rel (0) target = $region105
    $region104: #{context_prediction_vit_forward.1} parent=1 // pred_region
      _
    $region105: #{context_prediction_vit_forward.1} parent=1 // pred_fallthru
      _
    // Predicated region
    $region106: #{context_prediction_vit_forward.1} parent=1 // pred_check
      _
    $region107: #{context_prediction_vit_forward.1} parent=1 // pred_check_branch
      %118 = sbr.rel (0) target = $region109
    $region108: #{context_prediction_vit_forward.1} parent=1 // pred_region
      _
    $region109: #{context_prediction_vit_forward.1} parent=1 // pred_fallthru
      _
    // Predicated region
    $region110: #{context_prediction_vit_forward.1} parent=1 // pred_check
      _
    $region111: #{context_prediction_vit_forward.1} parent=1 // pred_check_branch
      %120 = sbr.rel (0) target = $region113
    $region112: #{context_prediction_vit_forward.1} parent=1 // pred_region
      _
    $region113: #{context_prediction_vit_forward.1} parent=1 // pred_fallthru
      _
    // Predicated region
    $region114: #{context_prediction_vit_forward.1} parent=1 // pred_check
      _
    $region115: #{context_prediction_vit_forward.1} parent=1 // pred_check_branch
      %122 = sbr.rel (0) target = $region117
    $region116: #{context_prediction_vit_forward.1} parent=1 // pred_region
      _
    $region117: #{context_prediction_vit_forward.1} parent=1 // pred_fallthru
      _
    %v124 = vld [vmem:[%s1] sm:$0xff]
    %v125 = vld [vmem:[%s1 + $0x8] sm:$0xff]
    %v126 = vld [vmem:[%s1 + $0x10] sm:$0xff]
    %v127 = vld [vmem:[%s1 + $0x18] sm:$0xff]
    %v128 = vld [vmem:[%s1 + $0x20] sm:$0xff]
    %v129 = vld [vmem:[%s1 + $0x28] sm:$0xff]
    %v130 = vld [vmem:[%s1 + $0x30] sm:$0xff]
    %v131 = vld [vmem:[%s1 + $0x38] sm:$0xff]
    %v132 = vpack.c.bf16 %v125, %v124
    %v133 = vpack.c.bf16 %v127, %v126
    %v134 = vpack.c.bf16 %v129, %v128
    %v135 = vpack.c.bf16 %v131, %v130
    %v136 = vld [vmem:[%s3] sm:$0xf]
    %v137 = vld [vmem:[%s3 + $0x4] sm:$0xf]
    %v138 = vld [vmem:[%s3 + $0x8] sm:$0xf]
    %v139 = vld [vmem:[%s3 + $0xc] sm:$0xf]
    %v140 = vld [vmem:[%s3 + $0x10] sm:$0xf]
    %v141 = vld [vmem:[%s3 + $0x14] sm:$0xf]
    %v142 = vld [vmem:[%s3 + $0x18] sm:$0xf]
    %v143 = vld [vmem:[%s3 + $0x1c] sm:$0xf]
    %v144 = vld [vmem:[%s5] sm:$0x1]
    %v146 = vlaneseq
    %v147 = vshrl.u32 %v146, 7
    %v148 = vsub.s32 0, %v147
    %v149 = vrot.slane %v144, %v148
    %v159 = vunpack.c.l.b16 %v136
    %v160 = vunpack.c.l.b16 %v137
    %v161 = vunpack.c.l.b16 %v138
    %v162 = vunpack.c.l.b16 %v139
    %v163 = vunpack.c.l.b16 %v140
    %v164 = vunpack.c.l.b16 %v141
    %v165 = vunpack.c.l.b16 %v142
    %v166 = vunpack.c.l.b16 %v143
    %v167 = vpack.c.b16 %v160, %v159
    %v168 = vpack.c.b16 %v162, %v161
    %v169 = vpack.c.b16 %v164, %v163
    %v170 = vpack.c.b16 %v166, %v165
    %vm175 = vcmask 523264
    %v177 = vsel %vm175, %v132, 0
    %v180 = vsel %vm175, %v133, 0
    %v183 = vsel %vm175, %v134, 0
    %v186 = vsel %vm175, %v135, 0
    %188 = vmatprep.subr.bf16.mxu0 0
    %189 = vmatpush1.bf16.msra.mxu0 %v167
    %190 = vmatprep.subr.bf16.mxu0 0
    %191 = vmatpush1.bf16.msra.mxu0 %v168
    %192 = vmatprep.subr.bf16.mxu0 0
    %193 = vmatpush1.bf16.msra.mxu0 %v169
    %194 = vmatprep.subr.bf16.mxu0 0
    %195 = vmatpush1.bf16.msra.mxu0 %v170
    %196 = vmatprep.subr.bf16.mxu0 0
    %197 = vmatpush1.bf16.msra.mxu0 0
    %198 = vmatprep.subr.bf16.mxu0 0
    %199 = vmatpush1.bf16.msra.mxu0 0
    %200 = vmatprep.subr.bf16.mxu0 0
    %201 = vmatpush1.bf16.msra.mxu0 0
    %202 = vmatprep.subr.bf16.mxu0 0
    %203 = vmatpush1.bf16.msra.mxu0 0
    %204 = vmatprep.subr.bf16.mxu0 0
    %205 = vmatpush1.bf16.msra.mxu0 0
    %206 = vmatprep.subr.bf16.mxu0 0
    %207 = vmatpush1.bf16.msra.mxu0 0
    %208 = vmatprep.subr.bf16.mxu0 0
    %209 = vmatpush1.bf16.msra.mxu0 0
    %210 = vmatprep.subr.bf16.mxu0 0
    %211 = vmatpush1.bf16.msra.mxu0 0
    %212 = vmatprep.subr.bf16.mxu0 0
    %213 = vmatpush1.bf16.msra.mxu0 0
    %214 = vmatprep.subr.bf16.mxu0 0
    %215 = vmatpush1.bf16.msra.mxu0 0
    %216 = vmatprep.subr.bf16.mxu0 0
    %217 = vmatpush1.bf16.msra.mxu0 0
    %218 = vmatprep.subr.bf16.mxu0 0
    %219 = vmatpush1.bf16.msra.mxu0 0
    %220 = vmatprep.mubr.bf16.mxu0 0
    %221 = vmatmul.mubr.bf16.gmra.mrb[0].mxu0 %v177
    %v222 = vpop.f32.mrb[0].mxu0
    %v223 = vadd.f32 %v149, %v222
    %v224 = vpop.f32.mrb[0].mxu0
    %v225 = vpop.f32.mrb[0].mxu0
    %v226 = vadd.f32 %v149, %v225
    %v227 = vpop.f32.mrb[0].mxu0
    %228 = vmatprep.mubr.bf16.mxu0 0
    %229 = vmatmul.mubr.bf16.gmra.mrb[0].mxu0 %v180
    %v230 = vpop.f32.mrb[0].mxu0
    %v231 = vadd.f32 %v149, %v230
    %v232 = vpop.f32.mrb[0].mxu0
    %v233 = vpop.f32.mrb[0].mxu0
    %v234 = vadd.f32 %v149, %v233
    %v235 = vpop.f32.mrb[0].mxu0
    %236 = vmatprep.mubr.bf16.mxu0 0
    %237 = vmatmul.mubr.bf16.gmra.mrb[0].mxu0 %v183
    %v238 = vpop.f32.mrb[0].mxu0
    %v239 = vadd.f32 %v149, %v238
    %v240 = vpop.f32.mrb[0].mxu0
    %v241 = vpop.f32.mrb[0].mxu0
    %v242 = vadd.f32 %v149, %v241
    %v243 = vpop.f32.mrb[0].mxu0
    %244 = vmatprep.mubr.bf16.mxu0 0
    %245 = vmatmul.mubr.bf16.gmra.mrb[0].mxu0 %v186
    %v246 = vpop.f32.mrb[0].mxu0
    %v247 = vadd.f32 %v149, %v246
    %v248 = vpop.f32.mrb[0].mxu0
    %v249 = vpop.f32.mrb[0].mxu0
    %v250 = vadd.f32 %v149, %v249
    %v251 = vpop.f32.mrb[0].mxu0
    %252 = vdwg.mxu0
    %v253 = vld [vmem:[%s7] sm:$0xff]
    %v254 = vld [vmem:[%s7 + $0x8] sm:$0xff]
    %v255 = vld [vmem:[%s7 + $0x10] sm:$0xff]
    %v256 = vadd.f32 %v223, %v253
    %v257 = vadd.f32 %v226, %v254
    %v258 = vadd.f32 %v255, 0.0
    %v259 = vadd.f32 %v231, %v253
    %v260 = vadd.f32 %v234, %v254
    %v261 = vadd.f32 %v239, %v253
    %v262 = vadd.f32 %v242, %v254
    %v263 = vadd.f32 %v247, %v253
    %v264 = vadd.f32 %v250, %v254
    %v265 = vlaneseq
    %v266 = vand.u32 %v265, 127
    %vm267 = vcmp.lt.s32.totalorder %v266, 17
    %v268 = vsel %vm267, 0.0, -1e+30
    %v269 = vld [vmem:[%s9] sm:$0x1]
    %v270 = vld [vmem:[%s11] sm:$0x1]
    %vm271 = vcmask 261120
    %v272 = vsel %vm271, %v256, 0.0
    %273 = vadd.xlane.f32.xlu0 %v272
    %v274 = vpop.xlane.xlu0 %273
    %v275 = vsel %vm271, %v257, 0.0
    %276 = vadd.xlane.f32.xlu0 %v275
    %v277 = vpop.xlane.xlu0 %276
    %v278 = vsel %vm271, %v258, 0.0
    %279 = vadd.xlane.f32.xlu0 %v278
    %v280 = vpop.xlane.xlu0 %279
    %v281 = vsel %vm271, %v259, 0.0
    %282 = vadd.xlane.f32.xlu0 %v281
    %v283 = vpop.xlane.xlu0 %282
    %v284 = vsel %vm271, %v260, 0.0
    %285 = vadd.xlane.f32.xlu0 %v284
    %v286 = vpop.xlane.xlu0 %285
    %v287 = vsel %vm271, %v261, 0.0
    %288 = vadd.xlane.f32.xlu0 %v287
    %v289 = vpop.xlane.xlu0 %288
    %v290 = vsel %vm271, %v262, 0.0
    %291 = vadd.xlane.f32.xlu0 %v290
    %v292 = vpop.xlane.xlu0 %291
    %v293 = vsel %vm271, %v263, 0.0
    %294 = vadd.xlane.f32.xlu0 %v293
    %v295 = vpop.xlane.xlu0 %294
    %v296 = vsel %vm271, %v264, 0.0
    %297 = vadd.xlane.f32.xlu0 %v296
    %v298 = vpop.xlane.xlu0 %297
    %v299 = vrcp.pop 32.0
    %v300 = vmul.f32 %v274, %v299
    %v301 = vmul.f32 %v277, %v299
    %v302 = vmul.f32 %v280, %v299
    %v303 = vmul.f32 %v283, %v299
    %v304 = vmul.f32 %v286, %v299
    %v305 = vmul.f32 %v289, %v299
    %v306 = vmul.f32 %v292, %v299
    %v307 = vmul.f32 %v295, %v299
    %v308 = vmul.f32 %v298, %v299
    %v309 = vsub.f32 %v256, %v300
    %v310 = vsub.f32 %v257, %v301
    %v311 = vsub.f32 %v258, %v302
    %v312 = vsub.f32 %v259, %v303
    %v313 = vsub.f32 %v260, %v304
    %v314 = vsub.f32 %v261, %v305
    %v315 = vsub.f32 %v262, %v306
    %v316 = vsub.f32 %v263, %v307
    %v317 = vsub.f32 %v264, %v308
    %v318 = vmul.f32 %v309, %v309
    %v319 = vmul.f32 %v310, %v310
    %v320 = vmul.f32 %v311, %v311
    %v321 = vmul.f32 %v312, %v312
    %v322 = vmul.f32 %v313, %v313
    %v323 = vmul.f32 %v314, %v314
    %v324 = vmul.f32 %v315, %v315
    %v325 = vmul.f32 %v316, %v316
    %v326 = vmul.f32 %v317, %v317
    %v327 = vsel %vm271, %v318, 0.0
    %328 = vadd.xlane.f32.xlu0 %v327
    %v329 = vpop.xlane.xlu0 %328
    %v330 = vsel %vm271, %v319, 0.0
    %331 = vadd.xlane.f32.xlu0 %v330
    %v332 = vpop.xlane.xlu0 %331
    %v333 = vsel %vm271, %v320, 0.0
    %334 = vadd.xlane.f32.xlu0 %v333
    %v335 = vpop.xlane.xlu0 %334
    %v336 = vsel %vm271, %v321, 0.0
    %337 = vadd.xlane.f32.xlu0 %v336
    %v338 = vpop.xlane.xlu0 %337
    %v339 = vsel %vm271, %v322, 0.0
    %340 = vadd.xlane.f32.xlu0 %v339
    %v341 = vpop.xlane.xlu0 %340
    %v342 = vsel %vm271, %v323, 0.0
    %343 = vadd.xlane.f32.xlu0 %v342
    %v344 = vpop.xlane.xlu0 %343
    %v345 = vsel %vm271, %v324, 0.0
    %346 = vadd.xlane.f32.xlu0 %v345
    %v347 = vpop.xlane.xlu0 %346
    %v348 = vsel %vm271, %v325, 0.0
    %349 = vadd.xlane.f32.xlu0 %v348
    %v350 = vpop.xlane.xlu0 %349
    %v351 = vsel %vm271, %v326, 0.0
    %352 = vadd.xlane.f32.xlu0 %v351
    %v353 = vpop.xlane.xlu0 %352
    %v354 = vmul.f32 %v329, %v299
    %v355 = vmul.f32 %v332, %v299
    %v356 = vmul.f32 %v335, %v299
    %v357 = vmul.f32 %v338, %v299
    %v358 = vmul.f32 %v341, %v299
    %v359 = vmul.f32 %v344, %v299
    %v360 = vmul.f32 %v347, %v299
    %v361 = vmul.f32 %v350, %v299
    %v362 = vmul.f32 %v353, %v299
    %v363 = vadd.f32 %v354, 1e-12
    %v364 = vadd.f32 %v355, 1e-12
    %v365 = vadd.f32 %v356, 1e-12
    %v366 = vadd.f32 %v357, 1e-12
    %v367 = vadd.f32 %v358, 1e-12
    %v368 = vadd.f32 %v359, 1e-12
    %v369 = vadd.f32 %v360, 1e-12
    %v370 = vadd.f32 %v361, 1e-12
    %v371 = vadd.f32 %v362, 1e-12
    %v372 = vrsqrt.pop %v363
    %v373 = vrsqrt.pop %v364
    %v374 = vrsqrt.pop %v365
    %v375 = vrsqrt.pop %v366
    %v376 = vrsqrt.pop %v367
    %v377 = vrsqrt.pop %v368
    %v378 = vrsqrt.pop %v369
    %v379 = vrsqrt.pop %v370
    %v380 = vrsqrt.pop %v371
    %v381 = vmul.f32 %v309, %v372
    %v382 = vmul.f32 %v310, %v373
    %v383 = vmul.f32 %v311, %v374
    %v384 = vmul.f32 %v312, %v375
    %v385 = vmul.f32 %v313, %v376
    %v386 = vmul.f32 %v314, %v377
    %v387 = vmul.f32 %v315, %v378
    %v388 = vmul.f32 %v316, %v379
    %v389 = vmul.f32 %v317, %v380
    %v391 = vlaneseq
    %v392 = vshrl.u32 %v391, 7
    %v393 = vsub.s32 0, %v392
    %v394 = vrot.slane %v269, %v393
    %v396 = vmul.f32 %v381, %v394
    %v397 = vmul.f32 %v382, %v394
    %v398 = vmul.f32 %v383, %v394
    %v399 = vmul.f32 %v384, %v394
    %v400 = vmul.f32 %v385, %v394
    %v401 = vmul.f32 %v386, %v394
    %v402 = vmul.f32 %v387, %v394
    %v403 = vmul.f32 %v388, %v394
    %v404 = vmul.f32 %v389, %v394
    %v406 = vlaneseq
    %v407 = vshrl.u32 %v406, 7
    %v408 = vsub.s32 0, %v407
    %v409 = vrot.slane %v270, %v408
    %v411 = vadd.f32 %v396, %v409
    %v412 = vadd.f32 %v397, %v409
    %v413 = vadd.f32 %v398, %v409
    %v414 = vadd.f32 %v399, %v409
    %v415 = vadd.f32 %v400, %v409
    %v416 = vadd.f32 %v401, %v409
    %v417 = vadd.f32 %v402, %v409
    %v418 = vadd.f32 %v403, %v409
    %v419 = vadd.f32 %v404, %v409
    %v420 = vpack.c.bf16 %v412, %v411
    %v421 = vpack.c.bf16 %v414, %v413
    %v422 = vpack.c.bf16 %v413, %v415
    %v423 = vpack.c.bf16 %v417, %v416
    %v424 = vpack.c.bf16 %v418, %v413
    %v425 = vpack.c.bf16 %v413, %v419
    %v426 = vld [vmem:[%s13] sm:$0xf]
    %v427 = vld [vmem:[%s13 + $0x4] sm:$0xf]
    %v428 = vld [vmem:[%s13 + $0x8] sm:$0xf]
    %v429 = vld [vmem:[%s13 + $0xc] sm:$0xf]
    %v430 = vld [vmem:[%s15] sm:$0x1]
    %v432 = vlaneseq
    %v433 = vshrl.u32 %v432, 7
    %v434 = vsub.s32 0, %v433
    %v435 = vrot.slane %v430, %v434
    %v441 = vunpack.c.l.b16 %v426
    %v442 = vunpack.c.l.b16 %v427
    %v443 = vunpack.c.l.b16 %v428
    %v444 = vunpack.c.l.b16 %v429
    %v445 = vpack.c.b16 %v442, %v441
    %v446 = vpack.c.b16 %v444, %v443
    %v450 = vsel %vm271, %v420, 0
    %v453 = vsel %vm271, %v421, 0
    %v456 = vsel %vm271, %v422, 0
    %v459 = vsel %vm271, %v423, 0
    %v462 = vsel %vm271, %v424, 0
    %v465 = vsel %vm271, %v425, 0
    %467 = vmatprep.subr.bf16.mxu0 0
    %468 = vmatpush1.bf16.msra.mxu0 %v445
    %469 = vmatprep.subr.bf16.mxu0 0
    %470 = vmatpush1.bf16.msra.mxu0 %v446
    %471 = vmatprep.subr.bf16.mxu0 0
    %472 = vmatpush1.bf16.msra.mxu0 0
    %473 = vmatprep.subr.bf16.mxu0 0
    %474 = vmatpush1.bf16.msra.mxu0 0
    %475 = vmatprep.subr.bf16.mxu0 0
    %476 = vmatpush1.bf16.msra.mxu0 0
    %477 = vmatprep.subr.bf16.mxu0 0
    %478 = vmatpush1.bf16.msra.mxu0 0
    %479 = vmatprep.subr.bf16.mxu0 0
    %480 = vmatpush1.bf16.msra.mxu0 0
    %481 = vmatprep.subr.bf16.mxu0 0
    %482 = vmatpush1.bf16.msra.mxu0 0
    %483 = vmatprep.subr.bf16.mxu0 0
    %484 = vmatpush1.bf16.msra.mxu0 0
    %485 = vmatprep.subr.bf16.mxu0 0
    %486 = vmatpush1.bf16.msra.mxu0 0
    %487 = vmatprep.subr.bf16.mxu0 0
    %488 = vmatpush1.bf16.msra.mxu0 0
    %489 = vmatprep.subr.bf16.mxu0 0
    %490 = vmatpush1.bf16.msra.mxu0 0
    %491 = vmatprep.subr.bf16.mxu0 0
    %492 = vmatpush1.bf16.msra.mxu0 0
    %493 = vmatprep.subr.bf16.mxu0 0
    %494 = vmatpush1.bf16.msra.mxu0 0
    %495 = vmatprep.subr.bf16.mxu0 0
    %496 = vmatpush1.bf16.msra.mxu0 0
    %497 = vmatprep.subr.bf16.mxu0 0
    %498 = vmatpush1.bf16.msra.mxu0 0
    %499 = vmatprep.mubr.bf16.mxu0 0
    %500 = vmatmul.mubr.bf16.gmra.mrb[0].mxu0 %v450
    %v501 = vpop.f32.mrb[0].mxu0
    %v502 = vadd.f32 %v435, %v501
    %v503 = vpop.f32.mrb[0].mxu0
    %v504 = vpop.f32.mrb[0].mxu0
    %v505 = vadd.f32 %v435, %v504
    %v506 = vpop.f32.mrb[0].mxu0
    %507 = vmatprep.mubr.bf16.mxu0 0
    %508 = vmatmul.mubr.bf16.gmra.mrb[0].mxu0 %v453
    %v509 = vpop.f32.mrb[0].mxu0
    %v510 = vadd.f32 %v435, %v509
    %v511 = vpop.f32.mrb[0].mxu0
    %v512 = vpop.f32.mrb[0].mxu0
    %v513 = vadd.f32 %v435, %v512
    %v514 = vpop.f32.mrb[0].mxu0
    %515 = vmatprep.mubr.bf16.mxu0 0
    %516 = vmatmul.mubr.bf16.gmra.mrb[0].mxu0 %v456
    %v517 = vpop.f32.mrb[0].mxu0
    %v518 = vadd.f32 %v435, %v517
    %v519 = vpop.f32.mrb[0].mxu0
    %v520 = vpop.f32.mrb[0].mxu0
    %v521 = vadd.f32 %v435, %v520
    %v522 = vpop.f32.mrb[0].mxu0
    %523 = vmatprep.mubr.bf16.mxu0 0
    %524 = vmatmul.mubr.bf16.gmra.mrb[0].mxu0 %v459
    %v525 = vpop.f32.mrb[0].mxu0
    %v526 = vadd.f32 %v435, %v525
    %v527 = vpop.f32.mrb[0].mxu0
    %v528 = vpop.f32.mrb[0].mxu0
    %v529 = vadd.f32 %v435, %v528
    %v530 = vpop.f32.mrb[0].mxu0
    %531 = vmatprep.mubr.bf16.mxu0 0
    %532 = vmatmul.mubr.bf16.gmra.mrb[0].mxu0 %v462
    %v533 = vpop.f32.mrb[0].mxu0
    %v534 = vadd.f32 %v435, %v533
    %v535 = vpop.f32.mrb[0].mxu0
    %v536 = vpop.f32.mrb[0].mxu0
    %v537 = vadd.f32 %v435, %v536
    %v538 = vpop.f32.mrb[0].mxu0
    %539 = vmatprep.mubr.bf16.mxu0 0
    %540 = vmatmul.mubr.bf16.gmra.mrb[0].mxu0 %v465
    %v541 = vpop.f32.mrb[0].mxu0
    %v542 = vadd.f32 %v435, %v541
    %v543 = vpop.f32.mrb[0].mxu0
    %v544 = vpop.f32.mrb[0].mxu0
    %v545 = vadd.f32 %v435, %v544
    %v546 = vpop.f32.mrb[0].mxu0
    %547 = vdwg.mxu0
    %s548 = scalar_lea.vmem %s13, 32
    %v549 = vld [vmem:[%s548] sm:$0xf]
    %v550 = vld [vmem:[%s548 + $0x4] sm:$0xf]
    %v551 = vld [vmem:[%s548 + $0x8] sm:$0xf]
    %v552 = vld [vmem:[%s548 + $0xc] sm:$0xf]
    %s553 = scalar_lea.vmem %s15, 2
    %v554 = vld [vmem:[%s553] sm:$0x1]
    %v556 = vlaneseq
    %v557 = vshrl.u32 %v556, 7
    %v558 = vsub.s32 0, %v557
    %v559 = vrot.slane %v554, %v558
    %v565 = vunpack.c.l.b16 %v549
    %v566 = vunpack.c.l.b16 %v550
    %v567 = vunpack.c.l.b16 %v551
    %v568 = vunpack.c.l.b16 %v552
    %v569 = vpack.c.b16 %v566, %v565
    %v570 = vpack.c.b16 %v568, %v567
    %573 = vmatprep.subr.bf16.mxu0 0
    %574 = vmatpush1.bf16.msra.mxu0 %v569
    %575 = vmatprep.subr.bf16.mxu0 0
    %576 = vmatpush1.bf16.msra.mxu0 %v570
    %577 = vmatprep.subr.bf16.mxu0 0
    %578 = vmatpush1.bf16.msra.mxu0 0
    %579 = vmatprep.subr.bf16.mxu0 0
    %580 = vmatpush1.bf16.msra.mxu0 0
    %581 = vmatprep.subr.bf16.mxu0 0
    %582 = vmatpush1.bf16.msra.mxu0 0
    %583 = vmatprep.subr.bf16.mxu0 0
    %584 = vmatpush1.bf16.msra.mxu0 0
    %585 = vmatprep.subr.bf16.mxu0 0
    %586 = vmatpush1.bf16.msra.mxu0 0
    %587 = vmatprep.subr.bf16.mxu0 0
    %588 = vmatpush1.bf16.msra.mxu0 0
    %589 = vmatprep.subr.bf16.mxu0 0
    %590 = vmatpush1.bf16.msra.mxu0 0
    %591 = vmatprep.subr.bf16.mxu0 0
    %592 = vmatpush1.bf16.msra.mxu0 0
    %593 = vmatprep.subr.bf16.mxu0 0
    %594 = vmatpush1.bf16.msra.mxu0 0
    %595 = vmatprep.subr.bf16.mxu0 0
    %596 = vmatpush1.bf16.msra.mxu0 0
    %597 = vmatprep.subr.bf16.mxu0 0
    %598 = vmatpush1.bf16.msra.mxu0 0
    %599 = vmatprep.subr.bf16.mxu0 0
    %600 = vmatpush1.bf16.msra.mxu0 0
    %601 = vmatprep.subr.bf16.mxu0 0
    %602 = vmatpush1.bf16.msra.mxu0 0
    %603 = vmatprep.subr.bf16.mxu0 0
    %604 = vmatpush1.bf16.msra.mxu0 0
    %605 = vmatprep.mubr.bf16.mxu0 0
    %606 = vmatmul.mubr.bf16.gmra.mrb[0].mxu0 %v450
    %v607 = vpop.f32.mrb[0].mxu0
    %v608 = vadd.f32 %v559, %v607
    %v609 = vpop.f32.mrb[0].mxu0
    %v610 = vpop.f32.mrb[0].mxu0
    %v611 = vadd.f32 %v559, %v610
    %v612 = vpop.f32.mrb[0].mxu0
    %613 = vmatprep.mubr.bf16.mxu0 0
    %614 = vmatmul.mubr.bf16.gmra.mrb[0].mxu0 %v453
    %v615 = vpop.f32.mrb[0].mxu0
    %v616 = vadd.f32 %v559, %v615
    %v617 = vpop.f32.mrb[0].mxu0
    %v618 = vpop.f32.mrb[0].mxu0
    %v619 = vadd.f32 %v559, %v618
    %v620 = vpop.f32.mrb[0].mxu0
    %621 = vmatprep.mubr.bf16.mxu0 0
    %622 = vmatmul.mubr.bf16.gmra.mrb[0].mxu0 %v456
    %v623 = vpop.f32.mrb[0].mxu0
    %v624 = vadd.f32 %v559, %v623
    %v625 = vpop.f32.mrb[0].mxu0
    %v626 = vpop.f32.mrb[0].mxu0
    %v627 = vadd.f32 %v559, %v626
    %v628 = vpop.f32.mrb[0].mxu0
    %629 = vmatprep.mubr.bf16.mxu0 0
    %630 = vmatmul.mubr.bf16.gmra.mrb[0].mxu0 %v459
    %v631 = vpop.f32.mrb[0].mxu0
    %v632 = vadd.f32 %v559, %v631
    %v633 = vpop.f32.mrb[0].mxu0
    %v634 = vpop.f32.mrb[0].mxu0
    %v635 = vadd.f32 %v559, %v634
    %v636 = vpop.f32.mrb[0].mxu0
    %637 = vmatprep.mubr.bf16.mxu0 0
    %638 = vmatmul.mubr.bf16.gmra.mrb[0].mxu0 %v462
    %v639 = vpop.f32.mrb[0].mxu0
    %v640 = vadd.f32 %v559, %v639
    %v641 = vpop.f32.mrb[0].mxu0
    %v642 = vpop.f32.mrb[0].mxu0
    %v643 = vadd.f32 %v559, %v642
    %v644 = vpop.f32.mrb[0].mxu0
    %645 = vmatprep.mubr.bf16.mxu0 0
    %646 = vmatmul.mubr.bf16.gmra.mrb[0].mxu0 %v465
    %v647 = vpop.f32.mrb[0].mxu0
    %v648 = vadd.f32 %v559, %v647
    %v649 = vpop.f32.mrb[0].mxu0
    %v650 = vpop.f32.mrb[0].mxu0
    %v651 = vadd.f32 %v559, %v650
    %v652 = vpop.f32.mrb[0].mxu0
    %653 = vdwg.mxu0
    %s654 = scalar_lea.vmem %s13, 64
    %v655 = vld [vmem:[%s654] sm:$0xf]
    %v656 = vld [vmem:[%s654 + $0x4] sm:$0xf]
    %v657 = vld [vmem:[%s654 + $0x8] sm:$0xf]
    %v658 = vld [vmem:[%s654 + $0xc] sm:$0xf]
    %s659 = scalar_lea.vmem %s15, 4
    %v660 = vld [vmem:[%s659] sm:$0x1]
    %v662 = vlaneseq
    %v663 = vshrl.u32 %v662, 7
    %v664 = vsub.s32 0, %v663
    %v665 = vrot.slane %v660, %v664
    %v671 = vunpack.c.l.b16 %v655
    %v672 = vunpack.c.l.b16 %v656
    %v673 = vunpack.c.l.b16 %v657
    %v674 = vunpack.c.l.b16 %v658
    %v675 = vpack.c.b16 %v672, %v671
    %v676 = vpack.c.b16 %v674, %v673
    %679 = vmatprep.subr.bf16.mxu0 0
    %680 = vmatpush1.bf16.msra.mxu0 %v675
    %681 = vmatprep.subr.bf16.mxu0 0
    %682 = vmatpush1.bf16.msra.mxu0 %v676
    %683 = vmatprep.subr.bf16.mxu0 0
    %684 = vmatpush1.bf16.msra.mxu0 0
    %685 = vmatprep.subr.bf16.mxu0 0
    %686 = vmatpush1.bf16.msra.mxu0 0
    %687 = vmatprep.subr.bf16.mxu0 0
    %688 = vmatpush1.bf16.msra.mxu0 0
    %689 = vmatprep.subr.bf16.mxu0 0
    %690 = vmatpush1.bf16.msra.mxu0 0
    %691 = vmatprep.subr.bf16.mxu0 0
    %692 = vmatpush1.bf16.msra.mxu0 0
    %693 = vmatprep.subr.bf16.mxu0 0
    %694 = vmatpush1.bf16.msra.mxu0 0
    %695 = vmatprep.subr.bf16.mxu0 0
    %696 = vmatpush1.bf16.msra.mxu0 0
    %697 = vmatprep.subr.bf16.mxu0 0
    %698 = vmatpush1.bf16.msra.mxu0 0
    %699 = vmatprep.subr.bf16.mxu0 0
    %700 = vmatpush1.bf16.msra.mxu0 0
    %701 = vmatprep.subr.bf16.mxu0 0
    %702 = vmatpush1.bf16.msra.mxu0 0
    %703 = vmatprep.subr.bf16.mxu0 0
    %704 = vmatpush1.bf16.msra.mxu0 0
    %705 = vmatprep.subr.bf16.mxu0 0
    %706 = vmatpush1.bf16.msra.mxu0 0
    %707 = vmatprep.subr.bf16.mxu0 0
    %708 = vmatpush1.bf16.msra.mxu0 0
    %709 = vmatprep.subr.bf16.mxu0 0
    %710 = vmatpush1.bf16.msra.mxu0 0
    %711 = vmatprep.mubr.bf16.mxu0 0
    %712 = vmatmul.mubr.bf16.gmra.mrb[0].mxu0 %v450
    %v713 = vpop.f32.mrb[0].mxu0
    %v714 = vadd.f32 %v665, %v713
    %v715 = vpop.f32.mrb[0].mxu0
    %v716 = vpop.f32.mrb[0].mxu0
    %v717 = vadd.f32 %v665, %v716
    %v718 = vpop.f32.mrb[0].mxu0
    %719 = vmatprep.mubr.bf16.mxu0 0
    %720 = vmatmul.mubr.bf16.gmra.mrb[0].mxu0 %v453
    %v721 = vpop.f32.mrb[0].mxu0
    %v722 = vadd.f32 %v665, %v721
    %v723 = vpop.f32.mrb[0].mxu0
    %v724 = vpop.f32.mrb[0].mxu0
    %v725 = vadd.f32 %v665, %v724
    %v726 = vpop.f32.mrb[0].mxu0
    %727 = vmatprep.mubr.bf16.mxu0 0
    %728 = vmatmul.mubr.bf16.gmra.mrb[0].mxu0 %v456
    %v729 = vpop.f32.mrb[0].mxu0
    %v730 = vadd.f32 %v665, %v729
    %v731 = vpop.f32.mrb[0].mxu0
    %v732 = vpop.f32.mrb[0].mxu0
    %v733 = vadd.f32 %v665, %v732
    %v734 = vpop.f32.mrb[0].mxu0
    %735 = vmatprep.mubr.bf16.mxu0 0
    %736 = vmatmul.mubr.bf16.gmra.mrb[0].mxu0 %v459
    %v737 = vpop.f32.mrb[0].mxu0
    %v738 = vadd.f32 %v665, %v737
    %v739 = vpop.f32.mrb[0].mxu0
    %v740 = vpop.f32.mrb[0].mxu0
    %v741 = vadd.f32 %v665, %v740
    %v742 = vpop.f32.mrb[0].mxu0
    %743 = vmatprep.mubr.bf16.mxu0 0
    %744 = vmatmul.mubr.bf16.gmra.mrb[0].mxu0 %v462
    %v745 = vpop.f32.mrb[0].mxu0
    %v746 = vadd.f32 %v665, %v745
    %v747 = vpop.f32.mrb[0].mxu0
    %v748 = vpop.f32.mrb[0].mxu0
    %v749 = vadd.f32 %v665, %v748
    %v750 = vpop.f32.mrb[0].mxu0
    %751 = vmatprep.mubr.bf16.mxu0 0
    %752 = vmatmul.mubr.bf16.gmra.mrb[0].mxu0 %v465
    %v753 = vpop.f32.mrb[0].mxu0
    %v754 = vadd.f32 %v665, %v753
    %v755 = vpop.f32.mrb[0].mxu0
    %v756 = vpop.f32.mrb[0].mxu0
    %v757 = vadd.f32 %v665, %v756
    %v758 = vpop.f32.mrb[0].mxu0
    %759 = vdwg.mxu0
    %v760 = vpack.c.bf16 %v505, %v502
    %v761 = vpack.c.bf16 %v510, %v510
    %v762 = vpack.c.bf16 %v518, %v513
    %v763 = vpack.c.bf16 %v521, %v521
    %v764 = vpack.c.bf16 %v529, %v526
    %v765 = vpack.c.bf16 %v534, %v534
    %v766 = vpack.c.bf16 %v542, %v537
    %v767 = vpack.c.bf16 %v545, %v545
    %v768 = vpack.c.bf16 %v611, %v608
    %v769 = vpack.c.bf16 %v616, %v616
    %v770 = vpack.c.bf16 %v624, %v619
    %v771 = vpack.c.bf16 %v627, %v627
    %v772 = vpack.c.bf16 %v635, %v632
    %v773 = vpack.c.bf16 %v640, %v640
    %v774 = vpack.c.bf16 %v648, %v643
    %v775 = vpack.c.bf16 %v651, %v651
    %vm776 = vcmask 130048
    %v778 = vsel %vm776, %v760, 0
    %v781 = vsel %vm776, %v761, 0
    %v784 = vsel %vm776, %v768, 0
    %v787 = vsel %vm776, %v769, 0
    %789 = vmatprep.subr.bf16.mxu0 0
    %790 = vmatpush1.bf16.xpose.msra.mxu0 %v784
    %791 = vmatprep.subr.bf16.mxu0 0
    %792 = vmatpush1.bf16.xpose.msra.mxu0 %v787
    %793 = vmatprep.subr.bf16.mxu0 0
    %794 = vmatpush1.bf16.xpose.msra.mxu0 0
    %795 = vmatprep.subr.bf16.mxu0 0
    %796 = vmatpush1.bf16.xpose.msra.mxu0 0
    %797 = vmatprep.subr.bf16.mxu0 0
    %798 = vmatpush1.bf16.xpose.msra.mxu0 0
    %799 = vmatprep.subr.bf16.mxu0 0
    %800 = vmatpush1.bf16.xpose.msra.mxu0 0
    %801 = vmatprep.subr.bf16.mxu0 0
    %802 = vmatpush1.bf16.xpose.msra.mxu0 0
    %803 = vmatprep.subr.bf16.mxu0 0
    %804 = vmatpush1.bf16.xpose.msra.mxu0 0
    %805 = vmatprep.subr.bf16.mxu0 0
    %806 = vmatpush1.bf16.xpose.msra.mxu0 0
    %807 = vmatprep.subr.bf16.mxu0 0
    %808 = vmatpush1.bf16.xpose.msra.mxu0 0
    %809 = vmatprep.subr.bf16.mxu0 0
    %810 = vmatpush1.bf16.xpose.msra.mxu0 0
    %811 = vmatprep.subr.bf16.mxu0 0
    %812 = vmatpush1.bf16.xpose.msra.mxu0 0
    %813 = vmatprep.subr.bf16.mxu0 0
    %814 = vmatpush1.bf16.xpose.msra.mxu0 0
    %815 = vmatprep.subr.bf16.mxu0 0
    %816 = vmatpush1.bf16.xpose.msra.mxu0 0
    %817 = vmatprep.subr.bf16.mxu0 0
    %818 = vmatpush1.bf16.xpose.msra.mxu0 0
    %819 = vmatprep.subr.bf16.mxu0 0
    %820 = vmatpush1.bf16.xpose.msra.mxu0 0
    %821 = vmatprep.mubr.bf16.mxu0 0
    %822 = vmatmul.mubr.bf16.gmra.mrb[0].mxu0 %v778
    %v823 = vpop.f32.mrb[0].mxu0
    %v824 = vadd.f32 0.0, %v823
    %v825 = vpop.f32.mrb[0].mxu0
    %v826 = vpop.f32.mrb[0].mxu0
    %v827 = vadd.f32 0.0, %v826
    %v828 = vpop.f32.mrb[0].mxu0
    %829 = vmatprep.mubr.bf16.mxu0 0
    %830 = vmatmul.mubr.bf16.gmra.mrb[0].mxu0 %v781
    %v831 = vpop.f32.mrb[0].mxu0
    %v832 = vadd.f32 0.0, %v831
    %v833 = vpop.f32.mrb[0].mxu0
    %v834 = vpop.f32.mrb[0].mxu0
    %v835 = vpop.f32.mrb[0].mxu0
    %836 = vdwg.mxu0
    %v838 = vsel %vm776, %v762, 0
    %v841 = vsel %vm776, %v763, 0
    %v844 = vsel %vm776, %v770, 0
    %v847 = vsel %vm776, %v771, 0
    %849 = vmatprep.subr.bf16.mxu0 0
    %850 = vmatpush1.bf16.xpose.msra.mxu0 %v844
    %851 = vmatprep.subr.bf16.mxu0 0
    %852 = vmatpush1.bf16.xpose.msra.mxu0 %v847
    %853 = vmatprep.subr.bf16.mxu0 0
    %854 = vmatpush1.bf16.xpose.msra.mxu0 0
    %855 = vmatprep.subr.bf16.mxu0 0
    %856 = vmatpush1.bf16.xpose.msra.mxu0 0
    %857 = vmatprep.subr.bf16.mxu0 0
    %858 = vmatpush1.bf16.xpose.msra.mxu0 0
    %859 = vmatprep.subr.bf16.mxu0 0
    %860 = vmatpush1.bf16.xpose.msra.mxu0 0
    %861 = vmatprep.subr.bf16.mxu0 0
    %862 = vmatpush1.bf16.xpose.msra.mxu0 0
    %863 = vmatprep.subr.bf16.mxu0 0
    %864 = vmatpush1.bf16.xpose.msra.mxu0 0
    %865 = vmatprep.subr.bf16.mxu0 0
    %866 = vmatpush1.bf16.xpose.msra.mxu0 0
    %867 = vmatprep.subr.bf16.mxu0 0
    %868 = vmatpush1.bf16.xpose.msra.mxu0 0
    %869 = vmatprep.subr.bf16.mxu0 0
    %870 = vmatpush1.bf16.xpose.msra.mxu0 0
    %871 = vmatprep.subr.bf16.mxu0 0
    %872 = vmatpush1.bf16.xpose.msra.mxu0 0
    %873 = vmatprep.subr.bf16.mxu0 0
    %874 = vmatpush1.bf16.xpose.msra.mxu0 0
    %875 = vmatprep.subr.bf16.mxu0 0
    %876 = vmatpush1.bf16.xpose.msra.mxu0 0
    %877 = vmatprep.subr.bf16.mxu0 0
    %878 = vmatpush1.bf16.xpose.msra.mxu0 0
    %879 = vmatprep.subr.bf16.mxu0 0
    %880 = vmatpush1.bf16.xpose.msra.mxu0 0
    %881 = vmatprep.mubr.bf16.mxu0 0
    %882 = vmatmul.mubr.bf16.gmra.mrb[0].mxu0 %v838
    %v883 = vpop.f32.mrb[0].mxu0
    %v884 = vadd.f32 0.0, %v883
    %v885 = vpop.f32.mrb[0].mxu0
    %v886 = vpop.f32.mrb[0].mxu0
    %v887 = vadd.f32 0.0, %v886
    %v888 = vpop.f32.mrb[0].mxu0
    %889 = vmatprep.mubr.bf16.mxu0 0
    %890 = vmatmul.mubr.bf16.gmra.mrb[0].mxu0 %v841
    %v891 = vpop.f32.mrb[0].mxu0
    %v892 = vadd.f32 0.0, %v891
    %v893 = vpop.f32.mrb[0].mxu0
    %v894 = vpop.f32.mrb[0].mxu0
    %v895 = vpop.f32.mrb[0].mxu0
    %896 = vdwg.mxu0
    %v898 = vsel %vm776, %v764, 0
    %v901 = vsel %vm776, %v765, 0
    %v904 = vsel %vm776, %v772, 0
    %v907 = vsel %vm776, %v773, 0
    %909 = vmatprep.subr.bf16.mxu0 0
    %910 = vmatpush1.bf16.xpose.msra.mxu0 %v904
    %911 = vmatprep.subr.bf16.mxu0 0
    %912 = vmatpush1.bf16.xpose.msra.mxu0 %v907
    %913 = vmatprep.subr.bf16.mxu0 0
    %914 = vmatpush1.bf16.xpose.msra.mxu0 0
    %915 = vmatprep.subr.bf16.mxu0 0
    %916 = vmatpush1.bf16.xpose.msra.mxu0 0
    %917 = vmatprep.subr.bf16.mxu0 0
    %918 = vmatpush1.bf16.xpose.msra.mxu0 0
    %919 = vmatprep.subr.bf16.mxu0 0
    %920 = vmatpush1.bf16.xpose.msra.mxu0 0
    %921 = vmatprep.subr.bf16.mxu0 0
    %922 = vmatpush1.bf16.xpose.msra.mxu0 0
    %923 = vmatprep.subr.bf16.mxu0 0
    %924 = vmatpush1.bf16.xpose.msra.mxu0 0
    %925 = vmatprep.subr.bf16.mxu0 0
    %926 = vmatpush1.bf16.xpose.msra.mxu0 0
    %927 = vmatprep.subr.bf16.mxu0 0
    %928 = vmatpush1.bf16.xpose.msra.mxu0 0
    %929 = vmatprep.subr.bf16.mxu0 0
    %930 = vmatpush1.bf16.xpose.msra.mxu0 0
    %931 = vmatprep.subr.bf16.mxu0 0
    %932 = vmatpush1.bf16.xpose.msra.mxu0 0
    %933 = vmatprep.subr.bf16.mxu0 0
    %934 = vmatpush1.bf16.xpose.msra.mxu0 0
    %935 = vmatprep.subr.bf16.mxu0 0
    %936 = vmatpush1.bf16.xpose.msra.mxu0 0
    %937 = vmatprep.subr.bf16.mxu0 0
    %938 = vmatpush1.bf16.xpose.msra.mxu0 0
    %939 = vmatprep.subr.bf16.mxu0 0
    %940 = vmatpush1.bf16.xpose.msra.mxu0 0
    %941 = vmatprep.mubr.bf16.mxu0 0
    %942 = vmatmul.mubr.bf16.gmra.mrb[0].mxu0 %v898
    %v943 = vpop.f32.mrb[0].mxu0
    %v944 = vadd.f32 0.0, %v943
    %v945 = vpop.f32.mrb[0].mxu0
    %v946 = vpop.f32.mrb[0].mxu0
    %v947 = vadd.f32 0.0, %v946
    %v948 = vpop.f32.mrb[0].mxu0
    %949 = vmatprep.mubr.bf16.mxu0 0
    %950 = vmatmul.mubr.bf16.gmra.mrb[0].mxu0 %v901
    %v951 = vpop.f32.mrb[0].mxu0
    %v952 = vadd.f32 0.0, %v951
    %v953 = vpop.f32.mrb[0].mxu0
    %v954 = vpop.f32.mrb[0].mxu0
    %v955 = vpop.f32.mrb[0].mxu0
    %956 = vdwg.mxu0
    %v958 = vsel %vm776, %v766, 0
    %v961 = vsel %vm776, %v767, 0
    %v964 = vsel %vm776, %v774, 0
    %v967 = vsel %vm776, %v775, 0
    %969 = vmatprep.subr.bf16.mxu0 0
    %970 = vmatpush1.bf16.xpose.msra.mxu0 %v964
    %971 = vmatprep.subr.bf16.mxu0 0
    %972 = vmatpush1.bf16.xpose.msra.mxu0 %v967
    %973 = vmatprep.subr.bf16.mxu0 0
    %974 = vmatpush1.bf16.xpose.msra.mxu0 0
    %975 = vmatprep.subr.bf16.mxu0 0
    %976 = vmatpush1.bf16.xpose.msra.mxu0 0
    %977 = vmatprep.subr.bf16.mxu0 0
    %978 = vmatpush1.bf16.xpose.msra.mxu0 0
    %979 = vmatprep.subr.bf16.mxu0 0
    %980 = vmatpush1.bf16.xpose.msra.mxu0 0
    %981 = vmatprep.subr.bf16.mxu0 0
    %982 = vmatpush1.bf16.xpose.msra.mxu0 0
    %983 = vmatprep.subr.bf16.mxu0 0
    %984 = vmatpush1.bf16.xpose.msra.mxu0 0
    %985 = vmatprep.subr.bf16.mxu0 0
    %986 = vmatpush1.bf16.xpose.msra.mxu0 0
    %987 = vmatprep.subr.bf16.mxu0 0
    %988 = vmatpush1.bf16.xpose.msra.mxu0 0
    %989 = vmatprep.subr.bf16.mxu0 0
    %990 = vmatpush1.bf16.xpose.msra.mxu0 0
    %991 = vmatprep.subr.bf16.mxu0 0
    %992 = vmatpush1.bf16.xpose.msra.mxu0 0
    %993 = vmatprep.subr.bf16.mxu0 0
    %994 = vmatpush1.bf16.xpose.msra.mxu0 0
    %995 = vmatprep.subr.bf16.mxu0 0
    %996 = vmatpush1.bf16.xpose.msra.mxu0 0
    %997 = vmatprep.subr.bf16.mxu0 0
    %998 = vmatpush1.bf16.xpose.msra.mxu0 0
    %999 = vmatprep.subr.bf16.mxu0 0
    %1000 = vmatpush1.bf16.xpose.msra.mxu0 0
    %1001 = vmatprep.mubr.bf16.mxu0 0
    %1002 = vmatmul.mubr.bf16.gmra.mrb[0].mxu0 %v958
    %v1003 = vpop.f32.mrb[0].mxu0
    %v1004 = vadd.f32 0.0, %v1003
    %v1005 = vpop.f32.mrb[0].mxu0
    %v1006 = vpop.f32.mrb[0].mxu0
    %v1007 = vadd.f32 0.0, %v1006
    %v1008 = vpop.f32.mrb[0].mxu0
    %1009 = vmatprep.mubr.bf16.mxu0 0
    %1010 = vmatmul.mubr.bf16.gmra.mrb[0].mxu0 %v961
    %v1011 = vpop.f32.mrb[0].mxu0
    %v1012 = vadd.f32 0.0, %v1011
    %v1013 = vpop.f32.mrb[0].mxu0
    %v1014 = vpop.f32.mrb[0].mxu0
    %v1015 = vpop.f32.mrb[0].mxu0
    %1016 = vdwg.mxu0
    %v1017 = vmul.f32 %v824, 0.25
    %v1018 = vmul.f32 %v827, 0.25
    %v1019 = vmul.f32 %v832, 0.25
    %v1020 = vmul.f32 %v884, 0.25
    %v1021 = vmul.f32 %v887, 0.25
    %v1022 = vmul.f32 %v892, 0.25
    %v1023 = vmul.f32 %v944, 0.25
    %v1024 = vmul.f32 %v947, 0.25
    %v1025 = vmul.f32 %v952, 0.25
    %v1026 = vmul.f32 %v1004, 0.25
    %v1027 = vmul.f32 %v1007, 0.25
    %v1028 = vmul.f32 %v1012, 0.25
    %v1029 = vadd.f32 %v1017, %v268
    %v1030 = vadd.f32 %v1018, %v268
    %v1031 = vadd.f32 %v1019, %v268
    %v1032 = vadd.f32 %v1020, %v268
    %v1033 = vadd.f32 %v1021, %v268
    %v1034 = vadd.f32 %v1022, %v268
    %v1035 = vadd.f32 %v1023, %v268
    %v1036 = vadd.f32 %v1024, %v268
    %v1037 = vadd.f32 %v1025, %v268
    %v1038 = vadd.f32 %v1026, %v268
    %v1039 = vadd.f32 %v1027, %v268
    %v1040 = vadd.f32 %v1028, %v268
    %vm1041 = vcmask 195584
    %v1042 = vsel %vm1041, %v1029, -inf
    %1043 = vmax.xlane.f32.xlu0 %v1042
    %v1044 = vpop.xlane.xlu0 %1043
    %v1045 = vsel %vm1041, %v1030, -inf
    %1046 = vmax.xlane.f32.xlu0 %v1045
    %v1047 = vpop.xlane.xlu0 %1046
    %v1048 = vsel %vm1041, %v1031, -inf
    %1049 = vmax.xlane.f32.xlu0 %v1048
    %v1050 = vpop.xlane.xlu0 %1049
    %v1051 = vsel %vm1041, %v1032, -inf
    %1052 = vmax.xlane.f32.xlu0 %v1051
    %v1053 = vpop.xlane.xlu0 %1052
    %v1054 = vsel %vm1041, %v1033, -inf
    %1055 = vmax.xlane.f32.xlu0 %v1054
    %v1056 = vpop.xlane.xlu0 %1055
    %v1057 = vsel %vm1041, %v1034, -inf
    %1058 = vmax.xlane.f32.xlu0 %v1057
    %v1059 = vpop.xlane.xlu0 %1058
    %v1060 = vsel %vm1041, %v1035, -inf
    %1061 = vmax.xlane.f32.xlu0 %v1060
    %v1062 = vpop.xlane.xlu0 %1061
    %v1063 = vsel %vm1041, %v1036, -inf
    %1064 = vmax.xlane.f32.xlu0 %v1063
    %v1065 = vpop.xlane.xlu0 %1064
    %v1066 = vsel %vm1041, %v1037, -inf
    %1067 = vmax.xlane.f32.xlu0 %v1066
    %v1068 = vpop.xlane.xlu0 %1067
    %v1069 = vsel %vm1041, %v1038, -inf
    %1070 = vmax.xlane.f32.xlu0 %v1069
    %v1071 = vpop.xlane.xlu0 %1070
    %v1072 = vsel %vm1041, %v1039, -inf
    %1073 = vmax.xlane.f32.xlu0 %v1072
    %v1074 = vpop.xlane.xlu0 %1073
    %v1075 = vsel %vm1041, %v1040, -inf
    %1076 = vmax.xlane.f32.xlu0 %v1075
    %v1077 = vpop.xlane.xlu0 %1076
    %v1078 = vsub.f32 %v1029, %v1044
    %v1079 = vsub.f32 %v1030, %v1047
    %v1080 = vsub.f32 %v1031, %v1050
    %v1081 = vsub.f32 %v1032, %v1053
    %v1082 = vsub.f32 %v1033, %v1056
    %v1083 = vsub.f32 %v1034, %v1059
    %v1084 = vsub.f32 %v1035, %v1062
    %v1085 = vsub.f32 %v1036, %v1065
    %v1086 = vsub.f32 %v1037, %v1068
    %v1087 = vsub.f32 %v1038, %v1071
    %v1088 = vsub.f32 %v1039, %v1074
    %v1089 = vsub.f32 %v1040, %v1077
    %v1090 = vmul.f32 %v1078, 1.442695
    %v1091 = vpow.pop %v1090
    %v1092 = vmul.f32 %v1079, 1.442695
    %v1093 = vpow.pop %v1092
    %v1094 = vmul.f32 %v1080, 1.442695
    %v1095 = vpow.pop %v1094
    %v1096 = vmul.f32 %v1081, 1.442695
    %v1097 = vpow.pop %v1096
    %v1098 = vmul.f32 %v1082, 1.442695
    %v1099 = vpow.pop %v1098
    %v1100 = vmul.f32 %v1083, 1.442695
    %v1101 = vpow.pop %v1100
    %v1102 = vmul.f32 %v1084, 1.442695
    %v1103 = vpow.pop %v1102
    %v1104 = vmul.f32 %v1085, 1.442695
    %v1105 = vpow.pop %v1104
    %v1106 = vmul.f32 %v1086, 1.442695
    %v1107 = vpow.pop %v1106
    %v1108 = vmul.f32 %v1087, 1.442695
    %v1109 = vpow.pop %v1108
    %v1110 = vmul.f32 %v1088, 1.442695
    %v1111 = vpow.pop %v1110
    %v1112 = vmul.f32 %v1089, 1.442695
    %v1113 = vpow.pop %v1112
    %v1114 = vsel %vm1041, %v1091, 0.0
    %1115 = vadd.xlane.f32.xlu0 %v1114
    %v1116 = vpop.xlane.xlu0 %1115
    %v1117 = vsel %vm1041, %v1093, 0.0
    %1118 = vadd.xlane.f32.xlu0 %v1117
    %v1119 = vpop.xlane.xlu0 %1118
    %v1120 = vsel %vm1041, %v1095, 0.0
    %1121 = vadd.xlane.f32.xlu0 %v1120
    %v1122 = vpop.xlane.xlu0 %1121
    %v1123 = vsel %vm1041, %v1097, 0.0
    %1124 = vadd.xlane.f32.xlu0 %v1123
    %v1125 = vpop.xlane.xlu0 %1124
    %v1126 = vsel %vm1041, %v1099, 0.0
    %1127 = vadd.xlane.f32.xlu0 %v1126
    %v1128 = vpop.xlane.xlu0 %1127
    %v1129 = vsel %vm1041, %v1101, 0.0
    %1130 = vadd.xlane.f32.xlu0 %v1129
    %v1131 = vpop.xlane.xlu0 %1130
    %v1132 = vsel %vm1041, %v1103, 0.0
    %1133 = vadd.xlane.f32.xlu0 %v1132
    %v1134 = vpop.xlane.xlu0 %1133
    %v1135 = vsel %vm1041, %v1105, 0.0
    %1136 = vadd.xlane.f32.xlu0 %v1135
    %v1137 = vpop.xlane.xlu0 %1136
    %v1138 = vsel %vm1041, %v1107, 0.0
    %1139 = vadd.xlane.f32.xlu0 %v1138
    %v1140 = vpop.xlane.xlu0 %1139
    %v1141 = vsel %vm1041, %v1109, 0.0
    %1142 = vadd.xlane.f32.xlu0 %v1141
    %v1143 = vpop.xlane.xlu0 %1142
    %v1144 = vsel %vm1041, %v1111, 0.0
    %1145 = vadd.xlane.f32.xlu0 %v1144
    %v1146 = vpop.xlane.xlu0 %1145
    %v1147 = vsel %vm1041, %v1113, 0.0
    %1148 = vadd.xlane.f32.xlu0 %v1147
    %v1149 = vpop.xlane.xlu0 %1148
    %v1150 = vrcp.pop %v1116
    %v1151 = vrcp.pop %v1119
    %v1152 = vrcp.pop %v1122
    %v1153 = vrcp.pop %v1125
    %v1154 = vrcp.pop %v1128
    %v1155 = vrcp.pop %v1131
    %v1156 = vrcp.pop %v1134
    %v1157 = vrcp.pop %v1137
    %v1158 = vrcp.pop %v1140
    %v1159 = vrcp.pop %v1143
    %v1160 = vrcp.pop %v1146
    %v1161 = vrcp.pop %v1149
    %v1162 = vmul.f32 %v1091, %v1150
    %v1163 = vmul.f32 %v1093, %v1151
    %v1164 = vmul.f32 %v1095, %v1152
    %v1165 = vmul.f32 %v1097, %v1153
    %v1166 = vmul.f32 %v1099, %v1154
    %v1167 = vmul.f32 %v1101, %v1155
    %v1168 = vmul.f32 %v1103, %v1156
    %v1169 = vmul.f32 %v1105, %v1157
    %v1170 = vmul.f32 %v1107, %v1158
    %v1171 = vmul.f32 %v1109, %v1159
    %v1172 = vmul.f32 %v1111, %v1160
    %v1173 = vmul.f32 %v1113, %v1161
    %v1174 = vpack.c.bf16 %v1163, %v1162
    %v1175 = vpack.c.bf16 %v1164, %v1164
    %v1176 = vpack.c.bf16 %v1166, %v1165
    %v1177 = vpack.c.bf16 %v1167, %v1167
    %v1178 = vpack.c.bf16 %v1169, %v1168
    %v1179 = vpack.c.bf16 %v1170, %v1170
    %v1180 = vpack.c.bf16 %v1172, %v1171
    %v1181 = vpack.c.bf16 %v1173, %v1173
    %v1182 = vpack.c.bf16 %v717, %v714
    %v1183 = vpack.c.bf16 %v722, %v722
    %v1184 = vpack.c.bf16 %v730, %v725
    %v1185 = vpack.c.bf16 %v733, %v733
    %v1186 = vpack.c.bf16 %v741, %v738
    %v1187 = vpack.c.bf16 %v746, %v746
    %v1188 = vpack.c.bf16 %v754, %v749
    %v1189 = vpack.c.bf16 %v757, %v757
    %v1191 = vsel %vm1041, %v1174, 0
    %v1194 = vsel %vm1041, %v1175, 0
    %vm1196 = vcmask 1043456
    %v1198 = vsel %vm1196, %v1183, 0
    %1200 = vmatprep.subr.bf16.mxu0 0
    %1201 = vmatpush1.bf16.msra.mxu0 %v1182
    %1202 = vmatprep.subr.bf16.mxu0 0
    %1203 = vmatpush1.bf16.msra.mxu0 %v1198
    %1204 = vmatprep.subr.bf16.mxu0 0
    %1205 = vmatpush1.bf16.msra.mxu0 0
    %1206 = vmatprep.subr.bf16.mxu0 0
    %1207 = vmatpush1.bf16.msra.mxu0 0
    %1208 = vmatprep.subr.bf16.mxu0 0
    %1209 = vmatpush1.bf16.msra.mxu0 0
    %1210 = vmatprep.subr.bf16.mxu0 0
    %1211 = vmatpush1.bf16.msra.mxu0 0
    %1212 = vmatprep.subr.bf16.mxu0 0
    %1213 = vmatpush1.bf16.msra.mxu0 0
    %1214 = vmatprep.subr.bf16.mxu0 0
    %1215 = vmatpush1.bf16.msra.mxu0 0
    %1216 = vmatprep.subr.bf16.mxu0 0
    %1217 = vmatpush1.bf16.msra.mxu0 0
    %1218 = vmatprep.subr.bf16.mxu0 0
    %1219 = vmatpush1.bf16.msra.mxu0 0
    %1220 = vmatprep.subr.bf16.mxu0 0
    %1221 = vmatpush1.bf16.msra.mxu0 0
    %1222 = vmatprep.subr.bf16.mxu0 0
    %1223 = vmatpush1.bf16.msra.mxu0 0
    %1224 = vmatprep.subr.bf16.mxu0 0
    %1225 = vmatpush1.bf16.msra.mxu0 0
    %1226 = vmatprep.subr.bf16.mxu0 0
    %1227 = vmatpush1.bf16.msra.mxu0 0
    %1228 = vmatprep.subr.bf16.mxu0 0
    %1229 = vmatpush1.bf16.msra.mxu0 0
    %1230 = vmatprep.subr.bf16.mxu0 0
    %1231 = vmatpush1.bf16.msra.mxu0 0
    %1232 = vmatprep.mubr.bf16.mxu0 0
    %1233 = vmatmul.mubr.bf16.gmra.mrb[0].mxu0 %v1191
    %v1234 = vpop.f32.mrb[0].mxu0
    %v1235 = vadd.f32 0.0, %v1234
    %v1236 = vpop.f32.mrb[0].mxu0
    %v1237 = vpop.f32.mrb[0].mxu0
    %v1238 = vadd.f32 0.0, %v1237
    %v1239 = vpop.f32.mrb[0].mxu0
    %1240 = vmatprep.mubr.bf16.mxu0 0
    %1241 = vmatmul.mubr.bf16.gmra.mrb[0].mxu0 %v1194
    %v1242 = vpop.f32.mrb[0].mxu0
    %v1243 = vadd.f32 0.0, %v1242
    %v1244 = vpop.f32.mrb[0].mxu0
    %v1245 = vpop.f32.mrb[0].mxu0
    %v1246 = vpop.f32.mrb[0].mxu0
    %1247 = vdwg.mxu0
    %v1249 = vsel %vm1041, %v1176, 0
    %v1252 = vsel %vm1041, %v1177, 0
    %v1255 = vsel %vm1196, %v1185, 0
    %1257 = vmatprep.subr.bf16.mxu0 0
    %1258 = vmatpush1.bf16.msra.mxu0 %v1184
    %1259 = vmatprep.subr.bf16.mxu0 0
    %1260 = vmatpush1.bf16.msra.mxu0 %v1255
    %1261 = vmatprep.subr.bf16.mxu0 0
    %1262 = vmatpush1.bf16.msra.mxu0 0
    %1263 = vmatprep.subr.bf16.mxu0 0
    %1264 = vmatpush1.bf16.msra.mxu0 0
    %1265 = vmatprep.subr.bf16.mxu0 0
    %1266 = vmatpush1.bf16.msra.mxu0 0
    %1267 = vmatprep.subr.bf16.mxu0 0
    %1268 = vmatpush1.bf16.msra.mxu0 0
    %1269 = vmatprep.subr.bf16.mxu0 0
    %1270 = vmatpush1.bf16.msra.mxu0 0
    %1271 = vmatprep.subr.bf16.mxu0 0
    %1272 = vmatpush1.bf16.msra.mxu0 0
    %1273 = vmatprep.subr.bf16.mxu0 0
    %1274 = vmatpush1.bf16.msra.mxu0 0
    %1275 = vmatprep.subr.bf16.mxu0 0
    %1276 = vmatpush1.bf16.msra.mxu0 0
    %1277 = vmatprep.subr.bf16.mxu0 0
    %1278 = vmatpush1.bf16.msra.mxu0 0
    %1279 = vmatprep.subr.bf16.mxu0 0
    %1280 = vmatpush1.bf16.msra.mxu0 0
    %1281 = vmatprep.subr.bf16.mxu0 0
    %1282 = vmatpush1.bf16.msra.mxu0 0
    %1283 = vmatprep.subr.bf16.mxu0 0
    %1284 = vmatpush1.bf16.msra.mxu0 0
    %1285 = vmatprep.subr.bf16.mxu0 0
    %1286 = vmatpush1.bf16.msra.mxu0 0
    %1287 = vmatprep.subr.bf16.mxu0 0
    %1288 = vmatpush1.bf16.msra.mxu0 0
    %1289 = vmatprep.mubr.bf16.mxu0 0
    %1290 = vmatmul.mubr.bf16.gmra.mrb[0].mxu0 %v1249
    %v1291 = vpop.f32.mrb[0].mxu0
    %v1292 = vadd.f32 0.0, %v1291
    %v1293 = vpop.f32.mrb[0].mxu0
    %v1294 = vpop.f32.mrb[0].mxu0
    %v1295 = vadd.f32 0.0, %v1294
    %v1296 = vpop.f32.mrb[0].mxu0
    %1297 = vmatprep.mubr.bf16.mxu0 0
    %1298 = vmatmul.mubr.bf16.gmra.mrb[0].mxu0 %v1252
    %v1299 = vpop.f32.mrb[0].mxu0
    %v1300 = vadd.f32 0.0, %v1299
    %v1301 = vpop.f32.mrb[0].mxu0
    %v1302 = vpop.f32.mrb[0].mxu0
    %v1303 = vpop.f32.mrb[0].mxu0
    %1304 = vdwg.mxu0
    %v1306 = vsel %vm1041, %v1178, 0
    %v1309 = vsel %vm1041, %v1179, 0
    %v1312 = vsel %vm1196, %v1187, 0
    %1314 = vmatprep.subr.bf16.mxu0 0
    %1315 = vmatpush1.bf16.msra.mxu0 %v1186
    %1316 = vmatprep.subr.bf16.mxu0 0
    %1317 = vmatpush1.bf16.msra.mxu0 %v1312
    %1318 = vmatprep.subr.bf16.mxu0 0
    %1319 = vmatpush1.bf16.msra.mxu0 0
    %1320 = vmatprep.subr.bf16.mxu0 0
    %1321 = vmatpush1.bf16.msra.mxu0 0
    %1322 = vmatprep.subr.bf16.mxu0 0
    %1323 = vmatpush1.bf16.msra.mxu0 0
    %1324 = vmatprep.subr.bf16.mxu0 0
    %1325 = vmatpush1.bf16.msra.mxu0 0
    %1326 = vmatprep.subr.bf16.mxu0 0
    %1327 = vmatpush1.bf16.msra.mxu0 0
    %1328 = vmatprep.subr.bf16.mxu0 0
    %1329 = vmatpush1.bf16.msra.mxu0 0
    %1330 = vmatprep.subr.bf16.mxu0 0
    %1331 = vmatpush1.bf16.msra.mxu0 0
    %1332 = vmatprep.subr.bf16.mxu0 0
    %1333 = vmatpush1.bf16.msra.mxu0 0
    %1334 = vmatprep.subr.bf16.mxu0 0
    %1335 = vmatpush1.bf16.msra.mxu0 0
    %1336 = vmatprep.subr.bf16.mxu0 0
    %1337 = vmatpush1.bf16.msra.mxu0 0
    %1338 = vmatprep.subr.bf16.mxu0 0
    %1339 = vmatpush1.bf16.msra.mxu0 0
    %1340 = vmatprep.subr.bf16.mxu0 0
    %1341 = vmatpush1.bf16.msra.mxu0 0
    %1342 = vmatprep.subr.bf16.mxu0 0
    %1343 = vmatpush1.bf16.msra.mxu0 0
    %1344 = vmatprep.subr.bf16.mxu0 0
    %1345 = vmatpush1.bf16.msra.mxu0 0
    %1346 = vmatprep.mubr.bf16.mxu0 0
    %1347 = vmatmul.mubr.bf16.gmra.mrb[0].mxu0 %v1306
    %v1348 = vpop.f32.mrb[0].mxu0
    %v1349 = vadd.f32 0.0, %v1348
    %v1350 = vpop.f32.mrb[0].mxu0
    %v1351 = vpop.f32.mrb[0].mxu0
    %v1352 = vadd.f32 0.0, %v1351
    %v1353 = vpop.f32.mrb[0].mxu0
    %1354 = vmatprep.mubr.bf16.mxu0 0
    %1355 = vmatmul.mubr.bf16.gmra.mrb[0].mxu0 %v1309
    %v1356 = vpop.f32.mrb[0].mxu0
    %v1357 = vadd.f32 0.0, %v1356
    %v1358 = vpop.f32.mrb[0].mxu0
    %v1359 = vpop.f32.mrb[0].mxu0
    %v1360 = vpop.f32.mrb[0].mxu0
    %1361 = vdwg.mxu0
    %v1363 = vsel %vm1041, %v1180, 0
    %v1366 = vsel %vm1041, %v1181, 0
    %v1369 = vsel %vm1196, %v1189, 0
    %1371 = vmatprep.subr.bf16.mxu0 0
    %1372 = vmatpush1.bf16.msra.mxu0 %v1188
    %1373 = vmatprep.subr.bf16.mxu0 0
    %1374 = vmatpush1.bf16.msra.mxu0 %v1369
    %1375 = vmatprep.subr.bf16.mxu0 0
    %1376 = vmatpush1.bf16.msra.mxu0 0
    %1377 = vmatprep.subr.bf16.mxu0 0
    %1378 = vmatpush1.bf16.msra.mxu0 0
    %1379 = vmatprep.subr.bf16.mxu0 0
    %1380 = vmatpush1.bf16.msra.mxu0 0
    %1381 = vmatprep.subr.bf16.mxu0 0
    %1382 = vmatpush1.bf16.msra.mxu0 0
    %1383 = vmatprep.subr.bf16.mxu0 0
    %1384 = vmatpush1.bf16.msra.mxu0 0
    %1385 = vmatprep.subr.bf16.mxu0 0
    %1386 = vmatpush1.bf16.msra.mxu0 0
    %1387 = vmatprep.subr.bf16.mxu0 0
    %1388 = vmatpush1.bf16.msra.mxu0 0
    %1389 = vmatprep.subr.bf16.mxu0 0
    %1390 = vmatpush1.bf16.msra.mxu0 0
    %1391 = vmatprep.subr.bf16.mxu0 0
    %1392 = vmatpush1.bf16.msra.mxu0 0
    %1393 = vmatprep.subr.bf16.mxu0 0
    %1394 = vmatpush1.bf16.msra.mxu0 0
    %1395 = vmatprep.subr.bf16.mxu0 0
    %1396 = vmatpush1.bf16.msra.mxu0 0
    %1397 = vmatprep.subr.bf16.mxu0 0
    %1398 = vmatpush1.bf16.msra.mxu0 0
    %1399 = vmatprep.subr.bf16.mxu0 0
    %1400 = vmatpush1.bf16.msra.mxu0 0
    %1401 = vmatprep.subr.bf16.mxu0 0
    %1402 = vmatpush1.bf16.msra.mxu0 0
    %1403 = vmatprep.mubr.bf16.mxu0 0
    %1404 = vmatmul.mubr.bf16.gmra.mrb[0].mxu0 %v1363
    %v1405 = vpop.f32.mrb[0].mxu0
    %v1406 = vadd.f32 0.0, %v1405
    %v1407 = vpop.f32.mrb[0].mxu0
    %v1408 = vpop.f32.mrb[0].mxu0
    %v1409 = vadd.f32 0.0, %v1408
    %v1410 = vpop.f32.mrb[0].mxu0
    %1411 = vmatprep.mubr.bf16.mxu0 0
    %1412 = vmatmul.mubr.bf16.gmra.mrb[0].mxu0 %v1366
    %v1413 = vpop.f32.mrb[0].mxu0
    %v1414 = vadd.f32 0.0, %v1413
    %v1415 = vpop.f32.mrb[0].mxu0
    %v1416 = vpop.f32.mrb[0].mxu0
    %v1417 = vpop.f32.mrb[0].mxu0
    %1418 = vdwg.mxu0
    %v1419 = vpack.c.bf16 %v1238, %v1235
    %v1420 = vpack.c.bf16 %v1292, %v1243
    %v1421 = vpack.c.bf16 %v1300, %v1295
    %v1422 = vpack.c.bf16 %v1352, %v1349
    %v1423 = vpack.c.bf16 %v1406, %v1357
    %v1424 = vpack.c.bf16 %v1414, %v1409
    %v1425 = vld [vmem:[%s17] sm:$0xf]
    %v1426 = vld [vmem:[%s17 + $0x4] sm:$0xf]
    %s1427 = scalar_lea.vmem %s13, 16
    %v1428 = vld [vmem:[%s1427] sm:$0xf]
    %v1429 = vld [vmem:[%s1427 + $0x4] sm:$0xf]
    %v1430 = vld [vmem:[%s1427 + $0x8] sm:$0xf]
    %v1431 = vld [vmem:[%s1427 + $0xc] sm:$0xf]
    %s1432 = scalar_lea.vmem %s15, 1
    %v1433 = vld [vmem:[%s1432] sm:$0x1]
    %v1435 = vlaneseq
    %v1436 = vshrl.u32 %v1435, 7
    %v1437 = vsub.s32 0, %v1436
    %v1438 = vrot.slane %v1433, %v1437
    %v1444 = vunpack.c.l.b16 %v1428
    %v1445 = vunpack.c.l.b16 %v1429
    %v1446 = vunpack.c.l.b16 %v1430
    %v1447 = vunpack.c.l.b16 %v1431
    %v1448 = vpack.c.b16 %v1445, %v1444
    %v1449 = vpack.c.b16 %v1447, %v1446
    %1452 = vmatprep.subr.bf16.mxu0 0
    %1453 = vmatpush1.bf16.msra.mxu0 %v1448
    %1454 = vmatprep.subr.bf16.mxu0 0
    %1455 = vmatpush1.bf16.msra.mxu0 %v1449
    %1456 = vmatprep.subr.bf16.mxu0 0
    %1457 = vmatpush1.bf16.msra.mxu0 0
    %1458 = vmatprep.subr.bf16.mxu0 0
    %1459 = vmatpush1.bf16.msra.mxu0 0
    %1460 = vmatprep.subr.bf16.mxu0 0
    %1461 = vmatpush1.bf16.msra.mxu0 0
    %1462 = vmatprep.subr.bf16.mxu0 0
    %1463 = vmatpush1.bf16.msra.mxu0 0
    %1464 = vmatprep.subr.bf16.mxu0 0
    %1465 = vmatpush1.bf16.msra.mxu0 0
    %1466 = vmatprep.subr.bf16.mxu0 0
    %1467 = vmatpush1.bf16.msra.mxu0 0
    %1468 = vmatprep.subr.bf16.mxu0 0
    %1469 = vmatpush1.bf16.msra.mxu0 0
    %1470 = vmatprep.subr.bf16.mxu0 0
    %1471 = vmatpush1.bf16.msra.mxu0 0
    %1472 = vmatprep.subr.bf16.mxu0 0
    %1473 = vmatpush1.bf16.msra.mxu0 0
    %1474 = vmatprep.subr.bf16.mxu0 0
    %1475 = vmatpush1.bf16.msra.mxu0 0
    %1476 = vmatprep.subr.bf16.mxu0 0
    %1477 = vmatpush1.bf16.msra.mxu0 0
    %1478 = vmatprep.subr.bf16.mxu0 0
    %1479 = vmatpush1.bf16.msra.mxu0 0
    %1480 = vmatprep.subr.bf16.mxu0 0
    %1481 = vmatpush1.bf16.msra.mxu0 0
    %1482 = vmatprep.subr.bf16.mxu0 0
    %1483 = vmatpush1.bf16.msra.mxu0 0
    %1484 = vmatprep.mubr.bf16.mxu0 0
    %1485 = vmatmul.mubr.bf16.gmra.mrb[0].mxu0 %v450
    %v1486 = vpop.f32.mrb[0].mxu0
    %v1487 = vadd.f32 %v1438, %v1486
    %v1488 = vpop.f32.mrb[0].mxu0
    %v1489 = vpop.f32.mrb[0].mxu0
    %v1490 = vadd.f32 %v1438, %v1489
    %v1491 = vpop.f32.mrb[0].mxu0
    %1492 = vmatprep.mubr.bf16.mxu0 0
    %1493 = vmatmul.mubr.bf16.gmra.mrb[0].mxu0 %v453
    %v1494 = vpop.f32.mrb[0].mxu0
    %v1495 = vadd.f32 %v1438, %v1494
    %v1496 = vpop.f32.mrb[0].mxu0
    %v1497 = vpop.f32.mrb[0].mxu0
    %v1498 = vadd.f32 %v1438, %v1497
    %v1499 = vpop.f32.mrb[0].mxu0
    %1500 = vmatprep.mubr.bf16.mxu0 0
    %1501 = vmatmul.mubr.bf16.gmra.mrb[0].mxu0 %v456
    %v1502 = vpop.f32.mrb[0].mxu0
    %v1503 = vadd.f32 %v1438, %v1502
    %v1504 = vpop.f32.mrb[0].mxu0
    %v1505 = vpop.f32.mrb[0].mxu0
    %v1506 = vadd.f32 %v1438, %v1505
    %v1507 = vpop.f32.mrb[0].mxu0
    %1508 = vmatprep.mubr.bf16.mxu0 0
    %1509 = vmatmul.mubr.bf16.gmra.mrb[0].mxu0 %v459
    %v1510 = vpop.f32.mrb[0].mxu0
    %v1511 = vadd.f32 %v1438, %v1510
    %v1512 = vpop.f32.mrb[0].mxu0
    %v1513 = vpop.f32.mrb[0].mxu0
    %v1514 = vadd.f32 %v1438, %v1513
    %v1515 = vpop.f32.mrb[0].mxu0
    %1516 = vmatprep.mubr.bf16.mxu0 0
    %1517 = vmatmul.mubr.bf16.gmra.mrb[0].mxu0 %v462
    %v1518 = vpop.f32.mrb[0].mxu0
    %v1519 = vadd.f32 %v1438, %v1518
    %v1520 = vpop.f32.mrb[0].mxu0
    %v1521 = vpop.f32.mrb[0].mxu0
    %v1522 = vadd.f32 %v1438, %v1521
    %v1523 = vpop.f32.mrb[0].mxu0
    %1524 = vmatprep.mubr.bf16.mxu0 0
    %1525 = vmatmul.mubr.bf16.gmra.mrb[0].mxu0 %v465
    %v1526 = vpop.f32.mrb[0].mxu0
    %v1527 = vadd.f32 %v1438, %v1526
    %v1528 = vpop.f32.mrb[0].mxu0
    %v1529 = vpop.f32.mrb[0].mxu0
    %v1530 = vadd.f32 %v1438, %v1529
    %v1531 = vpop.f32.mrb[0].mxu0
    %1532 = vdwg.mxu0
    %s1533 = scalar_lea.vmem %s13, 48
    %v1534 = vld [vmem:[%s1533] sm:$0xf]
    %v1535 = vld [vmem:[%s1533 + $0x4] sm:$0xf]
    %v1536 = vld [vmem:[%s1533 + $0x8] sm:$0xf]
    %v1537 = vld [vmem:[%s1533 + $0xc] sm:$0xf]
    %s1538 = scalar_lea.vmem %s15, 3
    %v1539 = vld [vmem:[%s1538] sm:$0x1]
    %v1541 = vlaneseq
    %v1542 = vshrl.u32 %v1541, 7
    %v1543 = vsub.s32 0, %v1542
    %v1544 = vrot.slane %v1539, %v1543
    %v1550 = vunpack.c.l.b16 %v1534
    %v1551 = vunpack.c.l.b16 %v1535
    %v1552 = vunpack.c.l.b16 %v1536
    %v1553 = vunpack.c.l.b16 %v1537
    %v1554 = vpack.c.b16 %v1551, %v1550
    %v1555 = vpack.c.b16 %v1553, %v1552
    %1558 = vmatprep.subr.bf16.mxu0 0
    %1559 = vmatpush1.bf16.msra.mxu0 %v1554
    %1560 = vmatprep.subr.bf16.mxu0 0
    %1561 = vmatpush1.bf16.msra.mxu0 %v1555
    %1562 = vmatprep.subr.bf16.mxu0 0
    %1563 = vmatpush1.bf16.msra.mxu0 0
    %1564 = vmatprep.subr.bf16.mxu0 0
    %1565 = vmatpush1.bf16.msra.mxu0 0
    %1566 = vmatprep.subr.bf16.mxu0 0
    %1567 = vmatpush1.bf16.msra.mxu0 0
    %1568 = vmatprep.subr.bf16.mxu0 0
    %1569 = vmatpush1.bf16.msra.mxu0 0
    %1570 = vmatprep.subr.bf16.mxu0 0
    %1571 = vmatpush1.bf16.msra.mxu0 0
    %1572 = vmatprep.subr.bf16.mxu0 0
    %1573 = vmatpush1.bf16.msra.mxu0 0
    %1574 = vmatprep.subr.bf16.mxu0 0
    %1575 = vmatpush1.bf16.msra.mxu0 0
    %1576 = vmatprep.subr.bf16.mxu0 0
    %1577 = vmatpush1.bf16.msra.mxu0 0
    %1578 = vmatprep.subr.bf16.mxu0 0
    %1579 = vmatpush1.bf16.msra.mxu0 0
    %1580 = vmatprep.subr.bf16.mxu0 0
    %1581 = vmatpush1.bf16.msra.mxu0 0
    %1582 = vmatprep.subr.bf16.mxu0 0
    %1583 = vmatpush1.bf16.msra.mxu0 0
    %1584 = vmatprep.subr.bf16.mxu0 0
    %1585 = vmatpush1.bf16.msra.mxu0 0
    %1586 = vmatprep.subr.bf16.mxu0 0
    %1587 = vmatpush1.bf16.msra.mxu0 0
    %1588 = vmatprep.subr.bf16.mxu0 0
    %1589 = vmatpush1.bf16.msra.mxu0 0
    %1590 = vmatprep.mubr.bf16.mxu0 0
    %1591 = vmatmul.mubr.bf16.gmra.mrb[0].mxu0 %v450
    %v1592 = vpop.f32.mrb[0].mxu0
    %v1593 = vadd.f32 %v1544, %v1592
    %v1594 = vpop.f32.mrb[0].mxu0
    %v1595 = vpop.f32.mrb[0].mxu0
    %v1596 = vadd.f32 %v1544, %v1595
    %v1597 = vpop.f32.mrb[0].mxu0
    %1598 = vmatprep.mubr.bf16.mxu0 0
    %1599 = vmatmul.mubr.bf16.gmra.mrb[0].mxu0 %v453
    %v1600 = vpop.f32.mrb[0].mxu0
    %v1601 = vadd.f32 %v1544, %v1600
    %v1602 = vpop.f32.mrb[0].mxu0
    %v1603 = vpop.f32.mrb[0].mxu0
    %v1604 = vadd.f32 %v1544, %v1603
    %v1605 = vpop.f32.mrb[0].mxu0
    %1606 = vmatprep.mubr.bf16.mxu0 0
    %1607 = vmatmul.mubr.bf16.gmra.mrb[0].mxu0 %v456
    %v1608 = vpop.f32.mrb[0].mxu0
    %v1609 = vadd.f32 %v1544, %v1608
    %v1610 = vpop.f32.mrb[0].mxu0
    %v1611 = vpop.f32.mrb[0].mxu0
    %v1612 = vadd.f32 %v1544, %v1611
    %v1613 = vpop.f32.mrb[0].mxu0
    %1614 = vmatprep.mubr.bf16.mxu0 0
    %1615 = vmatmul.mubr.bf16.gmra.mrb[0].mxu0 %v459
    %v1616 = vpop.f32.mrb[0].mxu0
    %v1617 = vadd.f32 %v1544, %v1616
    %v1618 = vpop.f32.mrb[0].mxu0
    %v1619 = vpop.f32.mrb[0].mxu0
    %v1620 = vadd.f32 %v1544, %v1619
    %v1621 = vpop.f32.mrb[0].mxu0
    %1622 = vmatprep.mubr.bf16.mxu0 0
    %1623 = vmatmul.mubr.bf16.gmra.mrb[0].mxu0 %v462
    %v1624 = vpop.f32.mrb[0].mxu0
    %v1625 = vadd.f32 %v1544, %v1624
    %v1626 = vpop.f32.mrb[0].mxu0
    %v1627 = vpop.f32.mrb[0].mxu0
    %v1628 = vadd.f32 %v1544, %v1627
    %v1629 = vpop.f32.mrb[0].mxu0
    %1630 = vmatprep.mubr.bf16.mxu0 0
    %1631 = vmatmul.mubr.bf16.gmra.mrb[0].mxu0 %v465
    %v1632 = vpop.f32.mrb[0].mxu0
    %v1633 = vadd.f32 %v1544, %v1632
    %v1634 = vpop.f32.mrb[0].mxu0
    %v1635 = vpop.f32.mrb[0].mxu0
    %v1636 = vadd.f32 %v1544, %v1635
    %v1637 = vpop.f32.mrb[0].mxu0
    %1638 = vdwg.mxu0
    %s1639 = scalar_lea.vmem %s13, 80
    %v1640 = vld [vmem:[%s1639] sm:$0xf]
    %v1641 = vld [vmem:[%s1639 + $0x4] sm:$0xf]
    %v1642 = vld [vmem:[%s1639 + $0x8] sm:$0xf]
    %v1643 = vld [vmem:[%s1639 + $0xc] sm:$0xf]
    %s1644 = scalar_lea.vmem %s15, 5
    %v1645 = vld [vmem:[%s1644] sm:$0x1]
    %v1647 = vlaneseq
    %v1648 = vshrl.u32 %v1647, 7
    %v1649 = vsub.s32 0, %v1648
    %v1650 = vrot.slane %v1645, %v1649
    %v1656 = vunpack.c.l.b16 %v1640
    %v1657 = vunpack.c.l.b16 %v1641
    %v1658 = vunpack.c.l.b16 %v1642
    %v1659 = vunpack.c.l.b16 %v1643
    %v1660 = vpack.c.b16 %v1657, %v1656
    %v1661 = vpack.c.b16 %v1659, %v1658
    %1664 = vmatprep.subr.bf16.mxu0 0
    %1665 = vmatpush1.bf16.msra.mxu0 %v1660
    %1666 = vmatprep.subr.bf16.mxu0 0
    %1667 = vmatpush1.bf16.msra.mxu0 %v1661
    %1668 = vmatprep.subr.bf16.mxu0 0
    %1669 = vmatpush1.bf16.msra.mxu0 0
    %1670 = vmatprep.subr.bf16.mxu0 0
    %1671 = vmatpush1.bf16.msra.mxu0 0
    %1672 = vmatprep.subr.bf16.mxu0 0
    %1673 = vmatpush1.bf16.msra.mxu0 0
    %1674 = vmatprep.subr.bf16.mxu0 0
    %1675 = vmatpush1.bf16.msra.mxu0 0
    %1676 = vmatprep.subr.bf16.mxu0 0
    %1677 = vmatpush1.bf16.msra.mxu0 0
    %1678 = vmatprep.subr.bf16.mxu0 0
    %1679 = vmatpush1.bf16.msra.mxu0 0
    %1680 = vmatprep.subr.bf16.mxu0 0
    %1681 = vmatpush1.bf16.msra.mxu0 0
    %1682 = vmatprep.subr.bf16.mxu0 0
    %1683 = vmatpush1.bf16.msra.mxu0 0
    %1684 = vmatprep.subr.bf16.mxu0 0
    %1685 = vmatpush1.bf16.msra.mxu0 0
    %1686 = vmatprep.subr.bf16.mxu0 0
    %1687 = vmatpush1.bf16.msra.mxu0 0
    %1688 = vmatprep.subr.bf16.mxu0 0
    %1689 = vmatpush1.bf16.msra.mxu0 0
    %1690 = vmatprep.subr.bf16.mxu0 0
    %1691 = vmatpush1.bf16.msra.mxu0 0
    %1692 = vmatprep.subr.bf16.mxu0 0
    %1693 = vmatpush1.bf16.msra.mxu0 0
    %1694 = vmatprep.subr.bf16.mxu0 0
    %1695 = vmatpush1.bf16.msra.mxu0 0
    %1696 = vmatprep.mubr.bf16.mxu0 0
    %1697 = vmatmul.mubr.bf16.gmra.mrb[0].mxu0 %v450
    %v1698 = vpop.f32.mrb[0].mxu0
    %v1699 = vadd.f32 %v1650, %v1698
    %v1700 = vpop.f32.mrb[0].mxu0
    %v1701 = vpop.f32.mrb[0].mxu0
    %v1702 = vadd.f32 %v1650, %v1701
    %v1703 = vpop.f32.mrb[0].mxu0
    %1704 = vmatprep.mubr.bf16.mxu0 0
    %1705 = vmatmul.mubr.bf16.gmra.mrb[0].mxu0 %v453
    %v1706 = vpop.f32.mrb[0].mxu0
    %v1707 = vadd.f32 %v1650, %v1706
    %v1708 = vpop.f32.mrb[0].mxu0
    %v1709 = vpop.f32.mrb[0].mxu0
    %v1710 = vadd.f32 %v1650, %v1709
    %v1711 = vpop.f32.mrb[0].mxu0
    %1712 = vmatprep.mubr.bf16.mxu0 0
    %1713 = vmatmul.mubr.bf16.gmra.mrb[0].mxu0 %v456
    %v1714 = vpop.f32.mrb[0].mxu0
    %v1715 = vadd.f32 %v1650, %v1714
    %v1716 = vpop.f32.mrb[0].mxu0
    %v1717 = vpop.f32.mrb[0].mxu0
    %v1718 = vadd.f32 %v1650, %v1717
    %v1719 = vpop.f32.mrb[0].mxu0
    %1720 = vmatprep.mubr.bf16.mxu0 0
    %1721 = vmatmul.mubr.bf16.gmra.mrb[0].mxu0 %v459
    %v1722 = vpop.f32.mrb[0].mxu0
    %v1723 = vadd.f32 %v1650, %v1722
    %v1724 = vpop.f32.mrb[0].mxu0
    %v1725 = vpop.f32.mrb[0].mxu0
    %v1726 = vadd.f32 %v1650, %v1725
    %v1727 = vpop.f32.mrb[0].mxu0
    %1728 = vmatprep.mubr.bf16.mxu0 0
    %1729 = vmatmul.mubr.bf16.gmra.mrb[0].mxu0 %v462
    %v1730 = vpop.f32.mrb[0].mxu0
    %v1731 = vadd.f32 %v1650, %v1730
    %v1732 = vpop.f32.mrb[0].mxu0
    %v1733 = vpop.f32.mrb[0].mxu0
    %v1734 = vadd.f32 %v1650, %v1733
    %v1735 = vpop.f32.mrb[0].mxu0
    %1736 = vmatprep.mubr.bf16.mxu0 0
    %1737 = vmatmul.mubr.bf16.gmra.mrb[0].mxu0 %v465
    %v1738 = vpop.f32.mrb[0].mxu0
    %v1739 = vadd.f32 %v1650, %v1738
    %v1740 = vpop.f32.mrb[0].mxu0
    %v1741 = vpop.f32.mrb[0].mxu0
    %v1742 = vadd.f32 %v1650, %v1741
    %v1743 = vpop.f32.mrb[0].mxu0
    %1744 = vdwg.mxu0
    %v1745 = vpack.c.bf16 %v1490, %v1487
    %v1746 = vpack.c.bf16 %v1495, %v1495
    %v1747 = vpack.c.bf16 %v1503, %v1498
    %v1748 = vpack.c.bf16 %v1506, %v1506
    %v1749 = vpack.c.bf16 %v1514, %v1511
    %v1750 = vpack.c.bf16 %v1519, %v1519
    %v1751 = vpack.c.bf16 %v1527, %v1522
    %v1752 = vpack.c.bf16 %v1530, %v1530
    %v1753 = vpack.c.bf16 %v1596, %v1593
    %v1754 = vpack.c.bf16 %v1601, %v1601
    %v1755 = vpack.c.bf16 %v1609, %v1604
    %v1756 = vpack.c.bf16 %v1612, %v1612
    %v1757 = vpack.c.bf16 %v1620, %v1617
    %v1758 = vpack.c.bf16 %v1625, %v1625
    %v1759 = vpack.c.bf16 %v1633, %v1628
    %v1760 = vpack.c.bf16 %v1636, %v1636
    %v1762 = vsel %vm776, %v1745, 0
    %v1765 = vsel %vm776, %v1746, 0
    %v1768 = vsel %vm776, %v1753, 0
    %v1771 = vsel %vm776, %v1754, 0
    %1773 = vmatprep.subr.bf16.mxu0 0
    %1774 = vmatpush1.bf16.xpose.msra.mxu0 %v1768
    %1775 = vmatprep.subr.bf16.mxu0 0
    %1776 = vmatpush1.bf16.xpose.msra.mxu0 %v1771
    %1777 = vmatprep.subr.bf16.mxu0 0
    %1778 = vmatpush1.bf16.xpose.msra.mxu0 0
    %1779 = vmatprep.subr.bf16.mxu0 0
    %1780 = vmatpush1.bf16.xpose.msra.mxu0 0
    %1781 = vmatprep.subr.bf16.mxu0 0
    %1782 = vmatpush1.bf16.xpose.msra.mxu0 0
    %1783 = vmatprep.subr.bf16.mxu0 0
    %1784 = vmatpush1.bf16.xpose.msra.mxu0 0
    %1785 = vmatprep.subr.bf16.mxu0 0
    %1786 = vmatpush1.bf16.xpose.msra.mxu0 0
    %1787 = vmatprep.subr.bf16.mxu0 0
    %1788 = vmatpush1.bf16.xpose.msra.mxu0 0
    %1789 = vmatprep.subr.bf16.mxu0 0
    %1790 = vmatpush1.bf16.xpose.msra.mxu0 0
    %1791 = vmatprep.subr.bf16.mxu0 0
    %1792 = vmatpush1.bf16.xpose.msra.mxu0 0
    %1793 = vmatprep.subr.bf16.mxu0 0
    %1794 = vmatpush1.bf16.xpose.msra.mxu0 0
    %1795 = vmatprep.subr.bf16.mxu0 0
    %1796 = vmatpush1.bf16.xpose.msra.mxu0 0
    %1797 = vmatprep.subr.bf16.mxu0 0
    %1798 = vmatpush1.bf16.xpose.msra.mxu0 0
    %1799 = vmatprep.subr.bf16.mxu0 0
    %1800 = vmatpush1.bf16.xpose.msra.mxu0 0
    %1801 = vmatprep.subr.bf16.mxu0 0
    %1802 = vmatpush1.bf16.xpose.msra.mxu0 0
    %1803 = vmatprep.subr.bf16.mxu0 0
    %1804 = vmatpush1.bf16.xpose.msra.mxu0 0
    %1805 = vmatprep.mubr.bf16.mxu0 0
    %1806 = vmatmul.mubr.bf16.gmra.mrb[0].mxu0 %v1762
    %v1807 = vpop.f32.mrb[0].mxu0
    %v1808 = vadd.f32 0.0, %v1807
    %v1809 = vpop.f32.mrb[0].mxu0
    %v1810 = vpop.f32.mrb[0].mxu0
    %v1811 = vadd.f32 0.0, %v1810
    %v1812 = vpop.f32.mrb[0].mxu0
    %1813 = vmatprep.mubr.bf16.mxu0 0
    %1814 = vmatmul.mubr.bf16.gmra.mrb[0].mxu0 %v1765
    %v1815 = vpop.f32.mrb[0].mxu0
    %v1816 = vadd.f32 0.0, %v1815
    %v1817 = vpop.f32.mrb[0].mxu0
    %v1818 = vpop.f32.mrb[0].mxu0
    %v1819 = vpop.f32.mrb[0].mxu0
    %1820 = vdwg.mxu0
    %v1822 = vsel %vm776, %v1747, 0
    %v1825 = vsel %vm776, %v1748, 0
    %v1828 = vsel %vm776, %v1755, 0
    %v1831 = vsel %vm776, %v1756, 0
    %1833 = vmatprep.subr.bf16.mxu0 0
    %1834 = vmatpush1.bf16.xpose.msra.mxu0 %v1828
    %1835 = vmatprep.subr.bf16.mxu0 0
    %1836 = vmatpush1.bf16.xpose.msra.mxu0 %v1831
    %1837 = vmatprep.subr.bf16.mxu0 0
    %1838 = vmatpush1.bf16.xpose.msra.mxu0 0
    %1839 = vmatprep.subr.bf16.mxu0 0
    %1840 = vmatpush1.bf16.xpose.msra.mxu0 0
    %1841 = vmatprep.subr.bf16.mxu0 0
    %1842 = vmatpush1.bf16.xpose.msra.mxu0 0
    %1843 = vmatprep.subr.bf16.mxu0 0
    %1844 = vmatpush1.bf16.xpose.msra.mxu0 0
    %1845 = vmatprep.subr.bf16.mxu0 0
    %1846 = vmatpush1.bf16.xpose.msra.mxu0 0
    %1847 = vmatprep.subr.bf16.mxu0 0
    %1848 = vmatpush1.bf16.xpose.msra.mxu0 0
    %1849 = vmatprep.subr.bf16.mxu0 0
    %1850 = vmatpush1.bf16.xpose.msra.mxu0 0
    %1851 = vmatprep.subr.bf16.mxu0 0
    %1852 = vmatpush1.bf16.xpose.msra.mxu0 0
    %1853 = vmatprep.subr.bf16.mxu0 0
    %1854 = vmatpush1.bf16.xpose.msra.mxu0 0
    %1855 = vmatprep.subr.bf16.mxu0 0
    %1856 = vmatpush1.bf16.xpose.msra.mxu0 0
    %1857 = vmatprep.subr.bf16.mxu0 0
    %1858 = vmatpush1.bf16.xpose.msra.mxu0 0
    %1859 = vmatprep.subr.bf16.mxu0 0
    %1860 = vmatpush1.bf16.xpose.msra.mxu0 0
    %1861 = vmatprep.subr.bf16.mxu0 0
    %1862 = vmatpush1.bf16.xpose.msra.mxu0 0
    %1863 = vmatprep.subr.bf16.mxu0 0
    %1864 = vmatpush1.bf16.xpose.msra.mxu0 0
    %1865 = vmatprep.mubr.bf16.mxu0 0
    %1866 = vmatmul.mubr.bf16.gmra.mrb[0].mxu0 %v1822
    %v1867 = vpop.f32.mrb[0].mxu0
    %v1868 = vadd.f32 0.0, %v1867
    %v1869 = vpop.f32.mrb[0].mxu0
    %v1870 = vpop.f32.mrb[0].mxu0
    %v1871 = vadd.f32 0.0, %v1870
    %v1872 = vpop.f32.mrb[0].mxu0
    %1873 = vmatprep.mubr.bf16.mxu0 0
    %1874 = vmatmul.mubr.bf16.gmra.mrb[0].mxu0 %v1825
    %v1875 = vpop.f32.mrb[0].mxu0
    %v1876 = vadd.f32 0.0, %v1875
    %v1877 = vpop.f32.mrb[0].mxu0
    %v1878 = vpop.f32.mrb[0].mxu0
    %v1879 = vpop.f32.mrb[0].mxu0
    %1880 = vdwg.mxu0
    %v1882 = vsel %vm776, %v1749, 0
    %v1885 = vsel %vm776, %v1750, 0
    %v1888 = vsel %vm776, %v1757, 0
    %v1891 = vsel %vm776, %v1758, 0
    %1893 = vmatprep.subr.bf16.mxu0 0
    %1894 = vmatpush1.bf16.xpose.msra.mxu0 %v1888
    %1895 = vmatprep.subr.bf16.mxu0 0
    %1896 = vmatpush1.bf16.xpose.msra.mxu0 %v1891
    %1897 = vmatprep.subr.bf16.mxu0 0
    %1898 = vmatpush1.bf16.xpose.msra.mxu0 0
    %1899 = vmatprep.subr.bf16.mxu0 0
    %1900 = vmatpush1.bf16.xpose.msra.mxu0 0
    %1901 = vmatprep.subr.bf16.mxu0 0
    %1902 = vmatpush1.bf16.xpose.msra.mxu0 0
    %1903 = vmatprep.subr.bf16.mxu0 0
    %1904 = vmatpush1.bf16.xpose.msra.mxu0 0
    %1905 = vmatprep.subr.bf16.mxu0 0
    %1906 = vmatpush1.bf16.xpose.msra.mxu0 0
    %1907 = vmatprep.subr.bf16.mxu0 0
    %1908 = vmatpush1.bf16.xpose.msra.mxu0 0
    %1909 = vmatprep.subr.bf16.mxu0 0
    %1910 = vmatpush1.bf16.xpose.msra.mxu0 0
    %1911 = vmatprep.subr.bf16.mxu0 0
    %1912 = vmatpush1.bf16.xpose.msra.mxu0 0
    %1913 = vmatprep.subr.bf16.mxu0 0
    %1914 = vmatpush1.bf16.xpose.msra.mxu0 0
    %1915 = vmatprep.subr.bf16.mxu0 0
    %1916 = vmatpush1.bf16.xpose.msra.mxu0 0
    %1917 = vmatprep.subr.bf16.mxu0 0
    %1918 = vmatpush1.bf16.xpose.msra.mxu0 0
    %1919 = vmatprep.subr.bf16.mxu0 0
    %1920 = vmatpush1.bf16.xpose.msra.mxu0 0
    %1921 = vmatprep.subr.bf16.mxu0 0
    %1922 = vmatpush1.bf16.xpose.msra.mxu0 0
    %1923 = vmatprep.subr.bf16.mxu0 0
    %1924 = vmatpush1.bf16.xpose.msra.mxu0 0
    %1925 = vmatprep.mubr.bf16.mxu0 0
    %1926 = vmatmul.mubr.bf16.gmra.mrb[0].mxu0 %v1882
    %v1927 = vpop.f32.mrb[0].mxu0
    %v1928 = vadd.f32 0.0, %v1927
    %v1929 = vpop.f32.mrb[0].mxu0
    %v1930 = vpop.f32.mrb[0].mxu0
    %v1931 = vadd.f32 0.0, %v1930
    %v1932 = vpop.f32.mrb[0].mxu0
    %1933 = vmatprep.mubr.bf16.mxu0 0
    %1934 = vmatmul.mubr.bf16.gmra.mrb[0].mxu0 %v1885
    %v1935 = vpop.f32.mrb[0].mxu0
    %v1936 = vadd.f32 0.0, %v1935
    %v1937 = vpop.f32.mrb[0].mxu0
    %v1938 = vpop.f32.mrb[0].mxu0
    %v1939 = vpop.f32.mrb[0].mxu0
    %1940 = vdwg.mxu0
    %v1942 = vsel %vm776, %v1751, 0
    %v1945 = vsel %vm776, %v1752, 0
    %v1948 = vsel %vm776, %v1759, 0
    %v1951 = vsel %vm776, %v1760, 0
    %1953 = vmatprep.subr.bf16.mxu0 0
    %1954 = vmatpush1.bf16.xpose.msra.mxu0 %v1948
    %1955 = vmatprep.subr.bf16.mxu0 0
    %1956 = vmatpush1.bf16.xpose.msra.mxu0 %v1951
    %1957 = vmatprep.subr.bf16.mxu0 0
    %1958 = vmatpush1.bf16.xpose.msra.mxu0 0
    %1959 = vmatprep.subr.bf16.mxu0 0
    %1960 = vmatpush1.bf16.xpose.msra.mxu0 0
    %1961 = vmatprep.subr.bf16.mxu0 0
    %1962 = vmatpush1.bf16.xpose.msra.mxu0 0
    %1963 = vmatprep.subr.bf16.mxu0 0
    %1964 = vmatpush1.bf16.xpose.msra.mxu0 0
    %1965 = vmatprep.subr.bf16.mxu0 0
    %1966 = vmatpush1.bf16.xpose.msra.mxu0 0
    %1967 = vmatprep.subr.bf16.mxu0 0
    %1968 = vmatpush1.bf16.xpose.msra.mxu0 0
    %1969 = vmatprep.subr.bf16.mxu0 0
    %1970 = vmatpush1.bf16.xpose.msra.mxu0 0
    %1971 = vmatprep.subr.bf16.mxu0 0
    %1972 = vmatpush1.bf16.xpose.msra.mxu0 0
    %1973 = vmatprep.subr.bf16.mxu0 0
    %1974 = vmatpush1.bf16.xpose.msra.mxu0 0
    %1975 = vmatprep.subr.bf16.mxu0 0
    %1976 = vmatpush1.bf16.xpose.msra.mxu0 0
    %1977 = vmatprep.subr.bf16.mxu0 0
    %1978 = vmatpush1.bf16.xpose.msra.mxu0 0
    %1979 = vmatprep.subr.bf16.mxu0 0
    %1980 = vmatpush1.bf16.xpose.msra.mxu0 0
    %1981 = vmatprep.subr.bf16.mxu0 0
    %1982 = vmatpush1.bf16.xpose.msra.mxu0 0
    %1983 = vmatprep.subr.bf16.mxu0 0
    %1984 = vmatpush1.bf16.xpose.msra.mxu0 0
    %1985 = vmatprep.mubr.bf16.mxu0 0
    %1986 = vmatmul.mubr.bf16.gmra.mrb[0].mxu0 %v1942
    %v1987 = vpop.f32.mrb[0].mxu0
    %v1988 = vadd.f32 0.0, %v1987
    %v1989 = vpop.f32.mrb[0].mxu0
    %v1990 = vpop.f32.mrb[0].mxu0
    %v1991 = vadd.f32 0.0, %v1990
    %v1992 = vpop.f32.mrb[0].mxu0
    %1993 = vmatprep.mubr.bf16.mxu0 0
    %1994 = vmatmul.mubr.bf16.gmra.mrb[0].mxu0 %v1945
    %v1995 = vpop.f32.mrb[0].mxu0
    %v1996 = vadd.f32 0.0, %v1995
    %v1997 = vpop.f32.mrb[0].mxu0
    %v1998 = vpop.f32.mrb[0].mxu0
    %v1999 = vpop.f32.mrb[0].mxu0
    %2000 = vdwg.mxu0
    %v2001 = vmul.f32 %v1808, 0.25
    %v2002 = vmul.f32 %v1811, 0.25
    %v2003 = vmul.f32 %v1816, 0.25
    %v2004 = vmul.f32 %v1868, 0.25
    %v2005 = vmul.f32 %v1871, 0.25
    %v2006 = vmul.f32 %v1876, 0.25
    %v2007 = vmul.f32 %v1928, 0.25
    %v2008 = vmul.f32 %v1931, 0.25
    %v2009 = vmul.f32 %v1936, 0.25
    %v2010 = vmul.f32 %v1988, 0.25
    %v2011 = vmul.f32 %v1991, 0.25
    %v2012 = vmul.f32 %v1996, 0.25
    %v2013 = vadd.f32 %v2001, %v268
    %v2014 = vadd.f32 %v2002, %v268
    %v2015 = vadd.f32 %v2003, %v268
    %v2016 = vadd.f32 %v2004, %v268
    %v2017 = vadd.f32 %v2005, %v268
    %v2018 = vadd.f32 %v2006, %v268
    %v2019 = vadd.f32 %v2007, %v268
    %v2020 = vadd.f32 %v2008, %v268
    %v2021 = vadd.f32 %v2009, %v268
    %v2022 = vadd.f32 %v2010, %v268
    %v2023 = vadd.f32 %v2011, %v268
    %v2024 = vadd.f32 %v2012, %v268
    %v2025 = vsel %vm1041, %v2013, -inf
    %2026 = vmax.xlane.f32.xlu0 %v2025
    %v2027 = vpop.xlane.xlu0 %2026
    %v2028 = vsel %vm1041, %v2014, -inf
    %2029 = vmax.xlane.f32.xlu0 %v2028
    %v2030 = vpop.xlane.xlu0 %2029
    %v2031 = vsel %vm1041, %v2015, -inf
    %2032 = vmax.xlane.f32.xlu0 %v2031
    %v2033 = vpop.xlane.xlu0 %2032
    %v2034 = vsel %vm1041, %v2016, -inf
    %2035 = vmax.xlane.f32.xlu0 %v2034
    %v2036 = vpop.xlane.xlu0 %2035
    %v2037 = vsel %vm1041, %v2017, -inf
    %2038 = vmax.xlane.f32.xlu0 %v2037
    %v2039 = vpop.xlane.xlu0 %2038
    %v2040 = vsel %vm1041, %v2018, -inf
    %2041 = vmax.xlane.f32.xlu0 %v2040
    %v2042 = vpop.xlane.xlu0 %2041
    %v2043 = vsel %vm1041, %v2019, -inf
    %2044 = vmax.xlane.f32.xlu0 %v2043
    %v2045 = vpop.xlane.xlu0 %2044
    %v2046 = vsel %vm1041, %v2020, -inf
    %2047 = vmax.xlane.f32.xlu0 %v2046
    %v2048 = vpop.xlane.xlu0 %2047
    %v2049 = vsel %vm1041, %v2021, -inf
    %2050 = vmax.xlane.f32.xlu0 %v2049
    %v2051 = vpop.xlane.xlu0 %2050
    %v2052 = vsel %vm1041, %v2022, -inf
    %2053 = vmax.xlane.f32.xlu0 %v2052
    %v2054 = vpop.xlane.xlu0 %2053
    %v2055 = vsel %vm1041, %v2023, -inf
    %2056 = vmax.xlane.f32.xlu0 %v2055
    %v2057 = vpop.xlane.xlu0 %2056
    %v2058 = vsel %vm1041, %v2024, -inf
    %2059 = vmax.xlane.f32.xlu0 %v2058
    %v2060 = vpop.xlane.xlu0 %2059
    %v2061 = vsub.f32 %v2013, %v2027
    %v2062 = vsub.f32 %v2014, %v2030
    %v2063 = vsub.f32 %v2015, %v2033
    %v2064 = vsub.f32 %v2016, %v2036
    %v2065 = vsub.f32 %v2017, %v2039
    %v2066 = vsub.f32 %v2018, %v2042
    %v2067 = vsub.f32 %v2019, %v2045
    %v2068 = vsub.f32 %v2020, %v2048
    %v2069 = vsub.f32 %v2021, %v2051
    %v2070 = vsub.f32 %v2022, %v2054
    %v2071 = vsub.f32 %v2023, %v2057
    %v2072 = vsub.f32 %v2024, %v2060
    %v2073 = vmul.f32 %v2061, 1.442695
    %v2074 = vpow.pop %v2073
    %v2075 = vmul.f32 %v2062, 1.442695
    %v2076 = vpow.pop %v2075
    %v2077 = vmul.f32 %v2063, 1.442695
    %v2078 = vpow.pop %v2077
    %v2079 = vmul.f32 %v2064, 1.442695
    %v2080 = vpow.pop %v2079
    %v2081 = vmul.f32 %v2065, 1.442695
    %v2082 = vpow.pop %v2081
    %v2083 = vmul.f32 %v2066, 1.442695
    %v2084 = vpow.pop %v2083
    %v2085 = vmul.f32 %v2067, 1.442695
    %v2086 = vpow.pop %v2085
    %v2087 = vmul.f32 %v2068, 1.442695
    %v2088 = vpow.pop %v2087
    %v2089 = vmul.f32 %v2069, 1.442695
    %v2090 = vpow.pop %v2089
    %v2091 = vmul.f32 %v2070, 1.442695
    %v2092 = vpow.pop %v2091
    %v2093 = vmul.f32 %v2071, 1.442695
    %v2094 = vpow.pop %v2093
    %v2095 = vmul.f32 %v2072, 1.442695
    %v2096 = vpow.pop %v2095
    %v2097 = vsel %vm1041, %v2074, 0.0
    %2098 = vadd.xlane.f32.xlu0 %v2097
    %v2099 = vpop.xlane.xlu0 %2098
    %v2100 = vsel %vm1041, %v2076, 0.0
    %2101 = vadd.xlane.f32.xlu0 %v2100
    %v2102 = vpop.xlane.xlu0 %2101
    %v2103 = vsel %vm1041, %v2078, 0.0
    %2104 = vadd.xlane.f32.xlu0 %v2103
    %v2105 = vpop.xlane.xlu0 %2104
    %v2106 = vsel %vm1041, %v2080, 0.0
    %2107 = vadd.xlane.f32.xlu0 %v2106
    %v2108 = vpop.xlane.xlu0 %2107
    %v2109 = vsel %vm1041, %v2082, 0.0
    %2110 = vadd.xlane.f32.xlu0 %v2109
    %v2111 = vpop.xlane.xlu0 %2110
    %v2112 = vsel %vm1041, %v2084, 0.0
    %2113 = vadd.xlane.f32.xlu0 %v2112
    %v2114 = vpop.xlane.xlu0 %2113
    %v2115 = vsel %vm1041, %v2086, 0.0
    %2116 = vadd.xlane.f32.xlu0 %v2115
    %v2117 = vpop.xlane.xlu0 %2116
    %v2118 = vsel %vm1041, %v2088, 0.0
    %2119 = vadd.xlane.f32.xlu0 %v2118
    %v2120 = vpop.xlane.xlu0 %2119
    %v2121 = vsel %vm1041, %v2090, 0.0
    %2122 = vadd.xlane.f32.xlu0 %v2121
    %v2123 = vpop.xlane.xlu0 %2122
    %v2124 = vsel %vm1041, %v2092, 0.0
    %2125 = vadd.xlane.f32.xlu0 %v2124
    %v2126 = vpop.xlane.xlu0 %2125
    %v2127 = vsel %vm1041, %v2094, 0.0
    %2128 = vadd.xlane.f32.xlu0 %v2127
    %v2129 = vpop.xlane.xlu0 %2128
    %v2130 = vsel %vm1041, %v2096, 0.0
    %2131 = vadd.xlane.f32.xlu0 %v2130
    %v2132 = vpop.xlane.xlu0 %2131
    %v2133 = vrcp.pop %v2099
    %v2134 = vrcp.pop %v2102
    %v2135 = vrcp.pop %v2105
    %v2136 = vrcp.pop %v2108
    %v2137 = vrcp.pop %v2111
    %v2138 = vrcp.pop %v2114
    %v2139 = vrcp.pop %v2117
    %v2140 = vrcp.pop %v2120
    %v2141 = vrcp.pop %v2123
    %v2142 = vrcp.pop %v2126
    %v2143 = vrcp.pop %v2129
    %v2144 = vrcp.pop %v2132
    %v2145 = vmul.f32 %v2074, %v2133
    %v2146 = vmul.f32 %v2076, %v2134
    %v2147 = vmul.f32 %v2078, %v2135
    %v2148 = vmul.f32 %v2080, %v2136
    %v2149 = vmul.f32 %v2082, %v2137
    %v2150 = vmul.f32 %v2084, %v2138
    %v2151 = vmul.f32 %v2086, %v2139
    %v2152 = vmul.f32 %v2088, %v2140
    %v2153 = vmul.f32 %v2090, %v2141
    %v2154 = vmul.f32 %v2092, %v2142
    %v2155 = vmul.f32 %v2094, %v2143
    %v2156 = vmul.f32 %v2096, %v2144
    %v2157 = vpack.c.bf16 %v2146, %v2145
    %v2158 = vpack.c.bf16 %v2147, %v2147
    %v2159 = vpack.c.bf16 %v2149, %v2148
    %v2160 = vpack.c.bf16 %v2150, %v2150
    %v2161 = vpack.c.bf16 %v2152, %v2151
    %v2162 = vpack.c.bf16 %v2153, %v2153
    %v2163 = vpack.c.bf16 %v2155, %v2154
    %v2164 = vpack.c.bf16 %v2156, %v2156
    %v2165 = vpack.c.bf16 %v1702, %v1699
    %v2166 = vpack.c.bf16 %v1707, %v1707
    %v2167 = vpack.c.bf16 %v1715, %v1710
    %v2168 = vpack.c.bf16 %v1718, %v1718
    %v2169 = vpack.c.bf16 %v1726, %v1723
    %v2170 = vpack.c.bf16 %v1731, %v1731
    %v2171 = vpack.c.bf16 %v1739, %v1734
    %v2172 = vpack.c.bf16 %v1742, %v1742
    %v2174 = vsel %vm1041, %v2157, 0
    %v2177 = vsel %vm1041, %v2158, 0
    %v2180 = vsel %vm1196, %v2166, 0
    %2182 = vmatprep.subr.bf16.mxu0 0
    %2183 = vmatpush1.bf16.msra.mxu0 %v2165
    %2184 = vmatprep.subr.bf16.mxu0 0
    %2185 = vmatpush1.bf16.msra.mxu0 %v2180
    %2186 = vmatprep.subr.bf16.mxu0 0
    %2187 = vmatpush1.bf16.msra.mxu0 0
    %2188 = vmatprep.subr.bf16.mxu0 0
    %2189 = vmatpush1.bf16.msra.mxu0 0
    %2190 = vmatprep.subr.bf16.mxu0 0
    %2191 = vmatpush1.bf16.msra.mxu0 0
    %2192 = vmatprep.subr.bf16.mxu0 0
    %2193 = vmatpush1.bf16.msra.mxu0 0
    %2194 = vmatprep.subr.bf16.mxu0 0
    %2195 = vmatpush1.bf16.msra.mxu0 0
    %2196 = vmatprep.subr.bf16.mxu0 0
    %2197 = vmatpush1.bf16.msra.mxu0 0
    %2198 = vmatprep.subr.bf16.mxu0 0
    %2199 = vmatpush1.bf16.msra.mxu0 0
    %2200 = vmatprep.subr.bf16.mxu0 0
    %2201 = vmatpush1.bf16.msra.mxu0 0
    %2202 = vmatprep.subr.bf16.mxu0 0
    %2203 = vmatpush1.bf16.msra.mxu0 0
    %2204 = vmatprep.subr.bf16.mxu0 0
    %2205 = vmatpush1.bf16.msra.mxu0 0
    %2206 = vmatprep.subr.bf16.mxu0 0
    %2207 = vmatpush1.bf16.msra.mxu0 0
    %2208 = vmatprep.subr.bf16.mxu0 0
    %2209 = vmatpush1.bf16.msra.mxu0 0
    %2210 = vmatprep.subr.bf16.mxu0 0
    %2211 = vmatpush1.bf16.msra.mxu0 0
    %2212 = vmatprep.subr.bf16.mxu0 0
    %2213 = vmatpush1.bf16.msra.mxu0 0
    %2214 = vmatprep.mubr.bf16.mxu0 0
    %2215 = vmatmul.mubr.bf16.gmra.mrb[0].mxu0 %v2174
    %v2216 = vpop.f32.mrb[0].mxu0
    %v2217 = vadd.f32 0.0, %v2216
    %v2218 = vpop.f32.mrb[0].mxu0
    %v2219 = vpop.f32.mrb[0].mxu0
    %v2220 = vadd.f32 0.0, %v2219
    %v2221 = vpop.f32.mrb[0].mxu0
    %2222 = vmatprep.mubr.bf16.mxu0 0
    %2223 = vmatmul.mubr.bf16.gmra.mrb[0].mxu0 %v2177
    %v2224 = vpop.f32.mrb[0].mxu0
    %v2225 = vadd.f32 0.0, %v2224
    %v2226 = vpop.f32.mrb[0].mxu0
    %v2227 = vpop.f32.mrb[0].mxu0
    %v2228 = vpop.f32.mrb[0].mxu0
    %2229 = vdwg.mxu0
    %v2231 = vsel %vm1041, %v2159, 0
    %v2234 = vsel %vm1041, %v2160, 0
    %v2237 = vsel %vm1196, %v2168, 0
    %2239 = vmatprep.subr.bf16.mxu0 0
    %2240 = vmatpush1.bf16.msra.mxu0 %v2167
    %2241 = vmatprep.subr.bf16.mxu0 0
    %2242 = vmatpush1.bf16.msra.mxu0 %v2237
    %2243 = vmatprep.subr.bf16.mxu0 0
    %2244 = vmatpush1.bf16.msra.mxu0 0
    %2245 = vmatprep.subr.bf16.mxu0 0
    %2246 = vmatpush1.bf16.msra.mxu0 0
    %2247 = vmatprep.subr.bf16.mxu0 0
    %2248 = vmatpush1.bf16.msra.mxu0 0
    %2249 = vmatprep.subr.bf16.mxu0 0
    %2250 = vmatpush1.bf16.msra.mxu0 0
    %2251 = vmatprep.subr.bf16.mxu0 0
    %2252 = vmatpush1.bf16.msra.mxu0 0
    %2253 = vmatprep.subr.bf16.mxu0 0
    %2254 = vmatpush1.bf16.msra.mxu0 0
    %2255 = vmatprep.subr.bf16.mxu0 0
    %2256 = vmatpush1.bf16.msra.mxu0 0
    %2257 = vmatprep.subr.bf16.mxu0 0
    %2258 = vmatpush1.bf16.msra.mxu0 0
    %2259 = vmatprep.subr.bf16.mxu0 0
    %2260 = vmatpush1.bf16.msra.mxu0 0
    %2261 = vmatprep.subr.bf16.mxu0 0
    %2262 = vmatpush1.bf16.msra.mxu0 0
    %2263 = vmatprep.subr.bf16.mxu0 0
    %2264 = vmatpush1.bf16.msra.mxu0 0
    %2265 = vmatprep.subr.bf16.mxu0 0
    %2266 = vmatpush1.bf16.msra.mxu0 0
    %2267 = vmatprep.subr.bf16.mxu0 0
    %2268 = vmatpush1.bf16.msra.mxu0 0
    %2269 = vmatprep.subr.bf16.mxu0 0
    %2270 = vmatpush1.bf16.msra.mxu0 0
    %2271 = vmatprep.mubr.bf16.mxu0 0
    %2272 = vmatmul.mubr.bf16.gmra.mrb[0].mxu0 %v2231
    %v2273 = vpop.f32.mrb[0].mxu0
    %v2274 = vadd.f32 0.0, %v2273
    %v2275 = vpop.f32.mrb[0].mxu0
    %v2276 = vpop.f32.mrb[0].mxu0
    %v2277 = vadd.f32 0.0, %v2276
    %v2278 = vpop.f32.mrb[0].mxu0
    %2279 = vmatprep.mubr.bf16.mxu0 0
    %2280 = vmatmul.mubr.bf16.gmra.mrb[0].mxu0 %v2234
    %v2281 = vpop.f32.mrb[0].mxu0
    %v2282 = vadd.f32 0.0, %v2281
    %v2283 = vpop.f32.mrb[0].mxu0
    %v2284 = vpop.f32.mrb[0].mxu0
    %v2285 = vpop.f32.mrb[0].mxu0
    %2286 = vdwg.mxu0
    %v2288 = vsel %vm1041, %v2161, 0
    %v2291 = vsel %vm1041, %v2162, 0
    %v2294 = vsel %vm1196, %v2170, 0
    %2296 = vmatprep.subr.bf16.mxu0 0
    %2297 = vmatpush1.bf16.msra.mxu0 %v2169
    %2298 = vmatprep.subr.bf16.mxu0 0
    %2299 = vmatpush1.bf16.msra.mxu0 %v2294
    %2300 = vmatprep.subr.bf16.mxu0 0
    %2301 = vmatpush1.bf16.msra.mxu0 0
    %2302 = vmatprep.subr.bf16.mxu0 0
    %2303 = vmatpush1.bf16.msra.mxu0 0
    %2304 = vmatprep.subr.bf16.mxu0 0
    %2305 = vmatpush1.bf16.msra.mxu0 0
    %2306 = vmatprep.subr.bf16.mxu0 0
    %2307 = vmatpush1.bf16.msra.mxu0 0
    %2308 = vmatprep.subr.bf16.mxu0 0
    %2309 = vmatpush1.bf16.msra.mxu0 0
    %2310 = vmatprep.subr.bf16.mxu0 0
    %2311 = vmatpush1.bf16.msra.mxu0 0
    %2312 = vmatprep.subr.bf16.mxu0 0
    %2313 = vmatpush1.bf16.msra.mxu0 0
    %2314 = vmatprep.subr.bf16.mxu0 0
    %2315 = vmatpush1.bf16.msra.mxu0 0
    %2316 = vmatprep.subr.bf16.mxu0 0
    %2317 = vmatpush1.bf16.msra.mxu0 0
    %2318 = vmatprep.subr.bf16.mxu0 0
    %2319 = vmatpush1.bf16.msra.mxu0 0
    %2320 = vmatprep.subr.bf16.mxu0 0
    %2321 = vmatpush1.bf16.msra.mxu0 0
    %2322 = vmatprep.subr.bf16.mxu0 0
    %2323 = vmatpush1.bf16.msra.mxu0 0
    %2324 = vmatprep.subr.bf16.mxu0 0
    %2325 = vmatpush1.bf16.msra.mxu0 0
    %2326 = vmatprep.subr.bf16.mxu0 0
    %2327 = vmatpush1.bf16.msra.mxu0 0
    %2328 = vmatprep.mubr.bf16.mxu0 0
    %2329 = vmatmul.mubr.bf16.gmra.mrb[0].mxu0 %v2288
    %v2330 = vpop.f32.mrb[0].mxu0
    %v2331 = vadd.f32 0.0, %v2330
    %v2332 = vpop.f32.mrb[0].mxu0
    %v2333 = vpop.f32.mrb[0].mxu0
    %v2334 = vadd.f32 0.0, %v2333
    %v2335 = vpop.f32.mrb[0].mxu0
    %2336 = vmatprep.mubr.bf16.mxu0 0
    %2337 = vmatmul.mubr.bf16.gmra.mrb[0].mxu0 %v2291
    %v2338 = vpop.f32.mrb[0].mxu0
    %v2339 = vadd.f32 0.0, %v2338
    %v2340 = vpop.f32.mrb[0].mxu0
    %v2341 = vpop.f32.mrb[0].mxu0
    %v2342 = vpop.f32.mrb[0].mxu0
    %2343 = vdwg.mxu0
    %v2345 = vsel %vm1041, %v2163, 0
    %v2348 = vsel %vm1041, %v2164, 0
    %v2351 = vsel %vm1196, %v2172, 0
    %2353 = vmatprep.subr.bf16.mxu0 0
    %2354 = vmatpush1.bf16.msra.mxu0 %v2171
    %2355 = vmatprep.subr.bf16.mxu0 0
    %2356 = vmatpush1.bf16.msra.mxu0 %v2351
    %2357 = vmatprep.subr.bf16.mxu0 0
    %2358 = vmatpush1.bf16.msra.mxu0 0
    %2359 = vmatprep.subr.bf16.mxu0 0
    %2360 = vmatpush1.bf16.msra.mxu0 0
    %2361 = vmatprep.subr.bf16.mxu0 0
    %2362 = vmatpush1.bf16.msra.mxu0 0
    %2363 = vmatprep.subr.bf16.mxu0 0
    %2364 = vmatpush1.bf16.msra.mxu0 0
    %2365 = vmatprep.subr.bf16.mxu0 0
    %2366 = vmatpush1.bf16.msra.mxu0 0
    %2367 = vmatprep.subr.bf16.mxu0 0
    %2368 = vmatpush1.bf16.msra.mxu0 0
    %2369 = vmatprep.subr.bf16.mxu0 0
    %2370 = vmatpush1.bf16.msra.mxu0 0
    %2371 = vmatprep.subr.bf16.mxu0 0
    %2372 = vmatpush1.bf16.msra.mxu0 0
    %2373 = vmatprep.subr.bf16.mxu0 0
    %2374 = vmatpush1.bf16.msra.mxu0 0
    %2375 = vmatprep.subr.bf16.mxu0 0
    %2376 = vmatpush1.bf16.msra.mxu0 0
    %2377 = vmatprep.subr.bf16.mxu0 0
    %2378 = vmatpush1.bf16.msra.mxu0 0
    %2379 = vmatprep.subr.bf16.mxu0 0
    %2380 = vmatpush1.bf16.msra.mxu0 0
    %2381 = vmatprep.subr.bf16.mxu0 0
    %2382 = vmatpush1.bf16.msra.mxu0 0
    %2383 = vmatprep.subr.bf16.mxu0 0
    %2384 = vmatpush1.bf16.msra.mxu0 0
    %2385 = vmatprep.mubr.bf16.mxu0 0
    %2386 = vmatmul.mubr.bf16.gmra.mrb[0].mxu0 %v2345
    %v2387 = vpop.f32.mrb[0].mxu0
    %v2388 = vadd.f32 0.0, %v2387
    %v2389 = vpop.f32.mrb[0].mxu0
    %v2390 = vpop.f32.mrb[0].mxu0
    %v2391 = vadd.f32 0.0, %v2390
    %v2392 = vpop.f32.mrb[0].mxu0
    %2393 = vmatprep.mubr.bf16.mxu0 0
    %2394 = vmatmul.mubr.bf16.gmra.mrb[0].mxu0 %v2348
    %v2395 = vpop.f32.mrb[0].mxu0
    %v2396 = vadd.f32 0.0, %v2395
    %v2397 = vpop.f32.mrb[0].mxu0
    %v2398 = vpop.f32.mrb[0].mxu0
    %v2399 = vpop.f32.mrb[0].mxu0
    %2400 = vdwg.mxu0
    %v2401 = vpack.c.bf16 %v2220, %v2217
    %v2402 = vpack.c.bf16 %v2274, %v2225
    %v2403 = vpack.c.bf16 %v2282, %v2277
    %v2404 = vpack.c.bf16 %v2334, %v2331
    %v2405 = vpack.c.bf16 %v2388, %v2339
    %v2406 = vpack.c.bf16 %v2396, %v2391
    %s2407 = scalar_lea.vmem %s17, 8
    %v2408 = vld [vmem:[%s2407] sm:$0xf]
    %v2409 = vld [vmem:[%s2407 + $0x4] sm:$0xf]
    %v2412 = vunpack.c.l.b16 %v2408
    %v2413 = vunpack.c.l.b16 %v2409
    %v2414 = vpack.c.b16 %v2413, %v2412
    %v2417 = vsel %vm776, %v2401, 0
    %v2420 = vsel %vm776, %v2402, 0
    %v2423 = vsel %vm776, %v2403, 0
    %v2426 = vsel %vm776, %v2404, 0
    %v2429 = vsel %vm776, %v2405, 0
    %v2432 = vsel %vm776, %v2406, 0
    %2434 = vmatprep.subr.bf16.mxu0 0
    %2435 = vmatpush1.bf16.msra.mxu0 %v2414
    %2436 = vmatprep.subr.bf16.mxu0 0
    %2437 = vmatpush1.bf16.msra.mxu0 0
    %2438 = vmatprep.subr.bf16.mxu0 0
    %2439 = vmatpush1.bf16.msra.mxu0 0
    %2440 = vmatprep.subr.bf16.mxu0 0
    %2441 = vmatpush1.bf16.msra.mxu0 0
    %2442 = vmatprep.subr.bf16.mxu0 0
    %2443 = vmatpush1.bf16.msra.mxu0 0
    %2444 = vmatprep.subr.bf16.mxu0 0
    %2445 = vmatpush1.bf16.msra.mxu0 0
    %2446 = vmatprep.subr.bf16.mxu0 0
    %2447 = vmatpush1.bf16.msra.mxu0 0
    %2448 = vmatprep.subr.bf16.mxu0 0
    %2449 = vmatpush1.bf16.msra.mxu0 0
    %2450 = vmatprep.subr.bf16.mxu0 0
    %2451 = vmatpush1.bf16.msra.mxu0 0
    %2452 = vmatprep.subr.bf16.mxu0 0
    %2453 = vmatpush1.bf16.msra.mxu0 0
    %2454 = vmatprep.subr.bf16.mxu0 0
    %2455 = vmatpush1.bf16.msra.mxu0 0
    %2456 = vmatprep.subr.bf16.mxu0 0
    %2457 = vmatpush1.bf16.msra.mxu0 0
    %2458 = vmatprep.subr.bf16.mxu0 0
    %2459 = vmatpush1.bf16.msra.mxu0 0
    %2460 = vmatprep.subr.bf16.mxu0 0
    %2461 = vmatpush1.bf16.msra.mxu0 0
    %2462 = vmatprep.subr.bf16.mxu0 0
    %2463 = vmatpush1.bf16.msra.mxu0 0
    %2464 = vmatprep.subr.bf16.mxu0 0
    %2465 = vmatpush1.bf16.msra.mxu0 0
    %2466 = vmatprep.mubr.bf16.mxu0 0
    %2467 = vmatmul.mubr.bf16.gmra.mrb[0].mxu0 %v2417
    %v2468 = vpop.f32.mrb[0].mxu0
    %v2469 = vadd.f32 0.0, %v2468
    %v2470 = vpop.f32.mrb[0].mxu0
    %v2471 = vpop.f32.mrb[0].mxu0
    %v2472 = vadd.f32 0.0, %v2471
    %v2473 = vpop.f32.mrb[0].mxu0
    %2474 = vmatprep.mubr.bf16.mxu0 0
    %2475 = vmatmul.mubr.bf16.gmra.mrb[0].mxu0 %v2420
    %v2476 = vpop.f32.mrb[0].mxu0
    %v2477 = vadd.f32 0.0, %v2476
    %v2478 = vpop.f32.mrb[0].mxu0
    %v2479 = vpop.f32.mrb[0].mxu0
    %v2480 = vadd.f32 0.0, %v2479
    %v2481 = vpop.f32.mrb[0].mxu0
    %2482 = vmatprep.mubr.bf16.mxu0 0
    %2483 = vmatmul.mubr.bf16.gmra.mrb[0].mxu0 %v2423
    %v2484 = vpop.f32.mrb[0].mxu0
    %v2485 = vadd.f32 0.0, %v2484
    %v2486 = vpop.f32.mrb[0].mxu0
    %v2487 = vpop.f32.mrb[0].mxu0
    %v2488 = vadd.f32 0.0, %v2487
    %v2489 = vpop.f32.mrb[0].mxu0
    %2490 = vmatprep.mubr.bf16.mxu0 0
    %2491 = vmatmul.mubr.bf16.gmra.mrb[0].mxu0 %v2426
    %v2492 = vpop.f32.mrb[0].mxu0
    %v2493 = vadd.f32 0.0, %v2492
    %v2494 = vpop.f32.mrb[0].mxu0
    %v2495 = vpop.f32.mrb[0].mxu0
    %v2496 = vadd.f32 0.0, %v2495
    %v2497 = vpop.f32.mrb[0].mxu0
    %2498 = vmatprep.mubr.bf16.mxu0 0
    %2499 = vmatmul.mubr.bf16.gmra.mrb[0].mxu0 %v2429
    %v2500 = vpop.f32.mrb[0].mxu0
    %v2501 = vadd.f32 0.0, %v2500
    %v2502 = vpop.f32.mrb[0].mxu0
    %v2503 = vpop.f32.mrb[0].mxu0
    %v2504 = vadd.f32 0.0, %v2503
    %v2505 = vpop.f32.mrb[0].mxu0
    %2506 = vmatprep.mubr.bf16.mxu0 0
    %2507 = vmatmul.mubr.bf16.gmra.mrb[0].mxu0 %v2432
    %v2508 = vpop.f32.mrb[0].mxu0
    %v2509 = vadd.f32 0.0, %v2508
    %v2510 = vpop.f32.mrb[0].mxu0
    %v2511 = vpop.f32.mrb[0].mxu0
    %v2512 = vadd.f32 0.0, %v2511
    %v2513 = vpop.f32.mrb[0].mxu0
    %2514 = vdwg.mxu0
    %v2517 = vunpack.c.l.b16 %v1425
    %v2518 = vunpack.c.l.b16 %v1426
    %v2519 = vpack.c.b16 %v2518, %v2517
    %v2522 = vsel %vm776, %v1419, 0
    %v2525 = vsel %vm776, %v1420, 0
    %v2528 = vsel %vm776, %v1421, 0
    %v2531 = vsel %vm776, %v1422, 0
    %v2534 = vsel %vm776, %v1423, 0
    %v2537 = vsel %vm776, %v1424, 0
    %2539 = vmatprep.subr.bf16.mxu0 0
    %2540 = vmatpush1.bf16.msra.mxu0 %v2519
    %2541 = vmatprep.subr.bf16.mxu0 0
    %2542 = vmatpush1.bf16.msra.mxu0 0
    %2543 = vmatprep.subr.bf16.mxu0 0
    %2544 = vmatpush1.bf16.msra.mxu0 0
    %2545 = vmatprep.subr.bf16.mxu0 0
    %2546 = vmatpush1.bf16.msra.mxu0 0
    %2547 = vmatprep.subr.bf16.mxu0 0
    %2548 = vmatpush1.bf16.msra.mxu0 0
    %2549 = vmatprep.subr.bf16.mxu0 0
    %2550 = vmatpush1.bf16.msra.mxu0 0
    %2551 = vmatprep.subr.bf16.mxu0 0
    %2552 = vmatpush1.bf16.msra.mxu0 0
    %2553 = vmatprep.subr.bf16.mxu0 0
    %2554 = vmatpush1.bf16.msra.mxu0 0
    %2555 = vmatprep.subr.bf16.mxu0 0
    %2556 = vmatpush1.bf16.msra.mxu0 0
    %2557 = vmatprep.subr.bf16.mxu0 0
    %2558 = vmatpush1.bf16.msra.mxu0 0
    %2559 = vmatprep.subr.bf16.mxu0 0
    %2560 = vmatpush1.bf16.msra.mxu0 0
    %2561 = vmatprep.subr.bf16.mxu0 0
    %2562 = vmatpush1.bf16.msra.mxu0 0
    %2563 = vmatprep.subr.bf16.mxu0 0
    %2564 = vmatpush1.bf16.msra.mxu0 0
    %2565 = vmatprep.subr.bf16.mxu0 0
    %2566 = vmatpush1.bf16.msra.mxu0 0
    %2567 = vmatprep.subr.bf16.mxu0 0
    %2568 = vmatpush1.bf16.msra.mxu0 0
    %2569 = vmatprep.subr.bf16.mxu0 0
    %2570 = vmatpush1.bf16.msra.mxu0 0
    %2571 = vmatprep.mubr.bf16.mxu0 0
    %2572 = vmatmul.mubr.bf16.gmra.mrb[0].mxu0 %v2522
    %v2573 = vpop.f32.mrb[0].mxu0
    %v2574 = vadd.f32 %v2469, %v2573
    %v2575 = vpop.f32.mrb[0].mxu0
    %v2576 = vpop.f32.mrb[0].mxu0
    %v2577 = vadd.f32 %v2472, %v2576
    %v2578 = vpop.f32.mrb[0].mxu0
    %2579 = vmatprep.mubr.bf16.mxu0 0
    %2580 = vmatmul.mubr.bf16.gmra.mrb[0].mxu0 %v2525
    %v2581 = vpop.f32.mrb[0].mxu0
    %v2582 = vadd.f32 %v2477, %v2581
    %v2583 = vpop.f32.mrb[0].mxu0
    %v2584 = vpop.f32.mrb[0].mxu0
    %v2585 = vadd.f32 %v2480, %v2584
    %v2586 = vpop.f32.mrb[0].mxu0
    %2587 = vmatprep.mubr.bf16.mxu0 0
    %2588 = vmatmul.mubr.bf16.gmra.mrb[0].mxu0 %v2528
    %v2589 = vpop.f32.mrb[0].mxu0
    %v2590 = vadd.f32 %v2485, %v2589
    %v2591 = vpop.f32.mrb[0].mxu0
    %v2592 = vpop.f32.mrb[0].mxu0
    %v2593 = vadd.f32 %v2488, %v2592
    %v2594 = vpop.f32.mrb[0].mxu0
    %2595 = vmatprep.mubr.bf16.mxu0 0
    %2596 = vmatmul.mubr.bf16.gmra.mrb[0].mxu0 %v2531
    %v2597 = vpop.f32.mrb[0].mxu0
    %v2598 = vadd.f32 %v2493, %v2597
    %v2599 = vpop.f32.mrb[0].mxu0
    %v2600 = vpop.f32.mrb[0].mxu0
    %v2601 = vadd.f32 %v2496, %v2600
    %v2602 = vpop.f32.mrb[0].mxu0
    %2603 = vmatprep.mubr.bf16.mxu0 0
    %2604 = vmatmul.mubr.bf16.gmra.mrb[0].mxu0 %v2534
    %v2605 = vpop.f32.mrb[0].mxu0
    %v2606 = vadd.f32 %v2501, %v2605
    %v2607 = vpop.f32.mrb[0].mxu0
    %v2608 = vpop.f32.mrb[0].mxu0
    %v2609 = vadd.f32 %v2504, %v2608
    %v2610 = vpop.f32.mrb[0].mxu0
    %2611 = vmatprep.mubr.bf16.mxu0 0
    %2612 = vmatmul.mubr.bf16.gmra.mrb[0].mxu0 %v2537
    %v2613 = vpop.f32.mrb[0].mxu0
    %v2614 = vadd.f32 %v2509, %v2613
    %v2615 = vpop.f32.mrb[0].mxu0
    %v2616 = vpop.f32.mrb[0].mxu0
    %v2617 = vadd.f32 %v2512, %v2616
    %v2618 = vpop.f32.mrb[0].mxu0
    %2619 = vdwg.mxu0
    %v2620 = vadd.f32 %v256, %v2574
    %v2621 = vadd.f32 %v257, %v2577
    %v2622 = vadd.f32 %v258, %v2582
    %v2623 = vadd.f32 %v259, %v2585
    %v2624 = vadd.f32 %v260, %v2590
    %v2625 = vadd.f32 %v258, %v2593
    %v2626 = vadd.f32 %v261, %v2598
    %v2627 = vadd.f32 %v262, %v2601
    %v2628 = vadd.f32 %v258, %v2606
    %v2629 = vadd.f32 %v263, %v2609
    %v2630 = vadd.f32 %v264, %v2614
    %v2631 = vadd.f32 %v258, %v2617
    %v2632 = vld [vmem:[%s19] sm:$0x1]
    %v2634 = vlaneseq
    %v2635 = vshrl.u32 %v2634, 7
    %v2636 = vsub.s32 0, %v2635
    %v2637 = vrot.slane %v2632, %v2636
    %v2639 = vadd.f32 %v2620, %v2637
    %v2640 = vadd.f32 %v2621, %v2637
    %v2641 = vadd.f32 %v2622, %v2637
    %v2642 = vadd.f32 %v2623, %v2637
    %v2643 = vadd.f32 %v2624, %v2637
    %v2644 = vadd.f32 %v2625, %v2637
    %v2645 = vadd.f32 %v2626, %v2637
    %v2646 = vadd.f32 %v2627, %v2637
    %v2647 = vadd.f32 %v2628, %v2637
    %v2648 = vadd.f32 %v2629, %v2637
    %v2649 = vadd.f32 %v2630, %v2637
    %v2650 = vadd.f32 %v2631, %v2637
    %v2651 = vld [vmem:[%s21] sm:$0x1]
    %v2652 = vld [vmem:[%s23] sm:$0x1]
    %v2653 = vsel %vm271, %v2639, 0.0
    %2654 = vadd.xlane.f32.xlu0 %v2653
    %v2655 = vpop.xlane.xlu0 %2654
    %v2656 = vsel %vm271, %v2640, 0.0
    %2657 = vadd.xlane.f32.xlu0 %v2656
    %v2658 = vpop.xlane.xlu0 %2657
    %v2659 = vsel %vm271, %v2641, 0.0
    %2660 = vadd.xlane.f32.xlu0 %v2659
    %v2661 = vpop.xlane.xlu0 %2660
    %v2662 = vsel %vm271, %v2642, 0.0
    %2663 = vadd.xlane.f32.xlu0 %v2662
    %v2664 = vpop.xlane.xlu0 %2663
    %v2665 = vsel %vm271, %v2643, 0.0
    %2666 = vadd.xlane.f32.xlu0 %v2665
    %v2667 = vpop.xlane.xlu0 %2666
    %v2668 = vsel %vm271, %v2644, 0.0
    %2669 = vadd.xlane.f32.xlu0 %v2668
    %v2670 = vpop.xlane.xlu0 %2669
    %v2671 = vsel %vm271, %v2645, 0.0
    %2672 = vadd.xlane.f32.xlu0 %v2671
    %v2673 = vpop.xlane.xlu0 %2672
    %v2674 = vsel %vm271, %v2646, 0.0
    %2675 = vadd.xlane.f32.xlu0 %v2674
    %v2676 = vpop.xlane.xlu0 %2675
    %v2677 = vsel %vm271, %v2647, 0.0
    %2678 = vadd.xlane.f32.xlu0 %v2677
    %v2679 = vpop.xlane.xlu0 %2678
    %v2680 = vsel %vm271, %v2648, 0.0
    %2681 = vadd.xlane.f32.xlu0 %v2680
    %v2682 = vpop.xlane.xlu0 %2681
    %v2683 = vsel %vm271, %v2649, 0.0
    %2684 = vadd.xlane.f32.xlu0 %v2683
    %v2685 = vpop.xlane.xlu0 %2684
    %v2686 = vsel %vm271, %v2650, 0.0
    %2687 = vadd.xlane.f32.xlu0 %v2686
    %v2688 = vpop.xlane.xlu0 %2687
    %v2689 = vmul.f32 %v2655, %v299
    %v2690 = vmul.f32 %v2658, %v299
    %v2691 = vmul.f32 %v2661, %v299
    %v2692 = vmul.f32 %v2664, %v299
    %v2693 = vmul.f32 %v2667, %v299
    %v2694 = vmul.f32 %v2670, %v299
    %v2695 = vmul.f32 %v2673, %v299
    %v2696 = vmul.f32 %v2676, %v299
    %v2697 = vmul.f32 %v2679, %v299
    %v2698 = vmul.f32 %v2682, %v299
    %v2699 = vmul.f32 %v2685, %v299
    %v2700 = vmul.f32 %v2688, %v299
    %v2701 = vsub.f32 %v2639, %v2689
    %v2702 = vsub.f32 %v2640, %v2690
    %v2703 = vsub.f32 %v2641, %v2691
    %v2704 = vsub.f32 %v2642, %v2692
    %v2705 = vsub.f32 %v2643, %v2693
    %v2706 = vsub.f32 %v2644, %v2694
    %v2707 = vsub.f32 %v2645, %v2695
    %v2708 = vsub.f32 %v2646, %v2696
    %v2709 = vsub.f32 %v2647, %v2697
    %v2710 = vsub.f32 %v2648, %v2698
    %v2711 = vsub.f32 %v2649, %v2699
    %v2712 = vsub.f32 %v2650, %v2700
    %v2713 = vmul.f32 %v2701, %v2701
    %v2714 = vmul.f32 %v2702, %v2702
    %v2715 = vmul.f32 %v2703, %v2703
    %v2716 = vmul.f32 %v2704, %v2704
    %v2717 = vmul.f32 %v2705, %v2705
    %v2718 = vmul.f32 %v2706, %v2706
    %v2719 = vmul.f32 %v2707, %v2707
    %v2720 = vmul.f32 %v2708, %v2708
    %v2721 = vmul.f32 %v2709, %v2709
    %v2722 = vmul.f32 %v2710, %v2710
    %v2723 = vmul.f32 %v2711, %v2711
    %v2724 = vmul.f32 %v2712, %v2712
    %v2725 = vsel %vm271, %v2713, 0.0
    %2726 = vadd.xlane.f32.xlu0 %v2725
    %v2727 = vpop.xlane.xlu0 %2726
    %v2728 = vsel %vm271, %v2714, 0.0
    %2729 = vadd.xlane.f32.xlu0 %v2728
    %v2730 = vpop.xlane.xlu0 %2729
    %v2731 = vsel %vm271, %v2715, 0.0
    %2732 = vadd.xlane.f32.xlu0 %v2731
    %v2733 = vpop.xlane.xlu0 %2732
    %v2734 = vsel %vm271, %v2716, 0.0
    %2735 = vadd.xlane.f32.xlu0 %v2734
    %v2736 = vpop.xlane.xlu0 %2735
    %v2737 = vsel %vm271, %v2717, 0.0
    %2738 = vadd.xlane.f32.xlu0 %v2737
    %v2739 = vpop.xlane.xlu0 %2738
    %v2740 = vsel %vm271, %v2718, 0.0
    %2741 = vadd.xlane.f32.xlu0 %v2740
    %v2742 = vpop.xlane.xlu0 %2741
    %v2743 = vsel %vm271, %v2719, 0.0
    %2744 = vadd.xlane.f32.xlu0 %v2743
    %v2745 = vpop.xlane.xlu0 %2744
    %v2746 = vsel %vm271, %v2720, 0.0
    %2747 = vadd.xlane.f32.xlu0 %v2746
    %v2748 = vpop.xlane.xlu0 %2747
    %v2749 = vsel %vm271, %v2721, 0.0
    %2750 = vadd.xlane.f32.xlu0 %v2749
    %v2751 = vpop.xlane.xlu0 %2750
    %v2752 = vsel %vm271, %v2722, 0.0
    %2753 = vadd.xlane.f32.xlu0 %v2752
    %v2754 = vpop.xlane.xlu0 %2753
    %v2755 = vsel %vm271, %v2723, 0.0
    %2756 = vadd.xlane.f32.xlu0 %v2755
    %v2757 = vpop.xlane.xlu0 %2756
    %v2758 = vsel %vm271, %v2724, 0.0
    %2759 = vadd.xlane.f32.xlu0 %v2758
    %v2760 = vpop.xlane.xlu0 %2759
    %v2761 = vmul.f32 %v2727, %v299
    %v2762 = vmul.f32 %v2730, %v299
    %v2763 = vmul.f32 %v2733, %v299
    %v2764 = vmul.f32 %v2736, %v299
    %v2765 = vmul.f32 %v2739, %v299
    %v2766 = vmul.f32 %v2742, %v299
    %v2767 = vmul.f32 %v2745, %v299
    %v2768 = vmul.f32 %v2748, %v299
    %v2769 = vmul.f32 %v2751, %v299
    %v2770 = vmul.f32 %v2754, %v299
    %v2771 = vmul.f32 %v2757, %v299
    %v2772 = vmul.f32 %v2760, %v299
    %v2773 = vadd.f32 %v2761, 1e-12
    %v2774 = vadd.f32 %v2762, 1e-12
    %v2775 = vadd.f32 %v2763, 1e-12
    %v2776 = vadd.f32 %v2764, 1e-12
    %v2777 = vadd.f32 %v2765, 1e-12
    %v2778 = vadd.f32 %v2766, 1e-12
    %v2779 = vadd.f32 %v2767, 1e-12
    %v2780 = vadd.f32 %v2768, 1e-12
    %v2781 = vadd.f32 %v2769, 1e-12
    %v2782 = vadd.f32 %v2770, 1e-12
    %v2783 = vadd.f32 %v2771, 1e-12
    %v2784 = vadd.f32 %v2772, 1e-12
    %v2785 = vrsqrt.pop %v2773
    %v2786 = vrsqrt.pop %v2774
    %v2787 = vrsqrt.pop %v2775
    %v2788 = vrsqrt.pop %v2776
    %v2789 = vrsqrt.pop %v2777
    %v2790 = vrsqrt.pop %v2778
    %v2791 = vrsqrt.pop %v2779
    %v2792 = vrsqrt.pop %v2780
    %v2793 = vrsqrt.pop %v2781
    %v2794 = vrsqrt.pop %v2782
    %v2795 = vrsqrt.pop %v2783
    %v2796 = vrsqrt.pop %v2784
    %v2797 = vmul.f32 %v2701, %v2785
    %v2798 = vmul.f32 %v2702, %v2786
    %v2799 = vmul.f32 %v2703, %v2787
    %v2800 = vmul.f32 %v2704, %v2788
    %v2801 = vmul.f32 %v2705, %v2789
    %v2802 = vmul.f32 %v2706, %v2790
    %v2803 = vmul.f32 %v2707, %v2791
    %v2804 = vmul.f32 %v2708, %v2792
    %v2805 = vmul.f32 %v2709, %v2793
    %v2806 = vmul.f32 %v2710, %v2794
    %v2807 = vmul.f32 %v2711, %v2795
    %v2808 = vmul.f32 %v2712, %v2796
    %v2810 = vlaneseq
    %v2811 = vshrl.u32 %v2810, 7
    %v2812 = vsub.s32 0, %v2811
    %v2813 = vrot.slane %v2651, %v2812
    %v2815 = vmul.f32 %v2797, %v2813
    %v2816 = vmul.f32 %v2798, %v2813
    %v2817 = vmul.f32 %v2799, %v2813
    %v2818 = vmul.f32 %v2800, %v2813
    %v2819 = vmul.f32 %v2801, %v2813
    %v2820 = vmul.f32 %v2802, %v2813
    %v2821 = vmul.f32 %v2803, %v2813
    %v2822 = vmul.f32 %v2804, %v2813
    %v2823 = vmul.f32 %v2805, %v2813
    %v2824 = vmul.f32 %v2806, %v2813
    %v2825 = vmul.f32 %v2807, %v2813
    %v2826 = vmul.f32 %v2808, %v2813
    %v2828 = vlaneseq
    %v2829 = vshrl.u32 %v2828, 7
    %v2830 = vsub.s32 0, %v2829
    %v2831 = vrot.slane %v2652, %v2830
    %v2833 = vadd.f32 %v2815, %v2831
    %v2834 = vadd.f32 %v2816, %v2831
    %v2835 = vadd.f32 %v2817, %v2831
    %v2836 = vadd.f32 %v2818, %v2831
    %v2837 = vadd.f32 %v2819, %v2831
    %v2838 = vadd.f32 %v2820, %v2831
    %v2839 = vadd.f32 %v2821, %v2831
    %v2840 = vadd.f32 %v2822, %v2831
    %v2841 = vadd.f32 %v2823, %v2831
    %v2842 = vadd.f32 %v2824, %v2831
    %v2843 = vadd.f32 %v2825, %v2831
    %v2844 = vadd.f32 %v2826, %v2831
    %v2845 = vpack.c.bf16 %v2834, %v2833
    %v2846 = vpack.c.bf16 %v2836, %v2835
    %v2847 = vpack.c.bf16 %v2838, %v2837
    %v2848 = vpack.c.bf16 %v2840, %v2839
    %v2849 = vpack.c.bf16 %v2842, %v2841
    %v2850 = vpack.c.bf16 %v2844, %v2843
    %v2851 = vld [vmem:[%s25] sm:$0xf]
    %v2852 = vld [vmem:[%s25 + $0x4] sm:$0xf]
    %v2853 = vld [vmem:[%s25 + $0x8] sm:$0xf]
    %v2854 = vld [vmem:[%s25 + $0xc] sm:$0xf]
    %v2855 = vld [vmem:[%s27] sm:$0x1]
    %v2857 = vlaneseq
    %v2858 = vshrl.u32 %v2857, 7
    %v2859 = vsub.s32 0, %v2858
    %v2860 = vrot.slane %v2855, %v2859
    %v2866 = vunpack.c.l.b16 %v2851
    %v2867 = vunpack.c.l.b16 %v2852
    %v2868 = vunpack.c.l.b16 %v2853
    %v2869 = vunpack.c.l.b16 %v2854
    %v2870 = vpack.c.b16 %v2867, %v2866
    %v2871 = vpack.c.b16 %v2869, %v2868
    %v2875 = vsel %vm271, %v2845, 0
    %v2878 = vsel %vm271, %v2846, 0
    %v2881 = vsel %vm271, %v2847, 0
    %v2884 = vsel %vm271, %v2848, 0
    %v2887 = vsel %vm271, %v2849, 0
    %v2890 = vsel %vm271, %v2850, 0
    %2892 = vmatprep.subr.bf16.mxu0 0
    %2893 = vmatpush1.bf16.msra.mxu0 %v2870
    %2894 = vmatprep.subr.bf16.mxu0 0
    %2895 = vmatpush1.bf16.msra.mxu0 %v2871
    %2896 = vmatprep.subr.bf16.mxu0 0
    %2897 = vmatpush1.bf16.msra.mxu0 0
    %2898 = vmatprep.subr.bf16.mxu0 0
    %2899 = vmatpush1.bf16.msra.mxu0 0
    %2900 = vmatprep.subr.bf16.mxu0 0
    %2901 = vmatpush1.bf16.msra.mxu0 0
    %2902 = vmatprep.subr.bf16.mxu0 0
    %2903 = vmatpush1.bf16.msra.mxu0 0
    %2904 = vmatprep.subr.bf16.mxu0 0
    %2905 = vmatpush1.bf16.msra.mxu0 0
    %2906 = vmatprep.subr.bf16.mxu0 0
    %2907 = vmatpush1.bf16.msra.mxu0 0
    %2908 = vmatprep.subr.bf16.mxu0 0
    %2909 = vmatpush1.bf16.msra.mxu0 0
    %2910 = vmatprep.subr.bf16.mxu0 0
    %2911 = vmatpush1.bf16.msra.mxu0 0
    %2912 = vmatprep.subr.bf16.mxu0 0
    %2913 = vmatpush1.bf16.msra.mxu0 0
    %2914 = vmatprep.subr.bf16.mxu0 0
    %2915 = vmatpush1.bf16.msra.mxu0 0
    %2916 = vmatprep.subr.bf16.mxu0 0
    %2917 = vmatpush1.bf16.msra.mxu0 0
    %2918 = vmatprep.subr.bf16.mxu0 0
    %2919 = vmatpush1.bf16.msra.mxu0 0
    %2920 = vmatprep.subr.bf16.mxu0 0
    %2921 = vmatpush1.bf16.msra.mxu0 0
    %2922 = vmatprep.subr.bf16.mxu0 0
    %2923 = vmatpush1.bf16.msra.mxu0 0
    %2924 = vmatprep.mubr.bf16.mxu0 0
    %2925 = vmatmul.mubr.bf16.gmra.mrb[0].mxu0 %v2875
    %v2926 = vpop.f32.mrb[0].mxu0
    %v2927 = vadd.f32 %v2860, %v2926
    %v2928 = vpop.f32.mrb[0].mxu0
    %v2929 = vpop.f32.mrb[0].mxu0
    %v2930 = vadd.f32 %v2860, %v2929
    %v2931 = vpop.f32.mrb[0].mxu0
    %2932 = vmatprep.mubr.bf16.mxu0 0
    %2933 = vmatmul.mubr.bf16.gmra.mrb[0].mxu0 %v2878
    %v2934 = vpop.f32.mrb[0].mxu0
    %v2935 = vadd.f32 %v2860, %v2934
    %v2936 = vpop.f32.mrb[0].mxu0
    %v2937 = vpop.f32.mrb[0].mxu0
    %v2938 = vadd.f32 %v2860, %v2937
    %v2939 = vpop.f32.mrb[0].mxu0
    %2940 = vmatprep.mubr.bf16.mxu0 0
    %2941 = vmatmul.mubr.bf16.gmra.mrb[0].mxu0 %v2881
    %v2942 = vpop.f32.mrb[0].mxu0
    %v2943 = vadd.f32 %v2860, %v2942
    %v2944 = vpop.f32.mrb[0].mxu0
    %v2945 = vpop.f32.mrb[0].mxu0
    %v2946 = vadd.f32 %v2860, %v2945
    %v2947 = vpop.f32.mrb[0].mxu0
    %2948 = vmatprep.mubr.bf16.mxu0 0
    %2949 = vmatmul.mubr.bf16.gmra.mrb[0].mxu0 %v2884
    %v2950 = vpop.f32.mrb[0].mxu0
    %v2951 = vadd.f32 %v2860, %v2950
    %v2952 = vpop.f32.mrb[0].mxu0
    %v2953 = vpop.f32.mrb[0].mxu0
    %v2954 = vadd.f32 %v2860, %v2953
    %v2955 = vpop.f32.mrb[0].mxu0
    %2956 = vmatprep.mubr.bf16.mxu0 0
    %2957 = vmatmul.mubr.bf16.gmra.mrb[0].mxu0 %v2887
    %v2958 = vpop.f32.mrb[0].mxu0
    %v2959 = vadd.f32 %v2860, %v2958
    %v2960 = vpop.f32.mrb[0].mxu0
    %v2961 = vpop.f32.mrb[0].mxu0
    %v2962 = vadd.f32 %v2860, %v2961
    %v2963 = vpop.f32.mrb[0].mxu0
    %2964 = vmatprep.mubr.bf16.mxu0 0
    %2965 = vmatmul.mubr.bf16.gmra.mrb[0].mxu0 %v2890
    %v2966 = vpop.f32.mrb[0].mxu0
    %v2967 = vadd.f32 %v2860, %v2966
    %v2968 = vpop.f32.mrb[0].mxu0
    %v2969 = vpop.f32.mrb[0].mxu0
    %v2970 = vadd.f32 %v2860, %v2969
    %v2971 = vpop.f32.mrb[0].mxu0
    %2972 = vdwg.mxu0
    %v2973 = vmul.f32 %v2927, %v2927
    %v2974 = vmul.f32 %v2930, %v2930
    %v2975 = vmul.f32 %v2935, %v2935
    %v2976 = vmul.f32 %v2938, %v2938
    %v2977 = vmul.f32 %v2943, %v2943
    %v2978 = vmul.f32 %v2946, %v2946
    %v2979 = vmul.f32 %v2951, %v2951
    %v2980 = vmul.f32 %v2954, %v2954
    %v2981 = vmul.f32 %v2959, %v2959
    %v2982 = vmul.f32 %v2962, %v2962
    %v2983 = vmul.f32 %v2967, %v2967
    %v2984 = vmul.f32 %v2970, %v2970
    %v2985 = vmul.f32 %v2927, %v2973
    %v2986 = vmul.f32 %v2930, %v2974
    %v2987 = vmul.f32 %v2935, %v2975
    %v2988 = vmul.f32 %v2938, %v2976
    %v2989 = vmul.f32 %v2943, %v2977
    %v2990 = vmul.f32 %v2946, %v2978
    %v2991 = vmul.f32 %v2951, %v2979
    %v2992 = vmul.f32 %v2954, %v2980
    %v2993 = vmul.f32 %v2959, %v2981
    %v2994 = vmul.f32 %v2962, %v2982
    %v2995 = vmul.f32 %v2967, %v2983
    %v2996 = vmul.f32 %v2970, %v2984
    %v2997 = vmul.f32 %v2985, 0.044715
    %v2998 = vmul.f32 %v2986, 0.044715
    %v2999 = vmul.f32 %v2987, 0.044715
    %v3000 = vmul.f32 %v2988, 0.044715
    %v3001 = vmul.f32 %v2989, 0.044715
    %v3002 = vmul.f32 %v2990, 0.044715
    %v3003 = vmul.f32 %v2991, 0.044715
    %v3004 = vmul.f32 %v2992, 0.044715
    %v3005 = vmul.f32 %v2993, 0.044715
    %v3006 = vmul.f32 %v2994, 0.044715
    %v3007 = vmul.f32 %v2995, 0.044715
    %v3008 = vmul.f32 %v2996, 0.044715
    %v3009 = vadd.f32 %v2927, %v2997
    %v3010 = vadd.f32 %v2930, %v2998
    %v3011 = vadd.f32 %v2935, %v2999
    %v3012 = vadd.f32 %v2938, %v3000
    %v3013 = vadd.f32 %v2943, %v3001
    %v3014 = vadd.f32 %v2946, %v3002
    %v3015 = vadd.f32 %v2951, %v3003
    %v3016 = vadd.f32 %v2954, %v3004
    %v3017 = vadd.f32 %v2959, %v3005
    %v3018 = vadd.f32 %v2962, %v3006
    %v3019 = vadd.f32 %v2967, %v3007
    %v3020 = vadd.f32 %v2970, %v3008
    %v3021 = vmul.f32 %v3009, 0.7978846
    %v3022 = vmul.f32 %v3010, 0.7978846
    %v3023 = vmul.f32 %v3011, 0.7978846
    %v3024 = vmul.f32 %v3012, 0.7978846
    %v3025 = vmul.f32 %v3013, 0.7978846
    %v3026 = vmul.f32 %v3014, 0.7978846
    %v3027 = vmul.f32 %v3015, 0.7978846
    %v3028 = vmul.f32 %v3016, 0.7978846
    %v3029 = vmul.f32 %v3017, 0.7978846
    %v3030 = vmul.f32 %v3018, 0.7978846
    %v3031 = vmul.f32 %v3019, 0.7978846
    %v3032 = vmul.f32 %v3020, 0.7978846
    %v3033 = vtanh.pop %v3021
    %v3034 = vtanh.pop %v3022
    %v3035 = vtanh.pop %v3023
    %v3036 = vtanh.pop %v3024
    %v3037 = vtanh.pop %v3025
    %v3038 = vtanh.pop %v3026
    %v3039 = vtanh.pop %v3027
    %v3040 = vtanh.pop %v3028
    %v3041 = vtanh.pop %v3029
    %v3042 = vtanh.pop %v3030
    %v3043 = vtanh.pop %v3031
    %v3044 = vtanh.pop %v3032
    %v3045 = vadd.f32 %v3033, 1.0
    %v3046 = vadd.f32 %v3034, 1.0
    %v3047 = vadd.f32 %v3035, 1.0
    %v3048 = vadd.f32 %v3036, 1.0
    %v3049 = vadd.f32 %v3037, 1.0
    %v3050 = vadd.f32 %v3038, 1.0
    %v3051 = vadd.f32 %v3039, 1.0
    %v3052 = vadd.f32 %v3040, 1.0
    %v3053 = vadd.f32 %v3041, 1.0
    %v3054 = vadd.f32 %v3042, 1.0
    %v3055 = vadd.f32 %v3043, 1.0
    %v3056 = vadd.f32 %v3044, 1.0
    %v3057 = vmul.f32 %v3045, 0.5
    %v3058 = vmul.f32 %v3046, 0.5
    %v3059 = vmul.f32 %v3047, 0.5
    %v3060 = vmul.f32 %v3048, 0.5
    %v3061 = vmul.f32 %v3049, 0.5
    %v3062 = vmul.f32 %v3050, 0.5
    %v3063 = vmul.f32 %v3051, 0.5
    %v3064 = vmul.f32 %v3052, 0.5
    %v3065 = vmul.f32 %v3053, 0.5
    %v3066 = vmul.f32 %v3054, 0.5
    %v3067 = vmul.f32 %v3055, 0.5
    %v3068 = vmul.f32 %v3056, 0.5
    %v3069 = vmul.f32 %v2927, %v3057
    %v3070 = vmul.f32 %v2930, %v3058
    %v3071 = vmul.f32 %v2935, %v3059
    %v3072 = vmul.f32 %v2938, %v3060
    %v3073 = vmul.f32 %v2943, %v3061
    %v3074 = vmul.f32 %v2946, %v3062
    %v3075 = vmul.f32 %v2951, %v3063
    %v3076 = vmul.f32 %v2954, %v3064
    %v3077 = vmul.f32 %v2959, %v3065
    %v3078 = vmul.f32 %v2962, %v3066
    %v3079 = vmul.f32 %v2967, %v3067
    %v3080 = vmul.f32 %v2970, %v3068
    %v3081 = vpack.c.bf16 %v3070, %v3069
    %v3082 = vpack.c.bf16 %v3072, %v3071
    %v3083 = vpack.c.bf16 %v3074, %v3073
    %v3084 = vpack.c.bf16 %v3076, %v3075
    %v3085 = vpack.c.bf16 %v3078, %v3077
    %v3086 = vpack.c.bf16 %v3080, %v3079
    %v3087 = vld [vmem:[%s29] sm:$0xf]
    %v3088 = vld [vmem:[%s29 + $0x4] sm:$0xf]
    %v3089 = vld [vmem:[%s29 + $0x8] sm:$0xf]
    %v3090 = vld [vmem:[%s29 + $0xc] sm:$0xf]
    %v3091 = vld [vmem:[%s29 + $0x10] sm:$0xf]
    %v3092 = vld [vmem:[%s29 + $0x14] sm:$0xf]
    %v3093 = vld [vmem:[%s29 + $0x18] sm:$0xf]
    %v3094 = vld [vmem:[%s29 + $0x1c] sm:$0xf]
    %v3103 = vunpack.c.l.b16 %v3087
    %v3104 = vunpack.c.l.b16 %v3088
    %v3105 = vunpack.c.l.b16 %v3089
    %v3106 = vunpack.c.l.b16 %v3090
    %v3107 = vunpack.c.l.b16 %v3091
    %v3108 = vunpack.c.l.b16 %v3092
    %v3109 = vunpack.c.l.b16 %v3093
    %v3110 = vunpack.c.l.b16 %v3094
    %v3111 = vpack.c.b16 %v3104, %v3103
    %v3112 = vpack.c.b16 %v3106, %v3105
    %v3113 = vpack.c.b16 %v3108, %v3107
    %v3114 = vpack.c.b16 %v3110, %v3109
    %v3120 = vsel %vm175, %v3081, 0
    %v3123 = vsel %vm175, %v3082, 0
    %v3126 = vsel %vm175, %v3083, 0
    %v3129 = vsel %vm175, %v3084, 0
    %v3132 = vsel %vm175, %v3085, 0
    %v3135 = vsel %vm175, %v3086, 0
    %3137 = vmatprep.subr.bf16.mxu0 0
    %3138 = vmatpush1.bf16.msra.mxu0 %v3111
    %3139 = vmatprep.subr.bf16.mxu0 0
    %3140 = vmatpush1.bf16.msra.mxu0 %v3112
    %3141 = vmatprep.subr.bf16.mxu0 0
    %3142 = vmatpush1.bf16.msra.mxu0 %v3113
    %3143 = vmatprep.subr.bf16.mxu0 0
    %3144 = vmatpush1.bf16.msra.mxu0 %v3114
    %3145 = vmatprep.subr.bf16.mxu0 0
    %3146 = vmatpush1.bf16.msra.mxu0 0
    %3147 = vmatprep.subr.bf16.mxu0 0
    %3148 = vmatpush1.bf16.msra.mxu0 0
    %3149 = vmatprep.subr.bf16.mxu0 0
    %3150 = vmatpush1.bf16.msra.mxu0 0
    %3151 = vmatprep.subr.bf16.mxu0 0
    %3152 = vmatpush1.bf16.msra.mxu0 0
    %3153 = vmatprep.subr.bf16.mxu0 0
    %3154 = vmatpush1.bf16.msra.mxu0 0
    %3155 = vmatprep.subr.bf16.mxu0 0
    %3156 = vmatpush1.bf16.msra.mxu0 0
    %3157 = vmatprep.subr.bf16.mxu0 0
    %3158 = vmatpush1.bf16.msra.mxu0 0
    %3159 = vmatprep.subr.bf16.mxu0 0
    %3160 = vmatpush1.bf16.msra.mxu0 0
    %3161 = vmatprep.subr.bf16.mxu0 0
    %3162 = vmatpush1.bf16.msra.mxu0 0
    %3163 = vmatprep.subr.bf16.mxu0 0
    %3164 = vmatpush1.bf16.msra.mxu0 0
    %3165 = vmatprep.subr.bf16.mxu0 0
    %3166 = vmatpush1.bf16.msra.mxu0 0
    %3167 = vmatprep.subr.bf16.mxu0 0
    %3168 = vmatpush1.bf16.msra.mxu0 0
    %3169 = vmatprep.mubr.bf16.mxu0 0
    %3170 = vmatmul.mubr.bf16.gmra.mrb[0].mxu0 %v3120
    %v3171 = vpop.f32.mrb[0].mxu0
    %v3172 = vadd.f32 0.0, %v3171
    %v3173 = vpop.f32.mrb[0].mxu0
    %v3174 = vpop.f32.mrb[0].mxu0
    %v3175 = vadd.f32 0.0, %v3174
    %v3176 = vpop.f32.mrb[0].mxu0
    %3177 = vmatprep.mubr.bf16.mxu0 0
    %3178 = vmatmul.mubr.bf16.gmra.mrb[0].mxu0 %v3123
    %v3179 = vpop.f32.mrb[0].mxu0
    %v3180 = vadd.f32 0.0, %v3179
    %v3181 = vpop.f32.mrb[0].mxu0
    %v3182 = vpop.f32.mrb[0].mxu0
    %v3183 = vadd.f32 0.0, %v3182
    %v3184 = vpop.f32.mrb[0].mxu0
    %3185 = vmatprep.mubr.bf16.mxu0 0
    %3186 = vmatmul.mubr.bf16.gmra.mrb[0].mxu0 %v3126
    %v3187 = vpop.f32.mrb[0].mxu0
    %v3188 = vadd.f32 0.0, %v3187
    %v3189 = vpop.f32.mrb[0].mxu0
    %v3190 = vpop.f32.mrb[0].mxu0
    %v3191 = vadd.f32 0.0, %v3190
    %v3192 = vpop.f32.mrb[0].mxu0
    %3193 = vmatprep.mubr.bf16.mxu0 0
    %3194 = vmatmul.mubr.bf16.gmra.mrb[0].mxu0 %v3129
    %v3195 = vpop.f32.mrb[0].mxu0
    %v3196 = vadd.f32 0.0, %v3195
    %v3197 = vpop.f32.mrb[0].mxu0
    %v3198 = vpop.f32.mrb[0].mxu0
    %v3199 = vadd.f32 0.0, %v3198
    %v3200 = vpop.f32.mrb[0].mxu0
    %3201 = vmatprep.mubr.bf16.mxu0 0
    %3202 = vmatmul.mubr.bf16.gmra.mrb[0].mxu0 %v3132
    %v3203 = vpop.f32.mrb[0].mxu0
    %v3204 = vadd.f32 0.0, %v3203
    %v3205 = vpop.f32.mrb[0].mxu0
    %v3206 = vpop.f32.mrb[0].mxu0
    %v3207 = vadd.f32 0.0, %v3206
    %v3208 = vpop.f32.mrb[0].mxu0
    %3209 = vmatprep.mubr.bf16.mxu0 0
    %3210 = vmatmul.mubr.bf16.gmra.mrb[0].mxu0 %v3135
    %v3211 = vpop.f32.mrb[0].mxu0
    %v3212 = vadd.f32 0.0, %v3211
    %v3213 = vpop.f32.mrb[0].mxu0
    %v3214 = vpop.f32.mrb[0].mxu0
    %v3215 = vadd.f32 0.0, %v3214
    %v3216 = vpop.f32.mrb[0].mxu0
    %3217 = vdwg.mxu0
    %v3218 = vadd.f32 %v2639, %v3172
    %v3219 = vadd.f32 %v2640, %v3175
    %v3220 = vadd.f32 %v2641, %v3180
    %v3221 = vadd.f32 %v2642, %v3183
    %v3222 = vadd.f32 %v2643, %v3188
    %v3223 = vadd.f32 %v2644, %v3191
    %v3224 = vadd.f32 %v2645, %v3196
    %v3225 = vadd.f32 %v2646, %v3199
    %v3226 = vadd.f32 %v2647, %v3204
    %v3227 = vadd.f32 %v2648, %v3207
    %v3228 = vadd.f32 %v2649, %v3212
    %v3229 = vadd.f32 %v2650, %v3215
    %v3230 = vld [vmem:[%s31] sm:$0x1]
    %v3232 = vlaneseq
    %v3233 = vshrl.u32 %v3232, 7
    %v3234 = vsub.s32 0, %v3233
    %v3235 = vrot.slane %v3230, %v3234
    %v3237 = vadd.f32 %v3218, %v3235
    %v3238 = vadd.f32 %v3219, %v3235
    %v3239 = vadd.f32 %v3220, %v3235
    %v3240 = vadd.f32 %v3221, %v3235
    %v3241 = vadd.f32 %v3222, %v3235
    %v3242 = vadd.f32 %v3223, %v3235
    %v3243 = vadd.f32 %v3224, %v3235
    %v3244 = vadd.f32 %v3225, %v3235
    %v3245 = vadd.f32 %v3226, %v3235
    %v3246 = vadd.f32 %v3227, %v3235
    %v3247 = vadd.f32 %v3228, %v3235
    %v3248 = vadd.f32 %v3229, %v3235
    %s3249 = scalar_lea.vmem %s9, 1
    %v3250 = vld [vmem:[%s3249] sm:$0x1]
    %s3251 = scalar_lea.vmem %s11, 1
    %v3252 = vld [vmem:[%s3251] sm:$0x1]
    %v3253 = vsel %vm271, %v3237, 0.0
    %3254 = vadd.xlane.f32.xlu0 %v3253
    %v3255 = vpop.xlane.xlu0 %3254
    %v3256 = vsel %vm271, %v3238, 0.0
    %3257 = vadd.xlane.f32.xlu0 %v3256
    %v3258 = vpop.xlane.xlu0 %3257
    %v3259 = vsel %vm271, %v3239, 0.0
    %3260 = vadd.xlane.f32.xlu0 %v3259
    %v3261 = vpop.xlane.xlu0 %3260
    %v3262 = vsel %vm271, %v3240, 0.0
    %3263 = vadd.xlane.f32.xlu0 %v3262
    %v3264 = vpop.xlane.xlu0 %3263
    %v3265 = vsel %vm271, %v3241, 0.0
    %3266 = vadd.xlane.f32.xlu0 %v3265
    %v3267 = vpop.xlane.xlu0 %3266
    %v3268 = vsel %vm271, %v3242, 0.0
    %3269 = vadd.xlane.f32.xlu0 %v3268
    %v3270 = vpop.xlane.xlu0 %3269
    %v3271 = vsel %vm271, %v3243, 0.0
    %3272 = vadd.xlane.f32.xlu0 %v3271
    %v3273 = vpop.xlane.xlu0 %3272
    %v3274 = vsel %vm271, %v3244, 0.0
    %3275 = vadd.xlane.f32.xlu0 %v3274
    %v3276 = vpop.xlane.xlu0 %3275
    %v3277 = vsel %vm271, %v3245, 0.0
    %3278 = vadd.xlane.f32.xlu0 %v3277
    %v3279 = vpop.xlane.xlu0 %3278
    %v3280 = vsel %vm271, %v3246, 0.0
    %3281 = vadd.xlane.f32.xlu0 %v3280
    %v3282 = vpop.xlane.xlu0 %3281
    %v3283 = vsel %vm271, %v3247, 0.0
    %3284 = vadd.xlane.f32.xlu0 %v3283
    %v3285 = vpop.xlane.xlu0 %3284
    %v3286 = vsel %vm271, %v3248, 0.0
    %3287 = vadd.xlane.f32.xlu0 %v3286
    %v3288 = vpop.xlane.xlu0 %3287
    %v3289 = vmul.f32 %v3255, %v299
    %v3290 = vmul.f32 %v3258, %v299
    %v3291 = vmul.f32 %v3261, %v299
    %v3292 = vmul.f32 %v3264, %v299
    %v3293 = vmul.f32 %v3267, %v299
    %v3294 = vmul.f32 %v3270, %v299
    %v3295 = vmul.f32 %v3273, %v299
    %v3296 = vmul.f32 %v3276, %v299
    %v3297 = vmul.f32 %v3279, %v299
    %v3298 = vmul.f32 %v3282, %v299
    %v3299 = vmul.f32 %v3285, %v299
    %v3300 = vmul.f32 %v3288, %v299
    %v3301 = vsub.f32 %v3237, %v3289
    %v3302 = vsub.f32 %v3238, %v3290
    %v3303 = vsub.f32 %v3239, %v3291
    %v3304 = vsub.f32 %v3240, %v3292
    %v3305 = vsub.f32 %v3241, %v3293
    %v3306 = vsub.f32 %v3242, %v3294
    %v3307 = vsub.f32 %v3243, %v3295
    %v3308 = vsub.f32 %v3244, %v3296
    %v3309 = vsub.f32 %v3245, %v3297
    %v3310 = vsub.f32 %v3246, %v3298
    %v3311 = vsub.f32 %v3247, %v3299
    %v3312 = vsub.f32 %v3248, %v3300
    %v3313 = vmul.f32 %v3301, %v3301
    %v3314 = vmul.f32 %v3302, %v3302
    %v3315 = vmul.f32 %v3303, %v3303
    %v3316 = vmul.f32 %v3304, %v3304
    %v3317 = vmul.f32 %v3305, %v3305
    %v3318 = vmul.f32 %v3306, %v3306
    %v3319 = vmul.f32 %v3307, %v3307
    %v3320 = vmul.f32 %v3308, %v3308
    %v3321 = vmul.f32 %v3309, %v3309
    %v3322 = vmul.f32 %v3310, %v3310
    %v3323 = vmul.f32 %v3311, %v3311
    %v3324 = vmul.f32 %v3312, %v3312
    %v3325 = vsel %vm271, %v3313, 0.0
    %3326 = vadd.xlane.f32.xlu0 %v3325
    %v3327 = vpop.xlane.xlu0 %3326
    %v3328 = vsel %vm271, %v3314, 0.0
    %3329 = vadd.xlane.f32.xlu0 %v3328
    %v3330 = vpop.xlane.xlu0 %3329
    %v3331 = vsel %vm271, %v3315, 0.0
    %3332 = vadd.xlane.f32.xlu0 %v3331
    %v3333 = vpop.xlane.xlu0 %3332
    %v3334 = vsel %vm271, %v3316, 0.0
    %3335 = vadd.xlane.f32.xlu0 %v3334
    %v3336 = vpop.xlane.xlu0 %3335
    %v3337 = vsel %vm271, %v3317, 0.0
    %3338 = vadd.xlane.f32.xlu0 %v3337
    %v3339 = vpop.xlane.xlu0 %3338
    %v3340 = vsel %vm271, %v3318, 0.0
    %3341 = vadd.xlane.f32.xlu0 %v3340
    %v3342 = vpop.xlane.xlu0 %3341
    %v3343 = vsel %vm271, %v3319, 0.0
    %3344 = vadd.xlane.f32.xlu0 %v3343
    %v3345 = vpop.xlane.xlu0 %3344
    %v3346 = vsel %vm271, %v3320, 0.0
    %3347 = vadd.xlane.f32.xlu0 %v3346
    %v3348 = vpop.xlane.xlu0 %3347
    %v3349 = vsel %vm271, %v3321, 0.0
    %3350 = vadd.xlane.f32.xlu0 %v3349
    %v3351 = vpop.xlane.xlu0 %3350
    %v3352 = vsel %vm271, %v3322, 0.0
    %3353 = vadd.xlane.f32.xlu0 %v3352
    %v3354 = vpop.xlane.xlu0 %3353
    %v3355 = vsel %vm271, %v3323, 0.0
    %3356 = vadd.xlane.f32.xlu0 %v3355
    %v3357 = vpop.xlane.xlu0 %3356
    %v3358 = vsel %vm271, %v3324, 0.0
    %3359 = vadd.xlane.f32.xlu0 %v3358
    %v3360 = vpop.xlane.xlu0 %3359
    %v3361 = vmul.f32 %v3327, %v299
    %v3362 = vmul.f32 %v3330, %v299
    %v3363 = vmul.f32 %v3333, %v299
    %v3364 = vmul.f32 %v3336, %v299
    %v3365 = vmul.f32 %v3339, %v299
    %v3366 = vmul.f32 %v3342, %v299
    %v3367 = vmul.f32 %v3345, %v299
    %v3368 = vmul.f32 %v3348, %v299
    %v3369 = vmul.f32 %v3351, %v299
    %v3370 = vmul.f32 %v3354, %v299
    %v3371 = vmul.f32 %v3357, %v299
    %v3372 = vmul.f32 %v3360, %v299
    %v3373 = vadd.f32 %v3361, 1e-12
    %v3374 = vadd.f32 %v3362, 1e-12
    %v3375 = vadd.f32 %v3363, 1e-12
    %v3376 = vadd.f32 %v3364, 1e-12
    %v3377 = vadd.f32 %v3365, 1e-12
    %v3378 = vadd.f32 %v3366, 1e-12
    %v3379 = vadd.f32 %v3367, 1e-12
    %v3380 = vadd.f32 %v3368, 1e-12
    %v3381 = vadd.f32 %v3369, 1e-12
    %v3382 = vadd.f32 %v3370, 1e-12
    %v3383 = vadd.f32 %v3371, 1e-12
    %v3384 = vadd.f32 %v3372, 1e-12
    %v3385 = vrsqrt.pop %v3373
    %v3386 = vrsqrt.pop %v3374
    %v3387 = vrsqrt.pop %v3375
    %v3388 = vrsqrt.pop %v3376
    %v3389 = vrsqrt.pop %v3377
    %v3390 = vrsqrt.pop %v3378
    %v3391 = vrsqrt.pop %v3379
    %v3392 = vrsqrt.pop %v3380
    %v3393 = vrsqrt.pop %v3381
    %v3394 = vrsqrt.pop %v3382
    %v3395 = vrsqrt.pop %v3383
    %v3396 = vrsqrt.pop %v3384
    %v3397 = vmul.f32 %v3301, %v3385
    %v3398 = vmul.f32 %v3302, %v3386
    %v3399 = vmul.f32 %v3303, %v3387
    %v3400 = vmul.f32 %v3304, %v3388
    %v3401 = vmul.f32 %v3305, %v3389
    %v3402 = vmul.f32 %v3306, %v3390
    %v3403 = vmul.f32 %v3307, %v3391
    %v3404 = vmul.f32 %v3308, %v3392
    %v3405 = vmul.f32 %v3309, %v3393
    %v3406 = vmul.f32 %v3310, %v3394
    %v3407 = vmul.f32 %v3311, %v3395
    %v3408 = vmul.f32 %v3312, %v3396
    %v3410 = vlaneseq
    %v3411 = vshrl.u32 %v3410, 7
    %v3412 = vsub.s32 0, %v3411
    %v3413 = vrot.slane %v3250, %v3412
    %v3415 = vmul.f32 %v3397, %v3413
    %v3416 = vmul.f32 %v3398, %v3413
    %v3417 = vmul.f32 %v3399, %v3413
    %v3418 = vmul.f32 %v3400, %v3413
    %v3419 = vmul.f32 %v3401, %v3413
    %v3420 = vmul.f32 %v3402, %v3413
    %v3421 = vmul.f32 %v3403, %v3413
    %v3422 = vmul.f32 %v3404, %v3413
    %v3423 = vmul.f32 %v3405, %v3413
    %v3424 = vmul.f32 %v3406, %v3413
    %v3425 = vmul.f32 %v3407, %v3413
    %v3426 = vmul.f32 %v3408, %v3413
    %v3428 = vlaneseq
    %v3429 = vshrl.u32 %v3428, 7
    %v3430 = vsub.s32 0, %v3429
    %v3431 = vrot.slane %v3252, %v3430
    %v3433 = vadd.f32 %v3415, %v3431
    %v3434 = vadd.f32 %v3416, %v3431
    %v3435 = vadd.f32 %v3417, %v3431
    %v3436 = vadd.f32 %v3418, %v3431
    %v3437 = vadd.f32 %v3419, %v3431
    %v3438 = vadd.f32 %v3420, %v3431
    %v3439 = vadd.f32 %v3421, %v3431
    %v3440 = vadd.f32 %v3422, %v3431
    %v3441 = vadd.f32 %v3423, %v3431
    %v3442 = vadd.f32 %v3424, %v3431
    %v3443 = vadd.f32 %v3425, %v3431
    %v3444 = vadd.f32 %v3426, %v3431
    %v3445 = vpack.c.bf16 %v3434, %v3433
    %v3446 = vpack.c.bf16 %v3436, %v3435
    %v3447 = vpack.c.bf16 %v3438, %v3437
    %v3448 = vpack.c.bf16 %v3440, %v3439
    %v3449 = vpack.c.bf16 %v3442, %v3441
    %v3450 = vpack.c.bf16 %v3444, %v3443
    %s3451 = scalar_lea.vmem %s13, 96
    %v3452 = vld [vmem:[%s3451] sm:$0xf]
    %v3453 = vld [vmem:[%s3451 + $0x4] sm:$0xf]
    %v3454 = vld [vmem:[%s3451 + $0x8] sm:$0xf]
    %v3455 = vld [vmem:[%s3451 + $0xc] sm:$0xf]
    %s3456 = scalar_lea.vmem %s15, 6
    %v3457 = vld [vmem:[%s3456] sm:$0x1]
    %v3459 = vlaneseq
    %v3460 = vshrl.u32 %v3459, 7
    %v3461 = vsub.s32 0, %v3460
    %v3462 = vrot.slane %v3457, %v3461
    %v3468 = vunpack.c.l.b16 %v3452
    %v3469 = vunpack.c.l.b16 %v3453
    %v3470 = vunpack.c.l.b16 %v3454
    %v3471 = vunpack.c.l.b16 %v3455
    %v3472 = vpack.c.b16 %v3469, %v3468
    %v3473 = vpack.c.b16 %v3471, %v3470
    %v3477 = vsel %vm271, %v3445, 0
    %v3480 = vsel %vm271, %v3446, 0
    %v3483 = vsel %vm271, %v3447, 0
    %v3486 = vsel %vm271, %v3448, 0
    %v3489 = vsel %vm271, %v3449, 0
    %v3492 = vsel %vm271, %v3450, 0
    %3494 = vmatprep.subr.bf16.mxu0 0
    %3495 = vmatpush1.bf16.msra.mxu0 %v3472
    %3496 = vmatprep.subr.bf16.mxu0 0
    %3497 = vmatpush1.bf16.msra.mxu0 %v3473
    %3498 = vmatprep.subr.bf16.mxu0 0
    %3499 = vmatpush1.bf16.msra.mxu0 0
    %3500 = vmatprep.subr.bf16.mxu0 0
    %3501 = vmatpush1.bf16.msra.mxu0 0
    %3502 = vmatprep.subr.bf16.mxu0 0
    %3503 = vmatpush1.bf16.msra.mxu0 0
    %3504 = vmatprep.subr.bf16.mxu0 0
    %3505 = vmatpush1.bf16.msra.mxu0 0
    %3506 = vmatprep.subr.bf16.mxu0 0
    %3507 = vmatpush1.bf16.msra.mxu0 0
    %3508 = vmatprep.subr.bf16.mxu0 0
    %3509 = vmatpush1.bf16.msra.mxu0 0
    %3510 = vmatprep.subr.bf16.mxu0 0
    %3511 = vmatpush1.bf16.msra.mxu0 0
    %3512 = vmatprep.subr.bf16.mxu0 0
    %3513 = vmatpush1.bf16.msra.mxu0 0
    %3514 = vmatprep.subr.bf16.mxu0 0
    %3515 = vmatpush1.bf16.msra.mxu0 0
    %3516 = vmatprep.subr.bf16.mxu0 0
    %3517 = vmatpush1.bf16.msra.mxu0 0
    %3518 = vmatprep.subr.bf16.mxu0 0
    %3519 = vmatpush1.bf16.msra.mxu0 0
    %3520 = vmatprep.subr.bf16.mxu0 0
    %3521 = vmatpush1.bf16.msra.mxu0 0
    %3522 = vmatprep.subr.bf16.mxu0 0
    %3523 = vmatpush1.bf16.msra.mxu0 0
    %3524 = vmatprep.subr.bf16.mxu0 0
    %3525 = vmatpush1.bf16.msra.mxu0 0
    %3526 = vmatprep.mubr.bf16.mxu0 0
    %3527 = vmatmul.mubr.bf16.gmra.mrb[0].mxu0 %v3477
    %v3528 = vpop.f32.mrb[0].mxu0
    %v3529 = vadd.f32 %v3462, %v3528
    %v3530 = vpop.f32.mrb[0].mxu0
    %v3531 = vpop.f32.mrb[0].mxu0
    %v3532 = vadd.f32 %v3462, %v3531
    %v3533 = vpop.f32.mrb[0].mxu0
    %3534 = vmatprep.mubr.bf16.mxu0 0
    %3535 = vmatmul.mubr.bf16.gmra.mrb[0].mxu0 %v3480
    %v3536 = vpop.f32.mrb[0].mxu0
    %v3537 = vadd.f32 %v3462, %v3536
    %v3538 = vpop.f32.mrb[0].mxu0
    %v3539 = vpop.f32.mrb[0].mxu0
    %v3540 = vadd.f32 %v3462, %v3539
    %v3541 = vpop.f32.mrb[0].mxu0
    %3542 = vmatprep.mubr.bf16.mxu0 0
    %3543 = vmatmul.mubr.bf16.gmra.mrb[0].mxu0 %v3483
    %v3544 = vpop.f32.mrb[0].mxu0
    %v3545 = vadd.f32 %v3462, %v3544
    %v3546 = vpop.f32.mrb[0].mxu0
    %v3547 = vpop.f32.mrb[0].mxu0
    %v3548 = vadd.f32 %v3462, %v3547
    %v3549 = vpop.f32.mrb[0].mxu0
    %3550 = vmatprep.mubr.bf16.mxu0 0
    %3551 = vmatmul.mubr.bf16.gmra.mrb[0].mxu0 %v3486
    %v3552 = vpop.f32.mrb[0].mxu0
    %v3553 = vadd.f32 %v3462, %v3552
    %v3554 = vpop.f32.mrb[0].mxu0
    %v3555 = vpop.f32.mrb[0].mxu0
    %v3556 = vadd.f32 %v3462, %v3555
    %v3557 = vpop.f32.mrb[0].mxu0
    %3558 = vmatprep.mubr.bf16.mxu0 0
    %3559 = vmatmul.mubr.bf16.gmra.mrb[0].mxu0 %v3489
    %v3560 = vpop.f32.mrb[0].mxu0
    %v3561 = vadd.f32 %v3462, %v3560
    %v3562 = vpop.f32.mrb[0].mxu0
    %v3563 = vpop.f32.mrb[0].mxu0
    %v3564 = vadd.f32 %v3462, %v3563
    %v3565 = vpop.f32.mrb[0].mxu0
    %3566 = vmatprep.mubr.bf16.mxu0 0
    %3567 = vmatmul.mubr.bf16.gmra.mrb[0].mxu0 %v3492
    %v3568 = vpop.f32.mrb[0].mxu0
    %v3569 = vadd.f32 %v3462, %v3568
    %v3570 = vpop.f32.mrb[0].mxu0
    %v3571 = vpop.f32.mrb[0].mxu0
    %v3572 = vadd.f32 %v3462, %v3571
    %v3573 = vpop.f32.mrb[0].mxu0
    %3574 = vdwg.mxu0
    %s3575 = scalar_lea.vmem %s13, 128
    %v3576 = vld [vmem:[%s3575] sm:$0xf]
    %v3577 = vld [vmem:[%s3575 + $0x4] sm:$0xf]
    %v3578 = vld [vmem:[%s3575 + $0x8] sm:$0xf]
    %v3579 = vld [vmem:[%s3575 + $0xc] sm:$0xf]
    %s3580 = scalar_lea.vmem %s15, 8
    %v3581 = vld [vmem:[%s3580] sm:$0x1]
    %v3583 = vlaneseq
    %v3584 = vshrl.u32 %v3583, 7
    %v3585 = vsub.s32 0, %v3584
    %v3586 = vrot.slane %v3581, %v3585
    %v3592 = vunpack.c.l.b16 %v3576
    %v3593 = vunpack.c.l.b16 %v3577
    %v3594 = vunpack.c.l.b16 %v3578
    %v3595 = vunpack.c.l.b16 %v3579
    %v3596 = vpack.c.b16 %v3593, %v3592
    %v3597 = vpack.c.b16 %v3595, %v3594
    %3600 = vmatprep.subr.bf16.mxu0 0
    %3601 = vmatpush1.bf16.msra.mxu0 %v3596
    %3602 = vmatprep.subr.bf16.mxu0 0
    %3603 = vmatpush1.bf16.msra.mxu0 %v3597
    %3604 = vmatprep.subr.bf16.mxu0 0
    %3605 = vmatpush1.bf16.msra.mxu0 0
    %3606 = vmatprep.subr.bf16.mxu0 0
    %3607 = vmatpush1.bf16.msra.mxu0 0
    %3608 = vmatprep.subr.bf16.mxu0 0
    %3609 = vmatpush1.bf16.msra.mxu0 0
    %3610 = vmatprep.subr.bf16.mxu0 0
    %3611 = vmatpush1.bf16.msra.mxu0 0
    %3612 = vmatprep.subr.bf16.mxu0 0
    %3613 = vmatpush1.bf16.msra.mxu0 0
    %3614 = vmatprep.subr.bf16.mxu0 0
    %3615 = vmatpush1.bf16.msra.mxu0 0
    %3616 = vmatprep.subr.bf16.mxu0 0
    %3617 = vmatpush1.bf16.msra.mxu0 0
    %3618 = vmatprep.subr.bf16.mxu0 0
    %3619 = vmatpush1.bf16.msra.mxu0 0
    %3620 = vmatprep.subr.bf16.mxu0 0
    %3621 = vmatpush1.bf16.msra.mxu0 0
    %3622 = vmatprep.subr.bf16.mxu0 0
    %3623 = vmatpush1.bf16.msra.mxu0 0
    %3624 = vmatprep.subr.bf16.mxu0 0
    %3625 = vmatpush1.bf16.msra.mxu0 0
    %3626 = vmatprep.subr.bf16.mxu0 0
    %3627 = vmatpush1.bf16.msra.mxu0 0
    %3628 = vmatprep.subr.bf16.mxu0 0
    %3629 = vmatpush1.bf16.msra.mxu0 0
    %3630 = vmatprep.subr.bf16.mxu0 0
    %3631 = vmatpush1.bf16.msra.mxu0 0
    %3632 = vmatprep.mubr.bf16.mxu0 0
    %3633 = vmatmul.mubr.bf16.gmra.mrb[0].mxu0 %v3477
    %v3634 = vpop.f32.mrb[0].mxu0
    %v3635 = vadd.f32 %v3586, %v3634
    %v3636 = vpop.f32.mrb[0].mxu0
    %v3637 = vpop.f32.mrb[0].mxu0
    %v3638 = vadd.f32 %v3586, %v3637
    %v3639 = vpop.f32.mrb[0].mxu0
    %3640 = vmatprep.mubr.bf16.mxu0 0
    %3641 = vmatmul.mubr.bf16.gmra.mrb[0].mxu0 %v3480
    %v3642 = vpop.f32.mrb[0].mxu0
    %v3643 = vadd.f32 %v3586, %v3642
    %v3644 = vpop.f32.mrb[0].mxu0
    %v3645 = vpop.f32.mrb[0].mxu0
    %v3646 = vadd.f32 %v3586, %v3645
    %v3647 = vpop.f32.mrb[0].mxu0
    %3648 = vmatprep.mubr.bf16.mxu0 0
    %3649 = vmatmul.mubr.bf16.gmra.mrb[0].mxu0 %v3483
    %v3650 = vpop.f32.mrb[0].mxu0
    %v3651 = vadd.f32 %v3586, %v3650
    %v3652 = vpop.f32.mrb[0].mxu0
    %v3653 = vpop.f32.mrb[0].mxu0
    %v3654 = vadd.f32 %v3586, %v3653
    %v3655 = vpop.f32.mrb[0].mxu0
    %3656 = vmatprep.mubr.bf16.mxu0 0
    %3657 = vmatmul.mubr.bf16.gmra.mrb[0].mxu0 %v3486
    %v3658 = vpop.f32.mrb[0].mxu0
    %v3659 = vadd.f32 %v3586, %v3658
    %v3660 = vpop.f32.mrb[0].mxu0
    %v3661 = vpop.f32.mrb[0].mxu0
    %v3662 = vadd.f32 %v3586, %v3661
    %v3663 = vpop.f32.mrb[0].mxu0
    %3664 = vmatprep.mubr.bf16.mxu0 0
    %3665 = vmatmul.mubr.bf16.gmra.mrb[0].mxu0 %v3489
    %v3666 = vpop.f32.mrb[0].mxu0
    %v3667 = vadd.f32 %v3586, %v3666
    %v3668 = vpop.f32.mrb[0].mxu0
    %v3669 = vpop.f32.mrb[0].mxu0
    %v3670 = vadd.f32 %v3586, %v3669
    %v3671 = vpop.f32.mrb[0].mxu0
    %3672 = vmatprep.mubr.bf16.mxu0 0
    %3673 = vmatmul.mubr.bf16.gmra.mrb[0].mxu0 %v3492
    %v3674 = vpop.f32.mrb[0].mxu0
    %v3675 = vadd.f32 %v3586, %v3674
    %v3676 = vpop.f32.mrb[0].mxu0
    %v3677 = vpop.f32.mrb[0].mxu0
    %v3678 = vadd.f32 %v3586, %v3677
    %v3679 = vpop.f32.mrb[0].mxu0
    %3680 = vdwg.mxu0
    %s3681 = scalar_lea.vmem %s13, 160
    %v3682 = vld [vmem:[%s3681] sm:$0xf]
    %v3683 = vld [vmem:[%s3681 + $0x4] sm:$0xf]
    %v3684 = vld [vmem:[%s3681 + $0x8] sm:$0xf]
    %v3685 = vld [vmem:[%s3681 + $0xc] sm:$0xf]
    %s3686 = scalar_lea.vmem %s15, 10
    %v3687 = vld [vmem:[%s3686] sm:$0x1]
    %v3689 = vlaneseq
    %v3690 = vshrl.u32 %v3689, 7
    %v3691 = vsub.s32 0, %v3690
    %v3692 = vrot.slane %v3687, %v3691
    %v3698 = vunpack.c.l.b16 %v3682
    %v3699 = vunpack.c.l.b16 %v3683
    %v3700 = vunpack.c.l.b16 %v3684
    %v3701 = vunpack.c.l.b16 %v3685
    %v3702 = vpack.c.b16 %v3699, %v3698
    %v3703 = vpack.c.b16 %v3701, %v3700
    %3706 = vmatprep.subr.bf16.mxu0 0
    %3707 = vmatpush1.bf16.msra.mxu0 %v3702
    %3708 = vmatprep.subr.bf16.mxu0 0
    %3709 = vmatpush1.bf16.msra.mxu0 %v3703
    %3710 = vmatprep.subr.bf16.mxu0 0
    %3711 = vmatpush1.bf16.msra.mxu0 0
    %3712 = vmatprep.subr.bf16.mxu0 0
    %3713 = vmatpush1.bf16.msra.mxu0 0
    %3714 = vmatprep.subr.bf16.mxu0 0
    %3715 = vmatpush1.bf16.msra.mxu0 0
    %3716 = vmatprep.subr.bf16.mxu0 0
    %3717 = vmatpush1.bf16.msra.mxu0 0
    %3718 = vmatprep.subr.bf16.mxu0 0
    %3719 = vmatpush1.bf16.msra.mxu0 0
    %3720 = vmatprep.subr.bf16.mxu0 0
    %3721 = vmatpush1.bf16.msra.mxu0 0
    %3722 = vmatprep.subr.bf16.mxu0 0
    %3723 = vmatpush1.bf16.msra.mxu0 0
    %3724 = vmatprep.subr.bf16.mxu0 0
    %3725 = vmatpush1.bf16.msra.mxu0 0
    %3726 = vmatprep.subr.bf16.mxu0 0
    %3727 = vmatpush1.bf16.msra.mxu0 0
    %3728 = vmatprep.subr.bf16.mxu0 0
    %3729 = vmatpush1.bf16.msra.mxu0 0
    %3730 = vmatprep.subr.bf16.mxu0 0
    %3731 = vmatpush1.bf16.msra.mxu0 0
    %3732 = vmatprep.subr.bf16.mxu0 0
    %3733 = vmatpush1.bf16.msra.mxu0 0
    %3734 = vmatprep.subr.bf16.mxu0 0
    %3735 = vmatpush1.bf16.msra.mxu0 0
    %3736 = vmatprep.subr.bf16.mxu0 0
    %3737 = vmatpush1.bf16.msra.mxu0 0
    %3738 = vmatprep.mubr.bf16.mxu0 0
    %3739 = vmatmul.mubr.bf16.gmra.mrb[0].mxu0 %v3477
    %v3740 = vpop.f32.mrb[0].mxu0
    %v3741 = vadd.f32 %v3692, %v3740
    %v3742 = vpop.f32.mrb[0].mxu0
    %v3743 = vpop.f32.mrb[0].mxu0
    %v3744 = vadd.f32 %v3692, %v3743
    %v3745 = vpop.f32.mrb[0].mxu0
    %3746 = vmatprep.mubr.bf16.mxu0 0
    %3747 = vmatmul.mubr.bf16.gmra.mrb[0].mxu0 %v3480
    %v3748 = vpop.f32.mrb[0].mxu0
    %v3749 = vadd.f32 %v3692, %v3748
    %v3750 = vpop.f32.mrb[0].mxu0
    %v3751 = vpop.f32.mrb[0].mxu0
    %v3752 = vadd.f32 %v3692, %v3751
    %v3753 = vpop.f32.mrb[0].mxu0
    %3754 = vmatprep.mubr.bf16.mxu0 0
    %3755 = vmatmul.mubr.bf16.gmra.mrb[0].mxu0 %v3483
    %v3756 = vpop.f32.mrb[0].mxu0
    %v3757 = vadd.f32 %v3692, %v3756
    %v3758 = vpop.f32.mrb[0].mxu0
    %v3759 = vpop.f32.mrb[0].mxu0
    %v3760 = vadd.f32 %v3692, %v3759
    %v3761 = vpop.f32.mrb[0].mxu0
    %3762 = vmatprep.mubr.bf16.mxu0 0
    %3763 = vmatmul.mubr.bf16.gmra.mrb[0].mxu0 %v3486
    %v3764 = vpop.f32.mrb[0].mxu0
    %v3765 = vadd.f32 %v3692, %v3764
    %v3766 = vpop.f32.mrb[0].mxu0
    %v3767 = vpop.f32.mrb[0].mxu0
    %v3768 = vadd.f32 %v3692, %v3767
    %v3769 = vpop.f32.mrb[0].mxu0
    %3770 = vmatprep.mubr.bf16.mxu0 0
    %3771 = vmatmul.mubr.bf16.gmra.mrb[0].mxu0 %v3489
    %v3772 = vpop.f32.mrb[0].mxu0
    %v3773 = vadd.f32 %v3692, %v3772
    %v3774 = vpop.f32.mrb[0].mxu0
    %v3775 = vpop.f32.mrb[0].mxu0
    %v3776 = vadd.f32 %v3692, %v3775
    %v3777 = vpop.f32.mrb[0].mxu0
    %3778 = vmatprep.mubr.bf16.mxu0 0
    %3779 = vmatmul.mubr.bf16.gmra.mrb[0].mxu0 %v3492
    %v3780 = vpop.f32.mrb[0].mxu0
    %v3781 = vadd.f32 %v3692, %v3780
    %v3782 = vpop.f32.mrb[0].mxu0
    %v3783 = vpop.f32.mrb[0].mxu0
    %v3784 = vadd.f32 %v3692, %v3783
    %v3785 = vpop.f32.mrb[0].mxu0
    %3786 = vdwg.mxu0
    %v3787 = vpack.c.bf16 %v3532, %v3529
    %v3788 = vpack.c.bf16 %v3537, %v3537
    %v3789 = vpack.c.bf16 %v3545, %v3540
    %v3790 = vpack.c.bf16 %v3548, %v3548
    %v3791 = vpack.c.bf16 %v3556, %v3553
    %v3792 = vpack.c.bf16 %v3561, %v3561
    %v3793 = vpack.c.bf16 %v3569, %v3564
    %v3794 = vpack.c.bf16 %v3572, %v3572
    %v3795 = vpack.c.bf16 %v3638, %v3635
    %v3796 = vpack.c.bf16 %v3643, %v3643
    %v3797 = vpack.c.bf16 %v3651, %v3646
    %v3798 = vpack.c.bf16 %v3654, %v3654
    %v3799 = vpack.c.bf16 %v3662, %v3659
    %v3800 = vpack.c.bf16 %v3667, %v3667
    %v3801 = vpack.c.bf16 %v3675, %v3670
    %v3802 = vpack.c.bf16 %v3678, %v3678
    %v3804 = vsel %vm776, %v3787, 0
    %v3807 = vsel %vm776, %v3788, 0
    %v3810 = vsel %vm776, %v3795, 0
    %v3813 = vsel %vm776, %v3796, 0
    %3815 = vmatprep.subr.bf16.mxu0 0
    %3816 = vmatpush1.bf16.xpose.msra.mxu0 %v3810
    %3817 = vmatprep.subr.bf16.mxu0 0
    %3818 = vmatpush1.bf16.xpose.msra.mxu0 %v3813
    %3819 = vmatprep.subr.bf16.mxu0 0
    %3820 = vmatpush1.bf16.xpose.msra.mxu0 0
    %3821 = vmatprep.subr.bf16.mxu0 0
    %3822 = vmatpush1.bf16.xpose.msra.mxu0 0
    %3823 = vmatprep.subr.bf16.mxu0 0
    %3824 = vmatpush1.bf16.xpose.msra.mxu0 0
    %3825 = vmatprep.subr.bf16.mxu0 0
    %3826 = vmatpush1.bf16.xpose.msra.mxu0 0
    %3827 = vmatprep.subr.bf16.mxu0 0
    %3828 = vmatpush1.bf16.xpose.msra.mxu0 0
    %3829 = vmatprep.subr.bf16.mxu0 0
    %3830 = vmatpush1.bf16.xpose.msra.mxu0 0
    %3831 = vmatprep.subr.bf16.mxu0 0
    %3832 = vmatpush1.bf16.xpose.msra.mxu0 0
    %3833 = vmatprep.subr.bf16.mxu0 0
    %3834 = vmatpush1.bf16.xpose.msra.mxu0 0
    %3835 = vmatprep.subr.bf16.mxu0 0
    %3836 = vmatpush1.bf16.xpose.msra.mxu0 0
    %3837 = vmatprep.subr.bf16.mxu0 0
    %3838 = vmatpush1.bf16.xpose.msra.mxu0 0
    %3839 = vmatprep.subr.bf16.mxu0 0
    %3840 = vmatpush1.bf16.xpose.msra.mxu0 0
    %3841 = vmatprep.subr.bf16.mxu0 0
    %3842 = vmatpush1.bf16.xpose.msra.mxu0 0
    %3843 = vmatprep.subr.bf16.mxu0 0
    %3844 = vmatpush1.bf16.xpose.msra.mxu0 0
    %3845 = vmatprep.subr.bf16.mxu0 0
    %3846 = vmatpush1.bf16.xpose.msra.mxu0 0
    %3847 = vmatprep.mubr.bf16.mxu0 0
    %3848 = vmatmul.mubr.bf16.gmra.mrb[0].mxu0 %v3804
    %v3849 = vpop.f32.mrb[0].mxu0
    %v3850 = vadd.f32 0.0, %v3849
    %v3851 = vpop.f32.mrb[0].mxu0
    %v3852 = vpop.f32.mrb[0].mxu0
    %v3853 = vadd.f32 0.0, %v3852
    %v3854 = vpop.f32.mrb[0].mxu0
    %3855 = vmatprep.mubr.bf16.mxu0 0
    %3856 = vmatmul.mubr.bf16.gmra.mrb[0].mxu0 %v3807
    %v3857 = vpop.f32.mrb[0].mxu0
    %v3858 = vadd.f32 0.0, %v3857
    %v3859 = vpop.f32.mrb[0].mxu0
    %v3860 = vpop.f32.mrb[0].mxu0
    %v3861 = vpop.f32.mrb[0].mxu0
    %3862 = vdwg.mxu0
    %v3864 = vsel %vm776, %v3789, 0
    %v3867 = vsel %vm776, %v3790, 0
    %v3870 = vsel %vm776, %v3797, 0
    %v3873 = vsel %vm776, %v3798, 0
    %3875 = vmatprep.subr.bf16.mxu0 0
    %3876 = vmatpush1.bf16.xpose.msra.mxu0 %v3870
    %3877 = vmatprep.subr.bf16.mxu0 0
    %3878 = vmatpush1.bf16.xpose.msra.mxu0 %v3873
    %3879 = vmatprep.subr.bf16.mxu0 0
    %3880 = vmatpush1.bf16.xpose.msra.mxu0 0
    %3881 = vmatprep.subr.bf16.mxu0 0
    %3882 = vmatpush1.bf16.xpose.msra.mxu0 0
    %3883 = vmatprep.subr.bf16.mxu0 0
    %3884 = vmatpush1.bf16.xpose.msra.mxu0 0
    %3885 = vmatprep.subr.bf16.mxu0 0
    %3886 = vmatpush1.bf16.xpose.msra.mxu0 0
    %3887 = vmatprep.subr.bf16.mxu0 0
    %3888 = vmatpush1.bf16.xpose.msra.mxu0 0
    %3889 = vmatprep.subr.bf16.mxu0 0
    %3890 = vmatpush1.bf16.xpose.msra.mxu0 0
    %3891 = vmatprep.subr.bf16.mxu0 0
    %3892 = vmatpush1.bf16.xpose.msra.mxu0 0
    %3893 = vmatprep.subr.bf16.mxu0 0
    %3894 = vmatpush1.bf16.xpose.msra.mxu0 0
    %3895 = vmatprep.subr.bf16.mxu0 0
    %3896 = vmatpush1.bf16.xpose.msra.mxu0 0
    %3897 = vmatprep.subr.bf16.mxu0 0
    %3898 = vmatpush1.bf16.xpose.msra.mxu0 0
    %3899 = vmatprep.subr.bf16.mxu0 0
    %3900 = vmatpush1.bf16.xpose.msra.mxu0 0
    %3901 = vmatprep.subr.bf16.mxu0 0
    %3902 = vmatpush1.bf16.xpose.msra.mxu0 0
    %3903 = vmatprep.subr.bf16.mxu0 0
    %3904 = vmatpush1.bf16.xpose.msra.mxu0 0
    %3905 = vmatprep.subr.bf16.mxu0 0
    %3906 = vmatpush1.bf16.xpose.msra.mxu0 0
    %3907 = vmatprep.mubr.bf16.mxu0 0
    %3908 = vmatmul.mubr.bf16.gmra.mrb[0].mxu0 %v3864
    %v3909 = vpop.f32.mrb[0].mxu0
    %v3910 = vadd.f32 0.0, %v3909
    %v3911 = vpop.f32.mrb[0].mxu0
    %v3912 = vpop.f32.mrb[0].mxu0
    %v3913 = vadd.f32 0.0, %v3912
    %v3914 = vpop.f32.mrb[0].mxu0
    %3915 = vmatprep.mubr.bf16.mxu0 0
    %3916 = vmatmul.mubr.bf16.gmra.mrb[0].mxu0 %v3867
    %v3917 = vpop.f32.mrb[0].mxu0
    %v3918 = vadd.f32 0.0, %v3917
    %v3919 = vpop.f32.mrb[0].mxu0
    %v3920 = vpop.f32.mrb[0].mxu0
    %v3921 = vpop.f32.mrb[0].mxu0
    %3922 = vdwg.mxu0
    %v3924 = vsel %vm776, %v3791, 0
    %v3927 = vsel %vm776, %v3792, 0
    %v3930 = vsel %vm776, %v3799, 0
    %v3933 = vsel %vm776, %v3800, 0
    %3935 = vmatprep.subr.bf16.mxu0 0
    %3936 = vmatpush1.bf16.xpose.msra.mxu0 %v3930
    %3937 = vmatprep.subr.bf16.mxu0 0
    %3938 = vmatpush1.bf16.xpose.msra.mxu0 %v3933
    %3939 = vmatprep.subr.bf16.mxu0 0
    %3940 = vmatpush1.bf16.xpose.msra.mxu0 0
    %3941 = vmatprep.subr.bf16.mxu0 0
    %3942 = vmatpush1.bf16.xpose.msra.mxu0 0
    %3943 = vmatprep.subr.bf16.mxu0 0
    %3944 = vmatpush1.bf16.xpose.msra.mxu0 0
    %3945 = vmatprep.subr.bf16.mxu0 0
    %3946 = vmatpush1.bf16.xpose.msra.mxu0 0
    %3947 = vmatprep.subr.bf16.mxu0 0
    %3948 = vmatpush1.bf16.xpose.msra.mxu0 0
    %3949 = vmatprep.subr.bf16.mxu0 0
    %3950 = vmatpush1.bf16.xpose.msra.mxu0 0
    %3951 = vmatprep.subr.bf16.mxu0 0
    %3952 = vmatpush1.bf16.xpose.msra.mxu0 0
    %3953 = vmatprep.subr.bf16.mxu0 0
    %3954 = vmatpush1.bf16.xpose.msra.mxu0 0
    %3955 = vmatprep.subr.bf16.mxu0 0
    %3956 = vmatpush1.bf16.xpose.msra.mxu0 0
    %3957 = vmatprep.subr.bf16.mxu0 0
    %3958 = vmatpush1.bf16.xpose.msra.mxu0 0
    %3959 = vmatprep.subr.bf16.mxu0 0
    %3960 = vmatpush1.bf16.xpose.msra.mxu0 0
    %3961 = vmatprep.subr.bf16.mxu0 0
    %3962 = vmatpush1.bf16.xpose.msra.mxu0 0
    %3963 = vmatprep.subr.bf16.mxu0 0
    %3964 = vmatpush1.bf16.xpose.msra.mxu0 0
    %3965 = vmatprep.subr.bf16.mxu0 0
    %3966 = vmatpush1.bf16.xpose.msra.mxu0 0
    %3967 = vmatprep.mubr.bf16.mxu0 0
    %3968 = vmatmul.mubr.bf16.gmra.mrb[0].mxu0 %v3924
    %v3969 = vpop.f32.mrb[0].mxu0
    %v3970 = vadd.f32 0.0, %v3969
    %v3971 = vpop.f32.mrb[0].mxu0
    %v3972 = vpop.f32.mrb[0].mxu0
    %v3973 = vadd.f32 0.0, %v3972
    %v3974 = vpop.f32.mrb[0].mxu0
    %3975 = vmatprep.mubr.bf16.mxu0 0
    %3976 = vmatmul.mubr.bf16.gmra.mrb[0].mxu0 %v3927
    %v3977 = vpop.f32.mrb[0].mxu0
    %v3978 = vadd.f32 0.0, %v3977
    %v3979 = vpop.f32.mrb[0].mxu0
    %v3980 = vpop.f32.mrb[0].mxu0
    %v3981 = vpop.f32.mrb[0].mxu0
    %3982 = vdwg.mxu0
    %v3984 = vsel %vm776, %v3793, 0
    %v3987 = vsel %vm776, %v3794, 0
    %v3990 = vsel %vm776, %v3801, 0
    %v3993 = vsel %vm776, %v3802, 0
    %3995 = vmatprep.subr.bf16.mxu0 0
    %3996 = vmatpush1.bf16.xpose.msra.mxu0 %v3990
    %3997 = vmatprep.subr.bf16.mxu0 0
    %3998 = vmatpush1.bf16.xpose.msra.mxu0 %v3993
    %3999 = vmatprep.subr.bf16.mxu0 0
    %4000 = vmatpush1.bf16.xpose.msra.mxu0 0
    %4001 = vmatprep.subr.bf16.mxu0 0
    %4002 = vmatpush1.bf16.xpose.msra.mxu0 0
    %4003 = vmatprep.subr.bf16.mxu0 0
    %4004 = vmatpush1.bf16.xpose.msra.mxu0 0
    %4005 = vmatprep.subr.bf16.mxu0 0
    %4006 = vmatpush1.bf16.xpose.msra.mxu0 0
    %4007 = vmatprep.subr.bf16.mxu0 0
    %4008 = vmatpush1.bf16.xpose.msra.mxu0 0
    %4009 = vmatprep.subr.bf16.mxu0 0
    %4010 = vmatpush1.bf16.xpose.msra.mxu0 0
    %4011 = vmatprep.subr.bf16.mxu0 0
    %4012 = vmatpush1.bf16.xpose.msra.mxu0 0
    %4013 = vmatprep.subr.bf16.mxu0 0
    %4014 = vmatpush1.bf16.xpose.msra.mxu0 0
    %4015 = vmatprep.subr.bf16.mxu0 0
    %4016 = vmatpush1.bf16.xpose.msra.mxu0 0
    %4017 = vmatprep.subr.bf16.mxu0 0
    %4018 = vmatpush1.bf16.xpose.msra.mxu0 0
    %4019 = vmatprep.subr.bf16.mxu0 0
    %4020 = vmatpush1.bf16.xpose.msra.mxu0 0
    %4021 = vmatprep.subr.bf16.mxu0 0
    %4022 = vmatpush1.bf16.xpose.msra.mxu0 0
    %4023 = vmatprep.subr.bf16.mxu0 0
    %4024 = vmatpush1.bf16.xpose.msra.mxu0 0
    %4025 = vmatprep.subr.bf16.mxu0 0
    %4026 = vmatpush1.bf16.xpose.msra.mxu0 0
    %4027 = vmatprep.mubr.bf16.mxu0 0
    %4028 = vmatmul.mubr.bf16.gmra.mrb[0].mxu0 %v3984
    %v4029 = vpop.f32.mrb[0].mxu0
    %v4030 = vadd.f32 0.0, %v4029
    %v4031 = vpop.f32.mrb[0].mxu0
    %v4032 = vpop.f32.mrb[0].mxu0
    %v4033 = vadd.f32 0.0, %v4032
    %v4034 = vpop.f32.mrb[0].mxu0
    %4035 = vmatprep.mubr.bf16.mxu0 0
    %4036 = vmatmul.mubr.bf16.gmra.mrb[0].mxu0 %v3987
    %v4037 = vpop.f32.mrb[0].mxu0
    %v4038 = vadd.f32 0.0, %v4037
    %v4039 = vpop.f32.mrb[0].mxu0
    %v4040 = vpop.f32.mrb[0].mxu0
    %v4041 = vpop.f32.mrb[0].mxu0
    %4042 = vdwg.mxu0
    %v4043 = vmul.f32 %v3850, 0.25
    %v4044 = vmul.f32 %v3853, 0.25
    %v4045 = vmul.f32 %v3858, 0.25
    %v4046 = vmul.f32 %v3910, 0.25
    %v4047 = vmul.f32 %v3913, 0.25
    %v4048 = vmul.f32 %v3918, 0.25
    %v4049 = vmul.f32 %v3970, 0.25
    %v4050 = vmul.f32 %v3973, 0.25
    %v4051 = vmul.f32 %v3978, 0.25
    %v4052 = vmul.f32 %v4030, 0.25
    %v4053 = vmul.f32 %v4033, 0.25
    %v4054 = vmul.f32 %v4038, 0.25
    %v4055 = vadd.f32 %v4043, %v268
    %v4056 = vadd.f32 %v4044, %v268
    %v4057 = vadd.f32 %v4045, %v268
    %v4058 = vadd.f32 %v4046, %v268
    %v4059 = vadd.f32 %v4047, %v268
    %v4060 = vadd.f32 %v4048, %v268
    %v4061 = vadd.f32 %v4049, %v268
    %v4062 = vadd.f32 %v4050, %v268
    %v4063 = vadd.f32 %v4051, %v268
    %v4064 = vadd.f32 %v4052, %v268
    %v4065 = vadd.f32 %v4053, %v268
    %v4066 = vadd.f32 %v4054, %v268
    %v4067 = vsel %vm1041, %v4055, -inf
    %4068 = vmax.xlane.f32.xlu0 %v4067
    %v4069 = vpop.xlane.xlu0 %4068
    %v4070 = vsel %vm1041, %v4056, -inf
    %4071 = vmax.xlane.f32.xlu0 %v4070
    %v4072 = vpop.xlane.xlu0 %4071
    %v4073 = vsel %vm1041, %v4057, -inf
    %4074 = vmax.xlane.f32.xlu0 %v4073
    %v4075 = vpop.xlane.xlu0 %4074
    %v4076 = vsel %vm1041, %v4058, -inf
    %4077 = vmax.xlane.f32.xlu0 %v4076
    %v4078 = vpop.xlane.xlu0 %4077
    %v4079 = vsel %vm1041, %v4059, -inf
    %4080 = vmax.xlane.f32.xlu0 %v4079
    %v4081 = vpop.xlane.xlu0 %4080
    %v4082 = vsel %vm1041, %v4060, -inf
    %4083 = vmax.xlane.f32.xlu0 %v4082
    %v4084 = vpop.xlane.xlu0 %4083
    %v4085 = vsel %vm1041, %v4061, -inf
    %4086 = vmax.xlane.f32.xlu0 %v4085
    %v4087 = vpop.xlane.xlu0 %4086
    %v4088 = vsel %vm1041, %v4062, -inf
    %4089 = vmax.xlane.f32.xlu0 %v4088
    %v4090 = vpop.xlane.xlu0 %4089
    %v4091 = vsel %vm1041, %v4063, -inf
    %4092 = vmax.xlane.f32.xlu0 %v4091
    %v4093 = vpop.xlane.xlu0 %4092
    %v4094 = vsel %vm1041, %v4064, -inf
    %4095 = vmax.xlane.f32.xlu0 %v4094
    %v4096 = vpop.xlane.xlu0 %4095
    %v4097 = vsel %vm1041, %v4065, -inf
    %4098 = vmax.xlane.f32.xlu0 %v4097
    %v4099 = vpop.xlane.xlu0 %4098
    %v4100 = vsel %vm1041, %v4066, -inf
    %4101 = vmax.xlane.f32.xlu0 %v4100
    %v4102 = vpop.xlane.xlu0 %4101
    %v4103 = vsub.f32 %v4055, %v4069
    %v4104 = vsub.f32 %v4056, %v4072
    %v4105 = vsub.f32 %v4057, %v4075
    %v4106 = vsub.f32 %v4058, %v4078
    %v4107 = vsub.f32 %v4059, %v4081
    %v4108 = vsub.f32 %v4060, %v4084
    %v4109 = vsub.f32 %v4061, %v4087
    %v4110 = vsub.f32 %v4062, %v4090
    %v4111 = vsub.f32 %v4063, %v4093
    %v4112 = vsub.f32 %v4064, %v4096
    %v4113 = vsub.f32 %v4065, %v4099
    %v4114 = vsub.f32 %v4066, %v4102
    %v4115 = vmul.f32 %v4103, 1.442695
    %v4116 = vpow.pop %v4115
    %v4117 = vmul.f32 %v4104, 1.442695
    %v4118 = vpow.pop %v4117
    %v4119 = vmul.f32 %v4105, 1.442695
    %v4120 = vpow.pop %v4119
    %v4121 = vmul.f32 %v4106, 1.442695
    %v4122 = vpow.pop %v4121
    %v4123 = vmul.f32 %v4107, 1.442695
    %v4124 = vpow.pop %v4123
    %v4125 = vmul.f32 %v4108, 1.442695
    %v4126 = vpow.pop %v4125
    %v4127 = vmul.f32 %v4109, 1.442695
    %v4128 = vpow.pop %v4127
    %v4129 = vmul.f32 %v4110, 1.442695
    %v4130 = vpow.pop %v4129
    %v4131 = vmul.f32 %v4111, 1.442695
    %v4132 = vpow.pop %v4131
    %v4133 = vmul.f32 %v4112, 1.442695
    %v4134 = vpow.pop %v4133
    %v4135 = vmul.f32 %v4113, 1.442695
    %v4136 = vpow.pop %v4135
    %v4137 = vmul.f32 %v4114, 1.442695
    %v4138 = vpow.pop %v4137
    %v4139 = vsel %vm1041, %v4116, 0.0
    %4140 = vadd.xlane.f32.xlu0 %v4139
    %v4141 = vpop.xlane.xlu0 %4140
    %v4142 = vsel %vm1041, %v4118, 0.0
    %4143 = vadd.xlane.f32.xlu0 %v4142
    %v4144 = vpop.xlane.xlu0 %4143
    %v4145 = vsel %vm1041, %v4120, 0.0
    %4146 = vadd.xlane.f32.xlu0 %v4145
    %v4147 = vpop.xlane.xlu0 %4146
    %v4148 = vsel %vm1041, %v4122, 0.0
    %4149 = vadd.xlane.f32.xlu0 %v4148
    %v4150 = vpop.xlane.xlu0 %4149
    %v4151 = vsel %vm1041, %v4124, 0.0
    %4152 = vadd.xlane.f32.xlu0 %v4151
    %v4153 = vpop.xlane.xlu0 %4152
    %v4154 = vsel %vm1041, %v4126, 0.0
    %4155 = vadd.xlane.f32.xlu0 %v4154
    %v4156 = vpop.xlane.xlu0 %4155
    %v4157 = vsel %vm1041, %v4128, 0.0
    %4158 = vadd.xlane.f32.xlu0 %v4157
    %v4159 = vpop.xlane.xlu0 %4158
    %v4160 = vsel %vm1041, %v4130, 0.0
    %4161 = vadd.xlane.f32.xlu0 %v4160
    %v4162 = vpop.xlane.xlu0 %4161
    %v4163 = vsel %vm1041, %v4132, 0.0
    %4164 = vadd.xlane.f32.xlu0 %v4163
    %v4165 = vpop.xlane.xlu0 %4164
    %v4166 = vsel %vm1041, %v4134, 0.0
    %4167 = vadd.xlane.f32.xlu0 %v4166
    %v4168 = vpop.xlane.xlu0 %4167
    %v4169 = vsel %vm1041, %v4136, 0.0
    %4170 = vadd.xlane.f32.xlu0 %v4169
    %v4171 = vpop.xlane.xlu0 %4170
    %v4172 = vsel %vm1041, %v4138, 0.0
    %4173 = vadd.xlane.f32.xlu0 %v4172
    %v4174 = vpop.xlane.xlu0 %4173
    %v4175 = vrcp.pop %v4141
    %v4176 = vrcp.pop %v4144
    %v4177 = vrcp.pop %v4147
    %v4178 = vrcp.pop %v4150
    %v4179 = vrcp.pop %v4153
    %v4180 = vrcp.pop %v4156
    %v4181 = vrcp.pop %v4159
    %v4182 = vrcp.pop %v4162
    %v4183 = vrcp.pop %v4165
    %v4184 = vrcp.pop %v4168
    %v4185 = vrcp.pop %v4171
    %v4186 = vrcp.pop %v4174
    %v4187 = vmul.f32 %v4116, %v4175
    %v4188 = vmul.f32 %v4118, %v4176
    %v4189 = vmul.f32 %v4120, %v4177
    %v4190 = vmul.f32 %v4122, %v4178
    %v4191 = vmul.f32 %v4124, %v4179
    %v4192 = vmul.f32 %v4126, %v4180
    %v4193 = vmul.f32 %v4128, %v4181
    %v4194 = vmul.f32 %v4130, %v4182
    %v4195 = vmul.f32 %v4132, %v4183
    %v4196 = vmul.f32 %v4134, %v4184
    %v4197 = vmul.f32 %v4136, %v4185
    %v4198 = vmul.f32 %v4138, %v4186
    %v4199 = vpack.c.bf16 %v4188, %v4187
    %v4200 = vpack.c.bf16 %v4189, %v4189
    %v4201 = vpack.c.bf16 %v4191, %v4190
    %v4202 = vpack.c.bf16 %v4192, %v4192
    %v4203 = vpack.c.bf16 %v4194, %v4193
    %v4204 = vpack.c.bf16 %v4195, %v4195
    %v4205 = vpack.c.bf16 %v4197, %v4196
    %v4206 = vpack.c.bf16 %v4198, %v4198
    %v4207 = vpack.c.bf16 %v3744, %v3741
    %v4208 = vpack.c.bf16 %v3749, %v3749
    %v4209 = vpack.c.bf16 %v3757, %v3752
    %v4210 = vpack.c.bf16 %v3760, %v3760
    %v4211 = vpack.c.bf16 %v3768, %v3765
    %v4212 = vpack.c.bf16 %v3773, %v3773
    %v4213 = vpack.c.bf16 %v3781, %v3776
    %v4214 = vpack.c.bf16 %v3784, %v3784
    %v4216 = vsel %vm1041, %v4199, 0
    %v4219 = vsel %vm1041, %v4200, 0
    %v4222 = vsel %vm1196, %v4208, 0
    %4224 = vmatprep.subr.bf16.mxu0 0
    %4225 = vmatpush1.bf16.msra.mxu0 %v4207
    %4226 = vmatprep.subr.bf16.mxu0 0
    %4227 = vmatpush1.bf16.msra.mxu0 %v4222
    %4228 = vmatprep.subr.bf16.mxu0 0
    %4229 = vmatpush1.bf16.msra.mxu0 0
    %4230 = vmatprep.subr.bf16.mxu0 0
    %4231 = vmatpush1.bf16.msra.mxu0 0
    %4232 = vmatprep.subr.bf16.mxu0 0
    %4233 = vmatpush1.bf16.msra.mxu0 0
    %4234 = vmatprep.subr.bf16.mxu0 0
    %4235 = vmatpush1.bf16.msra.mxu0 0
    %4236 = vmatprep.subr.bf16.mxu0 0
    %4237 = vmatpush1.bf16.msra.mxu0 0
    %4238 = vmatprep.subr.bf16.mxu0 0
    %4239 = vmatpush1.bf16.msra.mxu0 0
    %4240 = vmatprep.subr.bf16.mxu0 0
    %4241 = vmatpush1.bf16.msra.mxu0 0
    %4242 = vmatprep.subr.bf16.mxu0 0
    %4243 = vmatpush1.bf16.msra.mxu0 0
    %4244 = vmatprep.subr.bf16.mxu0 0
    %4245 = vmatpush1.bf16.msra.mxu0 0
    %4246 = vmatprep.subr.bf16.mxu0 0
    %4247 = vmatpush1.bf16.msra.mxu0 0
    %4248 = vmatprep.subr.bf16.mxu0 0
    %4249 = vmatpush1.bf16.msra.mxu0 0
    %4250 = vmatprep.subr.bf16.mxu0 0
    %4251 = vmatpush1.bf16.msra.mxu0 0
    %4252 = vmatprep.subr.bf16.mxu0 0
    %4253 = vmatpush1.bf16.msra.mxu0 0
    %4254 = vmatprep.subr.bf16.mxu0 0
    %4255 = vmatpush1.bf16.msra.mxu0 0
    %4256 = vmatprep.mubr.bf16.mxu0 0
    %4257 = vmatmul.mubr.bf16.gmra.mrb[0].mxu0 %v4216
    %v4258 = vpop.f32.mrb[0].mxu0
    %v4259 = vadd.f32 0.0, %v4258
    %v4260 = vpop.f32.mrb[0].mxu0
    %v4261 = vpop.f32.mrb[0].mxu0
    %v4262 = vadd.f32 0.0, %v4261
    %v4263 = vpop.f32.mrb[0].mxu0
    %4264 = vmatprep.mubr.bf16.mxu0 0
    %4265 = vmatmul.mubr.bf16.gmra.mrb[0].mxu0 %v4219
    %v4266 = vpop.f32.mrb[0].mxu0
    %v4267 = vadd.f32 0.0, %v4266
    %v4268 = vpop.f32.mrb[0].mxu0
    %v4269 = vpop.f32.mrb[0].mxu0
    %v4270 = vpop.f32.mrb[0].mxu0
    %4271 = vdwg.mxu0
    %v4273 = vsel %vm1041, %v4201, 0
    %v4276 = vsel %vm1041, %v4202, 0
    %v4279 = vsel %vm1196, %v4210, 0
    %4281 = vmatprep.subr.bf16.mxu0 0
    %4282 = vmatpush1.bf16.msra.mxu0 %v4209
    %4283 = vmatprep.subr.bf16.mxu0 0
    %4284 = vmatpush1.bf16.msra.mxu0 %v4279
    %4285 = vmatprep.subr.bf16.mxu0 0
    %4286 = vmatpush1.bf16.msra.mxu0 0
    %4287 = vmatprep.subr.bf16.mxu0 0
    %4288 = vmatpush1.bf16.msra.mxu0 0
    %4289 = vmatprep.subr.bf16.mxu0 0
    %4290 = vmatpush1.bf16.msra.mxu0 0
    %4291 = vmatprep.subr.bf16.mxu0 0
    %4292 = vmatpush1.bf16.msra.mxu0 0
    %4293 = vmatprep.subr.bf16.mxu0 0
    %4294 = vmatpush1.bf16.msra.mxu0 0
    %4295 = vmatprep.subr.bf16.mxu0 0
    %4296 = vmatpush1.bf16.msra.mxu0 0
    %4297 = vmatprep.subr.bf16.mxu0 0
    %4298 = vmatpush1.bf16.msra.mxu0 0
    %4299 = vmatprep.subr.bf16.mxu0 0
    %4300 = vmatpush1.bf16.msra.mxu0 0
    %4301 = vmatprep.subr.bf16.mxu0 0
    %4302 = vmatpush1.bf16.msra.mxu0 0
    %4303 = vmatprep.subr.bf16.mxu0 0
    %4304 = vmatpush1.bf16.msra.mxu0 0
    %4305 = vmatprep.subr.bf16.mxu0 0
    %4306 = vmatpush1.bf16.msra.mxu0 0
    %4307 = vmatprep.subr.bf16.mxu0 0
    %4308 = vmatpush1.bf16.msra.mxu0 0
    %4309 = vmatprep.subr.bf16.mxu0 0
    %4310 = vmatpush1.bf16.msra.mxu0 0
    %4311 = vmatprep.subr.bf16.mxu0 0
    %4312 = vmatpush1.bf16.msra.mxu0 0
    %4313 = vmatprep.mubr.bf16.mxu0 0
    %4314 = vmatmul.mubr.bf16.gmra.mrb[0].mxu0 %v4273
    %v4315 = vpop.f32.mrb[0].mxu0
    %v4316 = vadd.f32 0.0, %v4315
    %v4317 = vpop.f32.mrb[0].mxu0
    %v4318 = vpop.f32.mrb[0].mxu0
    %v4319 = vadd.f32 0.0, %v4318
    %v4320 = vpop.f32.mrb[0].mxu0
    %4321 = vmatprep.mubr.bf16.mxu0 0
    %4322 = vmatmul.mubr.bf16.gmra.mrb[0].mxu0 %v4276
    %v4323 = vpop.f32.mrb[0].mxu0
    %v4324 = vadd.f32 0.0, %v4323
    %v4325 = vpop.f32.mrb[0].mxu0
    %v4326 = vpop.f32.mrb[0].mxu0
    %v4327 = vpop.f32.mrb[0].mxu0
    %4328 = vdwg.mxu0
    %v4330 = vsel %vm1041, %v4203, 0
    %v4333 = vsel %vm1041, %v4204, 0
    %v4336 = vsel %vm1196, %v4212, 0
    %4338 = vmatprep.subr.bf16.mxu0 0
    %4339 = vmatpush1.bf16.msra.mxu0 %v4211
    %4340 = vmatprep.subr.bf16.mxu0 0
    %4341 = vmatpush1.bf16.msra.mxu0 %v4336
    %4342 = vmatprep.subr.bf16.mxu0 0
    %4343 = vmatpush1.bf16.msra.mxu0 0
    %4344 = vmatprep.subr.bf16.mxu0 0
    %4345 = vmatpush1.bf16.msra.mxu0 0
    %4346 = vmatprep.subr.bf16.mxu0 0
    %4347 = vmatpush1.bf16.msra.mxu0 0
    %4348 = vmatprep.subr.bf16.mxu0 0
    %4349 = vmatpush1.bf16.msra.mxu0 0
    %4350 = vmatprep.subr.bf16.mxu0 0
    %4351 = vmatpush1.bf16.msra.mxu0 0
    %4352 = vmatprep.subr.bf16.mxu0 0
    %4353 = vmatpush1.bf16.msra.mxu0 0
    %4354 = vmatprep.subr.bf16.mxu0 0
    %4355 = vmatpush1.bf16.msra.mxu0 0
    %4356 = vmatprep.subr.bf16.mxu0 0
    %4357 = vmatpush1.bf16.msra.mxu0 0
    %4358 = vmatprep.subr.bf16.mxu0 0
    %4359 = vmatpush1.bf16.msra.mxu0 0
    %4360 = vmatprep.subr.bf16.mxu0 0
    %4361 = vmatpush1.bf16.msra.mxu0 0
    %4362 = vmatprep.subr.bf16.mxu0 0
    %4363 = vmatpush1.bf16.msra.mxu0 0
    %4364 = vmatprep.subr.bf16.mxu0 0
    %4365 = vmatpush1.bf16.msra.mxu0 0
    %4366 = vmatprep.subr.bf16.mxu0 0
    %4367 = vmatpush1.bf16.msra.mxu0 0
    %4368 = vmatprep.subr.bf16.mxu0 0
    %4369 = vmatpush1.bf16.msra.mxu0 0
    %4370 = vmatprep.mubr.bf16.mxu0 0
    %4371 = vmatmul.mubr.bf16.gmra.mrb[0].mxu0 %v4330
    %v4372 = vpop.f32.mrb[0].mxu0
    %v4373 = vadd.f32 0.0, %v4372
    %v4374 = vpop.f32.mrb[0].mxu0
    %v4375 = vpop.f32.mrb[0].mxu0
    %v4376 = vadd.f32 0.0, %v4375
    %v4377 = vpop.f32.mrb[0].mxu0
    %4378 = vmatprep.mubr.bf16.mxu0 0
    %4379 = vmatmul.mubr.bf16.gmra.mrb[0].mxu0 %v4333
    %v4380 = vpop.f32.mrb[0].mxu0
    %v4381 = vadd.f32 0.0, %v4380
    %v4382 = vpop.f32.mrb[0].mxu0
    %v4383 = vpop.f32.mrb[0].mxu0
    %v4384 = vpop.f32.mrb[0].mxu0
    %4385 = vdwg.mxu0
    %v4387 = vsel %vm1041, %v4205, 0
    %v4390 = vsel %vm1041, %v4206, 0
    %v4393 = vsel %vm1196, %v4214, 0
    %4395 = vmatprep.subr.bf16.mxu0 0
    %4396 = vmatpush1.bf16.msra.mxu0 %v4213
    %4397 = vmatprep.subr.bf16.mxu0 0
    %4398 = vmatpush1.bf16.msra.mxu0 %v4393
    %4399 = vmatprep.subr.bf16.mxu0 0
    %4400 = vmatpush1.bf16.msra.mxu0 0
    %4401 = vmatprep.subr.bf16.mxu0 0
    %4402 = vmatpush1.bf16.msra.mxu0 0
    %4403 = vmatprep.subr.bf16.mxu0 0
    %4404 = vmatpush1.bf16.msra.mxu0 0
    %4405 = vmatprep.subr.bf16.mxu0 0
    %4406 = vmatpush1.bf16.msra.mxu0 0
    %4407 = vmatprep.subr.bf16.mxu0 0
    %4408 = vmatpush1.bf16.msra.mxu0 0
    %4409 = vmatprep.subr.bf16.mxu0 0
    %4410 = vmatpush1.bf16.msra.mxu0 0
    %4411 = vmatprep.subr.bf16.mxu0 0
    %4412 = vmatpush1.bf16.msra.mxu0 0
    %4413 = vmatprep.subr.bf16.mxu0 0
    %4414 = vmatpush1.bf16.msra.mxu0 0
    %4415 = vmatprep.subr.bf16.mxu0 0
    %4416 = vmatpush1.bf16.msra.mxu0 0
    %4417 = vmatprep.subr.bf16.mxu0 0
    %4418 = vmatpush1.bf16.msra.mxu0 0
    %4419 = vmatprep.subr.bf16.mxu0 0
    %4420 = vmatpush1.bf16.msra.mxu0 0
    %4421 = vmatprep.subr.bf16.mxu0 0
    %4422 = vmatpush1.bf16.msra.mxu0 0
    %4423 = vmatprep.subr.bf16.mxu0 0
    %4424 = vmatpush1.bf16.msra.mxu0 0
    %4425 = vmatprep.subr.bf16.mxu0 0
    %4426 = vmatpush1.bf16.msra.mxu0 0
    %4427 = vmatprep.mubr.bf16.mxu0 0
    %4428 = vmatmul.mubr.bf16.gmra.mrb[0].mxu0 %v4387
    %v4429 = vpop.f32.mrb[0].mxu0
    %v4430 = vadd.f32 0.0, %v4429
    %v4431 = vpop.f32.mrb[0].mxu0
    %v4432 = vpop.f32.mrb[0].mxu0
    %v4433 = vadd.f32 0.0, %v4432
    %v4434 = vpop.f32.mrb[0].mxu0
    %4435 = vmatprep.mubr.bf16.mxu0 0
    %4436 = vmatmul.mubr.bf16.gmra.mrb[0].mxu0 %v4390
    %v4437 = vpop.f32.mrb[0].mxu0
    %v4438 = vadd.f32 0.0, %v4437
    %v4439 = vpop.f32.mrb[0].mxu0
    %v4440 = vpop.f32.mrb[0].mxu0
    %v4441 = vpop.f32.mrb[0].mxu0
    %4442 = vdwg.mxu0
    %v4443 = vpack.c.bf16 %v4262, %v4259
    %v4444 = vpack.c.bf16 %v4316, %v4267
    %v4445 = vpack.c.bf16 %v4324, %v4319
    %v4446 = vpack.c.bf16 %v4376, %v4373
    %v4447 = vpack.c.bf16 %v4430, %v4381
    %v4448 = vpack.c.bf16 %v4438, %v4433
    %s4449 = scalar_lea.vmem %s17, 16
    %v4450 = vld [vmem:[%s4449] sm:$0xf]
    %v4451 = vld [vmem:[%s4449 + $0x4] sm:$0xf]
    %s4452 = scalar_lea.vmem %s13, 112
    %v4453 = vld [vmem:[%s4452] sm:$0xf]
    %v4454 = vld [vmem:[%s4452 + $0x4] sm:$0xf]
    %v4455 = vld [vmem:[%s4452 + $0x8] sm:$0xf]
    %v4456 = vld [vmem:[%s4452 + $0xc] sm:$0xf]
    %s4457 = scalar_lea.vmem %s15, 7
    %v4458 = vld [vmem:[%s4457] sm:$0x1]
    %v4460 = vlaneseq
    %v4461 = vshrl.u32 %v4460, 7
    %v4462 = vsub.s32 0, %v4461
    %v4463 = vrot.slane %v4458, %v4462
    %v4469 = vunpack.c.l.b16 %v4453
    %v4470 = vunpack.c.l.b16 %v4454
    %v4471 = vunpack.c.l.b16 %v4455
    %v4472 = vunpack.c.l.b16 %v4456
    %v4473 = vpack.c.b16 %v4470, %v4469
    %v4474 = vpack.c.b16 %v4472, %v4471
    %4477 = vmatprep.subr.bf16.mxu0 0
    %4478 = vmatpush1.bf16.msra.mxu0 %v4473
    %4479 = vmatprep.subr.bf16.mxu0 0
    %4480 = vmatpush1.bf16.msra.mxu0 %v4474
    %4481 = vmatprep.subr.bf16.mxu0 0
    %4482 = vmatpush1.bf16.msra.mxu0 0
    %4483 = vmatprep.subr.bf16.mxu0 0
    %4484 = vmatpush1.bf16.msra.mxu0 0
    %4485 = vmatprep.subr.bf16.mxu0 0
    %4486 = vmatpush1.bf16.msra.mxu0 0
    %4487 = vmatprep.subr.bf16.mxu0 0
    %4488 = vmatpush1.bf16.msra.mxu0 0
    %4489 = vmatprep.subr.bf16.mxu0 0
    %4490 = vmatpush1.bf16.msra.mxu0 0
    %4491 = vmatprep.subr.bf16.mxu0 0
    %4492 = vmatpush1.bf16.msra.mxu0 0
    %4493 = vmatprep.subr.bf16.mxu0 0
    %4494 = vmatpush1.bf16.msra.mxu0 0
    %4495 = vmatprep.subr.bf16.mxu0 0
    %4496 = vmatpush1.bf16.msra.mxu0 0
    %4497 = vmatprep.subr.bf16.mxu0 0
    %4498 = vmatpush1.bf16.msra.mxu0 0
    %4499 = vmatprep.subr.bf16.mxu0 0
    %4500 = vmatpush1.bf16.msra.mxu0 0
    %4501 = vmatprep.subr.bf16.mxu0 0
    %4502 = vmatpush1.bf16.msra.mxu0 0
    %4503 = vmatprep.subr.bf16.mxu0 0
    %4504 = vmatpush1.bf16.msra.mxu0 0
    %4505 = vmatprep.subr.bf16.mxu0 0
    %4506 = vmatpush1.bf16.msra.mxu0 0
    %4507 = vmatprep.subr.bf16.mxu0 0
    %4508 = vmatpush1.bf16.msra.mxu0 0
    %4509 = vmatprep.mubr.bf16.mxu0 0
    %4510 = vmatmul.mubr.bf16.gmra.mrb[0].mxu0 %v3477
    %v4511 = vpop.f32.mrb[0].mxu0
    %v4512 = vadd.f32 %v4463, %v4511
    %v4513 = vpop.f32.mrb[0].mxu0
    %v4514 = vpop.f32.mrb[0].mxu0
    %v4515 = vadd.f32 %v4463, %v4514
    %v4516 = vpop.f32.mrb[0].mxu0
    %4517 = vmatprep.mubr.bf16.mxu0 0
    %4518 = vmatmul.mubr.bf16.gmra.mrb[0].mxu0 %v3480
    %v4519 = vpop.f32.mrb[0].mxu0
    %v4520 = vadd.f32 %v4463, %v4519
    %v4521 = vpop.f32.mrb[0].mxu0
    %v4522 = vpop.f32.mrb[0].mxu0
    %v4523 = vadd.f32 %v4463, %v4522
    %v4524 = vpop.f32.mrb[0].mxu0
    %4525 = vmatprep.mubr.bf16.mxu0 0
    %4526 = vmatmul.mubr.bf16.gmra.mrb[0].mxu0 %v3483
    %v4527 = vpop.f32.mrb[0].mxu0
    %v4528 = vadd.f32 %v4463, %v4527
    %v4529 = vpop.f32.mrb[0].mxu0
    %v4530 = vpop.f32.mrb[0].mxu0
    %v4531 = vadd.f32 %v4463, %v4530
    %v4532 = vpop.f32.mrb[0].mxu0
    %4533 = vmatprep.mubr.bf16.mxu0 0
    %4534 = vmatmul.mubr.bf16.gmra.mrb[0].mxu0 %v3486
    %v4535 = vpop.f32.mrb[0].mxu0
    %v4536 = vadd.f32 %v4463, %v4535
    %v4537 = vpop.f32.mrb[0].mxu0
    %v4538 = vpop.f32.mrb[0].mxu0
    %v4539 = vadd.f32 %v4463, %v4538
    %v4540 = vpop.f32.mrb[0].mxu0
    %4541 = vmatprep.mubr.bf16.mxu0 0
    %4542 = vmatmul.mubr.bf16.gmra.mrb[0].mxu0 %v3489
    %v4543 = vpop.f32.mrb[0].mxu0
    %v4544 = vadd.f32 %v4463, %v4543
    %v4545 = vpop.f32.mrb[0].mxu0
    %v4546 = vpop.f32.mrb[0].mxu0
    %v4547 = vadd.f32 %v4463, %v4546
    %v4548 = vpop.f32.mrb[0].mxu0
    %4549 = vmatprep.mubr.bf16.mxu0 0
    %4550 = vmatmul.mubr.bf16.gmra.mrb[0].mxu0 %v3492
    %v4551 = vpop.f32.mrb[0].mxu0
    %v4552 = vadd.f32 %v4463, %v4551
    %v4553 = vpop.f32.mrb[0].mxu0
    %v4554 = vpop.f32.mrb[0].mxu0
    %v4555 = vadd.f32 %v4463, %v4554
    %v4556 = vpop.f32.mrb[0].mxu0
    %4557 = vdwg.mxu0
    %s4558 = scalar_lea.vmem %s13, 144
    %v4559 = vld [vmem:[%s4558] sm:$0xf]
    %v4560 = vld [vmem:[%s4558 + $0x4] sm:$0xf]
    %v4561 = vld [vmem:[%s4558 + $0x8] sm:$0xf]
    %v4562 = vld [vmem:[%s4558 + $0xc] sm:$0xf]
    %s4563 = scalar_lea.vmem %s15, 9
    %v4564 = vld [vmem:[%s4563] sm:$0x1]
    %v4566 = vlaneseq
    %v4567 = vshrl.u32 %v4566, 7
    %v4568 = vsub.s32 0, %v4567
    %v4569 = vrot.slane %v4564, %v4568
    %v4575 = vunpack.c.l.b16 %v4559
    %v4576 = vunpack.c.l.b16 %v4560
    %v4577 = vunpack.c.l.b16 %v4561
    %v4578 = vunpack.c.l.b16 %v4562
    %v4579 = vpack.c.b16 %v4576, %v4575
    %v4580 = vpack.c.b16 %v4578, %v4577
    %4583 = vmatprep.subr.bf16.mxu0 0
    %4584 = vmatpush1.bf16.msra.mxu0 %v4579
    %4585 = vmatprep.subr.bf16.mxu0 0
    %4586 = vmatpush1.bf16.msra.mxu0 %v4580
    %4587 = vmatprep.subr.bf16.mxu0 0
    %4588 = vmatpush1.bf16.msra.mxu0 0
    %4589 = vmatprep.subr.bf16.mxu0 0
    %4590 = vmatpush1.bf16.msra.mxu0 0
    %4591 = vmatprep.subr.bf16.mxu0 0
    %4592 = vmatpush1.bf16.msra.mxu0 0
    %4593 = vmatprep.subr.bf16.mxu0 0
    %4594 = vmatpush1.bf16.msra.mxu0 0
    %4595 = vmatprep.subr.bf16.mxu0 0
    %4596 = vmatpush1.bf16.msra.mxu0 0
    %4597 = vmatprep.subr.bf16.mxu0 0
    %4598 = vmatpush1.bf16.msra.mxu0 0
    %4599 = vmatprep.subr.bf16.mxu0 0
    %4600 = vmatpush1.bf16.msra.mxu0 0
    %4601 = vmatprep.subr.bf16.mxu0 0
    %4602 = vmatpush1.bf16.msra.mxu0 0
    %4603 = vmatprep.subr.bf16.mxu0 0
    %4604 = vmatpush1.bf16.msra.mxu0 0
    %4605 = vmatprep.subr.bf16.mxu0 0
    %4606 = vmatpush1.bf16.msra.mxu0 0
    %4607 = vmatprep.subr.bf16.mxu0 0
    %4608 = vmatpush1.bf16.msra.mxu0 0
    %4609 = vmatprep.subr.bf16.mxu0 0
    %4610 = vmatpush1.bf16.msra.mxu0 0
    %4611 = vmatprep.subr.bf16.mxu0 0
    %4612 = vmatpush1.bf16.msra.mxu0 0
    %4613 = vmatprep.subr.bf16.mxu0 0
    %4614 = vmatpush1.bf16.msra.mxu0 0
    %4615 = vmatprep.mubr.bf16.mxu0 0
    %4616 = vmatmul.mubr.bf16.gmra.mrb[0].mxu0 %v3477
    %v4617 = vpop.f32.mrb[0].mxu0
    %v4618 = vadd.f32 %v4569, %v4617
    %v4619 = vpop.f32.mrb[0].mxu0
    %v4620 = vpop.f32.mrb[0].mxu0
    %v4621 = vadd.f32 %v4569, %v4620
    %v4622 = vpop.f32.mrb[0].mxu0
    %4623 = vmatprep.mubr.bf16.mxu0 0
    %4624 = vmatmul.mubr.bf16.gmra.mrb[0].mxu0 %v3480
    %v4625 = vpop.f32.mrb[0].mxu0
    %v4626 = vadd.f32 %v4569, %v4625
    %v4627 = vpop.f32.mrb[0].mxu0
    %v4628 = vpop.f32.mrb[0].mxu0
    %v4629 = vadd.f32 %v4569, %v4628
    %v4630 = vpop.f32.mrb[0].mxu0
    %4631 = vmatprep.mubr.bf16.mxu0 0
    %4632 = vmatmul.mubr.bf16.gmra.mrb[0].mxu0 %v3483
    %v4633 = vpop.f32.mrb[0].mxu0
    %v4634 = vadd.f32 %v4569, %v4633
    %v4635 = vpop.f32.mrb[0].mxu0
    %v4636 = vpop.f32.mrb[0].mxu0
    %v4637 = vadd.f32 %v4569, %v4636
    %v4638 = vpop.f32.mrb[0].mxu0
    %4639 = vmatprep.mubr.bf16.mxu0 0
    %4640 = vmatmul.mubr.bf16.gmra.mrb[0].mxu0 %v3486
    %v4641 = vpop.f32.mrb[0].mxu0
    %v4642 = vadd.f32 %v4569, %v4641
    %v4643 = vpop.f32.mrb[0].mxu0
    %v4644 = vpop.f32.mrb[0].mxu0
    %v4645 = vadd.f32 %v4569, %v4644
    %v4646 = vpop.f32.mrb[0].mxu0
    %4647 = vmatprep.mubr.bf16.mxu0 0
    %4648 = vmatmul.mubr.bf16.gmra.mrb[0].mxu0 %v3489
    %v4649 = vpop.f32.mrb[0].mxu0
    %v4650 = vadd.f32 %v4569, %v4649
    %v4651 = vpop.f32.mrb[0].mxu0
    %v4652 = vpop.f32.mrb[0].mxu0
    %v4653 = vadd.f32 %v4569, %v4652
    %v4654 = vpop.f32.mrb[0].mxu0
    %4655 = vmatprep.mubr.bf16.mxu0 0
    %4656 = vmatmul.mubr.bf16.gmra.mrb[0].mxu0 %v3492
    %v4657 = vpop.f32.mrb[0].mxu0
    %v4658 = vadd.f32 %v4569, %v4657
    %v4659 = vpop.f32.mrb[0].mxu0
    %v4660 = vpop.f32.mrb[0].mxu0
    %v4661 = vadd.f32 %v4569, %v4660
    %v4662 = vpop.f32.mrb[0].mxu0
    %4663 = vdwg.mxu0
    %s4664 = scalar_lea.vmem %s13, 176
    %v4665 = vld [vmem:[%s4664] sm:$0xf]
    %v4666 = vld [vmem:[%s4664 + $0x4] sm:$0xf]
    %v4667 = vld [vmem:[%s4664 + $0x8] sm:$0xf]
    %v4668 = vld [vmem:[%s4664 + $0xc] sm:$0xf]
    %s4669 = scalar_lea.vmem %s15, 11
    %v4670 = vld [vmem:[%s4669] sm:$0x1]
    %v4672 = vlaneseq
    %v4673 = vshrl.u32 %v4672, 7
    %v4674 = vsub.s32 0, %v4673
    %v4675 = vrot.slane %v4670, %v4674
    %v4681 = vunpack.c.l.b16 %v4665
    %v4682 = vunpack.c.l.b16 %v4666
    %v4683 = vunpack.c.l.b16 %v4667
    %v4684 = vunpack.c.l.b16 %v4668
    %v4685 = vpack.c.b16 %v4682, %v4681
    %v4686 = vpack.c.b16 %v4684, %v4683
    %4689 = vmatprep.subr.bf16.mxu0 0
    %4690 = vmatpush1.bf16.msra.mxu0 %v4685
    %4691 = vmatprep.subr.bf16.mxu0 0
    %4692 = vmatpush1.bf16.msra.mxu0 %v4686
    %4693 = vmatprep.subr.bf16.mxu0 0
    %4694 = vmatpush1.bf16.msra.mxu0 0
    %4695 = vmatprep.subr.bf16.mxu0 0
    %4696 = vmatpush1.bf16.msra.mxu0 0
    %4697 = vmatprep.subr.bf16.mxu0 0
    %4698 = vmatpush1.bf16.msra.mxu0 0
    %4699 = vmatprep.subr.bf16.mxu0 0
    %4700 = vmatpush1.bf16.msra.mxu0 0
    %4701 = vmatprep.subr.bf16.mxu0 0
    %4702 = vmatpush1.bf16.msra.mxu0 0
    %4703 = vmatprep.subr.bf16.mxu0 0
    %4704 = vmatpush1.bf16.msra.mxu0 0
    %4705 = vmatprep.subr.bf16.mxu0 0
    %4706 = vmatpush1.bf16.msra.mxu0 0
    %4707 = vmatprep.subr.bf16.mxu0 0
    %4708 = vmatpush1.bf16.msra.mxu0 0
    %4709 = vmatprep.subr.bf16.mxu0 0
    %4710 = vmatpush1.bf16.msra.mxu0 0
    %4711 = vmatprep.subr.bf16.mxu0 0
    %4712 = vmatpush1.bf16.msra.mxu0 0
    %4713 = vmatprep.subr.bf16.mxu0 0
    %4714 = vmatpush1.bf16.msra.mxu0 0
    %4715 = vmatprep.subr.bf16.mxu0 0
    %4716 = vmatpush1.bf16.msra.mxu0 0
    %4717 = vmatprep.subr.bf16.mxu0 0
    %4718 = vmatpush1.bf16.msra.mxu0 0
    %4719 = vmatprep.subr.bf16.mxu0 0
    %4720 = vmatpush1.bf16.msra.mxu0 0
    %4721 = vmatprep.mubr.bf16.mxu0 0
    %4722 = vmatmul.mubr.bf16.gmra.mrb[0].mxu0 %v3477
    %v4723 = vpop.f32.mrb[0].mxu0
    %v4724 = vadd.f32 %v4675, %v4723
    %v4725 = vpop.f32.mrb[0].mxu0
    %v4726 = vpop.f32.mrb[0].mxu0
    %v4727 = vadd.f32 %v4675, %v4726
    %v4728 = vpop.f32.mrb[0].mxu0
    %4729 = vmatprep.mubr.bf16.mxu0 0
    %4730 = vmatmul.mubr.bf16.gmra.mrb[0].mxu0 %v3480
    %v4731 = vpop.f32.mrb[0].mxu0
    %v4732 = vadd.f32 %v4675, %v4731
    %v4733 = vpop.f32.mrb[0].mxu0
    %v4734 = vpop.f32.mrb[0].mxu0
    %v4735 = vadd.f32 %v4675, %v4734
    %v4736 = vpop.f32.mrb[0].mxu0
    %4737 = vmatprep.mubr.bf16.mxu0 0
    %4738 = vmatmul.mubr.bf16.gmra.mrb[0].mxu0 %v3483
    %v4739 = vpop.f32.mrb[0].mxu0
    %v4740 = vadd.f32 %v4675, %v4739
    %v4741 = vpop.f32.mrb[0].mxu0
    %v4742 = vpop.f32.mrb[0].mxu0
    %v4743 = vadd.f32 %v4675, %v4742
    %v4744 = vpop.f32.mrb[0].mxu0
    %4745 = vmatprep.mubr.bf16.mxu0 0
    %4746 = vmatmul.mubr.bf16.gmra.mrb[0].mxu0 %v3486
    %v4747 = vpop.f32.mrb[0].mxu0
    %v4748 = vadd.f32 %v4675, %v4747
    %v4749 = vpop.f32.mrb[0].mxu0
    %v4750 = vpop.f32.mrb[0].mxu0
    %v4751 = vadd.f32 %v4675, %v4750
    %v4752 = vpop.f32.mrb[0].mxu0
    %4753 = vmatprep.mubr.bf16.mxu0 0
    %4754 = vmatmul.mubr.bf16.gmra.mrb[0].mxu0 %v3489
    %v4755 = vpop.f32.mrb[0].mxu0
    %v4756 = vadd.f32 %v4675, %v4755
    %v4757 = vpop.f32.mrb[0].mxu0
    %v4758 = vpop.f32.mrb[0].mxu0
    %v4759 = vadd.f32 %v4675, %v4758
    %v4760 = vpop.f32.mrb[0].mxu0
    %4761 = vmatprep.mubr.bf16.mxu0 0
    %4762 = vmatmul.mubr.bf16.gmra.mrb[0].mxu0 %v3492
    %v4763 = vpop.f32.mrb[0].mxu0
    %v4764 = vadd.f32 %v4675, %v4763
    %v4765 = vpop.f32.mrb[0].mxu0
    %v4766 = vpop.f32.mrb[0].mxu0
    %v4767 = vadd.f32 %v4675, %v4766
    %v4768 = vpop.f32.mrb[0].mxu0
    %4769 = vdwg.mxu0
    %v4770 = vpack.c.bf16 %v4515, %v4512
    %v4771 = vpack.c.bf16 %v4520, %v4520
    %v4772 = vpack.c.bf16 %v4528, %v4523
    %v4773 = vpack.c.bf16 %v4531, %v4531
    %v4774 = vpack.c.bf16 %v4539, %v4536
    %v4775 = vpack.c.bf16 %v4544, %v4544
    %v4776 = vpack.c.bf16 %v4552, %v4547
    %v4777 = vpack.c.bf16 %v4555, %v4555
    %v4778 = vpack.c.bf16 %v4621, %v4618
    %v4779 = vpack.c.bf16 %v4626, %v4626
    %v4780 = vpack.c.bf16 %v4634, %v4629
    %v4781 = vpack.c.bf16 %v4637, %v4637
    %v4782 = vpack.c.bf16 %v4645, %v4642
    %v4783 = vpack.c.bf16 %v4650, %v4650
    %v4784 = vpack.c.bf16 %v4658, %v4653
    %v4785 = vpack.c.bf16 %v4661, %v4661
    %v4787 = vsel %vm776, %v4770, 0
    %v4790 = vsel %vm776, %v4771, 0
    %v4793 = vsel %vm776, %v4778, 0
    %v4796 = vsel %vm776, %v4779, 0
    %4798 = vmatprep.subr.bf16.mxu0 0
    %4799 = vmatpush1.bf16.xpose.msra.mxu0 %v4793
    %4800 = vmatprep.subr.bf16.mxu0 0
    %4801 = vmatpush1.bf16.xpose.msra.mxu0 %v4796
    %4802 = vmatprep.subr.bf16.mxu0 0
    %4803 = vmatpush1.bf16.xpose.msra.mxu0 0
    %4804 = vmatprep.subr.bf16.mxu0 0
    %4805 = vmatpush1.bf16.xpose.msra.mxu0 0
    %4806 = vmatprep.subr.bf16.mxu0 0
    %4807 = vmatpush1.bf16.xpose.msra.mxu0 0
    %4808 = vmatprep.subr.bf16.mxu0 0
    %4809 = vmatpush1.bf16.xpose.msra.mxu0 0
    %4810 = vmatprep.subr.bf16.mxu0 0
    %4811 = vmatpush1.bf16.xpose.msra.mxu0 0
    %4812 = vmatprep.subr.bf16.mxu0 0
    %4813 = vmatpush1.bf16.xpose.msra.mxu0 0
    %4814 = vmatprep.subr.bf16.mxu0 0
    %4815 = vmatpush1.bf16.xpose.msra.mxu0 0
    %4816 = vmatprep.subr.bf16.mxu0 0
    %4817 = vmatpush1.bf16.xpose.msra.mxu0 0
    %4818 = vmatprep.subr.bf16.mxu0 0
    %4819 = vmatpush1.bf16.xpose.msra.mxu0 0
    %4820 = vmatprep.subr.bf16.mxu0 0
    %4821 = vmatpush1.bf16.xpose.msra.mxu0 0
    %4822 = vmatprep.subr.bf16.mxu0 0
    %4823 = vmatpush1.bf16.xpose.msra.mxu0 0
    %4824 = vmatprep.subr.bf16.mxu0 0
    %4825 = vmatpush1.bf16.xpose.msra.mxu0 0
    %4826 = vmatprep.subr.bf16.mxu0 0
    %4827 = vmatpush1.bf16.xpose.msra.mxu0 0
    %4828 = vmatprep.subr.bf16.mxu0 0
    %4829 = vmatpush1.bf16.xpose.msra.mxu0 0
    %4830 = vmatprep.mubr.bf16.mxu0 0
    %4831 = vmatmul.mubr.bf16.gmra.mrb[0].mxu0 %v4787
    %v4832 = vpop.f32.mrb[0].mxu0
    %v4833 = vadd.f32 0.0, %v4832
    %v4834 = vpop.f32.mrb[0].mxu0
    %v4835 = vpop.f32.mrb[0].mxu0
    %v4836 = vadd.f32 0.0, %v4835
    %v4837 = vpop.f32.mrb[0].mxu0
    %4838 = vmatprep.mubr.bf16.mxu0 0
    %4839 = vmatmul.mubr.bf16.gmra.mrb[0].mxu0 %v4790
    %v4840 = vpop.f32.mrb[0].mxu0
    %v4841 = vadd.f32 0.0, %v4840
    %v4842 = vpop.f32.mrb[0].mxu0
    %v4843 = vpop.f32.mrb[0].mxu0
    %v4844 = vpop.f32.mrb[0].mxu0
    %4845 = vdwg.mxu0
    %v4847 = vsel %vm776, %v4772, 0
    %v4850 = vsel %vm776, %v4773, 0
    %v4853 = vsel %vm776, %v4780, 0
    %v4856 = vsel %vm776, %v4781, 0
    %4858 = vmatprep.subr.bf16.mxu0 0
    %4859 = vmatpush1.bf16.xpose.msra.mxu0 %v4853
    %4860 = vmatprep.subr.bf16.mxu0 0
    %4861 = vmatpush1.bf16.xpose.msra.mxu0 %v4856
    %4862 = vmatprep.subr.bf16.mxu0 0
    %4863 = vmatpush1.bf16.xpose.msra.mxu0 0
    %4864 = vmatprep.subr.bf16.mxu0 0
    %4865 = vmatpush1.bf16.xpose.msra.mxu0 0
    %4866 = vmatprep.subr.bf16.mxu0 0
    %4867 = vmatpush1.bf16.xpose.msra.mxu0 0
    %4868 = vmatprep.subr.bf16.mxu0 0
    %4869 = vmatpush1.bf16.xpose.msra.mxu0 0
    %4870 = vmatprep.subr.bf16.mxu0 0
    %4871 = vmatpush1.bf16.xpose.msra.mxu0 0
    %4872 = vmatprep.subr.bf16.mxu0 0
    %4873 = vmatpush1.bf16.xpose.msra.mxu0 0
    %4874 = vmatprep.subr.bf16.mxu0 0
    %4875 = vmatpush1.bf16.xpose.msra.mxu0 0
    %4876 = vmatprep.subr.bf16.mxu0 0
    %4877 = vmatpush1.bf16.xpose.msra.mxu0 0
    %4878 = vmatprep.subr.bf16.mxu0 0
    %4879 = vmatpush1.bf16.xpose.msra.mxu0 0
    %4880 = vmatprep.subr.bf16.mxu0 0
    %4881 = vmatpush1.bf16.xpose.msra.mxu0 0
    %4882 = vmatprep.subr.bf16.mxu0 0
    %4883 = vmatpush1.bf16.xpose.msra.mxu0 0
    %4884 = vmatprep.subr.bf16.mxu0 0
    %4885 = vmatpush1.bf16.xpose.msra.mxu0 0
    %4886 = vmatprep.subr.bf16.mxu0 0
    %4887 = vmatpush1.bf16.xpose.msra.mxu0 0
    %4888 = vmatprep.subr.bf16.mxu0 0
    %4889 = vmatpush1.bf16.xpose.msra.mxu0 0
    %4890 = vmatprep.mubr.bf16.mxu0 0
    %4891 = vmatmul.mubr.bf16.gmra.mrb[0].mxu0 %v4847
    %v4892 = vpop.f32.mrb[0].mxu0
    %v4893 = vadd.f32 0.0, %v4892
    %v4894 = vpop.f32.mrb[0].mxu0
    %v4895 = vpop.f32.mrb[0].mxu0
    %v4896 = vadd.f32 0.0, %v4895
    %v4897 = vpop.f32.mrb[0].mxu0
    %4898 = vmatprep.mubr.bf16.mxu0 0
    %4899 = vmatmul.mubr.bf16.gmra.mrb[0].mxu0 %v4850
    %v4900 = vpop.f32.mrb[0].mxu0
    %v4901 = vadd.f32 0.0, %v4900
    %v4902 = vpop.f32.mrb[0].mxu0
    %v4903 = vpop.f32.mrb[0].mxu0
    %v4904 = vpop.f32.mrb[0].mxu0
    %4905 = vdwg.mxu0
    %v4907 = vsel %vm776, %v4774, 0
    %v4910 = vsel %vm776, %v4775, 0
    %v4913 = vsel %vm776, %v4782, 0
    %v4916 = vsel %vm776, %v4783, 0
    %4918 = vmatprep.subr.bf16.mxu0 0
    %4919 = vmatpush1.bf16.xpose.msra.mxu0 %v4913
    %4920 = vmatprep.subr.bf16.mxu0 0
    %4921 = vmatpush1.bf16.xpose.msra.mxu0 %v4916
    %4922 = vmatprep.subr.bf16.mxu0 0
    %4923 = vmatpush1.bf16.xpose.msra.mxu0 0
    %4924 = vmatprep.subr.bf16.mxu0 0
    %4925 = vmatpush1.bf16.xpose.msra.mxu0 0
    %4926 = vmatprep.subr.bf16.mxu0 0
    %4927 = vmatpush1.bf16.xpose.msra.mxu0 0
    %4928 = vmatprep.subr.bf16.mxu0 0
    %4929 = vmatpush1.bf16.xpose.msra.mxu0 0
    %4930 = vmatprep.subr.bf16.mxu0 0
    %4931 = vmatpush1.bf16.xpose.msra.mxu0 0
    %4932 = vmatprep.subr.bf16.mxu0 0
    %4933 = vmatpush1.bf16.xpose.msra.mxu0 0
    %4934 = vmatprep.subr.bf16.mxu0 0
    %4935 = vmatpush1.bf16.xpose.msra.mxu0 0
    %4936 = vmatprep.subr.bf16.mxu0 0
    %4937 = vmatpush1.bf16.xpose.msra.mxu0 0
    %4938 = vmatprep.subr.bf16.mxu0 0
    %4939 = vmatpush1.bf16.xpose.msra.mxu0 0
    %4940 = vmatprep.subr.bf16.mxu0 0
    %4941 = vmatpush1.bf16.xpose.msra.mxu0 0
    %4942 = vmatprep.subr.bf16.mxu0 0
    %4943 = vmatpush1.bf16.xpose.msra.mxu0 0
    %4944 = vmatprep.subr.bf16.mxu0 0
    %4945 = vmatpush1.bf16.xpose.msra.mxu0 0
    %4946 = vmatprep.subr.bf16.mxu0 0
    %4947 = vmatpush1.bf16.xpose.msra.mxu0 0
    %4948 = vmatprep.subr.bf16.mxu0 0
    %4949 = vmatpush1.bf16.xpose.msra.mxu0 0
    %4950 = vmatprep.mubr.bf16.mxu0 0
    %4951 = vmatmul.mubr.bf16.gmra.mrb[0].mxu0 %v4907
    %v4952 = vpop.f32.mrb[0].mxu0
    %v4953 = vadd.f32 0.0, %v4952
    %v4954 = vpop.f32.mrb[0].mxu0
    %v4955 = vpop.f32.mrb[0].mxu0
    %v4956 = vadd.f32 0.0, %v4955
    %v4957 = vpop.f32.mrb[0].mxu0
    %4958 = vmatprep.mubr.bf16.mxu0 0
    %4959 = vmatmul.mubr.bf16.gmra.mrb[0].mxu0 %v4910
    %v4960 = vpop.f32.mrb[0].mxu0
    %v4961 = vadd.f32 0.0, %v4960
    %v4962 = vpop.f32.mrb[0].mxu0
    %v4963 = vpop.f32.mrb[0].mxu0
    %v4964 = vpop.f32.mrb[0].mxu0
    %4965 = vdwg.mxu0
    %v4967 = vsel %vm776, %v4776, 0
    %v4970 = vsel %vm776, %v4777, 0
    %v4973 = vsel %vm776, %v4784, 0
    %v4976 = vsel %vm776, %v4785, 0
    %4978 = vmatprep.subr.bf16.mxu0 0
    %4979 = vmatpush1.bf16.xpose.msra.mxu0 %v4973
    %4980 = vmatprep.subr.bf16.mxu0 0
    %4981 = vmatpush1.bf16.xpose.msra.mxu0 %v4976
    %4982 = vmatprep.subr.bf16.mxu0 0
    %4983 = vmatpush1.bf16.xpose.msra.mxu0 0
    %4984 = vmatprep.subr.bf16.mxu0 0
    %4985 = vmatpush1.bf16.xpose.msra.mxu0 0
    %4986 = vmatprep.subr.bf16.mxu0 0
    %4987 = vmatpush1.bf16.xpose.msra.mxu0 0
    %4988 = vmatprep.subr.bf16.mxu0 0
    %4989 = vmatpush1.bf16.xpose.msra.mxu0 0
    %4990 = vmatprep.subr.bf16.mxu0 0
    %4991 = vmatpush1.bf16.xpose.msra.mxu0 0
    %4992 = vmatprep.subr.bf16.mxu0 0
    %4993 = vmatpush1.bf16.xpose.msra.mxu0 0
    %4994 = vmatprep.subr.bf16.mxu0 0
    %4995 = vmatpush1.bf16.xpose.msra.mxu0 0
    %4996 = vmatprep.subr.bf16.mxu0 0
    %4997 = vmatpush1.bf16.xpose.msra.mxu0 0
    %4998 = vmatprep.subr.bf16.mxu0 0
    %4999 = vmatpush1.bf16.xpose.msra.mxu0 0
    %5000 = vmatprep.subr.bf16.mxu0 0
    %5001 = vmatpush1.bf16.xpose.msra.mxu0 0
    %5002 = vmatprep.subr.bf16.mxu0 0
    %5003 = vmatpush1.bf16.xpose.msra.mxu0 0
    %5004 = vmatprep.subr.bf16.mxu0 0
    %5005 = vmatpush1.bf16.xpose.msra.mxu0 0
    %5006 = vmatprep.subr.bf16.mxu0 0
    %5007 = vmatpush1.bf16.xpose.msra.mxu0 0
    %5008 = vmatprep.subr.bf16.mxu0 0
    %5009 = vmatpush1.bf16.xpose.msra.mxu0 0
    %5010 = vmatprep.mubr.bf16.mxu0 0
    %5011 = vmatmul.mubr.bf16.gmra.mrb[0].mxu0 %v4967
    %v5012 = vpop.f32.mrb[0].mxu0
    %v5013 = vadd.f32 0.0, %v5012
    %v5014 = vpop.f32.mrb[0].mxu0
    %v5015 = vpop.f32.mrb[0].mxu0
    %v5016 = vadd.f32 0.0, %v5015
    %v5017 = vpop.f32.mrb[0].mxu0
    %5018 = vmatprep.mubr.bf16.mxu0 0
    %5019 = vmatmul.mubr.bf16.gmra.mrb[0].mxu0 %v4970
    %v5020 = vpop.f32.mrb[0].mxu0
    %v5021 = vadd.f32 0.0, %v5020
    %v5022 = vpop.f32.mrb[0].mxu0
    %v5023 = vpop.f32.mrb[0].mxu0
    %v5024 = vpop.f32.mrb[0].mxu0
    %5025 = vdwg.mxu0
    %v5026 = vmul.f32 %v4833, 0.25
    %v5027 = vmul.f32 %v4836, 0.25
    %v5028 = vmul.f32 %v4841, 0.25
    %v5029 = vmul.f32 %v4893, 0.25
    %v5030 = vmul.f32 %v4896, 0.25
    %v5031 = vmul.f32 %v4901, 0.25
    %v5032 = vmul.f32 %v4953, 0.25
    %v5033 = vmul.f32 %v4956, 0.25
    %v5034 = vmul.f32 %v4961, 0.25
    %v5035 = vmul.f32 %v5013, 0.25
    %v5036 = vmul.f32 %v5016, 0.25
    %v5037 = vmul.f32 %v5021, 0.25
    %v5038 = vadd.f32 %v5026, %v268
    %v5039 = vadd.f32 %v5027, %v268
    %v5040 = vadd.f32 %v5028, %v268
    %v5041 = vadd.f32 %v5029, %v268
    %v5042 = vadd.f32 %v5030, %v268
    %v5043 = vadd.f32 %v5031, %v268
    %v5044 = vadd.f32 %v5032, %v268
    %v5045 = vadd.f32 %v5033, %v268
    %v5046 = vadd.f32 %v5034, %v268
    %v5047 = vadd.f32 %v5035, %v268
    %v5048 = vadd.f32 %v5036, %v268
    %v5049 = vadd.f32 %v5037, %v268
    %v5050 = vsel %vm1041, %v5038, -inf
    %5051 = vmax.xlane.f32.xlu0 %v5050
    %v5052 = vpop.xlane.xlu0 %5051
    %v5053 = vsel %vm1041, %v5039, -inf
    %5054 = vmax.xlane.f32.xlu0 %v5053
    %v5055 = vpop.xlane.xlu0 %5054
    %v5056 = vsel %vm1041, %v5040, -inf
    %5057 = vmax.xlane.f32.xlu0 %v5056
    %v5058 = vpop.xlane.xlu0 %5057
    %v5059 = vsel %vm1041, %v5041, -inf
    %5060 = vmax.xlane.f32.xlu0 %v5059
    %v5061 = vpop.xlane.xlu0 %5060
    %v5062 = vsel %vm1041, %v5042, -inf
    %5063 = vmax.xlane.f32.xlu0 %v5062
    %v5064 = vpop.xlane.xlu0 %5063
    %v5065 = vsel %vm1041, %v5043, -inf
    %5066 = vmax.xlane.f32.xlu0 %v5065
    %v5067 = vpop.xlane.xlu0 %5066
    %v5068 = vsel %vm1041, %v5044, -inf
    %5069 = vmax.xlane.f32.xlu0 %v5068
    %v5070 = vpop.xlane.xlu0 %5069
    %v5071 = vsel %vm1041, %v5045, -inf
    %5072 = vmax.xlane.f32.xlu0 %v5071
    %v5073 = vpop.xlane.xlu0 %5072
    %v5074 = vsel %vm1041, %v5046, -inf
    %5075 = vmax.xlane.f32.xlu0 %v5074
    %v5076 = vpop.xlane.xlu0 %5075
    %v5077 = vsel %vm1041, %v5047, -inf
    %5078 = vmax.xlane.f32.xlu0 %v5077
    %v5079 = vpop.xlane.xlu0 %5078
    %v5080 = vsel %vm1041, %v5048, -inf
    %5081 = vmax.xlane.f32.xlu0 %v5080
    %v5082 = vpop.xlane.xlu0 %5081
    %v5083 = vsel %vm1041, %v5049, -inf
    %5084 = vmax.xlane.f32.xlu0 %v5083
    %v5085 = vpop.xlane.xlu0 %5084
    %v5086 = vsub.f32 %v5038, %v5052
    %v5087 = vsub.f32 %v5039, %v5055
    %v5088 = vsub.f32 %v5040, %v5058
    %v5089 = vsub.f32 %v5041, %v5061
    %v5090 = vsub.f32 %v5042, %v5064
    %v5091 = vsub.f32 %v5043, %v5067
    %v5092 = vsub.f32 %v5044, %v5070
    %v5093 = vsub.f32 %v5045, %v5073
    %v5094 = vsub.f32 %v5046, %v5076
    %v5095 = vsub.f32 %v5047, %v5079
    %v5096 = vsub.f32 %v5048, %v5082
    %v5097 = vsub.f32 %v5049, %v5085
    %v5098 = vmul.f32 %v5086, 1.442695
    %v5099 = vpow.pop %v5098
    %v5100 = vmul.f32 %v5087, 1.442695
    %v5101 = vpow.pop %v5100
    %v5102 = vmul.f32 %v5088, 1.442695
    %v5103 = vpow.pop %v5102
    %v5104 = vmul.f32 %v5089, 1.442695
    %v5105 = vpow.pop %v5104
    %v5106 = vmul.f32 %v5090, 1.442695
    %v5107 = vpow.pop %v5106
    %v5108 = vmul.f32 %v5091, 1.442695
    %v5109 = vpow.pop %v5108
    %v5110 = vmul.f32 %v5092, 1.442695
    %v5111 = vpow.pop %v5110
    %v5112 = vmul.f32 %v5093, 1.442695
    %v5113 = vpow.pop %v5112
    %v5114 = vmul.f32 %v5094, 1.442695
    %v5115 = vpow.pop %v5114
    %v5116 = vmul.f32 %v5095, 1.442695
    %v5117 = vpow.pop %v5116
    %v5118 = vmul.f32 %v5096, 1.442695
    %v5119 = vpow.pop %v5118
    %v5120 = vmul.f32 %v5097, 1.442695
    %v5121 = vpow.pop %v5120
    %v5122 = vsel %vm1041, %v5099, 0.0
    %5123 = vadd.xlane.f32.xlu0 %v5122
    %v5124 = vpop.xlane.xlu0 %5123
    %v5125 = vsel %vm1041, %v5101, 0.0
    %5126 = vadd.xlane.f32.xlu0 %v5125
    %v5127 = vpop.xlane.xlu0 %5126
    %v5128 = vsel %vm1041, %v5103, 0.0
    %5129 = vadd.xlane.f32.xlu0 %v5128
    %v5130 = vpop.xlane.xlu0 %5129
    %v5131 = vsel %vm1041, %v5105, 0.0
    %5132 = vadd.xlane.f32.xlu0 %v5131
    %v5133 = vpop.xlane.xlu0 %5132
    %v5134 = vsel %vm1041, %v5107, 0.0
    %5135 = vadd.xlane.f32.xlu0 %v5134
    %v5136 = vpop.xlane.xlu0 %5135
    %v5137 = vsel %vm1041, %v5109, 0.0
    %5138 = vadd.xlane.f32.xlu0 %v5137
    %v5139 = vpop.xlane.xlu0 %5138
    %v5140 = vsel %vm1041, %v5111, 0.0
    %5141 = vadd.xlane.f32.xlu0 %v5140
    %v5142 = vpop.xlane.xlu0 %5141
    %v5143 = vsel %vm1041, %v5113, 0.0
    %5144 = vadd.xlane.f32.xlu0 %v5143
    %v5145 = vpop.xlane.xlu0 %5144
    %v5146 = vsel %vm1041, %v5115, 0.0
    %5147 = vadd.xlane.f32.xlu0 %v5146
    %v5148 = vpop.xlane.xlu0 %5147
    %v5149 = vsel %vm1041, %v5117, 0.0
    %5150 = vadd.xlane.f32.xlu0 %v5149
    %v5151 = vpop.xlane.xlu0 %5150
    %v5152 = vsel %vm1041, %v5119, 0.0
    %5153 = vadd.xlane.f32.xlu0 %v5152
    %v5154 = vpop.xlane.xlu0 %5153
    %v5155 = vsel %vm1041, %v5121, 0.0
    %5156 = vadd.xlane.f32.xlu0 %v5155
    %v5157 = vpop.xlane.xlu0 %5156
    %v5158 = vrcp.pop %v5124
    %v5159 = vrcp.pop %v5127
    %v5160 = vrcp.pop %v5130
    %v5161 = vrcp.pop %v5133
    %v5162 = vrcp.pop %v5136
    %v5163 = vrcp.pop %v5139
    %v5164 = vrcp.pop %v5142
    %v5165 = vrcp.pop %v5145
    %v5166 = vrcp.pop %v5148
    %v5167 = vrcp.pop %v5151
    %v5168 = vrcp.pop %v5154
    %v5169 = vrcp.pop %v5157
    %v5170 = vmul.f32 %v5099, %v5158
    %v5171 = vmul.f32 %v5101, %v5159
    %v5172 = vmul.f32 %v5103, %v5160
    %v5173 = vmul.f32 %v5105, %v5161
    %v5174 = vmul.f32 %v5107, %v5162
    %v5175 = vmul.f32 %v5109, %v5163
    %v5176 = vmul.f32 %v5111, %v5164
    %v5177 = vmul.f32 %v5113, %v5165
    %v5178 = vmul.f32 %v5115, %v5166
    %v5179 = vmul.f32 %v5117, %v5167
    %v5180 = vmul.f32 %v5119, %v5168
    %v5181 = vmul.f32 %v5121, %v5169
    %v5182 = vpack.c.bf16 %v5171, %v5170
    %v5183 = vpack.c.bf16 %v5172, %v5172
    %v5184 = vpack.c.bf16 %v5174, %v5173
    %v5185 = vpack.c.bf16 %v5175, %v5175
    %v5186 = vpack.c.bf16 %v5177, %v5176
    %v5187 = vpack.c.bf16 %v5178, %v5178
    %v5188 = vpack.c.bf16 %v5180, %v5179
    %v5189 = vpack.c.bf16 %v5181, %v5181
    %v5190 = vpack.c.bf16 %v4727, %v4724
    %v5191 = vpack.c.bf16 %v4732, %v4732
    %v5192 = vpack.c.bf16 %v4740, %v4735
    %v5193 = vpack.c.bf16 %v4743, %v4743
    %v5194 = vpack.c.bf16 %v4751, %v4748
    %v5195 = vpack.c.bf16 %v4756, %v4756
    %v5196 = vpack.c.bf16 %v4764, %v4759
    %v5197 = vpack.c.bf16 %v4767, %v4767
    %v5199 = vsel %vm1041, %v5182, 0
    %v5202 = vsel %vm1041, %v5183, 0
    %v5205 = vsel %vm1196, %v5191, 0
    %5207 = vmatprep.subr.bf16.mxu0 0
    %5208 = vmatpush1.bf16.msra.mxu0 %v5190
    %5209 = vmatprep.subr.bf16.mxu0 0
    %5210 = vmatpush1.bf16.msra.mxu0 %v5205
    %5211 = vmatprep.subr.bf16.mxu0 0
    %5212 = vmatpush1.bf16.msra.mxu0 0
    %5213 = vmatprep.subr.bf16.mxu0 0
    %5214 = vmatpush1.bf16.msra.mxu0 0
    %5215 = vmatprep.subr.bf16.mxu0 0
    %5216 = vmatpush1.bf16.msra.mxu0 0
    %5217 = vmatprep.subr.bf16.mxu0 0
    %5218 = vmatpush1.bf16.msra.mxu0 0
    %5219 = vmatprep.subr.bf16.mxu0 0
    %5220 = vmatpush1.bf16.msra.mxu0 0
    %5221 = vmatprep.subr.bf16.mxu0 0
    %5222 = vmatpush1.bf16.msra.mxu0 0
    %5223 = vmatprep.subr.bf16.mxu0 0
    %5224 = vmatpush1.bf16.msra.mxu0 0
    %5225 = vmatprep.subr.bf16.mxu0 0
    %5226 = vmatpush1.bf16.msra.mxu0 0
    %5227 = vmatprep.subr.bf16.mxu0 0
    %5228 = vmatpush1.bf16.msra.mxu0 0
    %5229 = vmatprep.subr.bf16.mxu0 0
    %5230 = vmatpush1.bf16.msra.mxu0 0
    %5231 = vmatprep.subr.bf16.mxu0 0
    %5232 = vmatpush1.bf16.msra.mxu0 0
    %5233 = vmatprep.subr.bf16.mxu0 0
    %5234 = vmatpush1.bf16.msra.mxu0 0
    %5235 = vmatprep.subr.bf16.mxu0 0
    %5236 = vmatpush1.bf16.msra.mxu0 0
    %5237 = vmatprep.subr.bf16.mxu0 0
    %5238 = vmatpush1.bf16.msra.mxu0 0
    %5239 = vmatprep.mubr.bf16.mxu0 0
    %5240 = vmatmul.mubr.bf16.gmra.mrb[0].mxu0 %v5199
    %v5241 = vpop.f32.mrb[0].mxu0
    %v5242 = vadd.f32 0.0, %v5241
    %v5243 = vpop.f32.mrb[0].mxu0
    %v5244 = vpop.f32.mrb[0].mxu0
    %v5245 = vadd.f32 0.0, %v5244
    %v5246 = vpop.f32.mrb[0].mxu0
    %5247 = vmatprep.mubr.bf16.mxu0 0
    %5248 = vmatmul.mubr.bf16.gmra.mrb[0].mxu0 %v5202
    %v5249 = vpop.f32.mrb[0].mxu0
    %v5250 = vadd.f32 0.0, %v5249
    %v5251 = vpop.f32.mrb[0].mxu0
    %v5252 = vpop.f32.mrb[0].mxu0
    %v5253 = vpop.f32.mrb[0].mxu0
    %5254 = vdwg.mxu0
    %v5256 = vsel %vm1041, %v5184, 0
    %v5259 = vsel %vm1041, %v5185, 0
    %v5262 = vsel %vm1196, %v5193, 0
    %5264 = vmatprep.subr.bf16.mxu0 0
    %5265 = vmatpush1.bf16.msra.mxu0 %v5192
    %5266 = vmatprep.subr.bf16.mxu0 0
    %5267 = vmatpush1.bf16.msra.mxu0 %v5262
    %5268 = vmatprep.subr.bf16.mxu0 0
    %5269 = vmatpush1.bf16.msra.mxu0 0
    %5270 = vmatprep.subr.bf16.mxu0 0
    %5271 = vmatpush1.bf16.msra.mxu0 0
    %5272 = vmatprep.subr.bf16.mxu0 0
    %5273 = vmatpush1.bf16.msra.mxu0 0
    %5274 = vmatprep.subr.bf16.mxu0 0
    %5275 = vmatpush1.bf16.msra.mxu0 0
    %5276 = vmatprep.subr.bf16.mxu0 0
    %5277 = vmatpush1.bf16.msra.mxu0 0
    %5278 = vmatprep.subr.bf16.mxu0 0
    %5279 = vmatpush1.bf16.msra.mxu0 0
    %5280 = vmatprep.subr.bf16.mxu0 0
    %5281 = vmatpush1.bf16.msra.mxu0 0
    %5282 = vmatprep.subr.bf16.mxu0 0
    %5283 = vmatpush1.bf16.msra.mxu0 0
    %5284 = vmatprep.subr.bf16.mxu0 0
    %5285 = vmatpush1.bf16.msra.mxu0 0
    %5286 = vmatprep.subr.bf16.mxu0 0
    %5287 = vmatpush1.bf16.msra.mxu0 0
    %5288 = vmatprep.subr.bf16.mxu0 0
    %5289 = vmatpush1.bf16.msra.mxu0 0
    %5290 = vmatprep.subr.bf16.mxu0 0
    %5291 = vmatpush1.bf16.msra.mxu0 0
    %5292 = vmatprep.subr.bf16.mxu0 0
    %5293 = vmatpush1.bf16.msra.mxu0 0
    %5294 = vmatprep.subr.bf16.mxu0 0
    %5295 = vmatpush1.bf16.msra.mxu0 0
    %5296 = vmatprep.mubr.bf16.mxu0 0
    %5297 = vmatmul.mubr.bf16.gmra.mrb[0].mxu0 %v5256
    %v5298 = vpop.f32.mrb[0].mxu0
    %v5299 = vadd.f32 0.0, %v5298
    %v5300 = vpop.f32.mrb[0].mxu0
    %v5301 = vpop.f32.mrb[0].mxu0
    %v5302 = vadd.f32 0.0, %v5301
    %v5303 = vpop.f32.mrb[0].mxu0
    %5304 = vmatprep.mubr.bf16.mxu0 0
    %5305 = vmatmul.mubr.bf16.gmra.mrb[0].mxu0 %v5259
    %v5306 = vpop.f32.mrb[0].mxu0
    %v5307 = vadd.f32 0.0, %v5306
    %v5308 = vpop.f32.mrb[0].mxu0
    %v5309 = vpop.f32.mrb[0].mxu0
    %v5310 = vpop.f32.mrb[0].mxu0
    %5311 = vdwg.mxu0
    %v5313 = vsel %vm1041, %v5186, 0
    %v5316 = vsel %vm1041, %v5187, 0
    %v5319 = vsel %vm1196, %v5195, 0
    %5321 = vmatprep.subr.bf16.mxu0 0
    %5322 = vmatpush1.bf16.msra.mxu0 %v5194
    %5323 = vmatprep.subr.bf16.mxu0 0
    %5324 = vmatpush1.bf16.msra.mxu0 %v5319
    %5325 = vmatprep.subr.bf16.mxu0 0
    %5326 = vmatpush1.bf16.msra.mxu0 0
    %5327 = vmatprep.subr.bf16.mxu0 0
    %5328 = vmatpush1.bf16.msra.mxu0 0
    %5329 = vmatprep.subr.bf16.mxu0 0
    %5330 = vmatpush1.bf16.msra.mxu0 0
    %5331 = vmatprep.subr.bf16.mxu0 0
    %5332 = vmatpush1.bf16.msra.mxu0 0
    %5333 = vmatprep.subr.bf16.mxu0 0
    %5334 = vmatpush1.bf16.msra.mxu0 0
    %5335 = vmatprep.subr.bf16.mxu0 0
    %5336 = vmatpush1.bf16.msra.mxu0 0
    %5337 = vmatprep.subr.bf16.mxu0 0
    %5338 = vmatpush1.bf16.msra.mxu0 0
    %5339 = vmatprep.subr.bf16.mxu0 0
    %5340 = vmatpush1.bf16.msra.mxu0 0
    %5341 = vmatprep.subr.bf16.mxu0 0
    %5342 = vmatpush1.bf16.msra.mxu0 0
    %5343 = vmatprep.subr.bf16.mxu0 0
    %5344 = vmatpush1.bf16.msra.mxu0 0
    %5345 = vmatprep.subr.bf16.mxu0 0
    %5346 = vmatpush1.bf16.msra.mxu0 0
    %5347 = vmatprep.subr.bf16.mxu0 0
    %5348 = vmatpush1.bf16.msra.mxu0 0
    %5349 = vmatprep.subr.bf16.mxu0 0
    %5350 = vmatpush1.bf16.msra.mxu0 0
    %5351 = vmatprep.subr.bf16.mxu0 0
    %5352 = vmatpush1.bf16.msra.mxu0 0
    %5353 = vmatprep.mubr.bf16.mxu0 0
    %5354 = vmatmul.mubr.bf16.gmra.mrb[0].mxu0 %v5313
    %v5355 = vpop.f32.mrb[0].mxu0
    %v5356 = vadd.f32 0.0, %v5355
    %v5357 = vpop.f32.mrb[0].mxu0
    %v5358 = vpop.f32.mrb[0].mxu0
    %v5359 = vadd.f32 0.0, %v5358
    %v5360 = vpop.f32.mrb[0].mxu0
    %5361 = vmatprep.mubr.bf16.mxu0 0
    %5362 = vmatmul.mubr.bf16.gmra.mrb[0].mxu0 %v5316
    %v5363 = vpop.f32.mrb[0].mxu0
    %v5364 = vadd.f32 0.0, %v5363
    %v5365 = vpop.f32.mrb[0].mxu0
    %v5366 = vpop.f32.mrb[0].mxu0
    %v5367 = vpop.f32.mrb[0].mxu0
    %5368 = vdwg.mxu0
    %v5370 = vsel %vm1041, %v5188, 0
    %v5373 = vsel %vm1041, %v5189, 0
    %v5376 = vsel %vm1196, %v5197, 0
    %5378 = vmatprep.subr.bf16.mxu0 0
    %5379 = vmatpush1.bf16.msra.mxu0 %v5196
    %5380 = vmatprep.subr.bf16.mxu0 0
    %5381 = vmatpush1.bf16.msra.mxu0 %v5376
    %5382 = vmatprep.subr.bf16.mxu0 0
    %5383 = vmatpush1.bf16.msra.mxu0 0
    %5384 = vmatprep.subr.bf16.mxu0 0
    %5385 = vmatpush1.bf16.msra.mxu0 0
    %5386 = vmatprep.subr.bf16.mxu0 0
    %5387 = vmatpush1.bf16.msra.mxu0 0
    %5388 = vmatprep.subr.bf16.mxu0 0
    %5389 = vmatpush1.bf16.msra.mxu0 0
    %5390 = vmatprep.subr.bf16.mxu0 0
    %5391 = vmatpush1.bf16.msra.mxu0 0
    %5392 = vmatprep.subr.bf16.mxu0 0
    %5393 = vmatpush1.bf16.msra.mxu0 0
    %5394 = vmatprep.subr.bf16.mxu0 0
    %5395 = vmatpush1.bf16.msra.mxu0 0
    %5396 = vmatprep.subr.bf16.mxu0 0
    %5397 = vmatpush1.bf16.msra.mxu0 0
    %5398 = vmatprep.subr.bf16.mxu0 0
    %5399 = vmatpush1.bf16.msra.mxu0 0
    %5400 = vmatprep.subr.bf16.mxu0 0
    %5401 = vmatpush1.bf16.msra.mxu0 0
    %5402 = vmatprep.subr.bf16.mxu0 0
    %5403 = vmatpush1.bf16.msra.mxu0 0
    %5404 = vmatprep.subr.bf16.mxu0 0
    %5405 = vmatpush1.bf16.msra.mxu0 0
    %5406 = vmatprep.subr.bf16.mxu0 0
    %5407 = vmatpush1.bf16.msra.mxu0 0
    %5408 = vmatprep.subr.bf16.mxu0 0
    %5409 = vmatpush1.bf16.msra.mxu0 0
    %5410 = vmatprep.mubr.bf16.mxu0 0
    %5411 = vmatmul.mubr.bf16.gmra.mrb[0].mxu0 %v5370
    %v5412 = vpop.f32.mrb[0].mxu0
    %v5413 = vadd.f32 0.0, %v5412
    %v5414 = vpop.f32.mrb[0].mxu0
    %v5415 = vpop.f32.mrb[0].mxu0
    %v5416 = vadd.f32 0.0, %v5415
    %v5417 = vpop.f32.mrb[0].mxu0
    %5418 = vmatprep.mubr.bf16.mxu0 0
    %5419 = vmatmul.mubr.bf16.gmra.mrb[0].mxu0 %v5373
    %v5420 = vpop.f32.mrb[0].mxu0
    %v5421 = vadd.f32 0.0, %v5420
    %v5422 = vpop.f32.mrb[0].mxu0
    %v5423 = vpop.f32.mrb[0].mxu0
    %v5424 = vpop.f32.mrb[0].mxu0
    %5425 = vdwg.mxu0
    %v5426 = vpack.c.bf16 %v5245, %v5242
    %v5427 = vpack.c.bf16 %v5299, %v5250
    %v5428 = vpack.c.bf16 %v5307, %v5302
    %v5429 = vpack.c.bf16 %v5359, %v5356
    %v5430 = vpack.c.bf16 %v5413, %v5364
    %v5431 = vpack.c.bf16 %v5421, %v5416
    %s5432 = scalar_lea.vmem %s17, 24
    %v5433 = vld [vmem:[%s5432] sm:$0xf]
    %v5434 = vld [vmem:[%s5432 + $0x4] sm:$0xf]
    %v5437 = vunpack.c.l.b16 %v5433
    %v5438 = vunpack.c.l.b16 %v5434
    %v5439 = vpack.c.b16 %v5438, %v5437
    %v5442 = vsel %vm776, %v5426, 0
    %v5445 = vsel %vm776, %v5427, 0
    %v5448 = vsel %vm776, %v5428, 0
    %v5451 = vsel %vm776, %v5429, 0
    %v5454 = vsel %vm776, %v5430, 0
    %v5457 = vsel %vm776, %v5431, 0
    %5459 = vmatprep.subr.bf16.mxu0 0
    %5460 = vmatpush1.bf16.msra.mxu0 %v5439
    %5461 = vmatprep.subr.bf16.mxu0 0
    %5462 = vmatpush1.bf16.msra.mxu0 0
    %5463 = vmatprep.subr.bf16.mxu0 0
    %5464 = vmatpush1.bf16.msra.mxu0 0
    %5465 = vmatprep.subr.bf16.mxu0 0
    %5466 = vmatpush1.bf16.msra.mxu0 0
    %5467 = vmatprep.subr.bf16.mxu0 0
    %5468 = vmatpush1.bf16.msra.mxu0 0
    %5469 = vmatprep.subr.bf16.mxu0 0
    %5470 = vmatpush1.bf16.msra.mxu0 0
    %5471 = vmatprep.subr.bf16.mxu0 0
    %5472 = vmatpush1.bf16.msra.mxu0 0
    %5473 = vmatprep.subr.bf16.mxu0 0
    %5474 = vmatpush1.bf16.msra.mxu0 0
    %5475 = vmatprep.subr.bf16.mxu0 0
    %5476 = vmatpush1.bf16.msra.mxu0 0
    %5477 = vmatprep.subr.bf16.mxu0 0
    %5478 = vmatpush1.bf16.msra.mxu0 0
    %5479 = vmatprep.subr.bf16.mxu0 0
    %5480 = vmatpush1.bf16.msra.mxu0 0
    %5481 = vmatprep.subr.bf16.mxu0 0
    %5482 = vmatpush1.bf16.msra.mxu0 0
    %5483 = vmatprep.subr.bf16.mxu0 0
    %5484 = vmatpush1.bf16.msra.mxu0 0
    %5485 = vmatprep.subr.bf16.mxu0 0
    %5486 = vmatpush1.bf16.msra.mxu0 0
    %5487 = vmatprep.subr.bf16.mxu0 0
    %5488 = vmatpush1.bf16.msra.mxu0 0
    %5489 = vmatprep.subr.bf16.mxu0 0
    %5490 = vmatpush1.bf16.msra.mxu0 0
    %5491 = vmatprep.mubr.bf16.mxu0 0
    %5492 = vmatmul.mubr.bf16.gmra.mrb[0].mxu0 %v5442
    %v5493 = vpop.f32.mrb[0].mxu0
    %v5494 = vadd.f32 0.0, %v5493
    %v5495 = vpop.f32.mrb[0].mxu0
    %v5496 = vpop.f32.mrb[0].mxu0
    %v5497 = vadd.f32 0.0, %v5496
    %v5498 = vpop.f32.mrb[0].mxu0
    %5499 = vmatprep.mubr.bf16.mxu0 0
    %5500 = vmatmul.mubr.bf16.gmra.mrb[0].mxu0 %v5445
    %v5501 = vpop.f32.mrb[0].mxu0
    %v5502 = vadd.f32 0.0, %v5501
    %v5503 = vpop.f32.mrb[0].mxu0
    %v5504 = vpop.f32.mrb[0].mxu0
    %v5505 = vadd.f32 0.0, %v5504
    %v5506 = vpop.f32.mrb[0].mxu0
    %5507 = vmatprep.mubr.bf16.mxu0 0
    %5508 = vmatmul.mubr.bf16.gmra.mrb[0].mxu0 %v5448
    %v5509 = vpop.f32.mrb[0].mxu0
    %v5510 = vadd.f32 0.0, %v5509
    %v5511 = vpop.f32.mrb[0].mxu0
    %v5512 = vpop.f32.mrb[0].mxu0
    %v5513 = vadd.f32 0.0, %v5512
    %v5514 = vpop.f32.mrb[0].mxu0
    %5515 = vmatprep.mubr.bf16.mxu0 0
    %5516 = vmatmul.mubr.bf16.gmra.mrb[0].mxu0 %v5451
    %v5517 = vpop.f32.mrb[0].mxu0
    %v5518 = vadd.f32 0.0, %v5517
    %v5519 = vpop.f32.mrb[0].mxu0
    %v5520 = vpop.f32.mrb[0].mxu0
    %v5521 = vadd.f32 0.0, %v5520
    %v5522 = vpop.f32.mrb[0].mxu0
    %5523 = vmatprep.mubr.bf16.mxu0 0
    %5524 = vmatmul.mubr.bf16.gmra.mrb[0].mxu0 %v5454
    %v5525 = vpop.f32.mrb[0].mxu0
    %v5526 = vadd.f32 0.0, %v5525
    %v5527 = vpop.f32.mrb[0].mxu0
    %v5528 = vpop.f32.mrb[0].mxu0
    %v5529 = vadd.f32 0.0, %v5528
    %v5530 = vpop.f32.mrb[0].mxu0
    %5531 = vmatprep.mubr.bf16.mxu0 0
    %5532 = vmatmul.mubr.bf16.gmra.mrb[0].mxu0 %v5457
    %v5533 = vpop.f32.mrb[0].mxu0
    %v5534 = vadd.f32 0.0, %v5533
    %v5535 = vpop.f32.mrb[0].mxu0
    %v5536 = vpop.f32.mrb[0].mxu0
    %v5537 = vadd.f32 0.0, %v5536
    %v5538 = vpop.f32.mrb[0].mxu0
    %5539 = vdwg.mxu0
    %v5542 = vunpack.c.l.b16 %v4450
    %v5543 = vunpack.c.l.b16 %v4451
    %v5544 = vpack.c.b16 %v5543, %v5542
    %v5547 = vsel %vm776, %v4443, 0
    %v5550 = vsel %vm776, %v4444, 0
    %v5553 = vsel %vm776, %v4445, 0
    %v5556 = vsel %vm776, %v4446, 0
    %v5559 = vsel %vm776, %v4447, 0
    %v5562 = vsel %vm776, %v4448, 0
    %5564 = vmatprep.subr.bf16.mxu0 0
    %5565 = vmatpush1.bf16.msra.mxu0 %v5544
    %5566 = vmatprep.subr.bf16.mxu0 0
    %5567 = vmatpush1.bf16.msra.mxu0 0
    %5568 = vmatprep.subr.bf16.mxu0 0
    %5569 = vmatpush1.bf16.msra.mxu0 0
    %5570 = vmatprep.subr.bf16.mxu0 0
    %5571 = vmatpush1.bf16.msra.mxu0 0
    %5572 = vmatprep.subr.bf16.mxu0 0
    %5573 = vmatpush1.bf16.msra.mxu0 0
    %5574 = vmatprep.subr.bf16.mxu0 0
    %5575 = vmatpush1.bf16.msra.mxu0 0
    %5576 = vmatprep.subr.bf16.mxu0 0
    %5577 = vmatpush1.bf16.msra.mxu0 0
    %5578 = vmatprep.subr.bf16.mxu0 0
    %5579 = vmatpush1.bf16.msra.mxu0 0
    %5580 = vmatprep.subr.bf16.mxu0 0
    %5581 = vmatpush1.bf16.msra.mxu0 0
    %5582 = vmatprep.subr.bf16.mxu0 0
    %5583 = vmatpush1.bf16.msra.mxu0 0
    %5584 = vmatprep.subr.bf16.mxu0 0
    %5585 = vmatpush1.bf16.msra.mxu0 0
    %5586 = vmatprep.subr.bf16.mxu0 0
    %5587 = vmatpush1.bf16.msra.mxu0 0
    %5588 = vmatprep.subr.bf16.mxu0 0
    %5589 = vmatpush1.bf16.msra.mxu0 0
    %5590 = vmatprep.subr.bf16.mxu0 0
    %5591 = vmatpush1.bf16.msra.mxu0 0
    %5592 = vmatprep.subr.bf16.mxu0 0
    %5593 = vmatpush1.bf16.msra.mxu0 0
    %5594 = vmatprep.subr.bf16.mxu0 0
    %5595 = vmatpush1.bf16.msra.mxu0 0
    %5596 = vmatprep.mubr.bf16.mxu0 0
    %5597 = vmatmul.mubr.bf16.gmra.mrb[0].mxu0 %v5547
    %v5598 = vpop.f32.mrb[0].mxu0
    %v5599 = vadd.f32 %v5494, %v5598
    %v5600 = vpop.f32.mrb[0].mxu0
    %v5601 = vpop.f32.mrb[0].mxu0
    %v5602 = vadd.f32 %v5497, %v5601
    %v5603 = vpop.f32.mrb[0].mxu0
    %5604 = vmatprep.mubr.bf16.mxu0 0
    %5605 = vmatmul.mubr.bf16.gmra.mrb[0].mxu0 %v5550
    %v5606 = vpop.f32.mrb[0].mxu0
    %v5607 = vadd.f32 %v5502, %v5606
    %v5608 = vpop.f32.mrb[0].mxu0
    %v5609 = vpop.f32.mrb[0].mxu0
    %v5610 = vadd.f32 %v5505, %v5609
    %v5611 = vpop.f32.mrb[0].mxu0
    %5612 = vmatprep.mubr.bf16.mxu0 0
    %5613 = vmatmul.mubr.bf16.gmra.mrb[0].mxu0 %v5553
    %v5614 = vpop.f32.mrb[0].mxu0
    %v5615 = vadd.f32 %v5510, %v5614
    %v5616 = vpop.f32.mrb[0].mxu0
    %v5617 = vpop.f32.mrb[0].mxu0
    %v5618 = vadd.f32 %v5513, %v5617
    %v5619 = vpop.f32.mrb[0].mxu0
    %5620 = vmatprep.mubr.bf16.mxu0 0
    %5621 = vmatmul.mubr.bf16.gmra.mrb[0].mxu0 %v5556
    %v5622 = vpop.f32.mrb[0].mxu0
    %v5623 = vadd.f32 %v5518, %v5622
    %v5624 = vpop.f32.mrb[0].mxu0
    %v5625 = vpop.f32.mrb[0].mxu0
    %v5626 = vadd.f32 %v5521, %v5625
    %v5627 = vpop.f32.mrb[0].mxu0
    %5628 = vmatprep.mubr.bf16.mxu0 0
    %5629 = vmatmul.mubr.bf16.gmra.mrb[0].mxu0 %v5559
    %v5630 = vpop.f32.mrb[0].mxu0
    %v5631 = vadd.f32 %v5526, %v5630
    %v5632 = vpop.f32.mrb[0].mxu0
    %v5633 = vpop.f32.mrb[0].mxu0
    %v5634 = vadd.f32 %v5529, %v5633
    %v5635 = vpop.f32.mrb[0].mxu0
    %5636 = vmatprep.mubr.bf16.mxu0 0
    %5637 = vmatmul.mubr.bf16.gmra.mrb[0].mxu0 %v5562
    %v5638 = vpop.f32.mrb[0].mxu0
    %v5639 = vadd.f32 %v5534, %v5638
    %v5640 = vpop.f32.mrb[0].mxu0
    %v5641 = vpop.f32.mrb[0].mxu0
    %v5642 = vadd.f32 %v5537, %v5641
    %v5643 = vpop.f32.mrb[0].mxu0
    %5644 = vdwg.mxu0
    %v5645 = vadd.f32 %v3237, %v5599
    %v5646 = vadd.f32 %v3238, %v5602
    %v5647 = vadd.f32 %v3239, %v5607
    %v5648 = vadd.f32 %v3240, %v5610
    %v5649 = vadd.f32 %v3241, %v5615
    %v5650 = vadd.f32 %v3242, %v5618
    %v5651 = vadd.f32 %v3243, %v5623
    %v5652 = vadd.f32 %v3244, %v5626
    %v5653 = vadd.f32 %v3245, %v5631
    %v5654 = vadd.f32 %v3246, %v5634
    %v5655 = vadd.f32 %v3247, %v5639
    %v5656 = vadd.f32 %v3248, %v5642
    %s5657 = scalar_lea.vmem %s19, 1
    %v5658 = vld [vmem:[%s5657] sm:$0x1]
    %v5660 = vlaneseq
    %v5661 = vshrl.u32 %v5660, 7
    %v5662 = vsub.s32 0, %v5661
    %v5663 = vrot.slane %v5658, %v5662
    %v5665 = vadd.f32 %v5645, %v5663
    %v5666 = vadd.f32 %v5646, %v5663
    %v5667 = vadd.f32 %v5647, %v5663
    %v5668 = vadd.f32 %v5648, %v5663
    %v5669 = vadd.f32 %v5649, %v5663
    %v5670 = vadd.f32 %v5650, %v5663
    %v5671 = vadd.f32 %v5651, %v5663
    %v5672 = vadd.f32 %v5652, %v5663
    %v5673 = vadd.f32 %v5653, %v5663
    %v5674 = vadd.f32 %v5654, %v5663
    %v5675 = vadd.f32 %v5655, %v5663
    %v5676 = vadd.f32 %v5656, %v5663
    %s5677 = scalar_lea.vmem %s21, 1
    %v5678 = vld [vmem:[%s5677] sm:$0x1]
    %s5679 = scalar_lea.vmem %s23, 1
    %v5680 = vld [vmem:[%s5679] sm:$0x1]
    %v5681 = vsel %vm271, %v5665, 0.0
    %5682 = vadd.xlane.f32.xlu0 %v5681
    %v5683 = vpop.xlane.xlu0 %5682
    %v5684 = vsel %vm271, %v5666, 0.0
    %5685 = vadd.xlane.f32.xlu0 %v5684
    %v5686 = vpop.xlane.xlu0 %5685
    %v5687 = vsel %vm271, %v5667, 0.0
    %5688 = vadd.xlane.f32.xlu0 %v5687
    %v5689 = vpop.xlane.xlu0 %5688
    %v5690 = vsel %vm271, %v5668, 0.0
    %5691 = vadd.xlane.f32.xlu0 %v5690
    %v5692 = vpop.xlane.xlu0 %5691
    %v5693 = vsel %vm271, %v5669, 0.0
    %5694 = vadd.xlane.f32.xlu0 %v5693
    %v5695 = vpop.xlane.xlu0 %5694
    %v5696 = vsel %vm271, %v5670, 0.0
    %5697 = vadd.xlane.f32.xlu0 %v5696
    %v5698 = vpop.xlane.xlu0 %5697
    %v5699 = vsel %vm271, %v5671, 0.0
    %5700 = vadd.xlane.f32.xlu0 %v5699
    %v5701 = vpop.xlane.xlu0 %5700
    %v5702 = vsel %vm271, %v5672, 0.0
    %5703 = vadd.xlane.f32.xlu0 %v5702
    %v5704 = vpop.xlane.xlu0 %5703
    %v5705 = vsel %vm271, %v5673, 0.0
    %5706 = vadd.xlane.f32.xlu0 %v5705
    %v5707 = vpop.xlane.xlu0 %5706
    %v5708 = vsel %vm271, %v5674, 0.0
    %5709 = vadd.xlane.f32.xlu0 %v5708
    %v5710 = vpop.xlane.xlu0 %5709
    %v5711 = vsel %vm271, %v5675, 0.0
    %5712 = vadd.xlane.f32.xlu0 %v5711
    %v5713 = vpop.xlane.xlu0 %5712
    %v5714 = vsel %vm271, %v5676, 0.0
    %5715 = vadd.xlane.f32.xlu0 %v5714
    %v5716 = vpop.xlane.xlu0 %5715
    %v5717 = vmul.f32 %v5683, %v299
    %v5718 = vmul.f32 %v5686, %v299
    %v5719 = vmul.f32 %v5689, %v299
    %v5720 = vmul.f32 %v5692, %v299
    %v5721 = vmul.f32 %v5695, %v299
    %v5722 = vmul.f32 %v5698, %v299
    %v5723 = vmul.f32 %v5701, %v299
    %v5724 = vmul.f32 %v5704, %v299
    %v5725 = vmul.f32 %v5707, %v299
    %v5726 = vmul.f32 %v5710, %v299
    %v5727 = vmul.f32 %v5713, %v299
    %v5728 = vmul.f32 %v5716, %v299
    %v5729 = vsub.f32 %v5665, %v5717
    %v5730 = vsub.f32 %v5666, %v5718
    %v5731 = vsub.f32 %v5667, %v5719
    %v5732 = vsub.f32 %v5668, %v5720
    %v5733 = vsub.f32 %v5669, %v5721
    %v5734 = vsub.f32 %v5670, %v5722
    %v5735 = vsub.f32 %v5671, %v5723
    %v5736 = vsub.f32 %v5672, %v5724
    %v5737 = vsub.f32 %v5673, %v5725
    %v5738 = vsub.f32 %v5674, %v5726
    %v5739 = vsub.f32 %v5675, %v5727
    %v5740 = vsub.f32 %v5676, %v5728
    %v5741 = vmul.f32 %v5729, %v5729
    %v5742 = vmul.f32 %v5730, %v5730
    %v5743 = vmul.f32 %v5731, %v5731
    %v5744 = vmul.f32 %v5732, %v5732
    %v5745 = vmul.f32 %v5733, %v5733
    %v5746 = vmul.f32 %v5734, %v5734
    %v5747 = vmul.f32 %v5735, %v5735
    %v5748 = vmul.f32 %v5736, %v5736
    %v5749 = vmul.f32 %v5737, %v5737
    %v5750 = vmul.f32 %v5738, %v5738
    %v5751 = vmul.f32 %v5739, %v5739
    %v5752 = vmul.f32 %v5740, %v5740
    %v5753 = vsel %vm271, %v5741, 0.0
    %5754 = vadd.xlane.f32.xlu0 %v5753
    %v5755 = vpop.xlane.xlu0 %5754
    %v5756 = vsel %vm271, %v5742, 0.0
    %5757 = vadd.xlane.f32.xlu0 %v5756
    %v5758 = vpop.xlane.xlu0 %5757
    %v5759 = vsel %vm271, %v5743, 0.0
    %5760 = vadd.xlane.f32.xlu0 %v5759
    %v5761 = vpop.xlane.xlu0 %5760
    %v5762 = vsel %vm271, %v5744, 0.0
    %5763 = vadd.xlane.f32.xlu0 %v5762
    %v5764 = vpop.xlane.xlu0 %5763
    %v5765 = vsel %vm271, %v5745, 0.0
    %5766 = vadd.xlane.f32.xlu0 %v5765
    %v5767 = vpop.xlane.xlu0 %5766
    %v5768 = vsel %vm271, %v5746, 0.0
    %5769 = vadd.xlane.f32.xlu0 %v5768
    %v5770 = vpop.xlane.xlu0 %5769
    %v5771 = vsel %vm271, %v5747, 0.0
    %5772 = vadd.xlane.f32.xlu0 %v5771
    %v5773 = vpop.xlane.xlu0 %5772
    %v5774 = vsel %vm271, %v5748, 0.0
    %5775 = vadd.xlane.f32.xlu0 %v5774
    %v5776 = vpop.xlane.xlu0 %5775
    %v5777 = vsel %vm271, %v5749, 0.0
    %5778 = vadd.xlane.f32.xlu0 %v5777
    %v5779 = vpop.xlane.xlu0 %5778
    %v5780 = vsel %vm271, %v5750, 0.0
    %5781 = vadd.xlane.f32.xlu0 %v5780
    %v5782 = vpop.xlane.xlu0 %5781
    %v5783 = vsel %vm271, %v5751, 0.0
    %5784 = vadd.xlane.f32.xlu0 %v5783
    %v5785 = vpop.xlane.xlu0 %5784
    %v5786 = vsel %vm271, %v5752, 0.0
    %5787 = vadd.xlane.f32.xlu0 %v5786
    %v5788 = vpop.xlane.xlu0 %5787
    %v5789 = vmul.f32 %v5755, %v299
    %v5790 = vmul.f32 %v5758, %v299
    %v5791 = vmul.f32 %v5761, %v299
    %v5792 = vmul.f32 %v5764, %v299
    %v5793 = vmul.f32 %v5767, %v299
    %v5794 = vmul.f32 %v5770, %v299
    %v5795 = vmul.f32 %v5773, %v299
    %v5796 = vmul.f32 %v5776, %v299
    %v5797 = vmul.f32 %v5779, %v299
    %v5798 = vmul.f32 %v5782, %v299
    %v5799 = vmul.f32 %v5785, %v299
    %v5800 = vmul.f32 %v5788, %v299
    %v5801 = vadd.f32 %v5789, 1e-12
    %v5802 = vadd.f32 %v5790, 1e-12
    %v5803 = vadd.f32 %v5791, 1e-12
    %v5804 = vadd.f32 %v5792, 1e-12
    %v5805 = vadd.f32 %v5793, 1e-12
    %v5806 = vadd.f32 %v5794, 1e-12
    %v5807 = vadd.f32 %v5795, 1e-12
    %v5808 = vadd.f32 %v5796, 1e-12
    %v5809 = vadd.f32 %v5797, 1e-12
    %v5810 = vadd.f32 %v5798, 1e-12
    %v5811 = vadd.f32 %v5799, 1e-12
    %v5812 = vadd.f32 %v5800, 1e-12
    %v5813 = vrsqrt.pop %v5801
    %v5814 = vrsqrt.pop %v5802
    %v5815 = vrsqrt.pop %v5803
    %v5816 = vrsqrt.pop %v5804
    %v5817 = vrsqrt.pop %v5805
    %v5818 = vrsqrt.pop %v5806
    %v5819 = vrsqrt.pop %v5807
    %v5820 = vrsqrt.pop %v5808
    %v5821 = vrsqrt.pop %v5809
    %v5822 = vrsqrt.pop %v5810
    %v5823 = vrsqrt.pop %v5811
    %v5824 = vrsqrt.pop %v5812
    %v5825 = vmul.f32 %v5729, %v5813
    %v5826 = vmul.f32 %v5730, %v5814
    %v5827 = vmul.f32 %v5731, %v5815
    %v5828 = vmul.f32 %v5732, %v5816
    %v5829 = vmul.f32 %v5733, %v5817
    %v5830 = vmul.f32 %v5734, %v5818
    %v5831 = vmul.f32 %v5735, %v5819
    %v5832 = vmul.f32 %v5736, %v5820
    %v5833 = vmul.f32 %v5737, %v5821
    %v5834 = vmul.f32 %v5738, %v5822
    %v5835 = vmul.f32 %v5739, %v5823
    %v5836 = vmul.f32 %v5740, %v5824
    %v5838 = vlaneseq
    %v5839 = vshrl.u32 %v5838, 7
    %v5840 = vsub.s32 0, %v5839
    %v5841 = vrot.slane %v5678, %v5840
    %v5843 = vmul.f32 %v5825, %v5841
    %v5844 = vmul.f32 %v5826, %v5841
    %v5845 = vmul.f32 %v5827, %v5841
    %v5846 = vmul.f32 %v5828, %v5841
    %v5847 = vmul.f32 %v5829, %v5841
    %v5848 = vmul.f32 %v5830, %v5841
    %v5849 = vmul.f32 %v5831, %v5841
    %v5850 = vmul.f32 %v5832, %v5841
    %v5851 = vmul.f32 %v5833, %v5841
    %v5852 = vmul.f32 %v5834, %v5841
    %v5853 = vmul.f32 %v5835, %v5841
    %v5854 = vmul.f32 %v5836, %v5841
    %v5856 = vlaneseq
    %v5857 = vshrl.u32 %v5856, 7
    %v5858 = vsub.s32 0, %v5857
    %v5859 = vrot.slane %v5680, %v5858
    %v5861 = vadd.f32 %v5843, %v5859
    %v5862 = vadd.f32 %v5844, %v5859
    %v5863 = vadd.f32 %v5845, %v5859
    %v5864 = vadd.f32 %v5846, %v5859
    %v5865 = vadd.f32 %v5847, %v5859
    %v5866 = vadd.f32 %v5848, %v5859
    %v5867 = vadd.f32 %v5849, %v5859
    %v5868 = vadd.f32 %v5850, %v5859
    %v5869 = vadd.f32 %v5851, %v5859
    %v5870 = vadd.f32 %v5852, %v5859
    %v5871 = vadd.f32 %v5853, %v5859
    %v5872 = vadd.f32 %v5854, %v5859
    %v5873 = vpack.c.bf16 %v5862, %v5861
    %v5874 = vpack.c.bf16 %v5864, %v5863
    %v5875 = vpack.c.bf16 %v5866, %v5865
    %v5876 = vpack.c.bf16 %v5868, %v5867
    %v5877 = vpack.c.bf16 %v5870, %v5869
    %v5878 = vpack.c.bf16 %v5872, %v5871
    %s5879 = scalar_lea.vmem %s25, 16
    %v5880 = vld [vmem:[%s5879] sm:$0xf]
    %v5881 = vld [vmem:[%s5879 + $0x4] sm:$0xf]
    %v5882 = vld [vmem:[%s5879 + $0x8] sm:$0xf]
    %v5883 = vld [vmem:[%s5879 + $0xc] sm:$0xf]
    %s5884 = scalar_lea.vmem %s27, 1
    %v5885 = vld [vmem:[%s5884] sm:$0x1]
    %v5887 = vlaneseq
    %v5888 = vshrl.u32 %v5887, 7
    %v5889 = vsub.s32 0, %v5888
    %v5890 = vrot.slane %v5885, %v5889
    %v5896 = vunpack.c.l.b16 %v5880
    %v5897 = vunpack.c.l.b16 %v5881
    %v5898 = vunpack.c.l.b16 %v5882
    %v5899 = vunpack.c.l.b16 %v5883
    %v5900 = vpack.c.b16 %v5897, %v5896
    %v5901 = vpack.c.b16 %v5899, %v5898
    %v5905 = vsel %vm271, %v5873, 0
    %v5908 = vsel %vm271, %v5874, 0
    %v5911 = vsel %vm271, %v5875, 0
    %v5914 = vsel %vm271, %v5876, 0
    %v5917 = vsel %vm271, %v5877, 0
    %v5920 = vsel %vm271, %v5878, 0
    %5922 = vmatprep.subr.bf16.mxu0 0
    %5923 = vmatpush1.bf16.msra.mxu0 %v5900
    %5924 = vmatprep.subr.bf16.mxu0 0
    %5925 = vmatpush1.bf16.msra.mxu0 %v5901
    %5926 = vmatprep.subr.bf16.mxu0 0
    %5927 = vmatpush1.bf16.msra.mxu0 0
    %5928 = vmatprep.subr.bf16.mxu0 0
    %5929 = vmatpush1.bf16.msra.mxu0 0
    %5930 = vmatprep.subr.bf16.mxu0 0
    %5931 = vmatpush1.bf16.msra.mxu0 0
    %5932 = vmatprep.subr.bf16.mxu0 0
    %5933 = vmatpush1.bf16.msra.mxu0 0
    %5934 = vmatprep.subr.bf16.mxu0 0
    %5935 = vmatpush1.bf16.msra.mxu0 0
    %5936 = vmatprep.subr.bf16.mxu0 0
    %5937 = vmatpush1.bf16.msra.mxu0 0
    %5938 = vmatprep.subr.bf16.mxu0 0
    %5939 = vmatpush1.bf16.msra.mxu0 0
    %5940 = vmatprep.subr.bf16.mxu0 0
    %5941 = vmatpush1.bf16.msra.mxu0 0
    %5942 = vmatprep.subr.bf16.mxu0 0
    %5943 = vmatpush1.bf16.msra.mxu0 0
    %5944 = vmatprep.subr.bf16.mxu0 0
    %5945 = vmatpush1.bf16.msra.mxu0 0
    %5946 = vmatprep.subr.bf16.mxu0 0
    %5947 = vmatpush1.bf16.msra.mxu0 0
    %5948 = vmatprep.subr.bf16.mxu0 0
    %5949 = vmatpush1.bf16.msra.mxu0 0
    %5950 = vmatprep.subr.bf16.mxu0 0
    %5951 = vmatpush1.bf16.msra.mxu0 0
    %5952 = vmatprep.subr.bf16.mxu0 0
    %5953 = vmatpush1.bf16.msra.mxu0 0
    %5954 = vmatprep.mubr.bf16.mxu0 0
    %5955 = vmatmul.mubr.bf16.gmra.mrb[0].mxu0 %v5905
    %v5956 = vpop.f32.mrb[0].mxu0
    %v5957 = vadd.f32 %v5890, %v5956
    %v5958 = vpop.f32.mrb[0].mxu0
    %v5959 = vpop.f32.mrb[0].mxu0
    %v5960 = vadd.f32 %v5890, %v5959
    %v5961 = vpop.f32.mrb[0].mxu0
    %5962 = vmatprep.mubr.bf16.mxu0 0
    %5963 = vmatmul.mubr.bf16.gmra.mrb[0].mxu0 %v5908
    %v5964 = vpop.f32.mrb[0].mxu0
    %v5965 = vadd.f32 %v5890, %v5964
    %v5966 = vpop.f32.mrb[0].mxu0
    %v5967 = vpop.f32.mrb[0].mxu0
    %v5968 = vadd.f32 %v5890, %v5967
    %v5969 = vpop.f32.mrb[0].mxu0
    %5970 = vmatprep.mubr.bf16.mxu0 0
    %5971 = vmatmul.mubr.bf16.gmra.mrb[0].mxu0 %v5911
    %v5972 = vpop.f32.mrb[0].mxu0
    %v5973 = vadd.f32 %v5890, %v5972
    %v5974 = vpop.f32.mrb[0].mxu0
    %v5975 = vpop.f32.mrb[0].mxu0
    %v5976 = vadd.f32 %v5890, %v5975
    %v5977 = vpop.f32.mrb[0].mxu0
    %5978 = vmatprep.mubr.bf16.mxu0 0
    %5979 = vmatmul.mubr.bf16.gmra.mrb[0].mxu0 %v5914
    %v5980 = vpop.f32.mrb[0].mxu0
    %v5981 = vadd.f32 %v5890, %v5980
    %v5982 = vpop.f32.mrb[0].mxu0
    %v5983 = vpop.f32.mrb[0].mxu0
    %v5984 = vadd.f32 %v5890, %v5983
    %v5985 = vpop.f32.mrb[0].mxu0
    %5986 = vmatprep.mubr.bf16.mxu0 0
    %5987 = vmatmul.mubr.bf16.gmra.mrb[0].mxu0 %v5917
    %v5988 = vpop.f32.mrb[0].mxu0
    %v5989 = vadd.f32 %v5890, %v5988
    %v5990 = vpop.f32.mrb[0].mxu0
    %v5991 = vpop.f32.mrb[0].mxu0
    %v5992 = vadd.f32 %v5890, %v5991
    %v5993 = vpop.f32.mrb[0].mxu0
    %5994 = vmatprep.mubr.bf16.mxu0 0
    %5995 = vmatmul.mubr.bf16.gmra.mrb[0].mxu0 %v5920
    %v5996 = vpop.f32.mrb[0].mxu0
    %v5997 = vadd.f32 %v5890, %v5996
    %v5998 = vpop.f32.mrb[0].mxu0
    %v5999 = vpop.f32.mrb[0].mxu0
    %v6000 = vadd.f32 %v5890, %v5999
    %v6001 = vpop.f32.mrb[0].mxu0
    %6002 = vdwg.mxu0
    %v6003 = vmul.f32 %v5957, %v5957
    %v6004 = vmul.f32 %v5960, %v5960
    %v6005 = vmul.f32 %v5965, %v5965
    %v6006 = vmul.f32 %v5968, %v5968
    %v6007 = vmul.f32 %v5973, %v5973
    %v6008 = vmul.f32 %v5976, %v5976
    %v6009 = vmul.f32 %v5981, %v5981
    %v6010 = vmul.f32 %v5984, %v5984
    %v6011 = vmul.f32 %v5989, %v5989
    %v6012 = vmul.f32 %v5992, %v5992
    %v6013 = vmul.f32 %v5997, %v5997
    %v6014 = vmul.f32 %v6000, %v6000
    %v6015 = vmul.f32 %v5957, %v6003
    %v6016 = vmul.f32 %v5960, %v6004
    %v6017 = vmul.f32 %v5965, %v6005
    %v6018 = vmul.f32 %v5968, %v6006
    %v6019 = vmul.f32 %v5973, %v6007
    %v6020 = vmul.f32 %v5976, %v6008
    %v6021 = vmul.f32 %v5981, %v6009
    %v6022 = vmul.f32 %v5984, %v6010
    %v6023 = vmul.f32 %v5989, %v6011
    %v6024 = vmul.f32 %v5992, %v6012
    %v6025 = vmul.f32 %v5997, %v6013
    %v6026 = vmul.f32 %v6000, %v6014
    %v6027 = vmul.f32 %v6015, 0.044715
    %v6028 = vmul.f32 %v6016, 0.044715
    %v6029 = vmul.f32 %v6017, 0.044715
    %v6030 = vmul.f32 %v6018, 0.044715
    %v6031 = vmul.f32 %v6019, 0.044715
    %v6032 = vmul.f32 %v6020, 0.044715
    %v6033 = vmul.f32 %v6021, 0.044715
    %v6034 = vmul.f32 %v6022, 0.044715
    %v6035 = vmul.f32 %v6023, 0.044715
    %v6036 = vmul.f32 %v6024, 0.044715
    %v6037 = vmul.f32 %v6025, 0.044715
    %v6038 = vmul.f32 %v6026, 0.044715
    %v6039 = vadd.f32 %v5957, %v6027
    %v6040 = vadd.f32 %v5960, %v6028
    %v6041 = vadd.f32 %v5965, %v6029
    %v6042 = vadd.f32 %v5968, %v6030
    %v6043 = vadd.f32 %v5973, %v6031
    %v6044 = vadd.f32 %v5976, %v6032
    %v6045 = vadd.f32 %v5981, %v6033
    %v6046 = vadd.f32 %v5984, %v6034
    %v6047 = vadd.f32 %v5989, %v6035
    %v6048 = vadd.f32 %v5992, %v6036
    %v6049 = vadd.f32 %v5997, %v6037
    %v6050 = vadd.f32 %v6000, %v6038
    %v6051 = vmul.f32 %v6039, 0.7978846
    %v6052 = vmul.f32 %v6040, 0.7978846
    %v6053 = vmul.f32 %v6041, 0.7978846
    %v6054 = vmul.f32 %v6042, 0.7978846
    %v6055 = vmul.f32 %v6043, 0.7978846
    %v6056 = vmul.f32 %v6044, 0.7978846
    %v6057 = vmul.f32 %v6045, 0.7978846
    %v6058 = vmul.f32 %v6046, 0.7978846
    %v6059 = vmul.f32 %v6047, 0.7978846
    %v6060 = vmul.f32 %v6048, 0.7978846
    %v6061 = vmul.f32 %v6049, 0.7978846
    %v6062 = vmul.f32 %v6050, 0.7978846
    %v6063 = vtanh.pop %v6051
    %v6064 = vtanh.pop %v6052
    %v6065 = vtanh.pop %v6053
    %v6066 = vtanh.pop %v6054
    %v6067 = vtanh.pop %v6055
    %v6068 = vtanh.pop %v6056
    %v6069 = vtanh.pop %v6057
    %v6070 = vtanh.pop %v6058
    %v6071 = vtanh.pop %v6059
    %v6072 = vtanh.pop %v6060
    %v6073 = vtanh.pop %v6061
    %v6074 = vtanh.pop %v6062
    %v6075 = vadd.f32 %v6063, 1.0
    %v6076 = vadd.f32 %v6064, 1.0
    %v6077 = vadd.f32 %v6065, 1.0
    %v6078 = vadd.f32 %v6066, 1.0
    %v6079 = vadd.f32 %v6067, 1.0
    %v6080 = vadd.f32 %v6068, 1.0
    %v6081 = vadd.f32 %v6069, 1.0
    %v6082 = vadd.f32 %v6070, 1.0
    %v6083 = vadd.f32 %v6071, 1.0
    %v6084 = vadd.f32 %v6072, 1.0
    %v6085 = vadd.f32 %v6073, 1.0
    %v6086 = vadd.f32 %v6074, 1.0
    %v6087 = vmul.f32 %v6075, 0.5
    %v6088 = vmul.f32 %v6076, 0.5
    %v6089 = vmul.f32 %v6077, 0.5
    %v6090 = vmul.f32 %v6078, 0.5
    %v6091 = vmul.f32 %v6079, 0.5
    %v6092 = vmul.f32 %v6080, 0.5
    %v6093 = vmul.f32 %v6081, 0.5
    %v6094 = vmul.f32 %v6082, 0.5
    %v6095 = vmul.f32 %v6083, 0.5
    %v6096 = vmul.f32 %v6084, 0.5
    %v6097 = vmul.f32 %v6085, 0.5
    %v6098 = vmul.f32 %v6086, 0.5
    %v6099 = vmul.f32 %v5957, %v6087
    %v6100 = vmul.f32 %v5960, %v6088
    %v6101 = vmul.f32 %v5965, %v6089
    %v6102 = vmul.f32 %v5968, %v6090
    %v6103 = vmul.f32 %v5973, %v6091
    %v6104 = vmul.f32 %v5976, %v6092
    %v6105 = vmul.f32 %v5981, %v6093
    %v6106 = vmul.f32 %v5984, %v6094
    %v6107 = vmul.f32 %v5989, %v6095
    %v6108 = vmul.f32 %v5992, %v6096
    %v6109 = vmul.f32 %v5997, %v6097
    %v6110 = vmul.f32 %v6000, %v6098
    %v6111 = vpack.c.bf16 %v6100, %v6099
    %v6112 = vpack.c.bf16 %v6102, %v6101
    %v6113 = vpack.c.bf16 %v6104, %v6103
    %v6114 = vpack.c.bf16 %v6106, %v6105
    %v6115 = vpack.c.bf16 %v6108, %v6107
    %v6116 = vpack.c.bf16 %v6110, %v6109
    %s6117 = scalar_lea.vmem %s29, 32
    %v6118 = vld [vmem:[%s6117] sm:$0xf]
    %v6119 = vld [vmem:[%s6117 + $0x4] sm:$0xf]
    %v6120 = vld [vmem:[%s6117 + $0x8] sm:$0xf]
    %v6121 = vld [vmem:[%s6117 + $0xc] sm:$0xf]
    %v6122 = vld [vmem:[%s6117 + $0x10] sm:$0xf]
    %v6123 = vld [vmem:[%s6117 + $0x14] sm:$0xf]
    %v6124 = vld [vmem:[%s6117 + $0x18] sm:$0xf]
    %v6125 = vld [vmem:[%s6117 + $0x1c] sm:$0xf]
    %v6134 = vunpack.c.l.b16 %v6118
    %v6135 = vunpack.c.l.b16 %v6119
    %v6136 = vunpack.c.l.b16 %v6120
    %v6137 = vunpack.c.l.b16 %v6121
    %v6138 = vunpack.c.l.b16 %v6122
    %v6139 = vunpack.c.l.b16 %v6123
    %v6140 = vunpack.c.l.b16 %v6124
    %v6141 = vunpack.c.l.b16 %v6125
    %v6142 = vpack.c.b16 %v6135, %v6134
    %v6143 = vpack.c.b16 %v6137, %v6136
    %v6144 = vpack.c.b16 %v6139, %v6138
    %v6145 = vpack.c.b16 %v6141, %v6140
    %v6151 = vsel %vm175, %v6111, 0
    %v6154 = vsel %vm175, %v6112, 0
    %v6157 = vsel %vm175, %v6113, 0
    %v6160 = vsel %vm175, %v6114, 0
    %v6163 = vsel %vm175, %v6115, 0
    %v6166 = vsel %vm175, %v6116, 0
    %6168 = vmatprep.subr.bf16.mxu0 0
    %6169 = vmatpush1.bf16.msra.mxu0 %v6142
    %6170 = vmatprep.subr.bf16.mxu0 0
    %6171 = vmatpush1.bf16.msra.mxu0 %v6143
    %6172 = vmatprep.subr.bf16.mxu0 0
    %6173 = vmatpush1.bf16.msra.mxu0 %v6144
    %6174 = vmatprep.subr.bf16.mxu0 0
    %6175 = vmatpush1.bf16.msra.mxu0 %v6145
    %6176 = vmatprep.subr.bf16.mxu0 0
    %6177 = vmatpush1.bf16.msra.mxu0 0
    %6178 = vmatprep.subr.bf16.mxu0 0
    %6179 = vmatpush1.bf16.msra.mxu0 0
    %6180 = vmatprep.subr.bf16.mxu0 0
    %6181 = vmatpush1.bf16.msra.mxu0 0
    %6182 = vmatprep.subr.bf16.mxu0 0
    %6183 = vmatpush1.bf16.msra.mxu0 0
    %6184 = vmatprep.subr.bf16.mxu0 0
    %6185 = vmatpush1.bf16.msra.mxu0 0
    %6186 = vmatprep.subr.bf16.mxu0 0
    %6187 = vmatpush1.bf16.msra.mxu0 0
    %6188 = vmatprep.subr.bf16.mxu0 0
    %6189 = vmatpush1.bf16.msra.mxu0 0
    %6190 = vmatprep.subr.bf16.mxu0 0
    %6191 = vmatpush1.bf16.msra.mxu0 0
    %6192 = vmatprep.subr.bf16.mxu0 0
    %6193 = vmatpush1.bf16.msra.mxu0 0
    %6194 = vmatprep.subr.bf16.mxu0 0
    %6195 = vmatpush1.bf16.msra.mxu0 0
    %6196 = vmatprep.subr.bf16.mxu0 0
    %6197 = vmatpush1.bf16.msra.mxu0 0
    %6198 = vmatprep.subr.bf16.mxu0 0
    %6199 = vmatpush1.bf16.msra.mxu0 0
    %6200 = vmatprep.mubr.bf16.mxu0 0
    %6201 = vmatmul.mubr.bf16.gmra.mrb[0].mxu0 %v6151
    %v6202 = vpop.f32.mrb[0].mxu0
    %v6203 = vpop.f32.mrb[0].mxu0
    %v6204 = vpop.f32.mrb[0].mxu0
    %v6205 = vpop.f32.mrb[0].mxu0
    %6206 = vmatprep.mubr.bf16.mxu0 0
    %6207 = vmatmul.mubr.bf16.gmra.mrb[0].mxu0 %v6154
    %v6208 = vpop.f32.mrb[0].mxu0
    %v6209 = vadd.f32 0.0, %v6208
    %v6210 = vpop.f32.mrb[0].mxu0
    %v6211 = vpop.f32.mrb[0].mxu0
    %v6212 = vpop.f32.mrb[0].mxu0
    %6213 = vmatprep.mubr.bf16.mxu0 0
    %6214 = vmatmul.mubr.bf16.gmra.mrb[0].mxu0 %v6157
    %v6215 = vpop.f32.mrb[0].mxu0
    %v6216 = vpop.f32.mrb[0].mxu0
    %v6217 = vpop.f32.mrb[0].mxu0
    %v6218 = vadd.f32 0.0, %v6217
    %v6219 = vpop.f32.mrb[0].mxu0
    %6220 = vmatprep.mubr.bf16.mxu0 0
    %6221 = vmatmul.mubr.bf16.gmra.mrb[0].mxu0 %v6160
    %v6222 = vpop.f32.mrb[0].mxu0
    %v6223 = vpop.f32.mrb[0].mxu0
    %v6224 = vpop.f32.mrb[0].mxu0
    %v6225 = vpop.f32.mrb[0].mxu0
    %6226 = vmatprep.mubr.bf16.mxu0 0
    %6227 = vmatmul.mubr.bf16.gmra.mrb[0].mxu0 %v6163
    %v6228 = vpop.f32.mrb[0].mxu0
    %v6229 = vadd.f32 0.0, %v6228
    %v6230 = vpop.f32.mrb[0].mxu0
    %v6231 = vpop.f32.mrb[0].mxu0
    %v6232 = vpop.f32.mrb[0].mxu0
    %6233 = vmatprep.mubr.bf16.mxu0 0
    %6234 = vmatmul.mubr.bf16.gmra.mrb[0].mxu0 %v6166
    %v6235 = vpop.f32.mrb[0].mxu0
    %v6236 = vpop.f32.mrb[0].mxu0
    %v6237 = vpop.f32.mrb[0].mxu0
    %v6238 = vadd.f32 0.0, %v6237
    %v6239 = vpop.f32.mrb[0].mxu0
    %6240 = vdwg.mxu0
    %v6241 = vadd.f32 %v5667, %v6209
    %v6242 = vadd.f32 %v5670, %v6218
    %v6243 = vadd.f32 %v5673, %v6229
    %v6244 = vadd.f32 %v5676, %v6238
    %s6245 = scalar_lea.vmem %s31, 1
    %v6246 = vld [vmem:[%s6245] sm:$0x1]
    %v6248 = vlaneseq
    %v6249 = vshrl.u32 %v6248, 7
    %v6250 = vsub.s32 0, %v6249
    %v6251 = vrot.slane %v6246, %v6250
    %v6253 = vadd.f32 %v6241, %v6251
    %v6254 = vadd.f32 %v6242, %v6251
    %v6255 = vadd.f32 %v6243, %v6251
    %v6256 = vadd.f32 %v6244, %v6251
    %v6257 = vld [vmem:[%s33] sm:$0x1]
    %v6258 = vld [vmem:[%s35] sm:$0x1]
    %v6263 = vrot.slane %v6254, 7
    %vm6264 = vcmask 1041409
    %v6265 = vsel %vm6264, %v6263, %v6253
    %v6266 = vrot.slane %v6255, 6
    %vm6267 = vcmask 1042434
    %v6268 = vsel %vm6267, %v6266, %v6265
    %v6269 = vrot.slane %v6256, 5
    %vm6270 = vcmask 1043459
    %v6271 = vsel %vm6270, %v6269, %v6268
    %vm6273 = vcmask 257024
    %v6274 = vsel %vm6273, %v6271, 0.0
    %6275 = vadd.xlane.f32.xlu0 %v6274
    %v6276 = vpop.xlane.xlu0 %6275
    %v6277 = vmul.f32 %v6276, %v299
    %v6279 = vrot.slane %v6277, 1
    %v6280 = vrot.slane %v6277, 2
    %v6281 = vrot.slane %v6277, 3
    %v6286 = vsub.f32 %v6253, %v6277
    %v6287 = vsub.f32 %v6254, %v6279
    %v6288 = vsub.f32 %v6255, %v6280
    %v6289 = vsub.f32 %v6256, %v6281
    %v6290 = vmul.f32 %v6286, %v6286
    %v6291 = vmul.f32 %v6287, %v6287
    %v6292 = vmul.f32 %v6288, %v6288
    %v6293 = vmul.f32 %v6289, %v6289
    %v6298 = vrot.slane %v6291, 7
    %v6299 = vsel %vm6264, %v6298, %v6290
    %v6300 = vrot.slane %v6292, 6
    %v6301 = vsel %vm6267, %v6300, %v6299
    %v6302 = vrot.slane %v6293, 5
    %v6303 = vsel %vm6270, %v6302, %v6301
    %v6305 = vsel %vm6273, %v6303, 0.0
    %6306 = vadd.xlane.f32.xlu0 %v6305
    %v6307 = vpop.xlane.xlu0 %6306
    %v6308 = vmul.f32 %v6307, %v299
    %v6309 = vadd.f32 %v6308, 1e-12
    %v6310 = vrsqrt.pop %v6309
    %v6312 = vrot.slane %v6310, 1
    %v6313 = vrot.slane %v6310, 2
    %v6314 = vrot.slane %v6310, 3
    %v6319 = vmul.f32 %v6286, %v6310
    %v6320 = vmul.f32 %v6287, %v6312
    %v6321 = vmul.f32 %v6288, %v6313
    %v6322 = vmul.f32 %v6289, %v6314
    %v6324 = vlaneseq
    %v6325 = vshrl.u32 %v6324, 7
    %v6326 = vsub.s32 0, %v6325
    %v6327 = vrot.slane %v6257, %v6326
    %v6329 = vmul.f32 %v6319, %v6327
    %v6330 = vmul.f32 %v6320, %v6327
    %v6331 = vmul.f32 %v6321, %v6327
    %v6332 = vmul.f32 %v6322, %v6327
    %v6334 = vlaneseq
    %v6335 = vshrl.u32 %v6334, 7
    %v6336 = vsub.s32 0, %v6335
    %v6337 = vrot.slane %v6258, %v6336
    %v6339 = vadd.f32 %v6329, %v6337
    %v6340 = vadd.f32 %v6330, %v6337
    %v6341 = vadd.f32 %v6331, %v6337
    %v6342 = vadd.f32 %v6332, %v6337
    %v6343 = vpack.c.bf16 %v6339, %v6339
    %v6344 = vpack.c.bf16 %v6340, %v6340
    %v6345 = vpack.c.bf16 %v6341, %v6341
    %v6346 = vpack.c.bf16 %v6342, %v6342
    %v6347 = vld [vmem:[%s37] sm:$0xf]
    %v6348 = vld [vmem:[%s37 + $0x4] sm:$0xf]
    %v6349 = vld [vmem:[%s37 + $0x8] sm:$0xf]
    %v6350 = vld [vmem:[%s37 + $0xc] sm:$0xf]
    %v6351 = vld [vmem:[%s39] sm:$0x1]
    %v6353 = vlaneseq
    %v6354 = vshrl.u32 %v6353, 7
    %v6355 = vsub.s32 0, %v6354
    %v6356 = vrot.slane %v6351, %v6355
    %v6362 = vunpack.c.l.b16 %v6343
    %v6363 = vunpack.c.l.b16 %v6344
    %v6364 = vunpack.c.l.b16 %v6345
    %v6365 = vunpack.c.l.b16 %v6346
    %v6366 = vrot.slane %v6363, 7
    %v6367 = vsel %vm6264, %v6366, %v6362
    %v6368 = vrot.slane %v6364, 6
    %v6369 = vsel %vm6267, %v6368, %v6367
    %v6370 = vrot.slane %v6365, 5
    %v6371 = vsel %vm6270, %v6370, %v6369
    %v6372 = vpack.c.b16 %v6371, %v6371
    %v6377 = vunpack.c.l.b16 %v6347
    %v6378 = vunpack.c.l.b16 %v6348
    %v6379 = vunpack.c.l.b16 %v6349
    %v6380 = vunpack.c.l.b16 %v6350
    %v6381 = vpack.c.b16 %v6378, %v6377
    %v6382 = vpack.c.b16 %v6380, %v6379
    %v6386 = vsel %vm271, %v6372, 0
    %6388 = vmatprep.subr.bf16.mxu0 0
    %6389 = vmatpush1.bf16.msra.mxu0 %v6381
    %6390 = vmatprep.subr.bf16.mxu0 0
    %6391 = vmatpush1.bf16.msra.mxu0 %v6382
    %6392 = vmatprep.subr.bf16.mxu0 0
    %6393 = vmatpush1.bf16.msra.mxu0 0
    %6394 = vmatprep.subr.bf16.mxu0 0
    %6395 = vmatpush1.bf16.msra.mxu0 0
    %6396 = vmatprep.subr.bf16.mxu0 0
    %6397 = vmatpush1.bf16.msra.mxu0 0
    %6398 = vmatprep.subr.bf16.mxu0 0
    %6399 = vmatpush1.bf16.msra.mxu0 0
    %6400 = vmatprep.subr.bf16.mxu0 0
    %6401 = vmatpush1.bf16.msra.mxu0 0
    %6402 = vmatprep.subr.bf16.mxu0 0
    %6403 = vmatpush1.bf16.msra.mxu0 0
    %6404 = vmatprep.subr.bf16.mxu0 0
    %6405 = vmatpush1.bf16.msra.mxu0 0
    %6406 = vmatprep.subr.bf16.mxu0 0
    %6407 = vmatpush1.bf16.msra.mxu0 0
    %6408 = vmatprep.subr.bf16.mxu0 0
    %6409 = vmatpush1.bf16.msra.mxu0 0
    %6410 = vmatprep.subr.bf16.mxu0 0
    %6411 = vmatpush1.bf16.msra.mxu0 0
    %6412 = vmatprep.subr.bf16.mxu0 0
    %6413 = vmatpush1.bf16.msra.mxu0 0
    %6414 = vmatprep.subr.bf16.mxu0 0
    %6415 = vmatpush1.bf16.msra.mxu0 0
    %6416 = vmatprep.subr.bf16.mxu0 0
    %6417 = vmatpush1.bf16.msra.mxu0 0
    %6418 = vmatprep.subr.bf16.mxu0 0
    %6419 = vmatpush1.bf16.msra.mxu0 0
    %6420 = vmatprep.mubr.bf16.mxu0 0
    %6421 = vmatmul.mubr.bf16.gmra.mrb[0].mxu0 %v6386
    %v6422 = vpop.f32.mrb[0].mxu0
    %v6423 = vadd.f32 %v6356, %v6422
    %v6424 = vpop.f32.mrb[0].mxu0
    %v6425 = vpop.f32.mrb[0].mxu0
    %v6426 = vpop.f32.mrb[0].mxu0
    %6427 = vdwg.mxu0
    %v6428 = vtanh.pop %v6423
    %v6429 = vpack.c.bf16 %v6428, %v6428
    %v6430 = vld [vmem:[%s41] sm:$0xff]
    %v6431 = vld [vmem:[%s41 + $0x8] sm:$0xff]
    %v6432 = vld [vmem:[%s41 + $0x10] sm:$0xff]
    %v6433 = vld [vmem:[%s41 + $0x18] sm:$0xff]
    %v6434 = vld [vmem:[%s41 + $0x20] sm:$0xff]
    %v6435 = vld [vmem:[%s41 + $0x28] sm:$0xff]
    %v6436 = vld [vmem:[%s41 + $0x30] sm:$0xff]
    %v6437 = vld [vmem:[%s41 + $0x38] sm:$0xff]
    %v6438 = vld [vmem:[%s41 + $0x40] sm:$0xff]
    %v6439 = vld [vmem:[%s41 + $0x48] sm:$0xff]
    %v6440 = vld [vmem:[%s41 + $0x50] sm:$0xff]
    %v6441 = vld [vmem:[%s41 + $0x58] sm:$0xff]
    %v6442 = vld [vmem:[%s41 + $0x60] sm:$0xff]
    %v6443 = vld [vmem:[%s41 + $0x68] sm:$0xff]
    %v6444 = vld [vmem:[%s41 + $0x70] sm:$0xff]
    %v6445 = vld [vmem:[%s41 + $0x78] sm:$0xff]
    %v6446 = vld [vmem:[%s43] sm:$0xff]
    %v6448 = vlaneseq
    %v6449 = vshrl.u32 %v6448, 7
    %v6450 = vsub.s32 0, %v6449
    %v6451 = vrot.slane %v6446, %v6450
    %v6452 = vlaneseq
    %v6453 = vshrl.u32 %v6452, 7
    %v6454 = vsub.s32 1, %v6453
    %v6455 = vrot.slane %v6446, %v6454
    %v6456 = vlaneseq
    %v6457 = vshrl.u32 %v6456, 7
    %v6458 = vsub.s32 2, %v6457
    %v6459 = vrot.slane %v6446, %v6458
    %v6460 = vlaneseq
    %v6461 = vshrl.u32 %v6460, 7
    %v6462 = vsub.s32 3, %v6461
    %v6463 = vrot.slane %v6446, %v6462
    %v6464 = vlaneseq
    %v6465 = vshrl.u32 %v6464, 7
    %v6466 = vsub.s32 4, %v6465
    %v6467 = vrot.slane %v6446, %v6466
    %v6468 = vlaneseq
    %v6469 = vshrl.u32 %v6468, 7
    %v6470 = vsub.s32 5, %v6469
    %v6471 = vrot.slane %v6446, %v6470
    %v6472 = vlaneseq
    %v6473 = vshrl.u32 %v6472, 7
    %v6474 = vsub.s32 6, %v6473
    %v6475 = vrot.slane %v6446, %v6474
    %v6476 = vlaneseq
    %v6477 = vshrl.u32 %v6476, 7
    %v6478 = vsub.s32 7, %v6477
    %v6479 = vrot.slane %v6446, %v6478
    %v6504 = vunpack.c.l.b16 %v6430
    %v6505 = vunpack.c.h.b16 %v6430
    %v6506 = vunpack.c.l.b16 %v6431
    %v6507 = vunpack.c.h.b16 %v6431
    %v6508 = vunpack.c.l.b16 %v6432
    %v6509 = vunpack.c.h.b16 %v6432
    %v6510 = vunpack.c.l.b16 %v6433
    %v6511 = vunpack.c.h.b16 %v6433
    %v6512 = vunpack.c.l.b16 %v6434
    %v6513 = vunpack.c.h.b16 %v6434
    %v6514 = vunpack.c.l.b16 %v6435
    %v6515 = vunpack.c.h.b16 %v6435
    %v6516 = vunpack.c.l.b16 %v6436
    %v6517 = vunpack.c.h.b16 %v6436
    %v6518 = vunpack.c.l.b16 %v6437
    %v6519 = vunpack.c.h.b16 %v6437
    %v6520 = vunpack.c.l.b16 %v6438
    %v6521 = vunpack.c.h.b16 %v6438
    %v6522 = vunpack.c.l.b16 %v6439
    %v6523 = vunpack.c.h.b16 %v6439
    %v6524 = vunpack.c.l.b16 %v6440
    %v6525 = vunpack.c.h.b16 %v6440
    %v6526 = vunpack.c.l.b16 %v6441
    %v6527 = vunpack.c.h.b16 %v6441
    %v6528 = vunpack.c.l.b16 %v6442
    %v6529 = vunpack.c.h.b16 %v6442
    %v6530 = vunpack.c.l.b16 %v6443
    %v6531 = vunpack.c.h.b16 %v6443
    %v6532 = vunpack.c.l.b16 %v6444
    %v6533 = vunpack.c.h.b16 %v6444
    %v6534 = vunpack.c.l.b16 %v6445
    %v6535 = vunpack.c.h.b16 %v6445
    %v6536 = vpack.c.b16 %v6512, %v6504
    %v6537 = vpack.c.b16 %v6513, %v6505
    %v6538 = vpack.c.b16 %v6514, %v6506
    %v6539 = vpack.c.b16 %v6515, %v6507
    %v6540 = vpack.c.b16 %v6516, %v6508
    %v6541 = vpack.c.b16 %v6517, %v6509
    %v6542 = vpack.c.b16 %v6518, %v6510
    %v6543 = vpack.c.b16 %v6519, %v6511
    %v6544 = vpack.c.b16 %v6528, %v6520
    %v6545 = vpack.c.b16 %v6529, %v6521
    %v6546 = vpack.c.b16 %v6530, %v6522
    %v6547 = vpack.c.b16 %v6531, %v6523
    %v6548 = vpack.c.b16 %v6532, %v6524
    %v6549 = vpack.c.b16 %v6533, %v6525
    %v6550 = vpack.c.b16 %v6534, %v6526
    %v6551 = vpack.c.b16 %v6535, %v6527
    %v6569 = vsel %vm271, %v6429, 0
    %6571 = vmatprep.subr.bf16.mxu0 %v6537
    %6572 = vmatpush1.bf16.msra.mxu0 %v6536
    %6573 = vmatprep.subr.bf16.mxu0 %v6545
    %6574 = vmatpush1.bf16.msra.mxu0 %v6544
    %6575 = vmatprep.subr.bf16.mxu0 0
    %6576 = vmatpush1.bf16.msra.mxu0 0
    %6577 = vmatprep.subr.bf16.mxu0 0
    %6578 = vmatpush1.bf16.msra.mxu0 0
    %6579 = vmatprep.subr.bf16.mxu0 0
    %6580 = vmatpush1.bf16.msra.mxu0 0
    %6581 = vmatprep.subr.bf16.mxu0 0
    %6582 = vmatpush1.bf16.msra.mxu0 0
    %6583 = vmatprep.subr.bf16.mxu0 0
    %6584 = vmatpush1.bf16.msra.mxu0 0
    %6585 = vmatprep.subr.bf16.mxu0 0
    %6586 = vmatpush1.bf16.msra.mxu0 0
    %6587 = vmatprep.subr.bf16.mxu0 0
    %6588 = vmatpush1.bf16.msra.mxu0 0
    %6589 = vmatprep.subr.bf16.mxu0 0
    %6590 = vmatpush1.bf16.msra.mxu0 0
    %6591 = vmatprep.subr.bf16.mxu0 0
    %6592 = vmatpush1.bf16.msra.mxu0 0
    %6593 = vmatprep.subr.bf16.mxu0 0
    %6594 = vmatpush1.bf16.msra.mxu0 0
    %6595 = vmatprep.subr.bf16.mxu0 0
    %6596 = vmatpush1.bf16.msra.mxu0 0
    %6597 = vmatprep.subr.bf16.mxu0 0
    %6598 = vmatpush1.bf16.msra.mxu0 0
    %6599 = vmatprep.subr.bf16.mxu0 0
    %6600 = vmatpush1.bf16.msra.mxu0 0
    %6601 = vmatprep.subr.bf16.mxu0 0
    %6602 = vmatpush1.bf16.msra.mxu0 0
    %6603 = vmatprep.mubr.bf16.mxu0 0
    %6604 = vmatmul.mubr.bf16.gmra.mrb[0].mxu0 %v6569
    %v6605 = vpop.f32.mrb[0].mxu0
    %v6606 = vadd.f32 %v6451, %v6605
    %v6607 = vpop.f32.mrb[0].mxu0
    %v6608 = vadd.f32 %v6455, %v6607
    %v6609 = vpop.f32.mrb[0].mxu0
    %v6610 = vpop.f32.mrb[0].mxu0
    %6611 = vdwg.mxu0
    %6612 = vmatprep.subr.bf16.mxu0 %v6539
    %6613 = vmatpush1.bf16.msra.mxu0 %v6538
    %6614 = vmatprep.subr.bf16.mxu0 %v6547
    %6615 = vmatpush1.bf16.msra.mxu0 %v6546
    %6616 = vmatprep.subr.bf16.mxu0 0
    %6617 = vmatpush1.bf16.msra.mxu0 0
    %6618 = vmatprep.subr.bf16.mxu0 0
    %6619 = vmatpush1.bf16.msra.mxu0 0
    %6620 = vmatprep.subr.bf16.mxu0 0
    %6621 = vmatpush1.bf16.msra.mxu0 0
    %6622 = vmatprep.subr.bf16.mxu0 0
    %6623 = vmatpush1.bf16.msra.mxu0 0
    %6624 = vmatprep.subr.bf16.mxu0 0
    %6625 = vmatpush1.bf16.msra.mxu0 0
    %6626 = vmatprep.subr.bf16.mxu0 0
    %6627 = vmatpush1.bf16.msra.mxu0 0
    %6628 = vmatprep.subr.bf16.mxu0 0
    %6629 = vmatpush1.bf16.msra.mxu0 0
    %6630 = vmatprep.subr.bf16.mxu0 0
    %6631 = vmatpush1.bf16.msra.mxu0 0
    %6632 = vmatprep.subr.bf16.mxu0 0
    %6633 = vmatpush1.bf16.msra.mxu0 0
    %6634 = vmatprep.subr.bf16.mxu0 0
    %6635 = vmatpush1.bf16.msra.mxu0 0
    %6636 = vmatprep.subr.bf16.mxu0 0
    %6637 = vmatpush1.bf16.msra.mxu0 0
    %6638 = vmatprep.subr.bf16.mxu0 0
    %6639 = vmatpush1.bf16.msra.mxu0 0
    %6640 = vmatprep.subr.bf16.mxu0 0
    %6641 = vmatpush1.bf16.msra.mxu0 0
    %6642 = vmatprep.subr.bf16.mxu0 0
    %6643 = vmatpush1.bf16.msra.mxu0 0
    %6644 = vmatprep.mubr.bf16.mxu0 0
    %6645 = vmatmul.mubr.bf16.gmra.mrb[0].mxu0 %v6569
    %v6646 = vpop.f32.mrb[0].mxu0
    %v6647 = vadd.f32 %v6459, %v6646
    %v6648 = vpop.f32.mrb[0].mxu0
    %v6649 = vadd.f32 %v6463, %v6648
    %v6650 = vpop.f32.mrb[0].mxu0
    %v6651 = vpop.f32.mrb[0].mxu0
    %6652 = vdwg.mxu0
    %6653 = vmatprep.subr.bf16.mxu0 %v6541
    %6654 = vmatpush1.bf16.msra.mxu0 %v6540
    %6655 = vmatprep.subr.bf16.mxu0 %v6549
    %6656 = vmatpush1.bf16.msra.mxu0 %v6548
    %6657 = vmatprep.subr.bf16.mxu0 0
    %6658 = vmatpush1.bf16.msra.mxu0 0
    %6659 = vmatprep.subr.bf16.mxu0 0
    %6660 = vmatpush1.bf16.msra.mxu0 0
    %6661 = vmatprep.subr.bf16.mxu0 0
    %6662 = vmatpush1.bf16.msra.mxu0 0
    %6663 = vmatprep.subr.bf16.mxu0 0
    %6664 = vmatpush1.bf16.msra.mxu0 0
    %6665 = vmatprep.subr.bf16.mxu0 0
    %6666 = vmatpush1.bf16.msra.mxu0 0
    %6667 = vmatprep.subr.bf16.mxu0 0
    %6668 = vmatpush1.bf16.msra.mxu0 0
    %6669 = vmatprep.subr.bf16.mxu0 0
    %6670 = vmatpush1.bf16.msra.mxu0 0
    %6671 = vmatprep.subr.bf16.mxu0 0
    %6672 = vmatpush1.bf16.msra.mxu0 0
    %6673 = vmatprep.subr.bf16.mxu0 0
    %6674 = vmatpush1.bf16.msra.mxu0 0
    %6675 = vmatprep.subr.bf16.mxu0 0
    %6676 = vmatpush1.bf16.msra.mxu0 0
    %6677 = vmatprep.subr.bf16.mxu0 0
    %6678 = vmatpush1.bf16.msra.mxu0 0
    %6679 = vmatprep.subr.bf16.mxu0 0
    %6680 = vmatpush1.bf16.msra.mxu0 0
    %6681 = vmatprep.subr.bf16.mxu0 0
    %6682 = vmatpush1.bf16.msra.mxu0 0
    %6683 = vmatprep.subr.bf16.mxu0 0
    %6684 = vmatpush1.bf16.msra.mxu0 0
    %6685 = vmatprep.mubr.bf16.mxu0 0
    %6686 = vmatmul.mubr.bf16.gmra.mrb[0].mxu0 %v6569
    %v6687 = vpop.f32.mrb[0].mxu0
    %v6688 = vadd.f32 %v6467, %v6687
    %v6689 = vpop.f32.mrb[0].mxu0
    %v6690 = vadd.f32 %v6471, %v6689
    %v6691 = vpop.f32.mrb[0].mxu0
    %v6692 = vpop.f32.mrb[0].mxu0
    %6693 = vdwg.mxu0
    %6694 = vmatprep.subr.bf16.mxu0 %v6543
    %6695 = vmatpush1.bf16.msra.mxu0 %v6542
    %6696 = vmatprep.subr.bf16.mxu0 %v6551
    %6697 = vmatpush1.bf16.msra.mxu0 %v6550
    %6698 = vmatprep.subr.bf16.mxu0 0
    %6699 = vmatpush1.bf16.msra.mxu0 0
    %6700 = vmatprep.subr.bf16.mxu0 0
    %6701 = vmatpush1.bf16.msra.mxu0 0
    %6702 = vmatprep.subr.bf16.mxu0 0
    %6703 = vmatpush1.bf16.msra.mxu0 0
    %6704 = vmatprep.subr.bf16.mxu0 0
    %6705 = vmatpush1.bf16.msra.mxu0 0
    %6706 = vmatprep.subr.bf16.mxu0 0
    %6707 = vmatpush1.bf16.msra.mxu0 0
    %6708 = vmatprep.subr.bf16.mxu0 0
    %6709 = vmatpush1.bf16.msra.mxu0 0
    %6710 = vmatprep.subr.bf16.mxu0 0
    %6711 = vmatpush1.bf16.msra.mxu0 0
    %6712 = vmatprep.subr.bf16.mxu0 0
    %6713 = vmatpush1.bf16.msra.mxu0 0
    %6714 = vmatprep.subr.bf16.mxu0 0
    %6715 = vmatpush1.bf16.msra.mxu0 0
    %6716 = vmatprep.subr.bf16.mxu0 0
    %6717 = vmatpush1.bf16.msra.mxu0 0
    %6718 = vmatprep.subr.bf16.mxu0 0
    %6719 = vmatpush1.bf16.msra.mxu0 0
    %6720 = vmatprep.subr.bf16.mxu0 0
    %6721 = vmatpush1.bf16.msra.mxu0 0
    %6722 = vmatprep.subr.bf16.mxu0 0
    %6723 = vmatpush1.bf16.msra.mxu0 0
    %6724 = vmatprep.subr.bf16.mxu0 0
    %6725 = vmatpush1.bf16.msra.mxu0 0
    %6726 = vmatprep.mubr.bf16.mxu0 0
    %6727 = vmatmul.mubr.bf16.gmra.mrb[0].mxu0 %v6569
    %v6728 = vpop.f32.mrb[0].mxu0
    %v6729 = vadd.f32 %v6475, %v6728
    %v6730 = vpop.f32.mrb[0].mxu0
    %v6731 = vadd.f32 %v6479, %v6730
    %v6732 = vpop.f32.mrb[0].mxu0
    %v6733 = vpop.f32.mrb[0].mxu0
    %6734 = vdwg.mxu0
    %v6735 = vmax.f32 %v6606, 0.0
    %v6736 = vmax.f32 %v6608, 0.0
    %v6737 = vmax.f32 %v6647, 0.0
    %v6738 = vmax.f32 %v6649, 0.0
    %v6739 = vmax.f32 %v6688, 0.0
    %v6740 = vmax.f32 %v6690, 0.0
    %v6741 = vmax.f32 %v6729, 0.0
    %v6742 = vmax.f32 %v6731, 0.0
    %v6743 = vpack.c.bf16 %v6735, %v6735
    %v6744 = vpack.c.bf16 %v6736, %v6736
    %v6745 = vpack.c.bf16 %v6737, %v6737
    %v6746 = vpack.c.bf16 %v6738, %v6738
    %v6747 = vpack.c.bf16 %v6739, %v6739
    %v6748 = vpack.c.bf16 %v6740, %v6740
    %v6749 = vpack.c.bf16 %v6741, %v6741
    %v6750 = vpack.c.bf16 %v6742, %v6742
    %v6751 = vld [vmem:[%s45] sm:$0xff]
    %v6752 = vld [vmem:[%s45 + $0x8] sm:$0xff]
    %v6753 = vld [vmem:[%s45 + $0x10] sm:$0xff]
    %v6754 = vld [vmem:[%s45 + $0x18] sm:$0xff]
    %v6755 = vld [vmem:[%s45 + $0x20] sm:$0xff]
    %v6756 = vld [vmem:[%s45 + $0x28] sm:$0xff]
    %v6757 = vld [vmem:[%s45 + $0x30] sm:$0xff]
    %v6758 = vld [vmem:[%s45 + $0x38] sm:$0xff]
    %v6759 = vld [vmem:[%s45 + $0x40] sm:$0xff]
    %v6760 = vld [vmem:[%s45 + $0x48] sm:$0xff]
    %v6761 = vld [vmem:[%s45 + $0x50] sm:$0xff]
    %v6762 = vld [vmem:[%s45 + $0x58] sm:$0xff]
    %v6763 = vld [vmem:[%s45 + $0x60] sm:$0xff]
    %v6764 = vld [vmem:[%s45 + $0x68] sm:$0xff]
    %v6765 = vld [vmem:[%s45 + $0x70] sm:$0xff]
    %v6766 = vld [vmem:[%s45 + $0x78] sm:$0xff]
    %v6767 = vld [vmem:[%s45 + $0x80] sm:$0xff]
    %v6768 = vld [vmem:[%s45 + $0x88] sm:$0xff]
    %v6769 = vld [vmem:[%s45 + $0x90] sm:$0xff]
    %v6770 = vld [vmem:[%s45 + $0x98] sm:$0xff]
    %v6771 = vld [vmem:[%s45 + $0xa0] sm:$0xff]
    %v6772 = vld [vmem:[%s45 + $0xa8] sm:$0xff]
    %v6773 = vld [vmem:[%s45 + $0xb0] sm:$0xff]
    %v6774 = vld [vmem:[%s45 + $0xb8] sm:$0xff]
    %v6775 = vld [vmem:[%s45 + $0xc0] sm:$0xff]
    %v6776 = vld [vmem:[%s45 + $0xc8] sm:$0xff]
    %v6777 = vld [vmem:[%s45 + $0xd0] sm:$0xff]
    %v6778 = vld [vmem:[%s45 + $0xd8] sm:$0xff]
    %v6779 = vld [vmem:[%s45 + $0xe0] sm:$0xff]
    %v6780 = vld [vmem:[%s45 + $0xe8] sm:$0xff]
    %v6781 = vld [vmem:[%s45 + $0xf0] sm:$0xff]
    %v6782 = vld [vmem:[%s45 + $0xf8] sm:$0xff]
    %v6783 = vld [vmem:[%s45 + $0x100] sm:$0xff]
    %v6784 = vld [vmem:[%s45 + $0x108] sm:$0xff]
    %v6785 = vld [vmem:[%s45 + $0x110] sm:$0xff]
    %v6786 = vld [vmem:[%s45 + $0x118] sm:$0xff]
    %v6787 = vld [vmem:[%s45 + $0x120] sm:$0xff]
    %v6788 = vld [vmem:[%s45 + $0x128] sm:$0xff]
    %v6789 = vld [vmem:[%s45 + $0x130] sm:$0xff]
    %v6790 = vld [vmem:[%s45 + $0x138] sm:$0xff]
    %v6791 = vld [vmem:[%s45 + $0x140] sm:$0xff]
    %v6792 = vld [vmem:[%s45 + $0x148] sm:$0xff]
    %v6793 = vld [vmem:[%s45 + $0x150] sm:$0xff]
    %v6794 = vld [vmem:[%s45 + $0x158] sm:$0xff]
    %v6795 = vld [vmem:[%s45 + $0x160] sm:$0xff]
    %v6796 = vld [vmem:[%s45 + $0x168] sm:$0xff]
    %v6797 = vld [vmem:[%s45 + $0x170] sm:$0xff]
    %v6798 = vld [vmem:[%s45 + $0x178] sm:$0xff]
    %v6799 = vld [vmem:[%s45 + $0x180] sm:$0xff]
    %v6800 = vld [vmem:[%s45 + $0x188] sm:$0xff]
    %v6801 = vld [vmem:[%s45 + $0x190] sm:$0xff]
    %v6802 = vld [vmem:[%s45 + $0x198] sm:$0xff]
    %v6803 = vld [vmem:[%s45 + $0x1a0] sm:$0xff]
    %v6804 = vld [vmem:[%s45 + $0x1a8] sm:$0xff]
    %v6805 = vld [vmem:[%s45 + $0x1b0] sm:$0xff]
    %v6806 = vld [vmem:[%s45 + $0x1b8] sm:$0xff]
    %v6807 = vld [vmem:[%s45 + $0x1c0] sm:$0xff]
    %v6808 = vld [vmem:[%s45 + $0x1c8] sm:$0xff]
    %v6809 = vld [vmem:[%s45 + $0x1d0] sm:$0xff]
    %v6810 = vld [vmem:[%s45 + $0x1d8] sm:$0xff]
    %v6811 = vld [vmem:[%s45 + $0x1e0] sm:$0xff]
    %v6812 = vld [vmem:[%s45 + $0x1e8] sm:$0xff]
    %v6813 = vld [vmem:[%s45 + $0x1f0] sm:$0xff]
    %v6814 = vld [vmem:[%s45 + $0x1f8] sm:$0xff]
    %v6815 = vld [vmem:[%s45 + $0x200] sm:$0xff]
    %v6816 = vld [vmem:[%s45 + $0x208] sm:$0xff]
    %v6817 = vld [vmem:[%s45 + $0x210] sm:$0xff]
    %v6818 = vld [vmem:[%s45 + $0x218] sm:$0xff]
    %v6819 = vld [vmem:[%s45 + $0x220] sm:$0xff]
    %v6820 = vld [vmem:[%s45 + $0x228] sm:$0xff]
    %v6821 = vld [vmem:[%s45 + $0x230] sm:$0xff]
    %v6822 = vld [vmem:[%s45 + $0x238] sm:$0xff]
    %v6823 = vld [vmem:[%s45 + $0x240] sm:$0xff]
    %v6824 = vld [vmem:[%s45 + $0x248] sm:$0xff]
    %v6825 = vld [vmem:[%s45 + $0x250] sm:$0xff]
    %v6826 = vld [vmem:[%s45 + $0x258] sm:$0xff]
    %v6827 = vld [vmem:[%s45 + $0x260] sm:$0xff]
    %v6828 = vld [vmem:[%s45 + $0x268] sm:$0xff]
    %v6829 = vld [vmem:[%s45 + $0x270] sm:$0xff]
    %v6830 = vld [vmem:[%s45 + $0x278] sm:$0xff]
    %v6831 = vld [vmem:[%s45 + $0x280] sm:$0xff]
    %v6832 = vld [vmem:[%s45 + $0x288] sm:$0xff]
    %v6833 = vld [vmem:[%s45 + $0x290] sm:$0xff]
    %v6834 = vld [vmem:[%s45 + $0x298] sm:$0xff]
    %v6835 = vld [vmem:[%s45 + $0x2a0] sm:$0xff]
    %v6836 = vld [vmem:[%s45 + $0x2a8] sm:$0xff]
    %v6837 = vld [vmem:[%s45 + $0x2b0] sm:$0xff]
    %v6838 = vld [vmem:[%s45 + $0x2b8] sm:$0xff]
    %v6839 = vld [vmem:[%s45 + $0x2c0] sm:$0xff]
    %v6840 = vld [vmem:[%s45 + $0x2c8] sm:$0xff]
    %v6841 = vld [vmem:[%s45 + $0x2d0] sm:$0xff]
    %v6842 = vld [vmem:[%s45 + $0x2d8] sm:$0xff]
    %v6843 = vld [vmem:[%s45 + $0x2e0] sm:$0xff]
    %v6844 = vld [vmem:[%s45 + $0x2e8] sm:$0xff]
    %v6845 = vld [vmem:[%s45 + $0x2f0] sm:$0xff]
    %v6846 = vld [vmem:[%s45 + $0x2f8] sm:$0xff]
    %v6847 = vld [vmem:[%s45 + $0x300] sm:$0xff]
    %v6848 = vld [vmem:[%s45 + $0x308] sm:$0xff]
    %v6849 = vld [vmem:[%s45 + $0x310] sm:$0xff]
    %v6850 = vld [vmem:[%s45 + $0x318] sm:$0xff]
    %v6851 = vld [vmem:[%s45 + $0x320] sm:$0xff]
    %v6852 = vld [vmem:[%s45 + $0x328] sm:$0xff]
    %v6853 = vld [vmem:[%s45 + $0x330] sm:$0xff]
    %v6854 = vld [vmem:[%s45 + $0x338] sm:$0xff]
    %v6855 = vld [vmem:[%s45 + $0x340] sm:$0xff]
    %v6856 = vld [vmem:[%s45 + $0x348] sm:$0xff]
    %v6857 = vld [vmem:[%s45 + $0x350] sm:$0xff]
    %v6858 = vld [vmem:[%s45 + $0x358] sm:$0xff]
    %v6859 = vld [vmem:[%s45 + $0x360] sm:$0xff]
    %v6860 = vld [vmem:[%s45 + $0x368] sm:$0xff]
    %v6861 = vld [vmem:[%s45 + $0x370] sm:$0xff]
    %v6862 = vld [vmem:[%s45 + $0x378] sm:$0xff]
    %v6863 = vld [vmem:[%s45 + $0x380] sm:$0xff]
    %v6864 = vld [vmem:[%s45 + $0x388] sm:$0xff]
    %v6865 = vld [vmem:[%s45 + $0x390] sm:$0xff]
    %v6866 = vld [vmem:[%s45 + $0x398] sm:$0xff]
    %v6867 = vld [vmem:[%s45 + $0x3a0] sm:$0xff]
    %v6868 = vld [vmem:[%s45 + $0x3a8] sm:$0xff]
    %v6869 = vld [vmem:[%s45 + $0x3b0] sm:$0xff]
    %v6870 = vld [vmem:[%s45 + $0x3b8] sm:$0xff]
    %v6871 = vld [vmem:[%s45 + $0x3c0] sm:$0xff]
    %v6872 = vld [vmem:[%s45 + $0x3c8] sm:$0xff]
    %v6873 = vld [vmem:[%s45 + $0x3d0] sm:$0xff]
    %v6874 = vld [vmem:[%s45 + $0x3d8] sm:$0xff]
    %v6875 = vld [vmem:[%s45 + $0x3e0] sm:$0xff]
    %v6876 = vld [vmem:[%s45 + $0x3e8] sm:$0xff]
    %v6877 = vld [vmem:[%s45 + $0x3f0] sm:$0xff]
    %v6878 = vld [vmem:[%s45 + $0x3f8] sm:$0xff]
    %v6879 = vld [vmem:[%s45 + $0x400] sm:$0xff]
    %v6880 = vld [vmem:[%s45 + $0x408] sm:$0xff]
    %v6881 = vld [vmem:[%s45 + $0x410] sm:$0xff]
    %v6882 = vld [vmem:[%s45 + $0x418] sm:$0xff]
    %v6883 = vld [vmem:[%s45 + $0x420] sm:$0xff]
    %v6884 = vld [vmem:[%s45 + $0x428] sm:$0xff]
    %v6885 = vld [vmem:[%s45 + $0x430] sm:$0xff]
    %v6886 = vld [vmem:[%s45 + $0x438] sm:$0xff]
    %v6887 = vld [vmem:[%s45 + $0x440] sm:$0xff]
    %v6888 = vld [vmem:[%s45 + $0x448] sm:$0xff]
    %v6889 = vld [vmem:[%s45 + $0x450] sm:$0xff]
    %v6890 = vld [vmem:[%s45 + $0x458] sm:$0xff]
    %v6891 = vld [vmem:[%s45 + $0x460] sm:$0xff]
    %v6892 = vld [vmem:[%s45 + $0x468] sm:$0xff]
    %v6893 = vld [vmem:[%s45 + $0x470] sm:$0xff]
    %v6894 = vld [vmem:[%s45 + $0x478] sm:$0xff]
    %v6895 = vld [vmem:[%s45 + $0x480] sm:$0xff]
    %v6896 = vld [vmem:[%s45 + $0x488] sm:$0xff]
    %v6897 = vld [vmem:[%s45 + $0x490] sm:$0xff]
    %v6898 = vld [vmem:[%s45 + $0x498] sm:$0xff]
    %v6899 = vld [vmem:[%s45 + $0x4a0] sm:$0xff]
    %v6900 = vld [vmem:[%s45 + $0x4a8] sm:$0xff]
    %v6901 = vld [vmem:[%s45 + $0x4b0] sm:$0xff]
    %v6902 = vld [vmem:[%s45 + $0x4b8] sm:$0xff]
    %v6903 = vld [vmem:[%s45 + $0x4c0] sm:$0xff]
    %v6904 = vld [vmem:[%s45 + $0x4c8] sm:$0xff]
    %v6905 = vld [vmem:[%s45 + $0x4d0] sm:$0xff]
    %v6906 = vld [vmem:[%s45 + $0x4d8] sm:$0xff]
    %v6907 = vld [vmem:[%s45 + $0x4e0] sm:$0xff]
    %v6908 = vld [vmem:[%s45 + $0x4e8] sm:$0xff]
    %v6909 = vld [vmem:[%s45 + $0x4f0] sm:$0xff]
    %v6910 = vld [vmem:[%s45 + $0x4f8] sm:$0xff]
    %v6911 = vld [vmem:[%s45 + $0x500] sm:$0xff]
    %v6912 = vld [vmem:[%s45 + $0x508] sm:$0xff]
    %v6913 = vld [vmem:[%s45 + $0x510] sm:$0xff]
    %v6914 = vld [vmem:[%s45 + $0x518] sm:$0xff]
    %v6915 = vld [vmem:[%s45 + $0x520] sm:$0xff]
    %v6916 = vld [vmem:[%s45 + $0x528] sm:$0xff]
    %v6917 = vld [vmem:[%s45 + $0x530] sm:$0xff]
    %v6918 = vld [vmem:[%s45 + $0x538] sm:$0xff]
    %v6919 = vld [vmem:[%s45 + $0x540] sm:$0xff]
    %v6920 = vld [vmem:[%s45 + $0x548] sm:$0xff]
    %v6921 = vld [vmem:[%s45 + $0x550] sm:$0xff]
    %v6922 = vld [vmem:[%s45 + $0x558] sm:$0xff]
    %v6923 = vld [vmem:[%s45 + $0x560] sm:$0xff]
    %v6924 = vld [vmem:[%s45 + $0x568] sm:$0xff]
    %v6925 = vld [vmem:[%s45 + $0x570] sm:$0xff]
    %v6926 = vld [vmem:[%s45 + $0x578] sm:$0xff]
    %v6927 = vld [vmem:[%s45 + $0x580] sm:$0xff]
    %v6928 = vld [vmem:[%s45 + $0x588] sm:$0xff]
    %v6929 = vld [vmem:[%s45 + $0x590] sm:$0xff]
    %v6930 = vld [vmem:[%s45 + $0x598] sm:$0xff]
    %v6931 = vld [vmem:[%s45 + $0x5a0] sm:$0xff]
    %v6932 = vld [vmem:[%s45 + $0x5a8] sm:$0xff]
    %v6933 = vld [vmem:[%s45 + $0x5b0] sm:$0xff]
    %v6934 = vld [vmem:[%s45 + $0x5b8] sm:$0xff]
    %v6935 = vld [vmem:[%s45 + $0x5c0] sm:$0xff]
    %v6936 = vld [vmem:[%s45 + $0x5c8] sm:$0xff]
    %v6937 = vld [vmem:[%s45 + $0x5d0] sm:$0xff]
    %v6938 = vld [vmem:[%s45 + $0x5d8] sm:$0xff]
    %v6939 = vld [vmem:[%s45 + $0x5e0] sm:$0xff]
    %v6940 = vld [vmem:[%s45 + $0x5e8] sm:$0xff]
    %v6941 = vld [vmem:[%s45 + $0x5f0] sm:$0xff]
    %v6942 = vld [vmem:[%s45 + $0x5f8] sm:$0xff]
    %v6943 = vld [vmem:[%s45 + $0x600] sm:$0xff]
    %v6944 = vld [vmem:[%s45 + $0x608] sm:$0xff]
    %v6945 = vld [vmem:[%s45 + $0x610] sm:$0xff]
    %v6946 = vld [vmem:[%s45 + $0x618] sm:$0xff]
    %v6947 = vld [vmem:[%s45 + $0x620] sm:$0xff]
    %v6948 = vld [vmem:[%s45 + $0x628] sm:$0xff]
    %v6949 = vld [vmem:[%s45 + $0x630] sm:$0xff]
    %v6950 = vld [vmem:[%s45 + $0x638] sm:$0xff]
    %v6951 = vld [vmem:[%s45 + $0x640] sm:$0xff]
    %v6952 = vld [vmem:[%s45 + $0x648] sm:$0xff]
    %v6953 = vld [vmem:[%s45 + $0x650] sm:$0xff]
    %v6954 = vld [vmem:[%s45 + $0x658] sm:$0xff]
    %v6955 = vld [vmem:[%s45 + $0x660] sm:$0xff]
    %v6956 = vld [vmem:[%s45 + $0x668] sm:$0xff]
    %v6957 = vld [vmem:[%s45 + $0x670] sm:$0xff]
    %v6958 = vld [vmem:[%s45 + $0x678] sm:$0xff]
    %v6959 = vld [vmem:[%s45 + $0x680] sm:$0xff]
    %v6960 = vld [vmem:[%s45 + $0x688] sm:$0xff]
    %v6961 = vld [vmem:[%s45 + $0x690] sm:$0xff]
    %v6962 = vld [vmem:[%s45 + $0x698] sm:$0xff]
    %v6963 = vld [vmem:[%s45 + $0x6a0] sm:$0xff]
    %v6964 = vld [vmem:[%s45 + $0x6a8] sm:$0xff]
    %v6965 = vld [vmem:[%s45 + $0x6b0] sm:$0xff]
    %v6966 = vld [vmem:[%s45 + $0x6b8] sm:$0xff]
    %v6967 = vld [vmem:[%s45 + $0x6c0] sm:$0xff]
    %v6968 = vld [vmem:[%s45 + $0x6c8] sm:$0xff]
    %v6969 = vld [vmem:[%s45 + $0x6d0] sm:$0xff]
    %v6970 = vld [vmem:[%s45 + $0x6d8] sm:$0xff]
    %v6971 = vld [vmem:[%s45 + $0x6e0] sm:$0xff]
    %v6972 = vld [vmem:[%s45 + $0x6e8] sm:$0xff]
    %v6973 = vld [vmem:[%s45 + $0x6f0] sm:$0xff]
    %v6974 = vld [vmem:[%s45 + $0x6f8] sm:$0xff]
    %v6975 = vld [vmem:[%s45 + $0x700] sm:$0xff]
    %v6976 = vld [vmem:[%s45 + $0x708] sm:$0xff]
    %v6977 = vld [vmem:[%s45 + $0x710] sm:$0xff]
    %v6978 = vld [vmem:[%s45 + $0x718] sm:$0xff]
    %v6979 = vld [vmem:[%s45 + $0x720] sm:$0xff]
    %v6980 = vld [vmem:[%s45 + $0x728] sm:$0xff]
    %v6981 = vld [vmem:[%s45 + $0x730] sm:$0xff]
    %v6982 = vld [vmem:[%s45 + $0x738] sm:$0xff]
    %v6983 = vld [vmem:[%s45 + $0x740] sm:$0xff]
    %v6984 = vld [vmem:[%s45 + $0x748] sm:$0xff]
    %v6985 = vld [vmem:[%s45 + $0x750] sm:$0xff]
    %v6986 = vld [vmem:[%s45 + $0x758] sm:$0xff]
    %v6987 = vld [vmem:[%s45 + $0x760] sm:$0xff]
    %v6988 = vld [vmem:[%s45 + $0x768] sm:$0xff]
    %v6989 = vld [vmem:[%s45 + $0x770] sm:$0xff]
    %v6990 = vld [vmem:[%s45 + $0x778] sm:$0xff]
    %v6991 = vld [vmem:[%s45 + $0x780] sm:$0xff]
    %v6992 = vld [vmem:[%s45 + $0x788] sm:$0xff]
    %v6993 = vld [vmem:[%s45 + $0x790] sm:$0xff]
    %v6994 = vld [vmem:[%s45 + $0x798] sm:$0xff]
    %v6995 = vld [vmem:[%s45 + $0x7a0] sm:$0xff]
    %v6996 = vld [vmem:[%s45 + $0x7a8] sm:$0xff]
    %v6997 = vld [vmem:[%s45 + $0x7b0] sm:$0xff]
    %v6998 = vld [vmem:[%s45 + $0x7b8] sm:$0xff]
    %v6999 = vld [vmem:[%s45 + $0x7c0] sm:$0xff]
    %v7000 = vld [vmem:[%s45 + $0x7c8] sm:$0xff]
    %v7001 = vld [vmem:[%s45 + $0x7d0] sm:$0xff]
    %v7002 = vld [vmem:[%s45 + $0x7d8] sm:$0xff]
    %v7003 = vld [vmem:[%s45 + $0x7e0] sm:$0xff]
    %v7004 = vld [vmem:[%s45 + $0x7e8] sm:$0xff]
    %v7005 = vld [vmem:[%s45 + $0x7f0] sm:$0xff]
    %v7006 = vld [vmem:[%s45 + $0x7f8] sm:$0xff]
    %v7007 = vld [vmem:[%s47] sm:$0xf]
    %v7009 = vlaneseq
    %v7010 = vshrl.u32 %v7009, 7
    %v7011 = vsub.s32 0, %v7010
    %v7012 = vrot.slane %v7007, %v7011
    %v7013 = vlaneseq
    %v7014 = vshrl.u32 %v7013, 7
    %v7015 = vsub.s32 1, %v7014
    %v7016 = vrot.slane %v7007, %v7015
    %v7017 = vlaneseq
    %v7018 = vshrl.u32 %v7017, 7
    %v7019 = vsub.s32 2, %v7018
    %v7020 = vrot.slane %v7007, %v7019
    %v7021 = vlaneseq
    %v7022 = vshrl.u32 %v7021, 7
    %v7023 = vsub.s32 3, %v7022
    %v7024 = vrot.slane %v7007, %v7023
    %v7285 = vunpack.c.l.b16 %v6751
    %v7286 = vunpack.c.h.b16 %v6751
    %v7287 = vunpack.c.l.b16 %v6752
    %v7288 = vunpack.c.h.b16 %v6752
    %v7289 = vunpack.c.l.b16 %v6753
    %v7290 = vunpack.c.h.b16 %v6753
    %v7291 = vunpack.c.l.b16 %v6754
    %v7292 = vunpack.c.h.b16 %v6754
    %v7293 = vunpack.c.l.b16 %v6755
    %v7294 = vunpack.c.h.b16 %v6755
    %v7295 = vunpack.c.l.b16 %v6756
    %v7296 = vunpack.c.h.b16 %v6756
    %v7297 = vunpack.c.l.b16 %v6757
    %v7298 = vunpack.c.h.b16 %v6757
    %v7299 = vunpack.c.l.b16 %v6758
    %v7300 = vunpack.c.h.b16 %v6758
    %v7301 = vunpack.c.l.b16 %v6759
    %v7302 = vunpack.c.h.b16 %v6759
    %v7303 = vunpack.c.l.b16 %v6760
    %v7304 = vunpack.c.h.b16 %v6760
    %v7305 = vunpack.c.l.b16 %v6761
    %v7306 = vunpack.c.h.b16 %v6761
    %v7307 = vunpack.c.l.b16 %v6762
    %v7308 = vunpack.c.h.b16 %v6762
    %v7309 = vunpack.c.l.b16 %v6763
    %v7310 = vunpack.c.h.b16 %v6763
    %v7311 = vunpack.c.l.b16 %v6764
    %v7312 = vunpack.c.h.b16 %v6764
    %v7313 = vunpack.c.l.b16 %v6765
    %v7314 = vunpack.c.h.b16 %v6765
    %v7315 = vunpack.c.l.b16 %v6766
    %v7316 = vunpack.c.h.b16 %v6766
    %v7317 = vunpack.c.l.b16 %v6767
    %v7318 = vunpack.c.h.b16 %v6767
    %v7319 = vunpack.c.l.b16 %v6768
    %v7320 = vunpack.c.h.b16 %v6768
    %v7321 = vunpack.c.l.b16 %v6769
    %v7322 = vunpack.c.h.b16 %v6769
    %v7323 = vunpack.c.l.b16 %v6770
    %v7324 = vunpack.c.h.b16 %v6770
    %v7325 = vunpack.c.l.b16 %v6771
    %v7326 = vunpack.c.h.b16 %v6771
    %v7327 = vunpack.c.l.b16 %v6772
    %v7328 = vunpack.c.h.b16 %v6772
    %v7329 = vunpack.c.l.b16 %v6773
    %v7330 = vunpack.c.h.b16 %v6773
    %v7331 = vunpack.c.l.b16 %v6774
    %v7332 = vunpack.c.h.b16 %v6774
    %v7333 = vunpack.c.l.b16 %v6775
    %v7334 = vunpack.c.h.b16 %v6775
    %v7335 = vunpack.c.l.b16 %v6776
    %v7336 = vunpack.c.h.b16 %v6776
    %v7337 = vunpack.c.l.b16 %v6777
    %v7338 = vunpack.c.h.b16 %v6777
    %v7339 = vunpack.c.l.b16 %v6778
    %v7340 = vunpack.c.h.b16 %v6778
    %v7341 = vunpack.c.l.b16 %v6779
    %v7342 = vunpack.c.h.b16 %v6779
    %v7343 = vunpack.c.l.b16 %v6780
    %v7344 = vunpack.c.h.b16 %v6780
    %v7345 = vunpack.c.l.b16 %v6781
    %v7346 = vunpack.c.h.b16 %v6781
    %v7347 = vunpack.c.l.b16 %v6782
    %v7348 = vunpack.c.h.b16 %v6782
    %v7349 = vunpack.c.l.b16 %v6783
    %v7350 = vunpack.c.h.b16 %v6783
    %v7351 = vunpack.c.l.b16 %v6784
    %v7352 = vunpack.c.h.b16 %v6784
    %v7353 = vunpack.c.l.b16 %v6785
    %v7354 = vunpack.c.h.b16 %v6785
    %v7355 = vunpack.c.l.b16 %v6786
    %v7356 = vunpack.c.h.b16 %v6786
    %v7357 = vunpack.c.l.b16 %v6787
    %v7358 = vunpack.c.h.b16 %v6787
    %v7359 = vunpack.c.l.b16 %v6788
    %v7360 = vunpack.c.h.b16 %v6788
    %v7361 = vunpack.c.l.b16 %v6789
    %v7362 = vunpack.c.h.b16 %v6789
    %v7363 = vunpack.c.l.b16 %v6790
    %v7364 = vunpack.c.h.b16 %v6790
    %v7365 = vunpack.c.l.b16 %v6791
    %v7366 = vunpack.c.h.b16 %v6791
    %v7367 = vunpack.c.l.b16 %v6792
    %v7368 = vunpack.c.h.b16 %v6792
    %v7369 = vunpack.c.l.b16 %v6793
    %v7370 = vunpack.c.h.b16 %v6793
    %v7371 = vunpack.c.l.b16 %v6794
    %v7372 = vunpack.c.h.b16 %v6794
    %v7373 = vunpack.c.l.b16 %v6795
    %v7374 = vunpack.c.h.b16 %v6795
    %v7375 = vunpack.c.l.b16 %v6796
    %v7376 = vunpack.c.h.b16 %v6796
    %v7377 = vunpack.c.l.b16 %v6797
    %v7378 = vunpack.c.h.b16 %v6797
    %v7379 = vunpack.c.l.b16 %v6798
    %v7380 = vunpack.c.h.b16 %v6798
    %v7381 = vunpack.c.l.b16 %v6799
    %v7382 = vunpack.c.h.b16 %v6799
    %v7383 = vunpack.c.l.b16 %v6800
    %v7384 = vunpack.c.h.b16 %v6800
    %v7385 = vunpack.c.l.b16 %v6801
    %v7386 = vunpack.c.h.b16 %v6801
    %v7387 = vunpack.c.l.b16 %v6802
    %v7388 = vunpack.c.h.b16 %v6802
    %v7389 = vunpack.c.l.b16 %v6803
    %v7390 = vunpack.c.h.b16 %v6803
    %v7391 = vunpack.c.l.b16 %v6804
    %v7392 = vunpack.c.h.b16 %v6804
    %v7393 = vunpack.c.l.b16 %v6805
    %v7394 = vunpack.c.h.b16 %v6805
    %v7395 = vunpack.c.l.b16 %v6806
    %v7396 = vunpack.c.h.b16 %v6806
    %v7397 = vunpack.c.l.b16 %v6807
    %v7398 = vunpack.c.h.b16 %v6807
    %v7399 = vunpack.c.l.b16 %v6808
    %v7400 = vunpack.c.h.b16 %v6808
    %v7401 = vunpack.c.l.b16 %v6809
    %v7402 = vunpack.c.h.b16 %v6809
    %v7403 = vunpack.c.l.b16 %v6810
    %v7404 = vunpack.c.h.b16 %v6810
    %v7405 = vunpack.c.l.b16 %v6811
    %v7406 = vunpack.c.h.b16 %v6811
    %v7407 = vunpack.c.l.b16 %v6812
    %v7408 = vunpack.c.h.b16 %v6812
    %v7409 = vunpack.c.l.b16 %v6813
    %v7410 = vunpack.c.h.b16 %v6813
    %v7411 = vunpack.c.l.b16 %v6814
    %v7412 = vunpack.c.h.b16 %v6814
    %v7413 = vunpack.c.l.b16 %v6815
    %v7414 = vunpack.c.h.b16 %v6815
    %v7415 = vunpack.c.l.b16 %v6816
    %v7416 = vunpack.c.h.b16 %v6816
    %v7417 = vunpack.c.l.b16 %v6817
    %v7418 = vunpack.c.h.b16 %v6817
    %v7419 = vunpack.c.l.b16 %v6818
    %v7420 = vunpack.c.h.b16 %v6818
    %v7421 = vunpack.c.l.b16 %v6819
    %v7422 = vunpack.c.h.b16 %v6819
    %v7423 = vunpack.c.l.b16 %v6820
    %v7424 = vunpack.c.h.b16 %v6820
    %v7425 = vunpack.c.l.b16 %v6821
    %v7426 = vunpack.c.h.b16 %v6821
    %v7427 = vunpack.c.l.b16 %v6822
    %v7428 = vunpack.c.h.b16 %v6822
    %v7429 = vunpack.c.l.b16 %v6823
    %v7430 = vunpack.c.h.b16 %v6823
    %v7431 = vunpack.c.l.b16 %v6824
    %v7432 = vunpack.c.h.b16 %v6824
    %v7433 = vunpack.c.l.b16 %v6825
    %v7434 = vunpack.c.h.b16 %v6825
    %v7435 = vunpack.c.l.b16 %v6826
    %v7436 = vunpack.c.h.b16 %v6826
    %v7437 = vunpack.c.l.b16 %v6827
    %v7438 = vunpack.c.h.b16 %v6827
    %v7439 = vunpack.c.l.b16 %v6828
    %v7440 = vunpack.c.h.b16 %v6828
    %v7441 = vunpack.c.l.b16 %v6829
    %v7442 = vunpack.c.h.b16 %v6829
    %v7443 = vunpack.c.l.b16 %v6830
    %v7444 = vunpack.c.h.b16 %v6830
    %v7445 = vunpack.c.l.b16 %v6831
    %v7446 = vunpack.c.h.b16 %v6831
    %v7447 = vunpack.c.l.b16 %v6832
    %v7448 = vunpack.c.h.b16 %v6832
    %v7449 = vunpack.c.l.b16 %v6833
    %v7450 = vunpack.c.h.b16 %v6833
    %v7451 = vunpack.c.l.b16 %v6834
    %v7452 = vunpack.c.h.b16 %v6834
    %v7453 = vunpack.c.l.b16 %v6835
    %v7454 = vunpack.c.h.b16 %v6835
    %v7455 = vunpack.c.l.b16 %v6836
    %v7456 = vunpack.c.h.b16 %v6836
    %v7457 = vunpack.c.l.b16 %v6837
    %v7458 = vunpack.c.h.b16 %v6837
    %v7459 = vunpack.c.l.b16 %v6838
    %v7460 = vunpack.c.h.b16 %v6838
    %v7461 = vunpack.c.l.b16 %v6839
    %v7462 = vunpack.c.h.b16 %v6839
    %v7463 = vunpack.c.l.b16 %v6840
    %v7464 = vunpack.c.h.b16 %v6840
    %v7465 = vunpack.c.l.b16 %v6841
    %v7466 = vunpack.c.h.b16 %v6841
    %v7467 = vunpack.c.l.b16 %v6842
    %v7468 = vunpack.c.h.b16 %v6842
    %v7469 = vunpack.c.l.b16 %v6843
    %v7470 = vunpack.c.h.b16 %v6843
    %v7471 = vunpack.c.l.b16 %v6844
    %v7472 = vunpack.c.h.b16 %v6844
    %v7473 = vunpack.c.l.b16 %v6845
    %v7474 = vunpack.c.h.b16 %v6845
    %v7475 = vunpack.c.l.b16 %v6846
    %v7476 = vunpack.c.h.b16 %v6846
    %v7477 = vunpack.c.l.b16 %v6847
    %v7478 = vunpack.c.h.b16 %v6847
    %v7479 = vunpack.c.l.b16 %v6848
    %v7480 = vunpack.c.h.b16 %v6848
    %v7481 = vunpack.c.l.b16 %v6849
    %v7482 = vunpack.c.h.b16 %v6849
    %v7483 = vunpack.c.l.b16 %v6850
    %v7484 = vunpack.c.h.b16 %v6850
    %v7485 = vunpack.c.l.b16 %v6851
    %v7486 = vunpack.c.h.b16 %v6851
    %v7487 = vunpack.c.l.b16 %v6852
    %v7488 = vunpack.c.h.b16 %v6852
    %v7489 = vunpack.c.l.b16 %v6853
    %v7490 = vunpack.c.h.b16 %v6853
    %v7491 = vunpack.c.l.b16 %v6854
    %v7492 = vunpack.c.h.b16 %v6854
    %v7493 = vunpack.c.l.b16 %v6855
    %v7494 = vunpack.c.h.b16 %v6855
    %v7495 = vunpack.c.l.b16 %v6856
    %v7496 = vunpack.c.h.b16 %v6856
    %v7497 = vunpack.c.l.b16 %v6857
    %v7498 = vunpack.c.h.b16 %v6857
    %v7499 = vunpack.c.l.b16 %v6858
    %v7500 = vunpack.c.h.b16 %v6858
    %v7501 = vunpack.c.l.b16 %v6859
    %v7502 = vunpack.c.h.b16 %v6859
    %v7503 = vunpack.c.l.b16 %v6860
    %v7504 = vunpack.c.h.b16 %v6860
    %v7505 = vunpack.c.l.b16 %v6861
    %v7506 = vunpack.c.h.b16 %v6861
    %v7507 = vunpack.c.l.b16 %v6862
    %v7508 = vunpack.c.h.b16 %v6862
    %v7509 = vunpack.c.l.b16 %v6863
    %v7510 = vunpack.c.h.b16 %v6863
    %v7511 = vunpack.c.l.b16 %v6864
    %v7512 = vunpack.c.h.b16 %v6864
    %v7513 = vunpack.c.l.b16 %v6865
    %v7514 = vunpack.c.h.b16 %v6865
    %v7515 = vunpack.c.l.b16 %v6866
    %v7516 = vunpack.c.h.b16 %v6866
    %v7517 = vunpack.c.l.b16 %v6867
    %v7518 = vunpack.c.h.b16 %v6867
    %v7519 = vunpack.c.l.b16 %v6868
    %v7520 = vunpack.c.h.b16 %v6868
    %v7521 = vunpack.c.l.b16 %v6869
    %v7522 = vunpack.c.h.b16 %v6869
    %v7523 = vunpack.c.l.b16 %v6870
    %v7524 = vunpack.c.h.b16 %v6870
    %v7525 = vunpack.c.l.b16 %v6871
    %v7526 = vunpack.c.h.b16 %v6871
    %v7527 = vunpack.c.l.b16 %v6872
    %v7528 = vunpack.c.h.b16 %v6872
    %v7529 = vunpack.c.l.b16 %v6873
    %v7530 = vunpack.c.h.b16 %v6873
    %v7531 = vunpack.c.l.b16 %v6874
    %v7532 = vunpack.c.h.b16 %v6874
    %v7533 = vunpack.c.l.b16 %v6875
    %v7534 = vunpack.c.h.b16 %v6875
    %v7535 = vunpack.c.l.b16 %v6876
    %v7536 = vunpack.c.h.b16 %v6876
    %v7537 = vunpack.c.l.b16 %v6877
    %v7538 = vunpack.c.h.b16 %v6877
    %v7539 = vunpack.c.l.b16 %v6878
    %v7540 = vunpack.c.h.b16 %v6878
    %v7541 = vunpack.c.l.b16 %v6879
    %v7542 = vunpack.c.h.b16 %v6879
    %v7543 = vunpack.c.l.b16 %v6880
    %v7544 = vunpack.c.h.b16 %v6880
    %v7545 = vunpack.c.l.b16 %v6881
    %v7546 = vunpack.c.h.b16 %v6881
    %v7547 = vunpack.c.l.b16 %v6882
    %v7548 = vunpack.c.h.b16 %v6882
    %v7549 = vunpack.c.l.b16 %v6883
    %v7550 = vunpack.c.h.b16 %v6883
    %v7551 = vunpack.c.l.b16 %v6884
    %v7552 = vunpack.c.h.b16 %v6884
    %v7553 = vunpack.c.l.b16 %v6885
    %v7554 = vunpack.c.h.b16 %v6885
    %v7555 = vunpack.c.l.b16 %v6886
    %v7556 = vunpack.c.h.b16 %v6886
    %v7557 = vunpack.c.l.b16 %v6887
    %v7558 = vunpack.c.h.b16 %v6887
    %v7559 = vunpack.c.l.b16 %v6888
    %v7560 = vunpack.c.h.b16 %v6888
    %v7561 = vunpack.c.l.b16 %v6889
    %v7562 = vunpack.c.h.b16 %v6889
    %v7563 = vunpack.c.l.b16 %v6890
    %v7564 = vunpack.c.h.b16 %v6890
    %v7565 = vunpack.c.l.b16 %v6891
    %v7566 = vunpack.c.h.b16 %v6891
    %v7567 = vunpack.c.l.b16 %v6892
    %v7568 = vunpack.c.h.b16 %v6892
    %v7569 = vunpack.c.l.b16 %v6893
    %v7570 = vunpack.c.h.b16 %v6893
    %v7571 = vunpack.c.l.b16 %v6894
    %v7572 = vunpack.c.h.b16 %v6894
    %v7573 = vunpack.c.l.b16 %v6895
    %v7574 = vunpack.c.h.b16 %v6895
    %v7575 = vunpack.c.l.b16 %v6896
    %v7576 = vunpack.c.h.b16 %v6896
    %v7577 = vunpack.c.l.b16 %v6897
    %v7578 = vunpack.c.h.b16 %v6897
    %v7579 = vunpack.c.l.b16 %v6898
    %v7580 = vunpack.c.h.b16 %v6898
    %v7581 = vunpack.c.l.b16 %v6899
    %v7582 = vunpack.c.h.b16 %v6899
    %v7583 = vunpack.c.l.b16 %v6900
    %v7584 = vunpack.c.h.b16 %v6900
    %v7585 = vunpack.c.l.b16 %v6901
    %v7586 = vunpack.c.h.b16 %v6901
    %v7587 = vunpack.c.l.b16 %v6902
    %v7588 = vunpack.c.h.b16 %v6902
    %v7589 = vunpack.c.l.b16 %v6903
    %v7590 = vunpack.c.h.b16 %v6903
    %v7591 = vunpack.c.l.b16 %v6904
    %v7592 = vunpack.c.h.b16 %v6904
    %v7593 = vunpack.c.l.b16 %v6905
    %v7594 = vunpack.c.h.b16 %v6905
    %v7595 = vunpack.c.l.b16 %v6906
    %v7596 = vunpack.c.h.b16 %v6906
    %v7597 = vunpack.c.l.b16 %v6907
    %v7598 = vunpack.c.h.b16 %v6907
    %v7599 = vunpack.c.l.b16 %v6908
    %v7600 = vunpack.c.h.b16 %v6908
    %v7601 = vunpack.c.l.b16 %v6909
    %v7602 = vunpack.c.h.b16 %v6909
    %v7603 = vunpack.c.l.b16 %v6910
    %v7604 = vunpack.c.h.b16 %v6910
    %v7605 = vunpack.c.l.b16 %v6911
    %v7606 = vunpack.c.h.b16 %v6911
    %v7607 = vunpack.c.l.b16 %v6912
    %v7608 = vunpack.c.h.b16 %v6912
    %v7609 = vunpack.c.l.b16 %v6913
    %v7610 = vunpack.c.h.b16 %v6913
    %v7611 = vunpack.c.l.b16 %v6914
    %v7612 = vunpack.c.h.b16 %v6914
    %v7613 = vunpack.c.l.b16 %v6915
    %v7614 = vunpack.c.h.b16 %v6915
    %v7615 = vunpack.c.l.b16 %v6916
    %v7616 = vunpack.c.h.b16 %v6916
    %v7617 = vunpack.c.l.b16 %v6917
    %v7618 = vunpack.c.h.b16 %v6917
    %v7619 = vunpack.c.l.b16 %v6918
    %v7620 = vunpack.c.h.b16 %v6918
    %v7621 = vunpack.c.l.b16 %v6919
    %v7622 = vunpack.c.h.b16 %v6919
    %v7623 = vunpack.c.l.b16 %v6920
    %v7624 = vunpack.c.h.b16 %v6920
    %v7625 = vunpack.c.l.b16 %v6921
    %v7626 = vunpack.c.h.b16 %v6921
    %v7627 = vunpack.c.l.b16 %v6922
    %v7628 = vunpack.c.h.b16 %v6922
    %v7629 = vunpack.c.l.b16 %v6923
    %v7630 = vunpack.c.h.b16 %v6923
    %v7631 = vunpack.c.l.b16 %v6924
    %v7632 = vunpack.c.h.b16 %v6924
    %v7633 = vunpack.c.l.b16 %v6925
    %v7634 = vunpack.c.h.b16 %v6925
    %v7635 = vunpack.c.l.b16 %v6926
    %v7636 = vunpack.c.h.b16 %v6926
    %v7637 = vunpack.c.l.b16 %v6927
    %v7638 = vunpack.c.h.b16 %v6927
    %v7639 = vunpack.c.l.b16 %v6928
    %v7640 = vunpack.c.h.b16 %v6928
    %v7641 = vunpack.c.l.b16 %v6929
    %v7642 = vunpack.c.h.b16 %v6929
    %v7643 = vunpack.c.l.b16 %v6930
    %v7644 = vunpack.c.h.b16 %v6930
    %v7645 = vunpack.c.l.b16 %v6931
    %v7646 = vunpack.c.h.b16 %v6931
    %v7647 = vunpack.c.l.b16 %v6932
    %v7648 = vunpack.c.h.b16 %v6932
    %v7649 = vunpack.c.l.b16 %v6933
    %v7650 = vunpack.c.h.b16 %v6933
    %v7651 = vunpack.c.l.b16 %v6934
    %v7652 = vunpack.c.h.b16 %v6934
    %v7653 = vunpack.c.l.b16 %v6935
    %v7654 = vunpack.c.h.b16 %v6935
    %v7655 = vunpack.c.l.b16 %v6936
    %v7656 = vunpack.c.h.b16 %v6936
    %v7657 = vunpack.c.l.b16 %v6937
    %v7658 = vunpack.c.h.b16 %v6937
    %v7659 = vunpack.c.l.b16 %v6938
    %v7660 = vunpack.c.h.b16 %v6938
    %v7661 = vunpack.c.l.b16 %v6939
    %v7662 = vunpack.c.h.b16 %v6939
    %v7663 = vunpack.c.l.b16 %v6940
    %v7664 = vunpack.c.h.b16 %v6940
    %v7665 = vunpack.c.l.b16 %v6941
    %v7666 = vunpack.c.h.b16 %v6941
    %v7667 = vunpack.c.l.b16 %v6942
    %v7668 = vunpack.c.h.b16 %v6942
    %v7669 = vunpack.c.l.b16 %v6943
    %v7670 = vunpack.c.h.b16 %v6943
    %v7671 = vunpack.c.l.b16 %v6944
    %v7672 = vunpack.c.h.b16 %v6944
    %v7673 = vunpack.c.l.b16 %v6945
    %v7674 = vunpack.c.h.b16 %v6945
    %v7675 = vunpack.c.l.b16 %v6946
    %v7676 = vunpack.c.h.b16 %v6946
    %v7677 = vunpack.c.l.b16 %v6947
    %v7678 = vunpack.c.h.b16 %v6947
    %v7679 = vunpack.c.l.b16 %v6948
    %v7680 = vunpack.c.h.b16 %v6948
    %v7681 = vunpack.c.l.b16 %v6949
    %v7682 = vunpack.c.h.b16 %v6949
    %v7683 = vunpack.c.l.b16 %v6950
    %v7684 = vunpack.c.h.b16 %v6950
    %v7685 = vunpack.c.l.b16 %v6951
    %v7686 = vunpack.c.h.b16 %v6951
    %v7687 = vunpack.c.l.b16 %v6952
    %v7688 = vunpack.c.h.b16 %v6952
    %v7689 = vunpack.c.l.b16 %v6953
    %v7690 = vunpack.c.h.b16 %v6953
    %v7691 = vunpack.c.l.b16 %v6954
    %v7692 = vunpack.c.h.b16 %v6954
    %v7693 = vunpack.c.l.b16 %v6955
    %v7694 = vunpack.c.h.b16 %v6955
    %v7695 = vunpack.c.l.b16 %v6956
    %v7696 = vunpack.c.h.b16 %v6956
    %v7697 = vunpack.c.l.b16 %v6957
    %v7698 = vunpack.c.h.b16 %v6957
    %v7699 = vunpack.c.l.b16 %v6958
    %v7700 = vunpack.c.h.b16 %v6958
    %v7701 = vunpack.c.l.b16 %v6959
    %v7702 = vunpack.c.h.b16 %v6959
    %v7703 = vunpack.c.l.b16 %v6960
    %v7704 = vunpack.c.h.b16 %v6960
    %v7705 = vunpack.c.l.b16 %v6961
    %v7706 = vunpack.c.h.b16 %v6961
    %v7707 = vunpack.c.l.b16 %v6962
    %v7708 = vunpack.c.h.b16 %v6962
    %v7709 = vunpack.c.l.b16 %v6963
    %v7710 = vunpack.c.h.b16 %v6963
    %v7711 = vunpack.c.l.b16 %v6964
    %v7712 = vunpack.c.h.b16 %v6964
    %v7713 = vunpack.c.l.b16 %v6965
    %v7714 = vunpack.c.h.b16 %v6965
    %v7715 = vunpack.c.l.b16 %v6966
    %v7716 = vunpack.c.h.b16 %v6966
    %v7717 = vunpack.c.l.b16 %v6967
    %v7718 = vunpack.c.h.b16 %v6967
    %v7719 = vunpack.c.l.b16 %v6968
    %v7720 = vunpack.c.h.b16 %v6968
    %v7721 = vunpack.c.l.b16 %v6969
    %v7722 = vunpack.c.h.b16 %v6969
    %v7723 = vunpack.c.l.b16 %v6970
    %v7724 = vunpack.c.h.b16 %v6970
    %v7725 = vunpack.c.l.b16 %v6971
    %v7726 = vunpack.c.h.b16 %v6971
    %v7727 = vunpack.c.l.b16 %v6972
    %v7728 = vunpack.c.h.b16 %v6972
    %v7729 = vunpack.c.l.b16 %v6973
    %v7730 = vunpack.c.h.b16 %v6973
    %v7731 = vunpack.c.l.b16 %v6974
    %v7732 = vunpack.c.h.b16 %v6974
    %v7733 = vunpack.c.l.b16 %v6975
    %v7734 = vunpack.c.h.b16 %v6975
    %v7735 = vunpack.c.l.b16 %v6976
    %v7736 = vunpack.c.h.b16 %v6976
    %v7737 = vunpack.c.l.b16 %v6977
    %v7738 = vunpack.c.h.b16 %v6977
    %v7739 = vunpack.c.l.b16 %v6978
    %v7740 = vunpack.c.h.b16 %v6978
    %v7741 = vunpack.c.l.b16 %v6979
    %v7742 = vunpack.c.h.b16 %v6979
    %v7743 = vunpack.c.l.b16 %v6980
    %v7744 = vunpack.c.h.b16 %v6980
    %v7745 = vunpack.c.l.b16 %v6981
    %v7746 = vunpack.c.h.b16 %v6981
    %v7747 = vunpack.c.l.b16 %v6982
    %v7748 = vunpack.c.h.b16 %v6982
    %v7749 = vunpack.c.l.b16 %v6983
    %v7750 = vunpack.c.h.b16 %v6983
    %v7751 = vunpack.c.l.b16 %v6984
    %v7752 = vunpack.c.h.b16 %v6984
    %v7753 = vunpack.c.l.b16 %v6985
    %v7754 = vunpack.c.h.b16 %v6985
    %v7755 = vunpack.c.l.b16 %v6986
    %v7756 = vunpack.c.h.b16 %v6986
    %v7757 = vunpack.c.l.b16 %v6987
    %v7758 = vunpack.c.h.b16 %v6987
    %v7759 = vunpack.c.l.b16 %v6988
    %v7760 = vunpack.c.h.b16 %v6988
    %v7761 = vunpack.c.l.b16 %v6989
    %v7762 = vunpack.c.h.b16 %v6989
    %v7763 = vunpack.c.l.b16 %v6990
    %v7764 = vunpack.c.h.b16 %v6990
    %v7765 = vunpack.c.l.b16 %v6991
    %v7766 = vunpack.c.h.b16 %v6991
    %v7767 = vunpack.c.l.b16 %v6992
    %v7768 = vunpack.c.h.b16 %v6992
    %v7769 = vunpack.c.l.b16 %v6993
    %v7770 = vunpack.c.h.b16 %v6993
    %v7771 = vunpack.c.l.b16 %v6994
    %v7772 = vunpack.c.h.b16 %v6994
    %v7773 = vunpack.c.l.b16 %v6995
    %v7774 = vunpack.c.h.b16 %v6995
    %v7775 = vunpack.c.l.b16 %v6996
    %v7776 = vunpack.c.h.b16 %v6996
    %v7777 = vunpack.c.l.b16 %v6997
    %v7778 = vunpack.c.h.b16 %v6997
    %v7779 = vunpack.c.l.b16 %v6998
    %v7780 = vunpack.c.h.b16 %v6998
    %v7781 = vunpack.c.l.b16 %v6999
    %v7782 = vunpack.c.h.b16 %v6999
    %v7783 = vunpack.c.l.b16 %v7000
    %v7784 = vunpack.c.h.b16 %v7000
    %v7785 = vunpack.c.l.b16 %v7001
    %v7786 = vunpack.c.h.b16 %v7001
    %v7787 = vunpack.c.l.b16 %v7002
    %v7788 = vunpack.c.h.b16 %v7002
    %v7789 = vunpack.c.l.b16 %v7003
    %v7790 = vunpack.c.h.b16 %v7003
    %v7791 = vunpack.c.l.b16 %v7004
    %v7792 = vunpack.c.h.b16 %v7004
    %v7793 = vunpack.c.l.b16 %v7005
    %v7794 = vunpack.c.h.b16 %v7005
    %v7795 = vunpack.c.l.b16 %v7006
    %v7796 = vunpack.c.h.b16 %v7006
    %v7797 = vpack.c.b16 %v7289, %v7285
    %v7798 = vpack.c.b16 %v7290, %v7286
    %v7799 = vpack.c.b16 %v7291, %v7287
    %v7800 = vpack.c.b16 %v7292, %v7288
    %v7801 = vpack.c.b16 %v7297, %v7293
    %v7802 = vpack.c.b16 %v7298, %v7294
    %v7803 = vpack.c.b16 %v7299, %v7295
    %v7804 = vpack.c.b16 %v7300, %v7296
    %v7805 = vpack.c.b16 %v7305, %v7301
    %v7806 = vpack.c.b16 %v7306, %v7302
    %v7807 = vpack.c.b16 %v7307, %v7303
    %v7808 = vpack.c.b16 %v7308, %v7304
    %v7809 = vpack.c.b16 %v7313, %v7309
    %v7810 = vpack.c.b16 %v7314, %v7310
    %v7811 = vpack.c.b16 %v7315, %v7311
    %v7812 = vpack.c.b16 %v7316, %v7312
    %v7813 = vpack.c.b16 %v7321, %v7317
    %v7814 = vpack.c.b16 %v7322, %v7318
    %v7815 = vpack.c.b16 %v7323, %v7319
    %v7816 = vpack.c.b16 %v7324, %v7320
    %v7817 = vpack.c.b16 %v7329, %v7325
    %v7818 = vpack.c.b16 %v7330, %v7326
    %v7819 = vpack.c.b16 %v7331, %v7327
    %v7820 = vpack.c.b16 %v7332, %v7328
    %v7821 = vpack.c.b16 %v7337, %v7333
    %v7822 = vpack.c.b16 %v7338, %v7334
    %v7823 = vpack.c.b16 %v7339, %v7335
    %v7824 = vpack.c.b16 %v7340, %v7336
    %v7825 = vpack.c.b16 %v7345, %v7341
    %v7826 = vpack.c.b16 %v7346, %v7342
    %v7827 = vpack.c.b16 %v7347, %v7343
    %v7828 = vpack.c.b16 %v7348, %v7344
    %v7829 = vpack.c.b16 %v7353, %v7349
    %v7830 = vpack.c.b16 %v7354, %v7350
    %v7831 = vpack.c.b16 %v7355, %v7351
    %v7832 = vpack.c.b16 %v7356, %v7352
    %v7833 = vpack.c.b16 %v7361, %v7357
    %v7834 = vpack.c.b16 %v7362, %v7358
    %v7835 = vpack.c.b16 %v7363, %v7359
    %v7836 = vpack.c.b16 %v7364, %v7360
    %v7837 = vpack.c.b16 %v7369, %v7365
    %v7838 = vpack.c.b16 %v7370, %v7366
    %v7839 = vpack.c.b16 %v7371, %v7367
    %v7840 = vpack.c.b16 %v7372, %v7368
    %v7841 = vpack.c.b16 %v7377, %v7373
    %v7842 = vpack.c.b16 %v7378, %v7374
    %v7843 = vpack.c.b16 %v7379, %v7375
    %v7844 = vpack.c.b16 %v7380, %v7376
    %v7845 = vpack.c.b16 %v7385, %v7381
    %v7846 = vpack.c.b16 %v7386, %v7382
    %v7847 = vpack.c.b16 %v7387, %v7383
    %v7848 = vpack.c.b16 %v7388, %v7384
    %v7849 = vpack.c.b16 %v7393, %v7389
    %v7850 = vpack.c.b16 %v7394, %v7390
    %v7851 = vpack.c.b16 %v7395, %v7391
    %v7852 = vpack.c.b16 %v7396, %v7392
    %v7853 = vpack.c.b16 %v7401, %v7397
    %v7854 = vpack.c.b16 %v7402, %v7398
    %v7855 = vpack.c.b16 %v7403, %v7399
    %v7856 = vpack.c.b16 %v7404, %v7400
    %v7857 = vpack.c.b16 %v7409, %v7405
    %v7858 = vpack.c.b16 %v7410, %v7406
    %v7859 = vpack.c.b16 %v7411, %v7407
    %v7860 = vpack.c.b16 %v7412, %v7408
    %v7861 = vpack.c.b16 %v7417, %v7413
    %v7862 = vpack.c.b16 %v7418, %v7414
    %v7863 = vpack.c.b16 %v7419, %v7415
    %v7864 = vpack.c.b16 %v7420, %v7416
    %v7865 = vpack.c.b16 %v7425, %v7421
    %v7866 = vpack.c.b16 %v7426, %v7422
    %v7867 = vpack.c.b16 %v7427, %v7423
    %v7868 = vpack.c.b16 %v7428, %v7424
    %v7869 = vpack.c.b16 %v7433, %v7429
    %v7870 = vpack.c.b16 %v7434, %v7430
    %v7871 = vpack.c.b16 %v7435, %v7431
    %v7872 = vpack.c.b16 %v7436, %v7432
    %v7873 = vpack.c.b16 %v7441, %v7437
    %v7874 = vpack.c.b16 %v7442, %v7438
    %v7875 = vpack.c.b16 %v7443, %v7439
    %v7876 = vpack.c.b16 %v7444, %v7440
    %v7877 = vpack.c.b16 %v7449, %v7445
    %v7878 = vpack.c.b16 %v7450, %v7446
    %v7879 = vpack.c.b16 %v7451, %v7447
    %v7880 = vpack.c.b16 %v7452, %v7448
    %v7881 = vpack.c.b16 %v7457, %v7453
    %v7882 = vpack.c.b16 %v7458, %v7454
    %v7883 = vpack.c.b16 %v7459, %v7455
    %v7884 = vpack.c.b16 %v7460, %v7456
    %v7885 = vpack.c.b16 %v7465, %v7461
    %v7886 = vpack.c.b16 %v7466, %v7462
    %v7887 = vpack.c.b16 %v7467, %v7463
    %v7888 = vpack.c.b16 %v7468, %v7464
    %v7889 = vpack.c.b16 %v7473, %v7469
    %v7890 = vpack.c.b16 %v7474, %v7470
    %v7891 = vpack.c.b16 %v7475, %v7471
    %v7892 = vpack.c.b16 %v7476, %v7472
    %v7893 = vpack.c.b16 %v7481, %v7477
    %v7894 = vpack.c.b16 %v7482, %v7478
    %v7895 = vpack.c.b16 %v7483, %v7479
    %v7896 = vpack.c.b16 %v7484, %v7480
    %v7897 = vpack.c.b16 %v7489, %v7485
    %v7898 = vpack.c.b16 %v7490, %v7486
    %v7899 = vpack.c.b16 %v7491, %v7487
    %v7900 = vpack.c.b16 %v7492, %v7488
    %v7901 = vpack.c.b16 %v7497, %v7493
    %v7902 = vpack.c.b16 %v7498, %v7494
    %v7903 = vpack.c.b16 %v7499, %v7495
    %v7904 = vpack.c.b16 %v7500, %v7496
    %v7905 = vpack.c.b16 %v7505, %v7501
    %v7906 = vpack.c.b16 %v7506, %v7502
    %v7907 = vpack.c.b16 %v7507, %v7503
    %v7908 = vpack.c.b16 %v7508, %v7504
    %v7909 = vpack.c.b16 %v7513, %v7509
    %v7910 = vpack.c.b16 %v7514, %v7510
    %v7911 = vpack.c.b16 %v7515, %v7511
    %v7912 = vpack.c.b16 %v7516, %v7512
    %v7913 = vpack.c.b16 %v7521, %v7517
    %v7914 = vpack.c.b16 %v7522, %v7518
    %v7915 = vpack.c.b16 %v7523, %v7519
    %v7916 = vpack.c.b16 %v7524, %v7520
    %v7917 = vpack.c.b16 %v7529, %v7525
    %v7918 = vpack.c.b16 %v7530, %v7526
    %v7919 = vpack.c.b16 %v7531, %v7527
    %v7920 = vpack.c.b16 %v7532, %v7528
    %v7921 = vpack.c.b16 %v7537, %v7533
    %v7922 = vpack.c.b16 %v7538, %v7534
    %v7923 = vpack.c.b16 %v7539, %v7535
    %v7924 = vpack.c.b16 %v7540, %v7536
    %v7925 = vpack.c.b16 %v7545, %v7541
    %v7926 = vpack.c.b16 %v7546, %v7542
    %v7927 = vpack.c.b16 %v7547, %v7543
    %v7928 = vpack.c.b16 %v7548, %v7544
    %v7929 = vpack.c.b16 %v7553, %v7549
    %v7930 = vpack.c.b16 %v7554, %v7550
    %v7931 = vpack.c.b16 %v7555, %v7551
    %v7932 = vpack.c.b16 %v7556, %v7552
    %v7933 = vpack.c.b16 %v7561, %v7557
    %v7934 = vpack.c.b16 %v7562, %v7558
    %v7935 = vpack.c.b16 %v7563, %v7559
    %v7936 = vpack.c.b16 %v7564, %v7560
    %v7937 = vpack.c.b16 %v7569, %v7565
    %v7938 = vpack.c.b16 %v7570, %v7566
    %v7939 = vpack.c.b16 %v7571, %v7567
    %v7940 = vpack.c.b16 %v7572, %v7568
    %v7941 = vpack.c.b16 %v7577, %v7573
    %v7942 = vpack.c.b16 %v7578, %v7574
    %v7943 = vpack.c.b16 %v7579, %v7575
    %v7944 = vpack.c.b16 %v7580, %v7576
    %v7945 = vpack.c.b16 %v7585, %v7581
    %v7946 = vpack.c.b16 %v7586, %v7582
    %v7947 = vpack.c.b16 %v7587, %v7583
    %v7948 = vpack.c.b16 %v7588, %v7584
    %v7949 = vpack.c.b16 %v7593, %v7589
    %v7950 = vpack.c.b16 %v7594, %v7590
    %v7951 = vpack.c.b16 %v7595, %v7591
    %v7952 = vpack.c.b16 %v7596, %v7592
    %v7953 = vpack.c.b16 %v7601, %v7597
    %v7954 = vpack.c.b16 %v7602, %v7598
    %v7955 = vpack.c.b16 %v7603, %v7599
    %v7956 = vpack.c.b16 %v7604, %v7600
    %v7957 = vpack.c.b16 %v7609, %v7605
    %v7958 = vpack.c.b16 %v7610, %v7606
    %v7959 = vpack.c.b16 %v7611, %v7607
    %v7960 = vpack.c.b16 %v7612, %v7608
    %v7961 = vpack.c.b16 %v7617, %v7613
    %v7962 = vpack.c.b16 %v7618, %v7614
    %v7963 = vpack.c.b16 %v7619, %v7615
    %v7964 = vpack.c.b16 %v7620, %v7616
    %v7965 = vpack.c.b16 %v7625, %v7621
    %v7966 = vpack.c.b16 %v7626, %v7622
    %v7967 = vpack.c.b16 %v7627, %v7623
    %v7968 = vpack.c.b16 %v7628, %v7624
    %v7969 = vpack.c.b16 %v7633, %v7629
    %v7970 = vpack.c.b16 %v7634, %v7630
    %v7971 = vpack.c.b16 %v7635, %v7631
    %v7972 = vpack.c.b16 %v7636, %v7632
    %v7973 = vpack.c.b16 %v7641, %v7637
    %v7974 = vpack.c.b16 %v7642, %v7638
    %v7975 = vpack.c.b16 %v7643, %v7639
    %v7976 = vpack.c.b16 %v7644, %v7640
    %v7977 = vpack.c.b16 %v7649, %v7645
    %v7978 = vpack.c.b16 %v7650, %v7646
    %v7979 = vpack.c.b16 %v7651, %v7647
    %v7980 = vpack.c.b16 %v7652, %v7648
    %v7981 = vpack.c.b16 %v7657, %v7653
    %v7982 = vpack.c.b16 %v7658, %v7654
    %v7983 = vpack.c.b16 %v7659, %v7655
    %v7984 = vpack.c.b16 %v7660, %v7656
    %v7985 = vpack.c.b16 %v7665, %v7661
    %v7986 = vpack.c.b16 %v7666, %v7662
    %v7987 = vpack.c.b16 %v7667, %v7663
    %v7988 = vpack.c.b16 %v7668, %v7664
    %v7989 = vpack.c.b16 %v7673, %v7669
    %v7990 = vpack.c.b16 %v7674, %v7670
    %v7991 = vpack.c.b16 %v7675, %v7671
    %v7992 = vpack.c.b16 %v7676, %v7672
    %v7993 = vpack.c.b16 %v7681, %v7677
    %v7994 = vpack.c.b16 %v7682, %v7678
    %v7995 = vpack.c.b16 %v7683, %v7679
    %v7996 = vpack.c.b16 %v7684, %v7680
    %v7997 = vpack.c.b16 %v7689, %v7685
    %v7998 = vpack.c.b16 %v7690, %v7686
    %v7999 = vpack.c.b16 %v7691, %v7687
    %v8000 = vpack.c.b16 %v7692, %v7688
    %v8001 = vpack.c.b16 %v7697, %v7693
    %v8002 = vpack.c.b16 %v7698, %v7694
    %v8003 = vpack.c.b16 %v7699, %v7695
    %v8004 = vpack.c.b16 %v7700, %v7696
    %v8005 = vpack.c.b16 %v7705, %v7701
    %v8006 = vpack.c.b16 %v7706, %v7702
    %v8007 = vpack.c.b16 %v7707, %v7703
    %v8008 = vpack.c.b16 %v7708, %v7704
    %v8009 = vpack.c.b16 %v7713, %v7709
    %v8010 = vpack.c.b16 %v7714, %v7710
    %v8011 = vpack.c.b16 %v7715, %v7711
    %v8012 = vpack.c.b16 %v7716, %v7712
    %v8013 = vpack.c.b16 %v7721, %v7717
    %v8014 = vpack.c.b16 %v7722, %v7718
    %v8015 = vpack.c.b16 %v7723, %v7719
    %v8016 = vpack.c.b16 %v7724, %v7720
    %v8017 = vpack.c.b16 %v7729, %v7725
    %v8018 = vpack.c.b16 %v7730, %v7726
    %v8019 = vpack.c.b16 %v7731, %v7727
    %v8020 = vpack.c.b16 %v7732, %v7728
    %v8021 = vpack.c.b16 %v7737, %v7733
    %v8022 = vpack.c.b16 %v7738, %v7734
    %v8023 = vpack.c.b16 %v7739, %v7735
    %v8024 = vpack.c.b16 %v7740, %v7736
    %v8025 = vpack.c.b16 %v7745, %v7741
    %v8026 = vpack.c.b16 %v7746, %v7742
    %v8027 = vpack.c.b16 %v7747, %v7743
    %v8028 = vpack.c.b16 %v7748, %v7744
    %v8029 = vpack.c.b16 %v7753, %v7749
    %v8030 = vpack.c.b16 %v7754, %v7750
    %v8031 = vpack.c.b16 %v7755, %v7751
    %v8032 = vpack.c.b16 %v7756, %v7752
    %v8033 = vpack.c.b16 %v7761, %v7757
    %v8034 = vpack.c.b16 %v7762, %v7758
    %v8035 = vpack.c.b16 %v7763, %v7759
    %v8036 = vpack.c.b16 %v7764, %v7760
    %v8037 = vpack.c.b16 %v7769, %v7765
    %v8038 = vpack.c.b16 %v7770, %v7766
    %v8039 = vpack.c.b16 %v7771, %v7767
    %v8040 = vpack.c.b16 %v7772, %v7768
    %v8041 = vpack.c.b16 %v7777, %v7773
    %v8042 = vpack.c.b16 %v7778, %v7774
    %v8043 = vpack.c.b16 %v7779, %v7775
    %v8044 = vpack.c.b16 %v7780, %v7776
    %v8045 = vpack.c.b16 %v7785, %v7781
    %v8046 = vpack.c.b16 %v7786, %v7782
    %v8047 = vpack.c.b16 %v7787, %v7783
    %v8048 = vpack.c.b16 %v7788, %v7784
    %v8049 = vpack.c.b16 %v7793, %v7789
    %v8050 = vpack.c.b16 %v7794, %v7790
    %v8051 = vpack.c.b16 %v7795, %v7791
    %v8052 = vpack.c.b16 %v7796, %v7792
    %8309 = vmatprep.subr.bf16.mxu0 %v7798
    %8310 = vmatpush1.bf16.msra.mxu0 %v7797
    %8311 = vmatprep.subr.bf16.mxu0 %v7802
    %8312 = vmatpush1.bf16.msra.mxu0 %v7801
    %8313 = vmatprep.subr.bf16.mxu0 %v7806
    %8314 = vmatpush1.bf16.msra.mxu0 %v7805
    %8315 = vmatprep.subr.bf16.mxu0 %v7810
    %8316 = vmatpush1.bf16.msra.mxu0 %v7809
    %8317 = vmatprep.subr.bf16.mxu0 %v7814
    %8318 = vmatpush1.bf16.msra.mxu0 %v7813
    %8319 = vmatprep.subr.bf16.mxu0 %v7818
    %8320 = vmatpush1.bf16.msra.mxu0 %v7817
    %8321 = vmatprep.subr.bf16.mxu0 %v7822
    %8322 = vmatpush1.bf16.msra.mxu0 %v7821
    %8323 = vmatprep.subr.bf16.mxu0 %v7826
    %8324 = vmatpush1.bf16.msra.mxu0 %v7825
    %8325 = vmatprep.subr.bf16.mxu0 %v7830
    %8326 = vmatpush1.bf16.msra.mxu0 %v7829
    %8327 = vmatprep.subr.bf16.mxu0 %v7834
    %8328 = vmatpush1.bf16.msra.mxu0 %v7833
    %8329 = vmatprep.subr.bf16.mxu0 %v7838
    %8330 = vmatpush1.bf16.msra.mxu0 %v7837
    %8331 = vmatprep.subr.bf16.mxu0 %v7842
    %8332 = vmatpush1.bf16.msra.mxu0 %v7841
    %8333 = vmatprep.subr.bf16.mxu0 %v7846
    %8334 = vmatpush1.bf16.msra.mxu0 %v7845
    %8335 = vmatprep.subr.bf16.mxu0 %v7850
    %8336 = vmatpush1.bf16.msra.mxu0 %v7849
    %8337 = vmatprep.subr.bf16.mxu0 %v7854
    %8338 = vmatpush1.bf16.msra.mxu0 %v7853
    %8339 = vmatprep.subr.bf16.mxu0 %v7858
    %8340 = vmatpush1.bf16.msra.mxu0 %v7857
    %8341 = vmatprep.mubr.bf16.mxu0 %v6744
    %8342 = vmatmul.mubr.bf16.gmra.mrb[0].mxu0 %v6743
    %v8343 = vpop.f32.mrb[0].mxu0
    %v8344 = vadd.f32 %v7012, %v8343
    %v8345 = vpop.f32.mrb[0].mxu0
    %v8346 = vadd.f32 %v7016, %v8345
    %v8347 = vpop.f32.mrb[0].mxu0
    %v8348 = vpop.f32.mrb[0].mxu0
    %8349 = vdwg.mxu0
    %8350 = vmatprep.subr.bf16.mxu0 %v7862
    %8351 = vmatpush1.bf16.msra.mxu0 %v7861
    %8352 = vmatprep.subr.bf16.mxu0 %v7866
    %8353 = vmatpush1.bf16.msra.mxu0 %v7865
    %8354 = vmatprep.subr.bf16.mxu0 %v7870
    %8355 = vmatpush1.bf16.msra.mxu0 %v7869
    %8356 = vmatprep.subr.bf16.mxu0 %v7874
    %8357 = vmatpush1.bf16.msra.mxu0 %v7873
    %8358 = vmatprep.subr.bf16.mxu0 %v7878
    %8359 = vmatpush1.bf16.msra.mxu0 %v7877
    %8360 = vmatprep.subr.bf16.mxu0 %v7882
    %8361 = vmatpush1.bf16.msra.mxu0 %v7881
    %8362 = vmatprep.subr.bf16.mxu0 %v7886
    %8363 = vmatpush1.bf16.msra.mxu0 %v7885
    %8364 = vmatprep.subr.bf16.mxu0 %v7890
    %8365 = vmatpush1.bf16.msra.mxu0 %v7889
    %8366 = vmatprep.subr.bf16.mxu0 %v7894
    %8367 = vmatpush1.bf16.msra.mxu0 %v7893
    %8368 = vmatprep.subr.bf16.mxu0 %v7898
    %8369 = vmatpush1.bf16.msra.mxu0 %v7897
    %8370 = vmatprep.subr.bf16.mxu0 %v7902
    %8371 = vmatpush1.bf16.msra.mxu0 %v7901
    %8372 = vmatprep.subr.bf16.mxu0 %v7906
    %8373 = vmatpush1.bf16.msra.mxu0 %v7905
    %8374 = vmatprep.subr.bf16.mxu0 %v7910
    %8375 = vmatpush1.bf16.msra.mxu0 %v7909
    %8376 = vmatprep.subr.bf16.mxu0 %v7914
    %8377 = vmatpush1.bf16.msra.mxu0 %v7913
    %8378 = vmatprep.subr.bf16.mxu0 %v7918
    %8379 = vmatpush1.bf16.msra.mxu0 %v7917
    %8380 = vmatprep.subr.bf16.mxu0 %v7922
    %8381 = vmatpush1.bf16.msra.mxu0 %v7921
    %8382 = vmatprep.mubr.bf16.mxu0 %v6746
    %8383 = vmatmul.mubr.bf16.gmra.mrb[0].mxu0 %v6745
    %v8384 = vpop.f32.mrb[0].mxu0
    %v8385 = vadd.f32 %v8344, %v8384
    %v8386 = vpop.f32.mrb[0].mxu0
    %v8387 = vadd.f32 %v8346, %v8386
    %v8388 = vpop.f32.mrb[0].mxu0
    %v8389 = vpop.f32.mrb[0].mxu0
    %8390 = vdwg.mxu0
    %8391 = vmatprep.subr.bf16.mxu0 %v7926
    %8392 = vmatpush1.bf16.msra.mxu0 %v7925
    %8393 = vmatprep.subr.bf16.mxu0 %v7930
    %8394 = vmatpush1.bf16.msra.mxu0 %v7929
    %8395 = vmatprep.subr.bf16.mxu0 %v7934
    %8396 = vmatpush1.bf16.msra.mxu0 %v7933
    %8397 = vmatprep.subr.bf16.mxu0 %v7938
    %8398 = vmatpush1.bf16.msra.mxu0 %v7937
    %8399 = vmatprep.subr.bf16.mxu0 %v7942
    %8400 = vmatpush1.bf16.msra.mxu0 %v7941
    %8401 = vmatprep.subr.bf16.mxu0 %v7946
    %8402 = vmatpush1.bf16.msra.mxu0 %v7945
    %8403 = vmatprep.subr.bf16.mxu0 %v7950
    %8404 = vmatpush1.bf16.msra.mxu0 %v7949
    %8405 = vmatprep.subr.bf16.mxu0 %v7954
    %8406 = vmatpush1.bf16.msra.mxu0 %v7953
    %8407 = vmatprep.subr.bf16.mxu0 %v7958
    %8408 = vmatpush1.bf16.msra.mxu0 %v7957
    %8409 = vmatprep.subr.bf16.mxu0 %v7962
    %8410 = vmatpush1.bf16.msra.mxu0 %v7961
    %8411 = vmatprep.subr.bf16.mxu0 %v7966
    %8412 = vmatpush1.bf16.msra.mxu0 %v7965
    %8413 = vmatprep.subr.bf16.mxu0 %v7970
    %8414 = vmatpush1.bf16.msra.mxu0 %v7969
    %8415 = vmatprep.subr.bf16.mxu0 %v7974
    %8416 = vmatpush1.bf16.msra.mxu0 %v7973
    %8417 = vmatprep.subr.bf16.mxu0 %v7978
    %8418 = vmatpush1.bf16.msra.mxu0 %v7977
    %8419 = vmatprep.subr.bf16.mxu0 %v7982
    %8420 = vmatpush1.bf16.msra.mxu0 %v7981
    %8421 = vmatprep.subr.bf16.mxu0 %v7986
    %8422 = vmatpush1.bf16.msra.mxu0 %v7985
    %8423 = vmatprep.mubr.bf16.mxu0 %v6748
    %8424 = vmatmul.mubr.bf16.gmra.mrb[0].mxu0 %v6747
    %v8425 = vpop.f32.mrb[0].mxu0
    %v8426 = vadd.f32 %v8385, %v8425
    %v8427 = vpop.f32.mrb[0].mxu0
    %v8428 = vadd.f32 %v8387, %v8427
    %v8429 = vpop.f32.mrb[0].mxu0
    %v8430 = vpop.f32.mrb[0].mxu0
    %8431 = vdwg.mxu0
    %8432 = vmatprep.subr.bf16.mxu0 %v7990
    %8433 = vmatpush1.bf16.msra.mxu0 %v7989
    %8434 = vmatprep.subr.bf16.mxu0 %v7994
    %8435 = vmatpush1.bf16.msra.mxu0 %v7993
    %8436 = vmatprep.subr.bf16.mxu0 %v7998
    %8437 = vmatpush1.bf16.msra.mxu0 %v7997
    %8438 = vmatprep.subr.bf16.mxu0 %v8002
    %8439 = vmatpush1.bf16.msra.mxu0 %v8001
    %8440 = vmatprep.subr.bf16.mxu0 %v8006
    %8441 = vmatpush1.bf16.msra.mxu0 %v8005
    %8442 = vmatprep.subr.bf16.mxu0 %v8010
    %8443 = vmatpush1.bf16.msra.mxu0 %v8009
    %8444 = vmatprep.subr.bf16.mxu0 %v8014
    %8445 = vmatpush1.bf16.msra.mxu0 %v8013
    %8446 = vmatprep.subr.bf16.mxu0 %v8018
    %8447 = vmatpush1.bf16.msra.mxu0 %v8017
    %8448 = vmatprep.subr.bf16.mxu0 %v8022
    %8449 = vmatpush1.bf16.msra.mxu0 %v8021
    %8450 = vmatprep.subr.bf16.mxu0 %v8026
    %8451 = vmatpush1.bf16.msra.mxu0 %v8025
    %8452 = vmatprep.subr.bf16.mxu0 %v8030
    %8453 = vmatpush1.bf16.msra.mxu0 %v8029
    %8454 = vmatprep.subr.bf16.mxu0 %v8034
    %8455 = vmatpush1.bf16.msra.mxu0 %v8033
    %8456 = vmatprep.subr.bf16.mxu0 %v8038
    %8457 = vmatpush1.bf16.msra.mxu0 %v8037
    %8458 = vmatprep.subr.bf16.mxu0 %v8042
    %8459 = vmatpush1.bf16.msra.mxu0 %v8041
    %8460 = vmatprep.subr.bf16.mxu0 %v8046
    %8461 = vmatpush1.bf16.msra.mxu0 %v8045
    %8462 = vmatprep.subr.bf16.mxu0 %v8050
    %8463 = vmatpush1.bf16.msra.mxu0 %v8049
    %8464 = vmatprep.mubr.bf16.mxu0 %v6750
    %8465 = vmatmul.mubr.bf16.gmra.mrb[0].mxu0 %v6749
    %v8466 = vpop.f32.mrb[0].mxu0
    %v8467 = vadd.f32 %v8426, %v8466
    %v8468 = vpop.f32.mrb[0].mxu0
    %v8469 = vadd.f32 %v8428, %v8468
    %v8470 = vpop.f32.mrb[0].mxu0
    %v8471 = vpop.f32.mrb[0].mxu0
    %8472 = vdwg.mxu0
    %8473 = vmatprep.subr.bf16.mxu0 %v7800
    %8474 = vmatpush1.bf16.msra.mxu0 %v7799
    %8475 = vmatprep.subr.bf16.mxu0 %v7804
    %8476 = vmatpush1.bf16.msra.mxu0 %v7803
    %8477 = vmatprep.subr.bf16.mxu0 %v7808
    %8478 = vmatpush1.bf16.msra.mxu0 %v7807
    %8479 = vmatprep.subr.bf16.mxu0 %v7812
    %8480 = vmatpush1.bf16.msra.mxu0 %v7811
    %8481 = vmatprep.subr.bf16.mxu0 %v7816
    %8482 = vmatpush1.bf16.msra.mxu0 %v7815
    %8483 = vmatprep.subr.bf16.mxu0 %v7820
    %8484 = vmatpush1.bf16.msra.mxu0 %v7819
    %8485 = vmatprep.subr.bf16.mxu0 %v7824
    %8486 = vmatpush1.bf16.msra.mxu0 %v7823
    %8487 = vmatprep.subr.bf16.mxu0 %v7828
    %8488 = vmatpush1.bf16.msra.mxu0 %v7827
    %8489 = vmatprep.subr.bf16.mxu0 %v7832
    %8490 = vmatpush1.bf16.msra.mxu0 %v7831
    %8491 = vmatprep.subr.bf16.mxu0 %v7836
    %8492 = vmatpush1.bf16.msra.mxu0 %v7835
    %8493 = vmatprep.subr.bf16.mxu0 %v7840
    %8494 = vmatpush1.bf16.msra.mxu0 %v7839
    %8495 = vmatprep.subr.bf16.mxu0 %v7844
    %8496 = vmatpush1.bf16.msra.mxu0 %v7843
    %8497 = vmatprep.subr.bf16.mxu0 %v7848
    %8498 = vmatpush1.bf16.msra.mxu0 %v7847
    %8499 = vmatprep.subr.bf16.mxu0 %v7852
    %8500 = vmatpush1.bf16.msra.mxu0 %v7851
    %8501 = vmatprep.subr.bf16.mxu0 %v7856
    %8502 = vmatpush1.bf16.msra.mxu0 %v7855
    %8503 = vmatprep.subr.bf16.mxu0 %v7860
    %8504 = vmatpush1.bf16.msra.mxu0 %v7859
    %8505 = vmatprep.mubr.bf16.mxu0 %v6744
    %8506 = vmatmul.mubr.bf16.gmra.mrb[0].mxu0 %v6743
    %v8507 = vpop.f32.mrb[0].mxu0
    %v8508 = vadd.f32 %v7020, %v8507
    %v8509 = vpop.f32.mrb[0].mxu0
    %v8510 = vadd.f32 %v7024, %v8509
    %v8511 = vpop.f32.mrb[0].mxu0
    %v8512 = vpop.f32.mrb[0].mxu0
    %8513 = vdwg.mxu0
    %8514 = vmatprep.subr.bf16.mxu0 %v7864
    %8515 = vmatpush1.bf16.msra.mxu0 %v7863
    %8516 = vmatprep.subr.bf16.mxu0 %v7868
    %8517 = vmatpush1.bf16.msra.mxu0 %v7867
    %8518 = vmatprep.subr.bf16.mxu0 %v7872
    %8519 = vmatpush1.bf16.msra.mxu0 %v7871
    %8520 = vmatprep.subr.bf16.mxu0 %v7876
    %8521 = vmatpush1.bf16.msra.mxu0 %v7875
    %8522 = vmatprep.subr.bf16.mxu0 %v7880
    %8523 = vmatpush1.bf16.msra.mxu0 %v7879
    %8524 = vmatprep.subr.bf16.mxu0 %v7884
    %8525 = vmatpush1.bf16.msra.mxu0 %v7883
    %8526 = vmatprep.subr.bf16.mxu0 %v7888
    %8527 = vmatpush1.bf16.msra.mxu0 %v7887
    %8528 = vmatprep.subr.bf16.mxu0 %v7892
    %8529 = vmatpush1.bf16.msra.mxu0 %v7891
    %8530 = vmatprep.subr.bf16.mxu0 %v7896
    %8531 = vmatpush1.bf16.msra.mxu0 %v7895
    %8532 = vmatprep.subr.bf16.mxu0 %v7900
    %8533 = vmatpush1.bf16.msra.mxu0 %v7899
    %8534 = vmatprep.subr.bf16.mxu0 %v7904
    %8535 = vmatpush1.bf16.msra.mxu0 %v7903
    %8536 = vmatprep.subr.bf16.mxu0 %v7908
    %8537 = vmatpush1.bf16.msra.mxu0 %v7907
    %8538 = vmatprep.subr.bf16.mxu0 %v7912
    %8539 = vmatpush1.bf16.msra.mxu0 %v7911
    %8540 = vmatprep.subr.bf16.mxu0 %v7916
    %8541 = vmatpush1.bf16.msra.mxu0 %v7915
    %8542 = vmatprep.subr.bf16.mxu0 %v7920
    %8543 = vmatpush1.bf16.msra.mxu0 %v7919
    %8544 = vmatprep.subr.bf16.mxu0 %v7924
    %8545 = vmatpush1.bf16.msra.mxu0 %v7923
    %8546 = vmatprep.mubr.bf16.mxu0 %v6746
    %8547 = vmatmul.mubr.bf16.gmra.mrb[0].mxu0 %v6745
    %v8548 = vpop.f32.mrb[0].mxu0
    %v8549 = vadd.f32 %v8508, %v8548
    %v8550 = vpop.f32.mrb[0].mxu0
    %v8551 = vadd.f32 %v8510, %v8550
    %v8552 = vpop.f32.mrb[0].mxu0
    %v8553 = vpop.f32.mrb[0].mxu0
    %8554 = vdwg.mxu0
    %8555 = vmatprep.subr.bf16.mxu0 %v7928
    %8556 = vmatpush1.bf16.msra.mxu0 %v7927
    %8557 = vmatprep.subr.bf16.mxu0 %v7932
    %8558 = vmatpush1.bf16.msra.mxu0 %v7931
    %8559 = vmatprep.subr.bf16.mxu0 %v7936
    %8560 = vmatpush1.bf16.msra.mxu0 %v7935
    %8561 = vmatprep.subr.bf16.mxu0 %v7940
    %8562 = vmatpush1.bf16.msra.mxu0 %v7939
    %8563 = vmatprep.subr.bf16.mxu0 %v7944
    %8564 = vmatpush1.bf16.msra.mxu0 %v7943
    %8565 = vmatprep.subr.bf16.mxu0 %v7948
    %8566 = vmatpush1.bf16.msra.mxu0 %v7947
    %8567 = vmatprep.subr.bf16.mxu0 %v7952
    %8568 = vmatpush1.bf16.msra.mxu0 %v7951
    %8569 = vmatprep.subr.bf16.mxu0 %v7956
    %8570 = vmatpush1.bf16.msra.mxu0 %v7955
    %8571 = vmatprep.subr.bf16.mxu0 %v7960
    %8572 = vmatpush1.bf16.msra.mxu0 %v7959
    %8573 = vmatprep.subr.bf16.mxu0 %v7964
    %8574 = vmatpush1.bf16.msra.mxu0 %v7963
    %8575 = vmatprep.subr.bf16.mxu0 %v7968
    %8576 = vmatpush1.bf16.msra.mxu0 %v7967
    %8577 = vmatprep.subr.bf16.mxu0 %v7972
    %8578 = vmatpush1.bf16.msra.mxu0 %v7971
    %8579 = vmatprep.subr.bf16.mxu0 %v7976
    %8580 = vmatpush1.bf16.msra.mxu0 %v7975
    %8581 = vmatprep.subr.bf16.mxu0 %v7980
    %8582 = vmatpush1.bf16.msra.mxu0 %v7979
    %8583 = vmatprep.subr.bf16.mxu0 %v7984
    %8584 = vmatpush1.bf16.msra.mxu0 %v7983
    %8585 = vmatprep.subr.bf16.mxu0 %v7988
    %8586 = vmatpush1.bf16.msra.mxu0 %v7987
    %8587 = vmatprep.mubr.bf16.mxu0 %v6748
    %8588 = vmatmul.mubr.bf16.gmra.mrb[0].mxu0 %v6747
    %v8589 = vpop.f32.mrb[0].mxu0
    %v8590 = vadd.f32 %v8549, %v8589
    %v8591 = vpop.f32.mrb[0].mxu0
    %v8592 = vadd.f32 %v8551, %v8591
    %v8593 = vpop.f32.mrb[0].mxu0
    %v8594 = vpop.f32.mrb[0].mxu0
    %8595 = vdwg.mxu0
    %8596 = vmatprep.subr.bf16.mxu0 %v7992
    %8597 = vmatpush1.bf16.msra.mxu0 %v7991
    %8598 = vmatprep.subr.bf16.mxu0 %v7996
    %8599 = vmatpush1.bf16.msra.mxu0 %v7995
    %8600 = vmatprep.subr.bf16.mxu0 %v8000
    %8601 = vmatpush1.bf16.msra.mxu0 %v7999
    %8602 = vmatprep.subr.bf16.mxu0 %v8004
    %8603 = vmatpush1.bf16.msra.mxu0 %v8003
    %8604 = vmatprep.subr.bf16.mxu0 %v8008
    %8605 = vmatpush1.bf16.msra.mxu0 %v8007
    %8606 = vmatprep.subr.bf16.mxu0 %v8012
    %8607 = vmatpush1.bf16.msra.mxu0 %v8011
    %8608 = vmatprep.subr.bf16.mxu0 %v8016
    %8609 = vmatpush1.bf16.msra.mxu0 %v8015
    %8610 = vmatprep.subr.bf16.mxu0 %v8020
    %8611 = vmatpush1.bf16.msra.mxu0 %v8019
    %8612 = vmatprep.subr.bf16.mxu0 %v8024
    %8613 = vmatpush1.bf16.msra.mxu0 %v8023
    %8614 = vmatprep.subr.bf16.mxu0 %v8028
    %8615 = vmatpush1.bf16.msra.mxu0 %v8027
    %8616 = vmatprep.subr.bf16.mxu0 %v8032
    %8617 = vmatpush1.bf16.msra.mxu0 %v8031
    %8618 = vmatprep.subr.bf16.mxu0 %v8036
    %8619 = vmatpush1.bf16.msra.mxu0 %v8035
    %8620 = vmatprep.subr.bf16.mxu0 %v8040
    %8621 = vmatpush1.bf16.msra.mxu0 %v8039
    %8622 = vmatprep.subr.bf16.mxu0 %v8044
    %8623 = vmatpush1.bf16.msra.mxu0 %v8043
    %8624 = vmatprep.subr.bf16.mxu0 %v8048
    %8625 = vmatpush1.bf16.msra.mxu0 %v8047
    %8626 = vmatprep.subr.bf16.mxu0 %v8052
    %8627 = vmatpush1.bf16.msra.mxu0 %v8051
    %8628 = vmatprep.mubr.bf16.mxu0 %v6750
    %8629 = vmatmul.mubr.bf16.gmra.mrb[0].mxu0 %v6749
    %v8630 = vpop.f32.mrb[0].mxu0
    %v8631 = vadd.f32 %v8590, %v8630
    %v8632 = vpop.f32.mrb[0].mxu0
    %v8633 = vadd.f32 %v8592, %v8632
    %v8634 = vpop.f32.mrb[0].mxu0
    %v8635 = vpop.f32.mrb[0].mxu0
    %8636 = vdwg.mxu0
    %v8637 = vpack.c.bf16 %v8467, %v8467
    %v8638 = vpack.c.bf16 %v8469, %v8469
    %v8639 = vpack.c.bf16 %v8631, %v8631
    %v8640 = vpack.c.bf16 %v8633, %v8633
    %v8641 = vld [vmem:[%s49] sm:$0xff]
    %v8642 = vld [vmem:[%s49 + $0x8] sm:$0xff]
    %v8643 = vld [vmem:[%s49 + $0x10] sm:$0xff]
    %v8644 = vld [vmem:[%s49 + $0x18] sm:$0xff]
    %v8645 = vld [vmem:[%s49 + $0x20] sm:$0xff]
    %v8646 = vld [vmem:[%s49 + $0x28] sm:$0xff]
    %v8647 = vld [vmem:[%s49 + $0x30] sm:$0xff]
    %v8648 = vld [vmem:[%s49 + $0x38] sm:$0xff]
    %v8649 = vld [vmem:[%s49 + $0x40] sm:$0xff]
    %v8650 = vld [vmem:[%s49 + $0x48] sm:$0xff]
    %v8651 = vld [vmem:[%s49 + $0x50] sm:$0xff]
    %v8652 = vld [vmem:[%s49 + $0x58] sm:$0xff]
    %v8653 = vld [vmem:[%s49 + $0x60] sm:$0xff]
    %v8654 = vld [vmem:[%s49 + $0x68] sm:$0xff]
    %v8655 = vld [vmem:[%s49 + $0x70] sm:$0xff]
    %v8656 = vld [vmem:[%s49 + $0x78] sm:$0xff]
    %v8657 = vld [vmem:[%s49 + $0x80] sm:$0xff]
    %v8658 = vld [vmem:[%s49 + $0x88] sm:$0xff]
    %v8659 = vld [vmem:[%s49 + $0x90] sm:$0xff]
    %v8660 = vld [vmem:[%s49 + $0x98] sm:$0xff]
    %v8661 = vld [vmem:[%s49 + $0xa0] sm:$0xff]
    %v8662 = vld [vmem:[%s49 + $0xa8] sm:$0xff]
    %v8663 = vld [vmem:[%s49 + $0xb0] sm:$0xff]
    %v8664 = vld [vmem:[%s49 + $0xb8] sm:$0xff]
    %v8665 = vld [vmem:[%s49 + $0xc0] sm:$0xff]
    %v8666 = vld [vmem:[%s49 + $0xc8] sm:$0xff]
    %v8667 = vld [vmem:[%s49 + $0xd0] sm:$0xff]
    %v8668 = vld [vmem:[%s49 + $0xd8] sm:$0xff]
    %v8669 = vld [vmem:[%s49 + $0xe0] sm:$0xff]
    %v8670 = vld [vmem:[%s49 + $0xe8] sm:$0xff]
    %v8671 = vld [vmem:[%s49 + $0xf0] sm:$0xff]
    %v8672 = vld [vmem:[%s49 + $0xf8] sm:$0xff]
    %v8673 = vld [vmem:[%s49 + $0x100] sm:$0xff]
    %v8674 = vld [vmem:[%s49 + $0x108] sm:$0xff]
    %v8675 = vld [vmem:[%s49 + $0x110] sm:$0xff]
    %v8676 = vld [vmem:[%s49 + $0x118] sm:$0xff]
    %v8677 = vld [vmem:[%s49 + $0x120] sm:$0xff]
    %v8678 = vld [vmem:[%s49 + $0x128] sm:$0xff]
    %v8679 = vld [vmem:[%s49 + $0x130] sm:$0xff]
    %v8680 = vld [vmem:[%s49 + $0x138] sm:$0xff]
    %v8681 = vld [vmem:[%s49 + $0x140] sm:$0xff]
    %v8682 = vld [vmem:[%s49 + $0x148] sm:$0xff]
    %v8683 = vld [vmem:[%s49 + $0x150] sm:$0xff]
    %v8684 = vld [vmem:[%s49 + $0x158] sm:$0xff]
    %v8685 = vld [vmem:[%s49 + $0x160] sm:$0xff]
    %v8686 = vld [vmem:[%s49 + $0x168] sm:$0xff]
    %v8687 = vld [vmem:[%s49 + $0x170] sm:$0xff]
    %v8688 = vld [vmem:[%s49 + $0x178] sm:$0xff]
    %v8689 = vld [vmem:[%s49 + $0x180] sm:$0xff]
    %v8690 = vld [vmem:[%s49 + $0x188] sm:$0xff]
    %v8691 = vld [vmem:[%s49 + $0x190] sm:$0xff]
    %v8692 = vld [vmem:[%s49 + $0x198] sm:$0xff]
    %v8693 = vld [vmem:[%s49 + $0x1a0] sm:$0xff]
    %v8694 = vld [vmem:[%s49 + $0x1a8] sm:$0xff]
    %v8695 = vld [vmem:[%s49 + $0x1b0] sm:$0xff]
    %v8696 = vld [vmem:[%s49 + $0x1b8] sm:$0xff]
    %v8697 = vld [vmem:[%s49 + $0x1c0] sm:$0xff]
    %v8698 = vld [vmem:[%s49 + $0x1c8] sm:$0xff]
    %v8699 = vld [vmem:[%s49 + $0x1d0] sm:$0xff]
    %v8700 = vld [vmem:[%s49 + $0x1d8] sm:$0xff]
    %v8701 = vld [vmem:[%s49 + $0x1e0] sm:$0xff]
    %v8702 = vld [vmem:[%s49 + $0x1e8] sm:$0xff]
    %v8703 = vld [vmem:[%s49 + $0x1f0] sm:$0xff]
    %v8704 = vld [vmem:[%s49 + $0x1f8] sm:$0xff]
    %v8705 = vld [vmem:[%s49 + $0x200] sm:$0xff]
    %v8706 = vld [vmem:[%s49 + $0x208] sm:$0xff]
    %v8707 = vld [vmem:[%s49 + $0x210] sm:$0xff]
    %v8708 = vld [vmem:[%s49 + $0x218] sm:$0xff]
    %v8709 = vld [vmem:[%s49 + $0x220] sm:$0xff]
    %v8710 = vld [vmem:[%s49 + $0x228] sm:$0xff]
    %v8711 = vld [vmem:[%s49 + $0x230] sm:$0xff]
    %v8712 = vld [vmem:[%s49 + $0x238] sm:$0xff]
    %v8713 = vld [vmem:[%s49 + $0x240] sm:$0xff]
    %v8714 = vld [vmem:[%s49 + $0x248] sm:$0xff]
    %v8715 = vld [vmem:[%s49 + $0x250] sm:$0xff]
    %v8716 = vld [vmem:[%s49 + $0x258] sm:$0xff]
    %v8717 = vld [vmem:[%s49 + $0x260] sm:$0xff]
    %v8718 = vld [vmem:[%s49 + $0x268] sm:$0xff]
    %v8719 = vld [vmem:[%s49 + $0x270] sm:$0xff]
    %v8720 = vld [vmem:[%s49 + $0x278] sm:$0xff]
    %v8721 = vld [vmem:[%s49 + $0x280] sm:$0xff]
    %v8722 = vld [vmem:[%s49 + $0x288] sm:$0xff]
    %v8723 = vld [vmem:[%s49 + $0x290] sm:$0xff]
    %v8724 = vld [vmem:[%s49 + $0x298] sm:$0xff]
    %v8725 = vld [vmem:[%s49 + $0x2a0] sm:$0xff]
    %v8726 = vld [vmem:[%s49 + $0x2a8] sm:$0xff]
    %v8727 = vld [vmem:[%s49 + $0x2b0] sm:$0xff]
    %v8728 = vld [vmem:[%s49 + $0x2b8] sm:$0xff]
    %v8729 = vld [vmem:[%s49 + $0x2c0] sm:$0xff]
    %v8730 = vld [vmem:[%s49 + $0x2c8] sm:$0xff]
    %v8731 = vld [vmem:[%s49 + $0x2d0] sm:$0xff]
    %v8732 = vld [vmem:[%s49 + $0x2d8] sm:$0xff]
    %v8733 = vld [vmem:[%s49 + $0x2e0] sm:$0xff]
    %v8734 = vld [vmem:[%s49 + $0x2e8] sm:$0xff]
    %v8735 = vld [vmem:[%s49 + $0x2f0] sm:$0xff]
    %v8736 = vld [vmem:[%s49 + $0x2f8] sm:$0xff]
    %v8737 = vld [vmem:[%s49 + $0x300] sm:$0xff]
    %v8738 = vld [vmem:[%s49 + $0x308] sm:$0xff]
    %v8739 = vld [vmem:[%s49 + $0x310] sm:$0xff]
    %v8740 = vld [vmem:[%s49 + $0x318] sm:$0xff]
    %v8741 = vld [vmem:[%s49 + $0x320] sm:$0xff]
    %v8742 = vld [vmem:[%s49 + $0x328] sm:$0xff]
    %v8743 = vld [vmem:[%s49 + $0x330] sm:$0xff]
    %v8744 = vld [vmem:[%s49 + $0x338] sm:$0xff]
    %v8745 = vld [vmem:[%s49 + $0x340] sm:$0xff]
    %v8746 = vld [vmem:[%s49 + $0x348] sm:$0xff]
    %v8747 = vld [vmem:[%s49 + $0x350] sm:$0xff]
    %v8748 = vld [vmem:[%s49 + $0x358] sm:$0xff]
    %v8749 = vld [vmem:[%s49 + $0x360] sm:$0xff]
    %v8750 = vld [vmem:[%s49 + $0x368] sm:$0xff]
    %v8751 = vld [vmem:[%s49 + $0x370] sm:$0xff]
    %v8752 = vld [vmem:[%s49 + $0x378] sm:$0xff]
    %v8753 = vld [vmem:[%s49 + $0x380] sm:$0xff]
    %v8754 = vld [vmem:[%s49 + $0x388] sm:$0xff]
    %v8755 = vld [vmem:[%s49 + $0x390] sm:$0xff]
    %v8756 = vld [vmem:[%s49 + $0x398] sm:$0xff]
    %v8757 = vld [vmem:[%s49 + $0x3a0] sm:$0xff]
    %v8758 = vld [vmem:[%s49 + $0x3a8] sm:$0xff]
    %v8759 = vld [vmem:[%s49 + $0x3b0] sm:$0xff]
    %v8760 = vld [vmem:[%s49 + $0x3b8] sm:$0xff]
    %v8761 = vld [vmem:[%s49 + $0x3c0] sm:$0xff]
    %v8762 = vld [vmem:[%s49 + $0x3c8] sm:$0xff]
    %v8763 = vld [vmem:[%s49 + $0x3d0] sm:$0xff]
    %v8764 = vld [vmem:[%s49 + $0x3d8] sm:$0xff]
    %v8765 = vld [vmem:[%s49 + $0x3e0] sm:$0xff]
    %v8766 = vld [vmem:[%s49 + $0x3e8] sm:$0xff]
    %v8767 = vld [vmem:[%s49 + $0x3f0] sm:$0xff]
    %v8768 = vld [vmem:[%s49 + $0x3f8] sm:$0xff]
    %v8769 = vld [vmem:[%s51] sm:$0xff]
    %v8770 = vld [vmem:[%s51 + $0x8] sm:$0xff]
    %v8771 = vld [vmem:[%s51 + $0x10] sm:$0xff]
    %v8772 = vld [vmem:[%s51 + $0x18] sm:$0xff]
    %v8773 = vld [vmem:[%s51 + $0x20] sm:$0xff]
    %v8774 = vld [vmem:[%s51 + $0x28] sm:$0xff]
    %v8775 = vld [vmem:[%s51 + $0x30] sm:$0xff]
    %v8776 = vld [vmem:[%s51 + $0x38] sm:$0xff]
    %v8777 = vld [vmem:[%s51 + $0x40] sm:$0xff]
    %v8778 = vld [vmem:[%s51 + $0x48] sm:$0xff]
    %v8779 = vld [vmem:[%s51 + $0x50] sm:$0xff]
    %v8780 = vld [vmem:[%s51 + $0x58] sm:$0xff]
    %v8781 = vld [vmem:[%s51 + $0x60] sm:$0xff]
    %v8782 = vld [vmem:[%s51 + $0x68] sm:$0xff]
    %v8783 = vld [vmem:[%s51 + $0x70] sm:$0xff]
    %v8784 = vld [vmem:[%s51 + $0x78] sm:$0xff]
    %v8785 = vld [vmem:[%s51 + $0x80] sm:$0xff]
    %v8786 = vld [vmem:[%s51 + $0x88] sm:$0xff]
    %v8787 = vld [vmem:[%s51 + $0x90] sm:$0xff]
    %v8788 = vld [vmem:[%s51 + $0x98] sm:$0xff]
    %v8789 = vld [vmem:[%s51 + $0xa0] sm:$0xff]
    %v8790 = vld [vmem:[%s51 + $0xa8] sm:$0xff]
    %v8791 = vld [vmem:[%s51 + $0xb0] sm:$0xff]
    %v8792 = vld [vmem:[%s51 + $0xb8] sm:$0xff]
    %v8793 = vld [vmem:[%s51 + $0xc0] sm:$0xff]
    %v8794 = vld [vmem:[%s51 + $0xc8] sm:$0xff]
    %v8795 = vld [vmem:[%s51 + $0xd0] sm:$0xff]
    %v8796 = vld [vmem:[%s51 + $0xd8] sm:$0xff]
    %v8797 = vld [vmem:[%s51 + $0xe0] sm:$0xff]
    %v8798 = vld [vmem:[%s51 + $0xe8] sm:$0xff]
    %v8799 = vld [vmem:[%s51 + $0xf0] sm:$0xff]
    %v8800 = vld [vmem:[%s51 + $0xf8] sm:$0xff]
    %v8801 = vld [vmem:[%s51 + $0x100] sm:$0xff]
    %v8802 = vld [vmem:[%s51 + $0x108] sm:$0xff]
    %v8803 = vld [vmem:[%s51 + $0x110] sm:$0xff]
    %v8804 = vld [vmem:[%s51 + $0x118] sm:$0xff]
    %v8805 = vld [vmem:[%s51 + $0x120] sm:$0xff]
    %v8806 = vld [vmem:[%s51 + $0x128] sm:$0xff]
    %v8807 = vld [vmem:[%s51 + $0x130] sm:$0xff]
    %v8808 = vld [vmem:[%s51 + $0x138] sm:$0xff]
    %v8809 = vld [vmem:[%s51 + $0x140] sm:$0xff]
    %v8810 = vld [vmem:[%s51 + $0x148] sm:$0xff]
    %v8811 = vld [vmem:[%s51 + $0x150] sm:$0xff]
    %v8812 = vld [vmem:[%s51 + $0x158] sm:$0xff]
    %v8813 = vld [vmem:[%s51 + $0x160] sm:$0xff]
    %v8814 = vld [vmem:[%s51 + $0x168] sm:$0xff]
    %v8815 = vld [vmem:[%s51 + $0x170] sm:$0xff]
    %v8816 = vld [vmem:[%s51 + $0x178] sm:$0xff]
    %v8817 = vld [vmem:[%s51 + $0x180] sm:$0xff]
    %v8818 = vld [vmem:[%s51 + $0x188] sm:$0xff]
    %v8819 = vld [vmem:[%s51 + $0x190] sm:$0xff]
    %v8820 = vld [vmem:[%s51 + $0x198] sm:$0xff]
    %v8821 = vld [vmem:[%s51 + $0x1a0] sm:$0xff]
    %v8822 = vld [vmem:[%s51 + $0x1a8] sm:$0xff]
    %v8823 = vld [vmem:[%s51 + $0x1b0] sm:$0xff]
    %v8824 = vld [vmem:[%s51 + $0x1b8] sm:$0xff]
    %v8825 = vld [vmem:[%s51 + $0x1c0] sm:$0xff]
    %v8826 = vld [vmem:[%s51 + $0x1c8] sm:$0xff]
    %v8827 = vld [vmem:[%s51 + $0x1d0] sm:$0xff]
    %v8828 = vld [vmem:[%s51 + $0x1d8] sm:$0xff]
    %v8829 = vld [vmem:[%s51 + $0x1e0] sm:$0xff]
    %v8830 = vld [vmem:[%s51 + $0x1e8] sm:$0xff]
    %v8831 = vld [vmem:[%s51 + $0x1f0] sm:$0xff]
    %v8832 = vld [vmem:[%s51 + $0x1f8] sm:$0xff]
    %v8833 = vld [vmem:[%s51 + $0x200] sm:$0xff]
    %v8834 = vld [vmem:[%s51 + $0x208] sm:$0xff]
    %v8835 = vld [vmem:[%s51 + $0x210] sm:$0xff]
    %v8836 = vld [vmem:[%s51 + $0x218] sm:$0xff]
    %v8837 = vld [vmem:[%s51 + $0x220] sm:$0xff]
    %v8838 = vld [vmem:[%s51 + $0x228] sm:$0xff]
    %v8839 = vld [vmem:[%s51 + $0x230] sm:$0xff]
    %v8840 = vld [vmem:[%s51 + $0x238] sm:$0xff]
    %v8841 = vld [vmem:[%s51 + $0x240] sm:$0xff]
    %v8842 = vld [vmem:[%s51 + $0x248] sm:$0xff]
    %v8843 = vld [vmem:[%s51 + $0x250] sm:$0xff]
    %v8844 = vld [vmem:[%s51 + $0x258] sm:$0xff]
    %v8845 = vld [vmem:[%s51 + $0x260] sm:$0xff]
    %v8846 = vld [vmem:[%s51 + $0x268] sm:$0xff]
    %v8847 = vld [vmem:[%s51 + $0x270] sm:$0xff]
    %v8848 = vld [vmem:[%s51 + $0x278] sm:$0xff]
    %v8849 = vld [vmem:[%s51 + $0x280] sm:$0xff]
    %v8850 = vld [vmem:[%s51 + $0x288] sm:$0xff]
    %v8851 = vld [vmem:[%s51 + $0x290] sm:$0xff]
    %v8852 = vld [vmem:[%s51 + $0x298] sm:$0xff]
    %v8853 = vld [vmem:[%s51 + $0x2a0] sm:$0xff]
    %v8854 = vld [vmem:[%s51 + $0x2a8] sm:$0xff]
    %v8855 = vld [vmem:[%s51 + $0x2b0] sm:$0xff]
    %v8856 = vld [vmem:[%s51 + $0x2b8] sm:$0xff]
    %v8857 = vld [vmem:[%s51 + $0x2c0] sm:$0xff]
    %v8858 = vld [vmem:[%s51 + $0x2c8] sm:$0xff]
    %v8859 = vld [vmem:[%s51 + $0x2d0] sm:$0xff]
    %v8860 = vld [vmem:[%s51 + $0x2d8] sm:$0xff]
    %v8861 = vld [vmem:[%s51 + $0x2e0] sm:$0xff]
    %v8862 = vld [vmem:[%s51 + $0x2e8] sm:$0xff]
    %v8863 = vld [vmem:[%s51 + $0x2f0] sm:$0xff]
    %v8864 = vld [vmem:[%s51 + $0x2f8] sm:$0xff]
    %v8865 = vld [vmem:[%s51 + $0x300] sm:$0xff]
    %v8866 = vld [vmem:[%s51 + $0x308] sm:$0xff]
    %v8867 = vld [vmem:[%s51 + $0x310] sm:$0xff]
    %v8868 = vld [vmem:[%s51 + $0x318] sm:$0xff]
    %v8869 = vld [vmem:[%s51 + $0x320] sm:$0xff]
    %v8870 = vld [vmem:[%s51 + $0x328] sm:$0xff]
    %v8871 = vld [vmem:[%s51 + $0x330] sm:$0xff]
    %v8872 = vld [vmem:[%s51 + $0x338] sm:$0xff]
    %v8873 = vld [vmem:[%s51 + $0x340] sm:$0xff]
    %v8874 = vld [vmem:[%s51 + $0x348] sm:$0xff]
    %v8875 = vld [vmem:[%s51 + $0x350] sm:$0xff]
    %v8876 = vld [vmem:[%s51 + $0x358] sm:$0xff]
    %v8877 = vld [vmem:[%s51 + $0x360] sm:$0xff]
    %v8878 = vld [vmem:[%s51 + $0x368] sm:$0xff]
    %v8879 = vld [vmem:[%s51 + $0x370] sm:$0xff]
    %v8880 = vld [vmem:[%s51 + $0x378] sm:$0xff]
    %v8881 = vld [vmem:[%s51 + $0x380] sm:$0xff]
    %v8882 = vld [vmem:[%s51 + $0x388] sm:$0xff]
    %v8883 = vld [vmem:[%s51 + $0x390] sm:$0xff]
    %v8884 = vld [vmem:[%s51 + $0x398] sm:$0xff]
    %v8885 = vld [vmem:[%s51 + $0x3a0] sm:$0xff]
    %v8886 = vld [vmem:[%s51 + $0x3a8] sm:$0xff]
    %v8887 = vld [vmem:[%s51 + $0x3b0] sm:$0xff]
    %v8888 = vld [vmem:[%s51 + $0x3b8] sm:$0xff]
    %v8889 = vld [vmem:[%s51 + $0x3c0] sm:$0xff]
    %v8890 = vld [vmem:[%s51 + $0x3c8] sm:$0xff]
    %v8891 = vld [vmem:[%s51 + $0x3d0] sm:$0xff]
    %v8892 = vld [vmem:[%s51 + $0x3d8] sm:$0xff]
    %v8893 = vld [vmem:[%s51 + $0x3e0] sm:$0xff]
    %v8894 = vld [vmem:[%s51 + $0x3e8] sm:$0xff]
    %v8895 = vld [vmem:[%s51 + $0x3f0] sm:$0xff]
    %v8896 = vld [vmem:[%s51 + $0x3f8] sm:$0xff]
    %v8901 = vrot.slane %v8637, 1
    %v8902 = vrot.slane %v8638, 1
    %v8903 = vrot.slane %v8639, 1
    %v8904 = vrot.slane %v8640, 1
    %v9037 = vunpack.c.l.b16 %v8769
    %v9038 = vunpack.c.h.b16 %v8769
    %v9039 = vunpack.c.l.b16 %v8770
    %v9040 = vunpack.c.h.b16 %v8770
    %v9041 = vunpack.c.l.b16 %v8771
    %v9042 = vunpack.c.h.b16 %v8771
    %v9043 = vunpack.c.l.b16 %v8772
    %v9044 = vunpack.c.h.b16 %v8772
    %v9045 = vunpack.c.l.b16 %v8773
    %v9046 = vunpack.c.h.b16 %v8773
    %v9047 = vunpack.c.l.b16 %v8774
    %v9048 = vunpack.c.h.b16 %v8774
    %v9049 = vunpack.c.l.b16 %v8775
    %v9050 = vunpack.c.h.b16 %v8775
    %v9051 = vunpack.c.l.b16 %v8776
    %v9052 = vunpack.c.h.b16 %v8776
    %v9053 = vunpack.c.l.b16 %v8777
    %v9054 = vunpack.c.h.b16 %v8777
    %v9055 = vunpack.c.l.b16 %v8778
    %v9056 = vunpack.c.h.b16 %v8778
    %v9057 = vunpack.c.l.b16 %v8779
    %v9058 = vunpack.c.h.b16 %v8779
    %v9059 = vunpack.c.l.b16 %v8780
    %v9060 = vunpack.c.h.b16 %v8780
    %v9061 = vunpack.c.l.b16 %v8781
    %v9062 = vunpack.c.h.b16 %v8781
    %v9063 = vunpack.c.l.b16 %v8782
    %v9064 = vunpack.c.h.b16 %v8782
    %v9065 = vunpack.c.l.b16 %v8783
    %v9066 = vunpack.c.h.b16 %v8783
    %v9067 = vunpack.c.l.b16 %v8784
    %v9068 = vunpack.c.h.b16 %v8784
    %v9069 = vunpack.c.l.b16 %v8785
    %v9070 = vunpack.c.h.b16 %v8785
    %v9071 = vunpack.c.l.b16 %v8786
    %v9072 = vunpack.c.h.b16 %v8786
    %v9073 = vunpack.c.l.b16 %v8787
    %v9074 = vunpack.c.h.b16 %v8787
    %v9075 = vunpack.c.l.b16 %v8788
    %v9076 = vunpack.c.h.b16 %v8788
    %v9077 = vunpack.c.l.b16 %v8789
    %v9078 = vunpack.c.h.b16 %v8789
    %v9079 = vunpack.c.l.b16 %v8790
    %v9080 = vunpack.c.h.b16 %v8790
    %v9081 = vunpack.c.l.b16 %v8791
    %v9082 = vunpack.c.h.b16 %v8791
    %v9083 = vunpack.c.l.b16 %v8792
    %v9084 = vunpack.c.h.b16 %v8792
    %v9085 = vunpack.c.l.b16 %v8793
    %v9086 = vunpack.c.h.b16 %v8793
    %v9087 = vunpack.c.l.b16 %v8794
    %v9088 = vunpack.c.h.b16 %v8794
    %v9089 = vunpack.c.l.b16 %v8795
    %v9090 = vunpack.c.h.b16 %v8795
    %v9091 = vunpack.c.l.b16 %v8796
    %v9092 = vunpack.c.h.b16 %v8796
    %v9093 = vunpack.c.l.b16 %v8797
    %v9094 = vunpack.c.h.b16 %v8797
    %v9095 = vunpack.c.l.b16 %v8798
    %v9096 = vunpack.c.h.b16 %v8798
    %v9097 = vunpack.c.l.b16 %v8799
    %v9098 = vunpack.c.h.b16 %v8799
    %v9099 = vunpack.c.l.b16 %v8800
    %v9100 = vunpack.c.h.b16 %v8800
    %v9101 = vunpack.c.l.b16 %v8801
    %v9102 = vunpack.c.h.b16 %v8801
    %v9103 = vunpack.c.l.b16 %v8802
    %v9104 = vunpack.c.h.b16 %v8802
    %v9105 = vunpack.c.l.b16 %v8803
    %v9106 = vunpack.c.h.b16 %v8803
    %v9107 = vunpack.c.l.b16 %v8804
    %v9108 = vunpack.c.h.b16 %v8804
    %v9109 = vunpack.c.l.b16 %v8805
    %v9110 = vunpack.c.h.b16 %v8805
    %v9111 = vunpack.c.l.b16 %v8806
    %v9112 = vunpack.c.h.b16 %v8806
    %v9113 = vunpack.c.l.b16 %v8807
    %v9114 = vunpack.c.h.b16 %v8807
    %v9115 = vunpack.c.l.b16 %v8808
    %v9116 = vunpack.c.h.b16 %v8808
    %v9117 = vunpack.c.l.b16 %v8809
    %v9118 = vunpack.c.h.b16 %v8809
    %v9119 = vunpack.c.l.b16 %v8810
    %v9120 = vunpack.c.h.b16 %v8810
    %v9121 = vunpack.c.l.b16 %v8811
    %v9122 = vunpack.c.h.b16 %v8811
    %v9123 = vunpack.c.l.b16 %v8812
    %v9124 = vunpack.c.h.b16 %v8812
    %v9125 = vunpack.c.l.b16 %v8813
    %v9126 = vunpack.c.h.b16 %v8813
    %v9127 = vunpack.c.l.b16 %v8814
    %v9128 = vunpack.c.h.b16 %v8814
    %v9129 = vunpack.c.l.b16 %v8815
    %v9130 = vunpack.c.h.b16 %v8815
    %v9131 = vunpack.c.l.b16 %v8816
    %v9132 = vunpack.c.h.b16 %v8816
    %v9133 = vunpack.c.l.b16 %v8817
    %v9134 = vunpack.c.h.b16 %v8817
    %v9135 = vunpack.c.l.b16 %v8818
    %v9136 = vunpack.c.h.b16 %v8818
    %v9137 = vunpack.c.l.b16 %v8819
    %v9138 = vunpack.c.h.b16 %v8819
    %v9139 = vunpack.c.l.b16 %v8820
    %v9140 = vunpack.c.h.b16 %v8820
    %v9141 = vunpack.c.l.b16 %v8821
    %v9142 = vunpack.c.h.b16 %v8821
    %v9143 = vunpack.c.l.b16 %v8822
    %v9144 = vunpack.c.h.b16 %v8822
    %v9145 = vunpack.c.l.b16 %v8823
    %v9146 = vunpack.c.h.b16 %v8823
    %v9147 = vunpack.c.l.b16 %v8824
    %v9148 = vunpack.c.h.b16 %v8824
    %v9149 = vunpack.c.l.b16 %v8825
    %v9150 = vunpack.c.h.b16 %v8825
    %v9151 = vunpack.c.l.b16 %v8826
    %v9152 = vunpack.c.h.b16 %v8826
    %v9153 = vunpack.c.l.b16 %v8827
    %v9154 = vunpack.c.h.b16 %v8827
    %v9155 = vunpack.c.l.b16 %v8828
    %v9156 = vunpack.c.h.b16 %v8828
    %v9157 = vunpack.c.l.b16 %v8829
    %v9158 = vunpack.c.h.b16 %v8829
    %v9159 = vunpack.c.l.b16 %v8830
    %v9160 = vunpack.c.h.b16 %v8830
    %v9161 = vunpack.c.l.b16 %v8831
    %v9162 = vunpack.c.h.b16 %v8831
    %v9163 = vunpack.c.l.b16 %v8832
    %v9164 = vunpack.c.h.b16 %v8832
    %v9165 = vunpack.c.l.b16 %v8833
    %v9166 = vunpack.c.h.b16 %v8833
    %v9167 = vunpack.c.l.b16 %v8834
    %v9168 = vunpack.c.h.b16 %v8834
    %v9169 = vunpack.c.l.b16 %v8835
    %v9170 = vunpack.c.h.b16 %v8835
    %v9171 = vunpack.c.l.b16 %v8836
    %v9172 = vunpack.c.h.b16 %v8836
    %v9173 = vunpack.c.l.b16 %v8837
    %v9174 = vunpack.c.h.b16 %v8837
    %v9175 = vunpack.c.l.b16 %v8838
    %v9176 = vunpack.c.h.b16 %v8838
    %v9177 = vunpack.c.l.b16 %v8839
    %v9178 = vunpack.c.h.b16 %v8839
    %v9179 = vunpack.c.l.b16 %v8840
    %v9180 = vunpack.c.h.b16 %v8840
    %v9181 = vunpack.c.l.b16 %v8841
    %v9182 = vunpack.c.h.b16 %v8841
    %v9183 = vunpack.c.l.b16 %v8842
    %v9184 = vunpack.c.h.b16 %v8842
    %v9185 = vunpack.c.l.b16 %v8843
    %v9186 = vunpack.c.h.b16 %v8843
    %v9187 = vunpack.c.l.b16 %v8844
    %v9188 = vunpack.c.h.b16 %v8844
    %v9189 = vunpack.c.l.b16 %v8845
    %v9190 = vunpack.c.h.b16 %v8845
    %v9191 = vunpack.c.l.b16 %v8846
    %v9192 = vunpack.c.h.b16 %v8846
    %v9193 = vunpack.c.l.b16 %v8847
    %v9194 = vunpack.c.h.b16 %v8847
    %v9195 = vunpack.c.l.b16 %v8848
    %v9196 = vunpack.c.h.b16 %v8848
    %v9197 = vunpack.c.l.b16 %v8849
    %v9198 = vunpack.c.h.b16 %v8849
    %v9199 = vunpack.c.l.b16 %v8850
    %v9200 = vunpack.c.h.b16 %v8850
    %v9201 = vunpack.c.l.b16 %v8851
    %v9202 = vunpack.c.h.b16 %v8851
    %v9203 = vunpack.c.l.b16 %v8852
    %v9204 = vunpack.c.h.b16 %v8852
    %v9205 = vunpack.c.l.b16 %v8853
    %v9206 = vunpack.c.h.b16 %v8853
    %v9207 = vunpack.c.l.b16 %v8854
    %v9208 = vunpack.c.h.b16 %v8854
    %v9209 = vunpack.c.l.b16 %v8855
    %v9210 = vunpack.c.h.b16 %v8855
    %v9211 = vunpack.c.l.b16 %v8856
    %v9212 = vunpack.c.h.b16 %v8856
    %v9213 = vunpack.c.l.b16 %v8857
    %v9214 = vunpack.c.h.b16 %v8857
    %v9215 = vunpack.c.l.b16 %v8858
    %v9216 = vunpack.c.h.b16 %v8858
    %v9217 = vunpack.c.l.b16 %v8859
    %v9218 = vunpack.c.h.b16 %v8859
    %v9219 = vunpack.c.l.b16 %v8860
    %v9220 = vunpack.c.h.b16 %v8860
    %v9221 = vunpack.c.l.b16 %v8861
    %v9222 = vunpack.c.h.b16 %v8861
    %v9223 = vunpack.c.l.b16 %v8862
    %v9224 = vunpack.c.h.b16 %v8862
    %v9225 = vunpack.c.l.b16 %v8863
    %v9226 = vunpack.c.h.b16 %v8863
    %v9227 = vunpack.c.l.b16 %v8864
    %v9228 = vunpack.c.h.b16 %v8864
    %v9229 = vunpack.c.l.b16 %v8865
    %v9230 = vunpack.c.h.b16 %v8865
    %v9231 = vunpack.c.l.b16 %v8866
    %v9232 = vunpack.c.h.b16 %v8866
    %v9233 = vunpack.c.l.b16 %v8867
    %v9234 = vunpack.c.h.b16 %v8867
    %v9235 = vunpack.c.l.b16 %v8868
    %v9236 = vunpack.c.h.b16 %v8868
    %v9237 = vunpack.c.l.b16 %v8869
    %v9238 = vunpack.c.h.b16 %v8869
    %v9239 = vunpack.c.l.b16 %v8870
    %v9240 = vunpack.c.h.b16 %v8870
    %v9241 = vunpack.c.l.b16 %v8871
    %v9242 = vunpack.c.h.b16 %v8871
    %v9243 = vunpack.c.l.b16 %v8872
    %v9244 = vunpack.c.h.b16 %v8872
    %v9245 = vunpack.c.l.b16 %v8873
    %v9246 = vunpack.c.h.b16 %v8873
    %v9247 = vunpack.c.l.b16 %v8874
    %v9248 = vunpack.c.h.b16 %v8874
    %v9249 = vunpack.c.l.b16 %v8875
    %v9250 = vunpack.c.h.b16 %v8875
    %v9251 = vunpack.c.l.b16 %v8876
    %v9252 = vunpack.c.h.b16 %v8876
    %v9253 = vunpack.c.l.b16 %v8877
    %v9254 = vunpack.c.h.b16 %v8877
    %v9255 = vunpack.c.l.b16 %v8878
    %v9256 = vunpack.c.h.b16 %v8878
    %v9257 = vunpack.c.l.b16 %v8879
    %v9258 = vunpack.c.h.b16 %v8879
    %v9259 = vunpack.c.l.b16 %v8880
    %v9260 = vunpack.c.h.b16 %v8880
    %v9261 = vunpack.c.l.b16 %v8881
    %v9262 = vunpack.c.h.b16 %v8881
    %v9263 = vunpack.c.l.b16 %v8882
    %v9264 = vunpack.c.h.b16 %v8882
    %v9265 = vunpack.c.l.b16 %v8883
    %v9266 = vunpack.c.h.b16 %v8883
    %v9267 = vunpack.c.l.b16 %v8884
    %v9268 = vunpack.c.h.b16 %v8884
    %v9269 = vunpack.c.l.b16 %v8885
    %v9270 = vunpack.c.h.b16 %v8885
    %v9271 = vunpack.c.l.b16 %v8886
    %v9272 = vunpack.c.h.b16 %v8886
    %v9273 = vunpack.c.l.b16 %v8887
    %v9274 = vunpack.c.h.b16 %v8887
    %v9275 = vunpack.c.l.b16 %v8888
    %v9276 = vunpack.c.h.b16 %v8888
    %v9277 = vunpack.c.l.b16 %v8889
    %v9278 = vunpack.c.h.b16 %v8889
    %v9279 = vunpack.c.l.b16 %v8890
    %v9280 = vunpack.c.h.b16 %v8890
    %v9281 = vunpack.c.l.b16 %v8891
    %v9282 = vunpack.c.h.b16 %v8891
    %v9283 = vunpack.c.l.b16 %v8892
    %v9284 = vunpack.c.h.b16 %v8892
    %v9285 = vunpack.c.l.b16 %v8893
    %v9286 = vunpack.c.h.b16 %v8893
    %v9287 = vunpack.c.l.b16 %v8894
    %v9288 = vunpack.c.h.b16 %v8894
    %v9289 = vunpack.c.l.b16 %v8895
    %v9290 = vunpack.c.h.b16 %v8895
    %v9291 = vunpack.c.l.b16 %v8896
    %v9292 = vunpack.c.h.b16 %v8896
    %v9293 = vpack.c.b16 %v9041, %v9037
    %v9294 = vpack.c.b16 %v9042, %v9038
    %v9295 = vpack.c.b16 %v9043, %v9039
    %v9296 = vpack.c.b16 %v9044, %v9040
    %v9297 = vpack.c.b16 %v9049, %v9045
    %v9298 = vpack.c.b16 %v9050, %v9046
    %v9299 = vpack.c.b16 %v9051, %v9047
    %v9300 = vpack.c.b16 %v9052, %v9048
    %v9301 = vpack.c.b16 %v9057, %v9053
    %v9302 = vpack.c.b16 %v9058, %v9054
    %v9303 = vpack.c.b16 %v9059, %v9055
    %v9304 = vpack.c.b16 %v9060, %v9056
    %v9305 = vpack.c.b16 %v9065, %v9061
    %v9306 = vpack.c.b16 %v9066, %v9062
    %v9307 = vpack.c.b16 %v9067, %v9063
    %v9308 = vpack.c.b16 %v9068, %v9064
    %v9309 = vpack.c.b16 %v9073, %v9069
    %v9310 = vpack.c.b16 %v9074, %v9070
    %v9311 = vpack.c.b16 %v9075, %v9071
    %v9312 = vpack.c.b16 %v9076, %v9072
    %v9313 = vpack.c.b16 %v9081, %v9077
    %v9314 = vpack.c.b16 %v9082, %v9078
    %v9315 = vpack.c.b16 %v9083, %v9079
    %v9316 = vpack.c.b16 %v9084, %v9080
    %v9317 = vpack.c.b16 %v9089, %v9085
    %v9318 = vpack.c.b16 %v9090, %v9086
    %v9319 = vpack.c.b16 %v9091, %v9087
    %v9320 = vpack.c.b16 %v9092, %v9088
    %v9321 = vpack.c.b16 %v9097, %v9093
    %v9322 = vpack.c.b16 %v9098, %v9094
    %v9323 = vpack.c.b16 %v9099, %v9095
    %v9324 = vpack.c.b16 %v9100, %v9096
    %v9325 = vpack.c.b16 %v9105, %v9101
    %v9326 = vpack.c.b16 %v9106, %v9102
    %v9327 = vpack.c.b16 %v9107, %v9103
    %v9328 = vpack.c.b16 %v9108, %v9104
    %v9329 = vpack.c.b16 %v9113, %v9109
    %v9330 = vpack.c.b16 %v9114, %v9110
    %v9331 = vpack.c.b16 %v9115, %v9111
    %v9332 = vpack.c.b16 %v9116, %v9112
    %v9333 = vpack.c.b16 %v9121, %v9117
    %v9334 = vpack.c.b16 %v9122, %v9118
    %v9335 = vpack.c.b16 %v9123, %v9119
    %v9336 = vpack.c.b16 %v9124, %v9120
    %v9337 = vpack.c.b16 %v9129, %v9125
    %v9338 = vpack.c.b16 %v9130, %v9126
    %v9339 = vpack.c.b16 %v9131, %v9127
    %v9340 = vpack.c.b16 %v9132, %v9128
    %v9341 = vpack.c.b16 %v9137, %v9133
    %v9342 = vpack.c.b16 %v9138, %v9134
    %v9343 = vpack.c.b16 %v9139, %v9135
    %v9344 = vpack.c.b16 %v9140, %v9136
    %v9345 = vpack.c.b16 %v9145, %v9141
    %v9346 = vpack.c.b16 %v9146, %v9142
    %v9347 = vpack.c.b16 %v9147, %v9143
    %v9348 = vpack.c.b16 %v9148, %v9144
    %v9349 = vpack.c.b16 %v9153, %v9149
    %v9350 = vpack.c.b16 %v9154, %v9150
    %v9351 = vpack.c.b16 %v9155, %v9151
    %v9352 = vpack.c.b16 %v9156, %v9152
    %v9353 = vpack.c.b16 %v9161, %v9157
    %v9354 = vpack.c.b16 %v9162, %v9158
    %v9355 = vpack.c.b16 %v9163, %v9159
    %v9356 = vpack.c.b16 %v9164, %v9160
    %v9357 = vpack.c.b16 %v9169, %v9165
    %v9358 = vpack.c.b16 %v9170, %v9166
    %v9359 = vpack.c.b16 %v9171, %v9167
    %v9360 = vpack.c.b16 %v9172, %v9168
    %v9361 = vpack.c.b16 %v9177, %v9173
    %v9362 = vpack.c.b16 %v9178, %v9174
    %v9363 = vpack.c.b16 %v9179, %v9175
    %v9364 = vpack.c.b16 %v9180, %v9176
    %v9365 = vpack.c.b16 %v9185, %v9181
    %v9366 = vpack.c.b16 %v9186, %v9182
    %v9367 = vpack.c.b16 %v9187, %v9183
    %v9368 = vpack.c.b16 %v9188, %v9184
    %v9369 = vpack.c.b16 %v9193, %v9189
    %v9370 = vpack.c.b16 %v9194, %v9190
    %v9371 = vpack.c.b16 %v9195, %v9191
    %v9372 = vpack.c.b16 %v9196, %v9192
    %v9373 = vpack.c.b16 %v9201, %v9197
    %v9374 = vpack.c.b16 %v9202, %v9198
    %v9375 = vpack.c.b16 %v9203, %v9199
    %v9376 = vpack.c.b16 %v9204, %v9200
    %v9377 = vpack.c.b16 %v9209, %v9205
    %v9378 = vpack.c.b16 %v9210, %v9206
    %v9379 = vpack.c.b16 %v9211, %v9207
    %v9380 = vpack.c.b16 %v9212, %v9208
    %v9381 = vpack.c.b16 %v9217, %v9213
    %v9382 = vpack.c.b16 %v9218, %v9214
    %v9383 = vpack.c.b16 %v9219, %v9215
    %v9384 = vpack.c.b16 %v9220, %v9216
    %v9385 = vpack.c.b16 %v9225, %v9221
    %v9386 = vpack.c.b16 %v9226, %v9222
    %v9387 = vpack.c.b16 %v9227, %v9223
    %v9388 = vpack.c.b16 %v9228, %v9224
    %v9389 = vpack.c.b16 %v9233, %v9229
    %v9390 = vpack.c.b16 %v9234, %v9230
    %v9391 = vpack.c.b16 %v9235, %v9231
    %v9392 = vpack.c.b16 %v9236, %v9232
    %v9393 = vpack.c.b16 %v9241, %v9237
    %v9394 = vpack.c.b16 %v9242, %v9238
    %v9395 = vpack.c.b16 %v9243, %v9239
    %v9396 = vpack.c.b16 %v9244, %v9240
    %v9397 = vpack.c.b16 %v9249, %v9245
    %v9398 = vpack.c.b16 %v9250, %v9246
    %v9399 = vpack.c.b16 %v9251, %v9247
    %v9400 = vpack.c.b16 %v9252, %v9248
    %v9401 = vpack.c.b16 %v9257, %v9253
    %v9402 = vpack.c.b16 %v9258, %v9254
    %v9403 = vpack.c.b16 %v9259, %v9255
    %v9404 = vpack.c.b16 %v9260, %v9256
    %v9405 = vpack.c.b16 %v9265, %v9261
    %v9406 = vpack.c.b16 %v9266, %v9262
    %v9407 = vpack.c.b16 %v9267, %v9263
    %v9408 = vpack.c.b16 %v9268, %v9264
    %v9409 = vpack.c.b16 %v9273, %v9269
    %v9410 = vpack.c.b16 %v9274, %v9270
    %v9411 = vpack.c.b16 %v9275, %v9271
    %v9412 = vpack.c.b16 %v9276, %v9272
    %v9413 = vpack.c.b16 %v9281, %v9277
    %v9414 = vpack.c.b16 %v9282, %v9278
    %v9415 = vpack.c.b16 %v9283, %v9279
    %v9416 = vpack.c.b16 %v9284, %v9280
    %v9417 = vpack.c.b16 %v9289, %v9285
    %v9418 = vpack.c.b16 %v9290, %v9286
    %v9419 = vpack.c.b16 %v9291, %v9287
    %v9420 = vpack.c.b16 %v9292, %v9288
    %9549 = vmatprep.subr.bf16.mxu0 %v9294
    %9550 = vmatpush1.bf16.msra.mxu0 %v9293
    %9551 = vmatprep.subr.bf16.mxu0 %v9298
    %9552 = vmatpush1.bf16.msra.mxu0 %v9297
    %9553 = vmatprep.subr.bf16.mxu0 %v9302
    %9554 = vmatpush1.bf16.msra.mxu0 %v9301
    %9555 = vmatprep.subr.bf16.mxu0 %v9306
    %9556 = vmatpush1.bf16.msra.mxu0 %v9305
    %9557 = vmatprep.subr.bf16.mxu0 %v9310
    %9558 = vmatpush1.bf16.msra.mxu0 %v9309
    %9559 = vmatprep.subr.bf16.mxu0 %v9314
    %9560 = vmatpush1.bf16.msra.mxu0 %v9313
    %9561 = vmatprep.subr.bf16.mxu0 %v9318
    %9562 = vmatpush1.bf16.msra.mxu0 %v9317
    %9563 = vmatprep.subr.bf16.mxu0 %v9322
    %9564 = vmatpush1.bf16.msra.mxu0 %v9321
    %9565 = vmatprep.subr.bf16.mxu0 %v9326
    %9566 = vmatpush1.bf16.msra.mxu0 %v9325
    %9567 = vmatprep.subr.bf16.mxu0 %v9330
    %9568 = vmatpush1.bf16.msra.mxu0 %v9329
    %9569 = vmatprep.subr.bf16.mxu0 %v9334
    %9570 = vmatpush1.bf16.msra.mxu0 %v9333
    %9571 = vmatprep.subr.bf16.mxu0 %v9338
    %9572 = vmatpush1.bf16.msra.mxu0 %v9337
    %9573 = vmatprep.subr.bf16.mxu0 %v9342
    %9574 = vmatpush1.bf16.msra.mxu0 %v9341
    %9575 = vmatprep.subr.bf16.mxu0 %v9346
    %9576 = vmatpush1.bf16.msra.mxu0 %v9345
    %9577 = vmatprep.subr.bf16.mxu0 %v9350
    %9578 = vmatpush1.bf16.msra.mxu0 %v9349
    %9579 = vmatprep.subr.bf16.mxu0 %v9354
    %9580 = vmatpush1.bf16.msra.mxu0 %v9353
    %9581 = vmatprep.mubr.bf16.mxu0 %v8902
    %9582 = vmatmul.mubr.bf16.gmra.mrb[0].mxu0 %v8901
    %v9583 = vpop.f32.mrb[0].mxu0
    %v9584 = vadd.f32 0.0, %v9583
    %v9585 = vpop.f32.mrb[0].mxu0
    %v9586 = vadd.f32 0.0, %v9585
    %v9587 = vpop.f32.mrb[0].mxu0
    %v9588 = vpop.f32.mrb[0].mxu0
    %9589 = vdwg.mxu0
    %9590 = vmatprep.subr.bf16.mxu0 %v9358
    %9591 = vmatpush1.bf16.msra.mxu0 %v9357
    %9592 = vmatprep.subr.bf16.mxu0 %v9362
    %9593 = vmatpush1.bf16.msra.mxu0 %v9361
    %9594 = vmatprep.subr.bf16.mxu0 %v9366
    %9595 = vmatpush1.bf16.msra.mxu0 %v9365
    %9596 = vmatprep.subr.bf16.mxu0 %v9370
    %9597 = vmatpush1.bf16.msra.mxu0 %v9369
    %9598 = vmatprep.subr.bf16.mxu0 %v9374
    %9599 = vmatpush1.bf16.msra.mxu0 %v9373
    %9600 = vmatprep.subr.bf16.mxu0 %v9378
    %9601 = vmatpush1.bf16.msra.mxu0 %v9377
    %9602 = vmatprep.subr.bf16.mxu0 %v9382
    %9603 = vmatpush1.bf16.msra.mxu0 %v9381
    %9604 = vmatprep.subr.bf16.mxu0 %v9386
    %9605 = vmatpush1.bf16.msra.mxu0 %v9385
    %9606 = vmatprep.subr.bf16.mxu0 %v9390
    %9607 = vmatpush1.bf16.msra.mxu0 %v9389
    %9608 = vmatprep.subr.bf16.mxu0 %v9394
    %9609 = vmatpush1.bf16.msra.mxu0 %v9393
    %9610 = vmatprep.subr.bf16.mxu0 %v9398
    %9611 = vmatpush1.bf16.msra.mxu0 %v9397
    %9612 = vmatprep.subr.bf16.mxu0 %v9402
    %9613 = vmatpush1.bf16.msra.mxu0 %v9401
    %9614 = vmatprep.subr.bf16.mxu0 %v9406
    %9615 = vmatpush1.bf16.msra.mxu0 %v9405
    %9616 = vmatprep.subr.bf16.mxu0 %v9410
    %9617 = vmatpush1.bf16.msra.mxu0 %v9409
    %9618 = vmatprep.subr.bf16.mxu0 %v9414
    %9619 = vmatpush1.bf16.msra.mxu0 %v9413
    %9620 = vmatprep.subr.bf16.mxu0 %v9418
    %9621 = vmatpush1.bf16.msra.mxu0 %v9417
    %9622 = vmatprep.mubr.bf16.mxu0 %v8904
    %9623 = vmatmul.mubr.bf16.gmra.mrb[0].mxu0 %v8903
    %v9624 = vpop.f32.mrb[0].mxu0
    %v9625 = vadd.f32 %v9584, %v9624
    %v9626 = vpop.f32.mrb[0].mxu0
    %v9627 = vadd.f32 %v9586, %v9626
    %v9628 = vpop.f32.mrb[0].mxu0
    %v9629 = vpop.f32.mrb[0].mxu0
    %9630 = vdwg.mxu0
    %9631 = vmatprep.subr.bf16.mxu0 %v9296
    %9632 = vmatpush1.bf16.msra.mxu0 %v9295
    %9633 = vmatprep.subr.bf16.mxu0 %v9300
    %9634 = vmatpush1.bf16.msra.mxu0 %v9299
    %9635 = vmatprep.subr.bf16.mxu0 %v9304
    %9636 = vmatpush1.bf16.msra.mxu0 %v9303
    %9637 = vmatprep.subr.bf16.mxu0 %v9308
    %9638 = vmatpush1.bf16.msra.mxu0 %v9307
    %9639 = vmatprep.subr.bf16.mxu0 %v9312
    %9640 = vmatpush1.bf16.msra.mxu0 %v9311
    %9641 = vmatprep.subr.bf16.mxu0 %v9316
    %9642 = vmatpush1.bf16.msra.mxu0 %v9315
    %9643 = vmatprep.subr.bf16.mxu0 %v9320
    %9644 = vmatpush1.bf16.msra.mxu0 %v9319
    %9645 = vmatprep.subr.bf16.mxu0 %v9324
    %9646 = vmatpush1.bf16.msra.mxu0 %v9323
    %9647 = vmatprep.subr.bf16.mxu0 %v9328
    %9648 = vmatpush1.bf16.msra.mxu0 %v9327
    %9649 = vmatprep.subr.bf16.mxu0 %v9332
    %9650 = vmatpush1.bf16.msra.mxu0 %v9331
    %9651 = vmatprep.subr.bf16.mxu0 %v9336
    %9652 = vmatpush1.bf16.msra.mxu0 %v9335
    %9653 = vmatprep.subr.bf16.mxu0 %v9340
    %9654 = vmatpush1.bf16.msra.mxu0 %v9339
    %9655 = vmatprep.subr.bf16.mxu0 %v9344
    %9656 = vmatpush1.bf16.msra.mxu0 %v9343
    %9657 = vmatprep.subr.bf16.mxu0 %v9348
    %9658 = vmatpush1.bf16.msra.mxu0 %v9347
    %9659 = vmatprep.subr.bf16.mxu0 %v9352
    %9660 = vmatpush1.bf16.msra.mxu0 %v9351
    %9661 = vmatprep.subr.bf16.mxu0 %v9356
    %9662 = vmatpush1.bf16.msra.mxu0 %v9355
    %9663 = vmatprep.mubr.bf16.mxu0 %v8902
    %9664 = vmatmul.mubr.bf16.gmra.mrb[0].mxu0 %v8901
    %v9665 = vpop.f32.mrb[0].mxu0
    %v9666 = vadd.f32 0.0, %v9665
    %v9667 = vpop.f32.mrb[0].mxu0
    %v9668 = vadd.f32 0.0, %v9667
    %v9669 = vpop.f32.mrb[0].mxu0
    %v9670 = vpop.f32.mrb[0].mxu0
    %9671 = vdwg.mxu0
    %9672 = vmatprep.subr.bf16.mxu0 %v9360
    %9673 = vmatpush1.bf16.msra.mxu0 %v9359
    %9674 = vmatprep.subr.bf16.mxu0 %v9364
    %9675 = vmatpush1.bf16.msra.mxu0 %v9363
    %9676 = vmatprep.subr.bf16.mxu0 %v9368
    %9677 = vmatpush1.bf16.msra.mxu0 %v9367
    %9678 = vmatprep.subr.bf16.mxu0 %v9372
    %9679 = vmatpush1.bf16.msra.mxu0 %v9371
    %9680 = vmatprep.subr.bf16.mxu0 %v9376
    %9681 = vmatpush1.bf16.msra.mxu0 %v9375
    %9682 = vmatprep.subr.bf16.mxu0 %v9380
    %9683 = vmatpush1.bf16.msra.mxu0 %v9379
    %9684 = vmatprep.subr.bf16.mxu0 %v9384
    %9685 = vmatpush1.bf16.msra.mxu0 %v9383
    %9686 = vmatprep.subr.bf16.mxu0 %v9388
    %9687 = vmatpush1.bf16.msra.mxu0 %v9387
    %9688 = vmatprep.subr.bf16.mxu0 %v9392
    %9689 = vmatpush1.bf16.msra.mxu0 %v9391
    %9690 = vmatprep.subr.bf16.mxu0 %v9396
    %9691 = vmatpush1.bf16.msra.mxu0 %v9395
    %9692 = vmatprep.subr.bf16.mxu0 %v9400
    %9693 = vmatpush1.bf16.msra.mxu0 %v9399
    %9694 = vmatprep.subr.bf16.mxu0 %v9404
    %9695 = vmatpush1.bf16.msra.mxu0 %v9403
    %9696 = vmatprep.subr.bf16.mxu0 %v9408
    %9697 = vmatpush1.bf16.msra.mxu0 %v9407
    %9698 = vmatprep.subr.bf16.mxu0 %v9412
    %9699 = vmatpush1.bf16.msra.mxu0 %v9411
    %9700 = vmatprep.subr.bf16.mxu0 %v9416
    %9701 = vmatpush1.bf16.msra.mxu0 %v9415
    %9702 = vmatprep.subr.bf16.mxu0 %v9420
    %9703 = vmatpush1.bf16.msra.mxu0 %v9419
    %9704 = vmatprep.mubr.bf16.mxu0 %v8904
    %9705 = vmatmul.mubr.bf16.gmra.mrb[0].mxu0 %v8903
    %v9706 = vpop.f32.mrb[0].mxu0
    %v9707 = vadd.f32 %v9666, %v9706
    %v9708 = vpop.f32.mrb[0].mxu0
    %v9709 = vadd.f32 %v9668, %v9708
    %v9710 = vpop.f32.mrb[0].mxu0
    %v9711 = vpop.f32.mrb[0].mxu0
    %9712 = vdwg.mxu0
    %v9841 = vunpack.c.l.b16 %v8641
    %v9842 = vunpack.c.h.b16 %v8641
    %v9843 = vunpack.c.l.b16 %v8642
    %v9844 = vunpack.c.h.b16 %v8642
    %v9845 = vunpack.c.l.b16 %v8643
    %v9846 = vunpack.c.h.b16 %v8643
    %v9847 = vunpack.c.l.b16 %v8644
    %v9848 = vunpack.c.h.b16 %v8644
    %v9849 = vunpack.c.l.b16 %v8645
    %v9850 = vunpack.c.h.b16 %v8645
    %v9851 = vunpack.c.l.b16 %v8646
    %v9852 = vunpack.c.h.b16 %v8646
    %v9853 = vunpack.c.l.b16 %v8647
    %v9854 = vunpack.c.h.b16 %v8647
    %v9855 = vunpack.c.l.b16 %v8648
    %v9856 = vunpack.c.h.b16 %v8648
    %v9857 = vunpack.c.l.b16 %v8649
    %v9858 = vunpack.c.h.b16 %v8649
    %v9859 = vunpack.c.l.b16 %v8650
    %v9860 = vunpack.c.h.b16 %v8650
    %v9861 = vunpack.c.l.b16 %v8651
    %v9862 = vunpack.c.h.b16 %v8651
    %v9863 = vunpack.c.l.b16 %v8652
    %v9864 = vunpack.c.h.b16 %v8652
    %v9865 = vunpack.c.l.b16 %v8653
    %v9866 = vunpack.c.h.b16 %v8653
    %v9867 = vunpack.c.l.b16 %v8654
    %v9868 = vunpack.c.h.b16 %v8654
    %v9869 = vunpack.c.l.b16 %v8655
    %v9870 = vunpack.c.h.b16 %v8655
    %v9871 = vunpack.c.l.b16 %v8656
    %v9872 = vunpack.c.h.b16 %v8656
    %v9873 = vunpack.c.l.b16 %v8657
    %v9874 = vunpack.c.h.b16 %v8657
    %v9875 = vunpack.c.l.b16 %v8658
    %v9876 = vunpack.c.h.b16 %v8658
    %v9877 = vunpack.c.l.b16 %v8659
    %v9878 = vunpack.c.h.b16 %v8659
    %v9879 = vunpack.c.l.b16 %v8660
    %v9880 = vunpack.c.h.b16 %v8660
    %v9881 = vunpack.c.l.b16 %v8661
    %v9882 = vunpack.c.h.b16 %v8661
    %v9883 = vunpack.c.l.b16 %v8662
    %v9884 = vunpack.c.h.b16 %v8662
    %v9885 = vunpack.c.l.b16 %v8663
    %v9886 = vunpack.c.h.b16 %v8663
    %v9887 = vunpack.c.l.b16 %v8664
    %v9888 = vunpack.c.h.b16 %v8664
    %v9889 = vunpack.c.l.b16 %v8665
    %v9890 = vunpack.c.h.b16 %v8665
    %v9891 = vunpack.c.l.b16 %v8666
    %v9892 = vunpack.c.h.b16 %v8666
    %v9893 = vunpack.c.l.b16 %v8667
    %v9894 = vunpack.c.h.b16 %v8667
    %v9895 = vunpack.c.l.b16 %v8668
    %v9896 = vunpack.c.h.b16 %v8668
    %v9897 = vunpack.c.l.b16 %v8669
    %v9898 = vunpack.c.h.b16 %v8669
    %v9899 = vunpack.c.l.b16 %v8670
    %v9900 = vunpack.c.h.b16 %v8670
    %v9901 = vunpack.c.l.b16 %v8671
    %v9902 = vunpack.c.h.b16 %v8671
    %v9903 = vunpack.c.l.b16 %v8672
    %v9904 = vunpack.c.h.b16 %v8672
    %v9905 = vunpack.c.l.b16 %v8673
    %v9906 = vunpack.c.h.b16 %v8673
    %v9907 = vunpack.c.l.b16 %v8674
    %v9908 = vunpack.c.h.b16 %v8674
    %v9909 = vunpack.c.l.b16 %v8675
    %v9910 = vunpack.c.h.b16 %v8675
    %v9911 = vunpack.c.l.b16 %v8676
    %v9912 = vunpack.c.h.b16 %v8676
    %v9913 = vunpack.c.l.b16 %v8677
    %v9914 = vunpack.c.h.b16 %v8677
    %v9915 = vunpack.c.l.b16 %v8678
    %v9916 = vunpack.c.h.b16 %v8678
    %v9917 = vunpack.c.l.b16 %v8679
    %v9918 = vunpack.c.h.b16 %v8679
    %v9919 = vunpack.c.l.b16 %v8680
    %v9920 = vunpack.c.h.b16 %v8680
    %v9921 = vunpack.c.l.b16 %v8681
    %v9922 = vunpack.c.h.b16 %v8681
    %v9923 = vunpack.c.l.b16 %v8682
    %v9924 = vunpack.c.h.b16 %v8682
    %v9925 = vunpack.c.l.b16 %v8683
    %v9926 = vunpack.c.h.b16 %v8683
    %v9927 = vunpack.c.l.b16 %v8684
    %v9928 = vunpack.c.h.b16 %v8684
    %v9929 = vunpack.c.l.b16 %v8685
    %v9930 = vunpack.c.h.b16 %v8685
    %v9931 = vunpack.c.l.b16 %v8686
    %v9932 = vunpack.c.h.b16 %v8686
    %v9933 = vunpack.c.l.b16 %v8687
    %v9934 = vunpack.c.h.b16 %v8687
    %v9935 = vunpack.c.l.b16 %v8688
    %v9936 = vunpack.c.h.b16 %v8688
    %v9937 = vunpack.c.l.b16 %v8689
    %v9938 = vunpack.c.h.b16 %v8689
    %v9939 = vunpack.c.l.b16 %v8690
    %v9940 = vunpack.c.h.b16 %v8690
    %v9941 = vunpack.c.l.b16 %v8691
    %v9942 = vunpack.c.h.b16 %v8691
    %v9943 = vunpack.c.l.b16 %v8692
    %v9944 = vunpack.c.h.b16 %v8692
    %v9945 = vunpack.c.l.b16 %v8693
    %v9946 = vunpack.c.h.b16 %v8693
    %v9947 = vunpack.c.l.b16 %v8694
    %v9948 = vunpack.c.h.b16 %v8694
    %v9949 = vunpack.c.l.b16 %v8695
    %v9950 = vunpack.c.h.b16 %v8695
    %v9951 = vunpack.c.l.b16 %v8696
    %v9952 = vunpack.c.h.b16 %v8696
    %v9953 = vunpack.c.l.b16 %v8697
    %v9954 = vunpack.c.h.b16 %v8697
    %v9955 = vunpack.c.l.b16 %v8698
    %v9956 = vunpack.c.h.b16 %v8698
    %v9957 = vunpack.c.l.b16 %v8699
    %v9958 = vunpack.c.h.b16 %v8699
    %v9959 = vunpack.c.l.b16 %v8700
    %v9960 = vunpack.c.h.b16 %v8700
    %v9961 = vunpack.c.l.b16 %v8701
    %v9962 = vunpack.c.h.b16 %v8701
    %v9963 = vunpack.c.l.b16 %v8702
    %v9964 = vunpack.c.h.b16 %v8702
    %v9965 = vunpack.c.l.b16 %v8703
    %v9966 = vunpack.c.h.b16 %v8703
    %v9967 = vunpack.c.l.b16 %v8704
    %v9968 = vunpack.c.h.b16 %v8704
    %v9969 = vunpack.c.l.b16 %v8705
    %v9970 = vunpack.c.h.b16 %v8705
    %v9971 = vunpack.c.l.b16 %v8706
    %v9972 = vunpack.c.h.b16 %v8706
    %v9973 = vunpack.c.l.b16 %v8707
    %v9974 = vunpack.c.h.b16 %v8707
    %v9975 = vunpack.c.l.b16 %v8708
    %v9976 = vunpack.c.h.b16 %v8708
    %v9977 = vunpack.c.l.b16 %v8709
    %v9978 = vunpack.c.h.b16 %v8709
    %v9979 = vunpack.c.l.b16 %v8710
    %v9980 = vunpack.c.h.b16 %v8710
    %v9981 = vunpack.c.l.b16 %v8711
    %v9982 = vunpack.c.h.b16 %v8711
    %v9983 = vunpack.c.l.b16 %v8712
    %v9984 = vunpack.c.h.b16 %v8712
    %v9985 = vunpack.c.l.b16 %v8713
    %v9986 = vunpack.c.h.b16 %v8713
    %v9987 = vunpack.c.l.b16 %v8714
    %v9988 = vunpack.c.h.b16 %v8714
    %v9989 = vunpack.c.l.b16 %v8715
    %v9990 = vunpack.c.h.b16 %v8715
    %v9991 = vunpack.c.l.b16 %v8716
    %v9992 = vunpack.c.h.b16 %v8716
    %v9993 = vunpack.c.l.b16 %v8717
    %v9994 = vunpack.c.h.b16 %v8717
    %v9995 = vunpack.c.l.b16 %v8718
    %v9996 = vunpack.c.h.b16 %v8718
    %v9997 = vunpack.c.l.b16 %v8719
    %v9998 = vunpack.c.h.b16 %v8719
    %v9999 = vunpack.c.l.b16 %v8720
    %v10000 = vunpack.c.h.b16 %v8720
    %v10001 = vunpack.c.l.b16 %v8721
    %v10002 = vunpack.c.h.b16 %v8721
    %v10003 = vunpack.c.l.b16 %v8722
    %v10004 = vunpack.c.h.b16 %v8722
    %v10005 = vunpack.c.l.b16 %v8723
    %v10006 = vunpack.c.h.b16 %v8723
    %v10007 = vunpack.c.l.b16 %v8724
    %v10008 = vunpack.c.h.b16 %v8724
    %v10009 = vunpack.c.l.b16 %v8725
    %v10010 = vunpack.c.h.b16 %v8725
    %v10011 = vunpack.c.l.b16 %v8726
    %v10012 = vunpack.c.h.b16 %v8726
    %v10013 = vunpack.c.l.b16 %v8727
    %v10014 = vunpack.c.h.b16 %v8727
    %v10015 = vunpack.c.l.b16 %v8728
    %v10016 = vunpack.c.h.b16 %v8728
    %v10017 = vunpack.c.l.b16 %v8729
    %v10018 = vunpack.c.h.b16 %v8729
    %v10019 = vunpack.c.l.b16 %v8730
    %v10020 = vunpack.c.h.b16 %v8730
    %v10021 = vunpack.c.l.b16 %v8731
    %v10022 = vunpack.c.h.b16 %v8731
    %v10023 = vunpack.c.l.b16 %v8732
    %v10024 = vunpack.c.h.b16 %v8732
    %v10025 = vunpack.c.l.b16 %v8733
    %v10026 = vunpack.c.h.b16 %v8733
    %v10027 = vunpack.c.l.b16 %v8734
    %v10028 = vunpack.c.h.b16 %v8734
    %v10029 = vunpack.c.l.b16 %v8735
    %v10030 = vunpack.c.h.b16 %v8735
    %v10031 = vunpack.c.l.b16 %v8736
    %v10032 = vunpack.c.h.b16 %v8736
    %v10033 = vunpack.c.l.b16 %v8737
    %v10034 = vunpack.c.h.b16 %v8737
    %v10035 = vunpack.c.l.b16 %v8738
    %v10036 = vunpack.c.h.b16 %v8738
    %v10037 = vunpack.c.l.b16 %v8739
    %v10038 = vunpack.c.h.b16 %v8739
    %v10039 = vunpack.c.l.b16 %v8740
    %v10040 = vunpack.c.h.b16 %v8740
    %v10041 = vunpack.c.l.b16 %v8741
    %v10042 = vunpack.c.h.b16 %v8741
    %v10043 = vunpack.c.l.b16 %v8742
    %v10044 = vunpack.c.h.b16 %v8742
    %v10045 = vunpack.c.l.b16 %v8743
    %v10046 = vunpack.c.h.b16 %v8743
    %v10047 = vunpack.c.l.b16 %v8744
    %v10048 = vunpack.c.h.b16 %v8744
    %v10049 = vunpack.c.l.b16 %v8745
    %v10050 = vunpack.c.h.b16 %v8745
    %v10051 = vunpack.c.l.b16 %v8746
    %v10052 = vunpack.c.h.b16 %v8746
    %v10053 = vunpack.c.l.b16 %v8747
    %v10054 = vunpack.c.h.b16 %v8747
    %v10055 = vunpack.c.l.b16 %v8748
    %v10056 = vunpack.c.h.b16 %v8748
    %v10057 = vunpack.c.l.b16 %v8749
    %v10058 = vunpack.c.h.b16 %v8749
    %v10059 = vunpack.c.l.b16 %v8750
    %v10060 = vunpack.c.h.b16 %v8750
    %v10061 = vunpack.c.l.b16 %v8751
    %v10062 = vunpack.c.h.b16 %v8751
    %v10063 = vunpack.c.l.b16 %v8752
    %v10064 = vunpack.c.h.b16 %v8752
    %v10065 = vunpack.c.l.b16 %v8753
    %v10066 = vunpack.c.h.b16 %v8753
    %v10067 = vunpack.c.l.b16 %v8754
    %v10068 = vunpack.c.h.b16 %v8754
    %v10069 = vunpack.c.l.b16 %v8755
    %v10070 = vunpack.c.h.b16 %v8755
    %v10071 = vunpack.c.l.b16 %v8756
    %v10072 = vunpack.c.h.b16 %v8756
    %v10073 = vunpack.c.l.b16 %v8757
    %v10074 = vunpack.c.h.b16 %v8757
    %v10075 = vunpack.c.l.b16 %v8758
    %v10076 = vunpack.c.h.b16 %v8758
    %v10077 = vunpack.c.l.b16 %v8759
    %v10078 = vunpack.c.h.b16 %v8759
    %v10079 = vunpack.c.l.b16 %v8760
    %v10080 = vunpack.c.h.b16 %v8760
    %v10081 = vunpack.c.l.b16 %v8761
    %v10082 = vunpack.c.h.b16 %v8761
    %v10083 = vunpack.c.l.b16 %v8762
    %v10084 = vunpack.c.h.b16 %v8762
    %v10085 = vunpack.c.l.b16 %v8763
    %v10086 = vunpack.c.h.b16 %v8763
    %v10087 = vunpack.c.l.b16 %v8764
    %v10088 = vunpack.c.h.b16 %v8764
    %v10089 = vunpack.c.l.b16 %v8765
    %v10090 = vunpack.c.h.b16 %v8765
    %v10091 = vunpack.c.l.b16 %v8766
    %v10092 = vunpack.c.h.b16 %v8766
    %v10093 = vunpack.c.l.b16 %v8767
    %v10094 = vunpack.c.h.b16 %v8767
    %v10095 = vunpack.c.l.b16 %v8768
    %v10096 = vunpack.c.h.b16 %v8768
    %v10097 = vpack.c.b16 %v9845, %v9841
    %v10098 = vpack.c.b16 %v9846, %v9842
    %v10099 = vpack.c.b16 %v9847, %v9843
    %v10100 = vpack.c.b16 %v9848, %v9844
    %v10101 = vpack.c.b16 %v9853, %v9849
    %v10102 = vpack.c.b16 %v9854, %v9850
    %v10103 = vpack.c.b16 %v9855, %v9851
    %v10104 = vpack.c.b16 %v9856, %v9852
    %v10105 = vpack.c.b16 %v9861, %v9857
    %v10106 = vpack.c.b16 %v9862, %v9858
    %v10107 = vpack.c.b16 %v9863, %v9859
    %v10108 = vpack.c.b16 %v9864, %v9860
    %v10109 = vpack.c.b16 %v9869, %v9865
    %v10110 = vpack.c.b16 %v9870, %v9866
    %v10111 = vpack.c.b16 %v9871, %v9867
    %v10112 = vpack.c.b16 %v9872, %v9868
    %v10113 = vpack.c.b16 %v9877, %v9873
    %v10114 = vpack.c.b16 %v9878, %v9874
    %v10115 = vpack.c.b16 %v9879, %v9875
    %v10116 = vpack.c.b16 %v9880, %v9876
    %v10117 = vpack.c.b16 %v9885, %v9881
    %v10118 = vpack.c.b16 %v9886, %v9882
    %v10119 = vpack.c.b16 %v9887, %v9883
    %v10120 = vpack.c.b16 %v9888, %v9884
    %v10121 = vpack.c.b16 %v9893, %v9889
    %v10122 = vpack.c.b16 %v9894, %v9890
    %v10123 = vpack.c.b16 %v9895, %v9891
    %v10124 = vpack.c.b16 %v9896, %v9892
    %v10125 = vpack.c.b16 %v9901, %v9897
    %v10126 = vpack.c.b16 %v9902, %v9898
    %v10127 = vpack.c.b16 %v9903, %v9899
    %v10128 = vpack.c.b16 %v9904, %v9900
    %v10129 = vpack.c.b16 %v9909, %v9905
    %v10130 = vpack.c.b16 %v9910, %v9906
    %v10131 = vpack.c.b16 %v9911, %v9907
    %v10132 = vpack.c.b16 %v9912, %v9908
    %v10133 = vpack.c.b16 %v9917, %v9913
    %v10134 = vpack.c.b16 %v9918, %v9914
    %v10135 = vpack.c.b16 %v9919, %v9915
    %v10136 = vpack.c.b16 %v9920, %v9916
    %v10137 = vpack.c.b16 %v9925, %v9921
    %v10138 = vpack.c.b16 %v9926, %v9922
    %v10139 = vpack.c.b16 %v9927, %v9923
    %v10140 = vpack.c.b16 %v9928, %v9924
    %v10141 = vpack.c.b16 %v9933, %v9929
    %v10142 = vpack.c.b16 %v9934, %v9930
    %v10143 = vpack.c.b16 %v9935, %v9931
    %v10144 = vpack.c.b16 %v9936, %v9932
    %v10145 = vpack.c.b16 %v9941, %v9937
    %v10146 = vpack.c.b16 %v9942, %v9938
    %v10147 = vpack.c.b16 %v9943, %v9939
    %v10148 = vpack.c.b16 %v9944, %v9940
    %v10149 = vpack.c.b16 %v9949, %v9945
    %v10150 = vpack.c.b16 %v9950, %v9946
    %v10151 = vpack.c.b16 %v9951, %v9947
    %v10152 = vpack.c.b16 %v9952, %v9948
    %v10153 = vpack.c.b16 %v9957, %v9953
    %v10154 = vpack.c.b16 %v9958, %v9954
    %v10155 = vpack.c.b16 %v9959, %v9955
    %v10156 = vpack.c.b16 %v9960, %v9956
    %v10157 = vpack.c.b16 %v9965, %v9961
    %v10158 = vpack.c.b16 %v9966, %v9962
    %v10159 = vpack.c.b16 %v9967, %v9963
    %v10160 = vpack.c.b16 %v9968, %v9964
    %v10161 = vpack.c.b16 %v9973, %v9969
    %v10162 = vpack.c.b16 %v9974, %v9970
    %v10163 = vpack.c.b16 %v9975, %v9971
    %v10164 = vpack.c.b16 %v9976, %v9972
    %v10165 = vpack.c.b16 %v9981, %v9977
    %v10166 = vpack.c.b16 %v9982, %v9978
    %v10167 = vpack.c.b16 %v9983, %v9979
    %v10168 = vpack.c.b16 %v9984, %v9980
    %v10169 = vpack.c.b16 %v9989, %v9985
    %v10170 = vpack.c.b16 %v9990, %v9986
    %v10171 = vpack.c.b16 %v9991, %v9987
    %v10172 = vpack.c.b16 %v9992, %v9988
    %v10173 = vpack.c.b16 %v9997, %v9993
    %v10174 = vpack.c.b16 %v9998, %v9994
    %v10175 = vpack.c.b16 %v9999, %v9995
    %v10176 = vpack.c.b16 %v10000, %v9996
    %v10177 = vpack.c.b16 %v10005, %v10001
    %v10178 = vpack.c.b16 %v10006, %v10002
    %v10179 = vpack.c.b16 %v10007, %v10003
    %v10180 = vpack.c.b16 %v10008, %v10004
    %v10181 = vpack.c.b16 %v10013, %v10009
    %v10182 = vpack.c.b16 %v10014, %v10010
    %v10183 = vpack.c.b16 %v10015, %v10011
    %v10184 = vpack.c.b16 %v10016, %v10012
    %v10185 = vpack.c.b16 %v10021, %v10017
    %v10186 = vpack.c.b16 %v10022, %v10018
    %v10187 = vpack.c.b16 %v10023, %v10019
    %v10188 = vpack.c.b16 %v10024, %v10020
    %v10189 = vpack.c.b16 %v10029, %v10025
    %v10190 = vpack.c.b16 %v10030, %v10026
    %v10191 = vpack.c.b16 %v10031, %v10027
    %v10192 = vpack.c.b16 %v10032, %v10028
    %v10193 = vpack.c.b16 %v10037, %v10033
    %v10194 = vpack.c.b16 %v10038, %v10034
    %v10195 = vpack.c.b16 %v10039, %v10035
    %v10196 = vpack.c.b16 %v10040, %v10036
    %v10197 = vpack.c.b16 %v10045, %v10041
    %v10198 = vpack.c.b16 %v10046, %v10042
    %v10199 = vpack.c.b16 %v10047, %v10043
    %v10200 = vpack.c.b16 %v10048, %v10044
    %v10201 = vpack.c.b16 %v10053, %v10049
    %v10202 = vpack.c.b16 %v10054, %v10050
    %v10203 = vpack.c.b16 %v10055, %v10051
    %v10204 = vpack.c.b16 %v10056, %v10052
    %v10205 = vpack.c.b16 %v10061, %v10057
    %v10206 = vpack.c.b16 %v10062, %v10058
    %v10207 = vpack.c.b16 %v10063, %v10059
    %v10208 = vpack.c.b16 %v10064, %v10060
    %v10209 = vpack.c.b16 %v10069, %v10065
    %v10210 = vpack.c.b16 %v10070, %v10066
    %v10211 = vpack.c.b16 %v10071, %v10067
    %v10212 = vpack.c.b16 %v10072, %v10068
    %v10213 = vpack.c.b16 %v10077, %v10073
    %v10214 = vpack.c.b16 %v10078, %v10074
    %v10215 = vpack.c.b16 %v10079, %v10075
    %v10216 = vpack.c.b16 %v10080, %v10076
    %v10217 = vpack.c.b16 %v10085, %v10081
    %v10218 = vpack.c.b16 %v10086, %v10082
    %v10219 = vpack.c.b16 %v10087, %v10083
    %v10220 = vpack.c.b16 %v10088, %v10084
    %v10221 = vpack.c.b16 %v10093, %v10089
    %v10222 = vpack.c.b16 %v10094, %v10090
    %v10223 = vpack.c.b16 %v10095, %v10091
    %v10224 = vpack.c.b16 %v10096, %v10092
    %10353 = vmatprep.subr.bf16.mxu0 %v10098
    %10354 = vmatpush1.bf16.msra.mxu0 %v10097
    %10355 = vmatprep.subr.bf16.mxu0 %v10102
    %10356 = vmatpush1.bf16.msra.mxu0 %v10101
    %10357 = vmatprep.subr.bf16.mxu0 %v10106
    %10358 = vmatpush1.bf16.msra.mxu0 %v10105
    %10359 = vmatprep.subr.bf16.mxu0 %v10110
    %10360 = vmatpush1.bf16.msra.mxu0 %v10109
    %10361 = vmatprep.subr.bf16.mxu0 %v10114
    %10362 = vmatpush1.bf16.msra.mxu0 %v10113
    %10363 = vmatprep.subr.bf16.mxu0 %v10118
    %10364 = vmatpush1.bf16.msra.mxu0 %v10117
    %10365 = vmatprep.subr.bf16.mxu0 %v10122
    %10366 = vmatpush1.bf16.msra.mxu0 %v10121
    %10367 = vmatprep.subr.bf16.mxu0 %v10126
    %10368 = vmatpush1.bf16.msra.mxu0 %v10125
    %10369 = vmatprep.subr.bf16.mxu0 %v10130
    %10370 = vmatpush1.bf16.msra.mxu0 %v10129
    %10371 = vmatprep.subr.bf16.mxu0 %v10134
    %10372 = vmatpush1.bf16.msra.mxu0 %v10133
    %10373 = vmatprep.subr.bf16.mxu0 %v10138
    %10374 = vmatpush1.bf16.msra.mxu0 %v10137
    %10375 = vmatprep.subr.bf16.mxu0 %v10142
    %10376 = vmatpush1.bf16.msra.mxu0 %v10141
    %10377 = vmatprep.subr.bf16.mxu0 %v10146
    %10378 = vmatpush1.bf16.msra.mxu0 %v10145
    %10379 = vmatprep.subr.bf16.mxu0 %v10150
    %10380 = vmatpush1.bf16.msra.mxu0 %v10149
    %10381 = vmatprep.subr.bf16.mxu0 %v10154
    %10382 = vmatpush1.bf16.msra.mxu0 %v10153
    %10383 = vmatprep.subr.bf16.mxu0 %v10158
    %10384 = vmatpush1.bf16.msra.mxu0 %v10157
    %10385 = vmatprep.mubr.bf16.mxu0 %v8638
    %10386 = vmatmul.mubr.bf16.gmra.mrb[0].mxu0 %v8637
    %v10387 = vpop.f32.mrb[0].mxu0
    %v10388 = vadd.f32 %v9625, %v10387
    %v10389 = vpop.f32.mrb[0].mxu0
    %v10390 = vadd.f32 %v9627, %v10389
    %v10391 = vpop.f32.mrb[0].mxu0
    %v10392 = vpop.f32.mrb[0].mxu0
    %10393 = vdwg.mxu0
    %10394 = vmatprep.subr.bf16.mxu0 %v10162
    %10395 = vmatpush1.bf16.msra.mxu0 %v10161
    %10396 = vmatprep.subr.bf16.mxu0 %v10166
    %10397 = vmatpush1.bf16.msra.mxu0 %v10165
    %10398 = vmatprep.subr.bf16.mxu0 %v10170
    %10399 = vmatpush1.bf16.msra.mxu0 %v10169
    %10400 = vmatprep.subr.bf16.mxu0 %v10174
    %10401 = vmatpush1.bf16.msra.mxu0 %v10173
    %10402 = vmatprep.subr.bf16.mxu0 %v10178
    %10403 = vmatpush1.bf16.msra.mxu0 %v10177
    %10404 = vmatprep.subr.bf16.mxu0 %v10182
    %10405 = vmatpush1.bf16.msra.mxu0 %v10181
    %10406 = vmatprep.subr.bf16.mxu0 %v10186
    %10407 = vmatpush1.bf16.msra.mxu0 %v10185
    %10408 = vmatprep.subr.bf16.mxu0 %v10190
    %10409 = vmatpush1.bf16.msra.mxu0 %v10189
    %10410 = vmatprep.subr.bf16.mxu0 %v10194
    %10411 = vmatpush1.bf16.msra.mxu0 %v10193
    %10412 = vmatprep.subr.bf16.mxu0 %v10198
    %10413 = vmatpush1.bf16.msra.mxu0 %v10197
    %10414 = vmatprep.subr.bf16.mxu0 %v10202
    %10415 = vmatpush1.bf16.msra.mxu0 %v10201
    %10416 = vmatprep.subr.bf16.mxu0 %v10206
    %10417 = vmatpush1.bf16.msra.mxu0 %v10205
    %10418 = vmatprep.subr.bf16.mxu0 %v10210
    %10419 = vmatpush1.bf16.msra.mxu0 %v10209
    %10420 = vmatprep.subr.bf16.mxu0 %v10214
    %10421 = vmatpush1.bf16.msra.mxu0 %v10213
    %10422 = vmatprep.subr.bf16.mxu0 %v10218
    %10423 = vmatpush1.bf16.msra.mxu0 %v10217
    %10424 = vmatprep.subr.bf16.mxu0 %v10222
    %10425 = vmatpush1.bf16.msra.mxu0 %v10221
    %10426 = vmatprep.mubr.bf16.mxu0 %v8640
    %10427 = vmatmul.mubr.bf16.gmra.mrb[0].mxu0 %v8639
    %v10428 = vpop.f32.mrb[0].mxu0
    %v10429 = vadd.f32 %v10388, %v10428
    %v10430 = vpop.f32.mrb[0].mxu0
    %v10431 = vadd.f32 %v10390, %v10430
    %v10432 = vpop.f32.mrb[0].mxu0
    %v10433 = vpop.f32.mrb[0].mxu0
    %10434 = vdwg.mxu0
    %10435 = vmatprep.subr.bf16.mxu0 %v10100
    %10436 = vmatpush1.bf16.msra.mxu0 %v10099
    %10437 = vmatprep.subr.bf16.mxu0 %v10104
    %10438 = vmatpush1.bf16.msra.mxu0 %v10103
    %10439 = vmatprep.subr.bf16.mxu0 %v10108
    %10440 = vmatpush1.bf16.msra.mxu0 %v10107
    %10441 = vmatprep.subr.bf16.mxu0 %v10112
    %10442 = vmatpush1.bf16.msra.mxu0 %v10111
    %10443 = vmatprep.subr.bf16.mxu0 %v10116
    %10444 = vmatpush1.bf16.msra.mxu0 %v10115
    %10445 = vmatprep.subr.bf16.mxu0 %v10120
    %10446 = vmatpush1.bf16.msra.mxu0 %v10119
    %10447 = vmatprep.subr.bf16.mxu0 %v10124
    %10448 = vmatpush1.bf16.msra.mxu0 %v10123
    %10449 = vmatprep.subr.bf16.mxu0 %v10128
    %10450 = vmatpush1.bf16.msra.mxu0 %v10127
    %10451 = vmatprep.subr.bf16.mxu0 %v10132
    %10452 = vmatpush1.bf16.msra.mxu0 %v10131
    %10453 = vmatprep.subr.bf16.mxu0 %v10136
    %10454 = vmatpush1.bf16.msra.mxu0 %v10135
    %10455 = vmatprep.subr.bf16.mxu0 %v10140
    %10456 = vmatpush1.bf16.msra.mxu0 %v10139
    %10457 = vmatprep.subr.bf16.mxu0 %v10144
    %10458 = vmatpush1.bf16.msra.mxu0 %v10143
    %10459 = vmatprep.subr.bf16.mxu0 %v10148
    %10460 = vmatpush1.bf16.msra.mxu0 %v10147
    %10461 = vmatprep.subr.bf16.mxu0 %v10152
    %10462 = vmatpush1.bf16.msra.mxu0 %v10151
    %10463 = vmatprep.subr.bf16.mxu0 %v10156
    %10464 = vmatpush1.bf16.msra.mxu0 %v10155
    %10465 = vmatprep.subr.bf16.mxu0 %v10160
    %10466 = vmatpush1.bf16.msra.mxu0 %v10159
    %10467 = vmatprep.mubr.bf16.mxu0 %v8638
    %10468 = vmatmul.mubr.bf16.gmra.mrb[0].mxu0 %v8637
    %v10469 = vpop.f32.mrb[0].mxu0
    %v10470 = vadd.f32 %v9707, %v10469
    %v10471 = vpop.f32.mrb[0].mxu0
    %v10472 = vadd.f32 %v9709, %v10471
    %v10473 = vpop.f32.mrb[0].mxu0
    %v10474 = vpop.f32.mrb[0].mxu0
    %10475 = vdwg.mxu0
    %10476 = vmatprep.subr.bf16.mxu0 %v10164
    %10477 = vmatpush1.bf16.msra.mxu0 %v10163
    %10478 = vmatprep.subr.bf16.mxu0 %v10168
    %10479 = vmatpush1.bf16.msra.mxu0 %v10167
    %10480 = vmatprep.subr.bf16.mxu0 %v10172
    %10481 = vmatpush1.bf16.msra.mxu0 %v10171
    %10482 = vmatprep.subr.bf16.mxu0 %v10176
    %10483 = vmatpush1.bf16.msra.mxu0 %v10175
    %10484 = vmatprep.subr.bf16.mxu0 %v10180
    %10485 = vmatpush1.bf16.msra.mxu0 %v10179
    %10486 = vmatprep.subr.bf16.mxu0 %v10184
    %10487 = vmatpush1.bf16.msra.mxu0 %v10183
    %10488 = vmatprep.subr.bf16.mxu0 %v10188
    %10489 = vmatpush1.bf16.msra.mxu0 %v10187
    %10490 = vmatprep.subr.bf16.mxu0 %v10192
    %10491 = vmatpush1.bf16.msra.mxu0 %v10191
    %10492 = vmatprep.subr.bf16.mxu0 %v10196
    %10493 = vmatpush1.bf16.msra.mxu0 %v10195
    %10494 = vmatprep.subr.bf16.mxu0 %v10200
    %10495 = vmatpush1.bf16.msra.mxu0 %v10199
    %10496 = vmatprep.subr.bf16.mxu0 %v10204
    %10497 = vmatpush1.bf16.msra.mxu0 %v10203
    %10498 = vmatprep.subr.bf16.mxu0 %v10208
    %10499 = vmatpush1.bf16.msra.mxu0 %v10207
    %10500 = vmatprep.subr.bf16.mxu0 %v10212
    %10501 = vmatpush1.bf16.msra.mxu0 %v10211
    %10502 = vmatprep.subr.bf16.mxu0 %v10216
    %10503 = vmatpush1.bf16.msra.mxu0 %v10215
    %10504 = vmatprep.subr.bf16.mxu0 %v10220
    %10505 = vmatpush1.bf16.msra.mxu0 %v10219
    %10506 = vmatprep.subr.bf16.mxu0 %v10224
    %10507 = vmatpush1.bf16.msra.mxu0 %v10223
    %10508 = vmatprep.mubr.bf16.mxu0 %v8640
    %10509 = vmatmul.mubr.bf16.gmra.mrb[0].mxu0 %v8639
    %v10510 = vpop.f32.mrb[0].mxu0
    %v10511 = vadd.f32 %v10470, %v10510
    %v10512 = vpop.f32.mrb[0].mxu0
    %v10513 = vadd.f32 %v10472, %v10512
    %v10514 = vpop.f32.mrb[0].mxu0
    %v10515 = vpop.f32.mrb[0].mxu0
    %10516 = vdwg.mxu0
    %v10517 = vld [vmem:[%s53] sm:$0xf]
    %v10519 = vlaneseq
    %v10520 = vshrl.u32 %v10519, 7
    %v10521 = vsub.s32 0, %v10520
    %v10522 = vrot.slane %v10517, %v10521
    %v10523 = vlaneseq
    %v10524 = vshrl.u32 %v10523, 7
    %v10525 = vsub.s32 1, %v10524
    %v10526 = vrot.slane %v10517, %v10525
    %v10527 = vlaneseq
    %v10528 = vshrl.u32 %v10527, 7
    %v10529 = vsub.s32 2, %v10528
    %v10530 = vrot.slane %v10517, %v10529
    %v10531 = vlaneseq
    %v10532 = vshrl.u32 %v10531, 7
    %v10533 = vsub.s32 3, %v10532
    %v10534 = vrot.slane %v10517, %v10533
    %v10539 = vadd.f32 %v10429, %v10522
    %v10540 = vadd.f32 %v10431, %v10526
    %v10541 = vadd.f32 %v10511, %v10530
    %v10542 = vadd.f32 %v10513, %v10534
    %v10543 = vmax.f32 %v10539, 0.0
    %v10544 = vmax.f32 %v10540, 0.0
    %v10545 = vmax.f32 %v10541, 0.0
    %v10546 = vmax.f32 %v10542, 0.0
    %v10547 = vpack.c.bf16 %v10543, %v10543
    %v10548 = vpack.c.bf16 %v10544, %v10544
    %v10549 = vpack.c.bf16 %v10545, %v10545
    %v10550 = vpack.c.bf16 %v10546, %v10546
    %v10551 = vld [vmem:[%s55] sm:$0xf]
    %v10552 = vld [vmem:[%s55 + $0x4] sm:$0xf]
    %v10553 = vld [vmem:[%s55 + $0x8] sm:$0xf]
    %v10554 = vld [vmem:[%s55 + $0xc] sm:$0xf]
    %v10555 = vld [vmem:[%s55 + $0x10] sm:$0xf]
    %v10556 = vld [vmem:[%s55 + $0x14] sm:$0xf]
    %v10557 = vld [vmem:[%s55 + $0x18] sm:$0xf]
    %v10558 = vld [vmem:[%s55 + $0x1c] sm:$0xf]
    %v10559 = vld [vmem:[%s55 + $0x20] sm:$0xf]
    %v10560 = vld [vmem:[%s55 + $0x24] sm:$0xf]
    %v10561 = vld [vmem:[%s55 + $0x28] sm:$0xf]
    %v10562 = vld [vmem:[%s55 + $0x2c] sm:$0xf]
    %v10563 = vld [vmem:[%s55 + $0x30] sm:$0xf]
    %v10564 = vld [vmem:[%s55 + $0x34] sm:$0xf]
    %v10565 = vld [vmem:[%s55 + $0x38] sm:$0xf]
    %v10566 = vld [vmem:[%s55 + $0x3c] sm:$0xf]
    %v10567 = vld [vmem:[%s55 + $0x40] sm:$0xf]
    %v10568 = vld [vmem:[%s55 + $0x44] sm:$0xf]
    %v10569 = vld [vmem:[%s55 + $0x48] sm:$0xf]
    %v10570 = vld [vmem:[%s55 + $0x4c] sm:$0xf]
    %v10571 = vld [vmem:[%s55 + $0x50] sm:$0xf]
    %v10572 = vld [vmem:[%s55 + $0x54] sm:$0xf]
    %v10573 = vld [vmem:[%s55 + $0x58] sm:$0xf]
    %v10574 = vld [vmem:[%s55 + $0x5c] sm:$0xf]
    %v10575 = vld [vmem:[%s55 + $0x60] sm:$0xf]
    %v10576 = vld [vmem:[%s55 + $0x64] sm:$0xf]
    %v10577 = vld [vmem:[%s55 + $0x68] sm:$0xf]
    %v10578 = vld [vmem:[%s55 + $0x6c] sm:$0xf]
    %v10579 = vld [vmem:[%s55 + $0x70] sm:$0xf]
    %v10580 = vld [vmem:[%s55 + $0x74] sm:$0xf]
    %v10581 = vld [vmem:[%s55 + $0x78] sm:$0xf]
    %v10582 = vld [vmem:[%s55 + $0x7c] sm:$0xf]
    %v10583 = vld [vmem:[%s55 + $0x80] sm:$0xf]
    %v10584 = vld [vmem:[%s55 + $0x84] sm:$0xf]
    %v10585 = vld [vmem:[%s55 + $0x88] sm:$0xf]
    %v10586 = vld [vmem:[%s55 + $0x8c] sm:$0xf]
    %v10587 = vld [vmem:[%s55 + $0x90] sm:$0xf]
    %v10588 = vld [vmem:[%s55 + $0x94] sm:$0xf]
    %v10589 = vld [vmem:[%s55 + $0x98] sm:$0xf]
    %v10590 = vld [vmem:[%s55 + $0x9c] sm:$0xf]
    %v10591 = vld [vmem:[%s55 + $0xa0] sm:$0xf]
    %v10592 = vld [vmem:[%s55 + $0xa4] sm:$0xf]
    %v10593 = vld [vmem:[%s55 + $0xa8] sm:$0xf]
    %v10594 = vld [vmem:[%s55 + $0xac] sm:$0xf]
    %v10595 = vld [vmem:[%s55 + $0xb0] sm:$0xf]
    %v10596 = vld [vmem:[%s55 + $0xb4] sm:$0xf]
    %v10597 = vld [vmem:[%s55 + $0xb8] sm:$0xf]
    %v10598 = vld [vmem:[%s55 + $0xbc] sm:$0xf]
    %v10599 = vld [vmem:[%s55 + $0xc0] sm:$0xf]
    %v10600 = vld [vmem:[%s55 + $0xc4] sm:$0xf]
    %v10601 = vld [vmem:[%s55 + $0xc8] sm:$0xf]
    %v10602 = vld [vmem:[%s55 + $0xcc] sm:$0xf]
    %v10603 = vld [vmem:[%s55 + $0xd0] sm:$0xf]
    %v10604 = vld [vmem:[%s55 + $0xd4] sm:$0xf]
    %v10605 = vld [vmem:[%s55 + $0xd8] sm:$0xf]
    %v10606 = vld [vmem:[%s55 + $0xdc] sm:$0xf]
    %v10607 = vld [vmem:[%s55 + $0xe0] sm:$0xf]
    %v10608 = vld [vmem:[%s55 + $0xe4] sm:$0xf]
    %v10609 = vld [vmem:[%s55 + $0xe8] sm:$0xf]
    %v10610 = vld [vmem:[%s55 + $0xec] sm:$0xf]
    %v10611 = vld [vmem:[%s55 + $0xf0] sm:$0xf]
    %v10612 = vld [vmem:[%s55 + $0xf4] sm:$0xf]
    %v10613 = vld [vmem:[%s55 + $0xf8] sm:$0xf]
    %v10614 = vld [vmem:[%s55 + $0xfc] sm:$0xf]
    %v10615 = vld [vmem:[%s57] sm:$0x1]
    %v10617 = vlaneseq
    %v10618 = vshrl.u32 %v10617, 7
    %v10619 = vsub.s32 0, %v10618
    %v10620 = vrot.slane %v10615, %v10619
    %v10686 = vunpack.c.l.b16 %v10551
    %v10687 = vunpack.c.l.b16 %v10552
    %v10688 = vunpack.c.l.b16 %v10553
    %v10689 = vunpack.c.l.b16 %v10554
    %v10690 = vunpack.c.l.b16 %v10555
    %v10691 = vunpack.c.l.b16 %v10556
    %v10692 = vunpack.c.l.b16 %v10557
    %v10693 = vunpack.c.l.b16 %v10558
    %v10694 = vunpack.c.l.b16 %v10559
    %v10695 = vunpack.c.l.b16 %v10560
    %v10696 = vunpack.c.l.b16 %v10561
    %v10697 = vunpack.c.l.b16 %v10562
    %v10698 = vunpack.c.l.b16 %v10563
    %v10699 = vunpack.c.l.b16 %v10564
    %v10700 = vunpack.c.l.b16 %v10565
    %v10701 = vunpack.c.l.b16 %v10566
    %v10702 = vunpack.c.l.b16 %v10567
    %v10703 = vunpack.c.l.b16 %v10568
    %v10704 = vunpack.c.l.b16 %v10569
    %v10705 = vunpack.c.l.b16 %v10570
    %v10706 = vunpack.c.l.b16 %v10571
    %v10707 = vunpack.c.l.b16 %v10572
    %v10708 = vunpack.c.l.b16 %v10573
    %v10709 = vunpack.c.l.b16 %v10574
    %v10710 = vunpack.c.l.b16 %v10575
    %v10711 = vunpack.c.l.b16 %v10576
    %v10712 = vunpack.c.l.b16 %v10577
    %v10713 = vunpack.c.l.b16 %v10578
    %v10714 = vunpack.c.l.b16 %v10579
    %v10715 = vunpack.c.l.b16 %v10580
    %v10716 = vunpack.c.l.b16 %v10581
    %v10717 = vunpack.c.l.b16 %v10582
    %v10718 = vunpack.c.l.b16 %v10583
    %v10719 = vunpack.c.l.b16 %v10584
    %v10720 = vunpack.c.l.b16 %v10585
    %v10721 = vunpack.c.l.b16 %v10586
    %v10722 = vunpack.c.l.b16 %v10587
    %v10723 = vunpack.c.l.b16 %v10588
    %v10724 = vunpack.c.l.b16 %v10589
    %v10725 = vunpack.c.l.b16 %v10590
    %v10726 = vunpack.c.l.b16 %v10591
    %v10727 = vunpack.c.l.b16 %v10592
    %v10728 = vunpack.c.l.b16 %v10593
    %v10729 = vunpack.c.l.b16 %v10594
    %v10730 = vunpack.c.l.b16 %v10595
    %v10731 = vunpack.c.l.b16 %v10596
    %v10732 = vunpack.c.l.b16 %v10597
    %v10733 = vunpack.c.l.b16 %v10598
    %v10734 = vunpack.c.l.b16 %v10599
    %v10735 = vunpack.c.l.b16 %v10600
    %v10736 = vunpack.c.l.b16 %v10601
    %v10737 = vunpack.c.l.b16 %v10602
    %v10738 = vunpack.c.l.b16 %v10603
    %v10739 = vunpack.c.l.b16 %v10604
    %v10740 = vunpack.c.l.b16 %v10605
    %v10741 = vunpack.c.l.b16 %v10606
    %v10742 = vunpack.c.l.b16 %v10607
    %v10743 = vunpack.c.l.b16 %v10608
    %v10744 = vunpack.c.l.b16 %v10609
    %v10745 = vunpack.c.l.b16 %v10610
    %v10746 = vunpack.c.l.b16 %v10611
    %v10747 = vunpack.c.l.b16 %v10612
    %v10748 = vunpack.c.l.b16 %v10613
    %v10749 = vunpack.c.l.b16 %v10614
    %v10750 = vpack.c.b16 %v10687, %v10686
    %v10751 = vpack.c.b16 %v10689, %v10688
    %v10752 = vpack.c.b16 %v10691, %v10690
    %v10753 = vpack.c.b16 %v10693, %v10692
    %v10754 = vpack.c.b16 %v10695, %v10694
    %v10755 = vpack.c.b16 %v10697, %v10696
    %v10756 = vpack.c.b16 %v10699, %v10698
    %v10757 = vpack.c.b16 %v10701, %v10700
    %v10758 = vpack.c.b16 %v10703, %v10702
    %v10759 = vpack.c.b16 %v10705, %v10704
    %v10760 = vpack.c.b16 %v10707, %v10706
    %v10761 = vpack.c.b16 %v10709, %v10708
    %v10762 = vpack.c.b16 %v10711, %v10710
    %v10763 = vpack.c.b16 %v10713, %v10712
    %v10764 = vpack.c.b16 %v10715, %v10714
    %v10765 = vpack.c.b16 %v10717, %v10716
    %v10766 = vpack.c.b16 %v10719, %v10718
    %v10767 = vpack.c.b16 %v10721, %v10720
    %v10768 = vpack.c.b16 %v10723, %v10722
    %v10769 = vpack.c.b16 %v10725, %v10724
    %v10770 = vpack.c.b16 %v10727, %v10726
    %v10771 = vpack.c.b16 %v10729, %v10728
    %v10772 = vpack.c.b16 %v10731, %v10730
    %v10773 = vpack.c.b16 %v10733, %v10732
    %v10774 = vpack.c.b16 %v10735, %v10734
    %v10775 = vpack.c.b16 %v10737, %v10736
    %v10776 = vpack.c.b16 %v10739, %v10738
    %v10777 = vpack.c.b16 %v10741, %v10740
    %v10778 = vpack.c.b16 %v10743, %v10742
    %v10779 = vpack.c.b16 %v10745, %v10744
    %v10780 = vpack.c.b16 %v10747, %v10746
    %v10781 = vpack.c.b16 %v10749, %v10748
    %10814 = vmatprep.subr.bf16.mxu0 0
    %10815 = vmatpush1.bf16.msra.mxu0 %v10750
    %10816 = vmatprep.subr.bf16.mxu0 0
    %10817 = vmatpush1.bf16.msra.mxu0 %v10751
    %10818 = vmatprep.subr.bf16.mxu0 0
    %10819 = vmatpush1.bf16.msra.mxu0 %v10752
    %10820 = vmatprep.subr.bf16.mxu0 0
    %10821 = vmatpush1.bf16.msra.mxu0 %v10753
    %10822 = vmatprep.subr.bf16.mxu0 0
    %10823 = vmatpush1.bf16.msra.mxu0 %v10754
    %10824 = vmatprep.subr.bf16.mxu0 0
    %10825 = vmatpush1.bf16.msra.mxu0 %v10755
    %10826 = vmatprep.subr.bf16.mxu0 0
    %10827 = vmatpush1.bf16.msra.mxu0 %v10756
    %10828 = vmatprep.subr.bf16.mxu0 0
    %10829 = vmatpush1.bf16.msra.mxu0 %v10757
    %10830 = vmatprep.subr.bf16.mxu0 0
    %10831 = vmatpush1.bf16.msra.mxu0 %v10758
    %10832 = vmatprep.subr.bf16.mxu0 0
    %10833 = vmatpush1.bf16.msra.mxu0 %v10759
    %10834 = vmatprep.subr.bf16.mxu0 0
    %10835 = vmatpush1.bf16.msra.mxu0 %v10760
    %10836 = vmatprep.subr.bf16.mxu0 0
    %10837 = vmatpush1.bf16.msra.mxu0 %v10761
    %10838 = vmatprep.subr.bf16.mxu0 0
    %10839 = vmatpush1.bf16.msra.mxu0 %v10762
    %10840 = vmatprep.subr.bf16.mxu0 0
    %10841 = vmatpush1.bf16.msra.mxu0 %v10763
    %10842 = vmatprep.subr.bf16.mxu0 0
    %10843 = vmatpush1.bf16.msra.mxu0 %v10764
    %10844 = vmatprep.subr.bf16.mxu0 0
    %10845 = vmatpush1.bf16.msra.mxu0 %v10765
    %10846 = vmatprep.mubr.bf16.mxu0 %v10548
    %10847 = vmatmul.mubr.bf16.gmra.mrb[0].mxu0 %v10547
    %v10848 = vpop.f32.mrb[0].mxu0
    %v10849 = vadd.f32 %v10620, %v10848
    %v10850 = vpop.f32.mrb[0].mxu0
    %v10851 = vpop.f32.mrb[0].mxu0
    %v10852 = vpop.f32.mrb[0].mxu0
    %10853 = vdwg.mxu0
    %10854 = vmatprep.subr.bf16.mxu0 0
    %10855 = vmatpush1.bf16.msra.mxu0 %v10766
    %10856 = vmatprep.subr.bf16.mxu0 0
    %10857 = vmatpush1.bf16.msra.mxu0 %v10767
    %10858 = vmatprep.subr.bf16.mxu0 0
    %10859 = vmatpush1.bf16.msra.mxu0 %v10768
    %10860 = vmatprep.subr.bf16.mxu0 0
    %10861 = vmatpush1.bf16.msra.mxu0 %v10769
    %10862 = vmatprep.subr.bf16.mxu0 0
    %10863 = vmatpush1.bf16.msra.mxu0 %v10770
    %10864 = vmatprep.subr.bf16.mxu0 0
    %10865 = vmatpush1.bf16.msra.mxu0 %v10771
    %10866 = vmatprep.subr.bf16.mxu0 0
    %10867 = vmatpush1.bf16.msra.mxu0 %v10772
    %10868 = vmatprep.subr.bf16.mxu0 0
    %10869 = vmatpush1.bf16.msra.mxu0 %v10773
    %10870 = vmatprep.subr.bf16.mxu0 0
    %10871 = vmatpush1.bf16.msra.mxu0 %v10774
    %10872 = vmatprep.subr.bf16.mxu0 0
    %10873 = vmatpush1.bf16.msra.mxu0 %v10775
    %10874 = vmatprep.subr.bf16.mxu0 0
    %10875 = vmatpush1.bf16.msra.mxu0 %v10776
    %10876 = vmatprep.subr.bf16.mxu0 0
    %10877 = vmatpush1.bf16.msra.mxu0 %v10777
    %10878 = vmatprep.subr.bf16.mxu0 0
    %10879 = vmatpush1.bf16.msra.mxu0 %v10778
    %10880 = vmatprep.subr.bf16.mxu0 0
    %10881 = vmatpush1.bf16.msra.mxu0 %v10779
    %10882 = vmatprep.subr.bf16.mxu0 0
    %10883 = vmatpush1.bf16.msra.mxu0 %v10780
    %10884 = vmatprep.subr.bf16.mxu0 0
    %10885 = vmatpush1.bf16.msra.mxu0 %v10781
    %10886 = vmatprep.mubr.bf16.mxu0 %v10550
    %10887 = vmatmul.mubr.bf16.gmra.mrb[0].mxu0 %v10549
    %v10888 = vpop.f32.mrb[0].mxu0
    %v10889 = vadd.f32 %v10849, %v10888
    %v10890 = vpop.f32.mrb[0].mxu0
    %v10891 = vpop.f32.mrb[0].mxu0
    %v10892 = vpop.f32.mrb[0].mxu0
    %10893 = vdwg.mxu0
    %vm10894 = vcmask 58368
    %10895 = vst.msk [vmem:[#allocation2] sm:$0x3] %vm10894, %v10889
    // Predicated region
    $region118: #{context_prediction_vit_forward.1} parent=1 // pred_check
      _
    $region119: #{context_prediction_vit_forward.1} parent=1 // pred_check_branch
      %10897 = sbr.rel (0) target = $region121
    $region120: #{context_prediction_vit_forward.1} parent=1 // pred_region
      %s10899 = ssub.s32 32, 32
      %10900 = vsyncadd [#allocation3], %s10899
      %s10902 = sshll.u32 [#allocation2], 4
      %s10903 = int_to_ptr.vmem [resolvable:$true] %s10902
      %10905 = dma.vmem_to_hbm [thread:$0]  %s10903, 32, %s59, [#allocation3]
    $region121: #{context_prediction_vit_forward.1} parent=1 // pred_fallthru
      _
    // Predicated region
    $region122: #{context_prediction_vit_forward.1} parent=1 // pred_check
      _
    $region123: #{context_prediction_vit_forward.1} parent=1 // pred_check_branch
      %10907 = sbr.rel (0) target = $region125
    $region124: #{context_prediction_vit_forward.1} parent=1 // pred_region
      %10908 = dma.done [#allocation3], 32
    $region125: #{context_prediction_vit_forward.1} parent=1 // pred_fallthru
      _
    %10909 = vsyncpa [#allocation3], 1

</llo_original>
